<compile_context>
chip_gen: v7x
topology: tpu7x:2x2x1
jax: 0.10.0
libtpu: 0.0.40
codegen_flags: <defaults>
</compile_context>

<pallas_src>
import functools

import jax
import jax.numpy as jnp
from jax.experimental import pallas as pl
from jax.experimental.pallas import tpu as pltpu

LANE = 128
SUBLANE = 8


# ----------------------------- helpers -----------------------------

def _round_up(n, m):
    return ((n + m - 1) // m) * m


def _pad_axis(a, axis, new_size):
    if a.shape[axis] == new_size:
        return a
    pad = [(0, 0)] * a.ndim
    pad[axis] = (0, new_size - a.shape[axis])
    return jnp.pad(a, pad)


def _pick_pixel_tile(hw, cap=512):
    """Largest divisor of hw that is <= cap, preferring multiples of 8."""
    if hw <= cap:
        return hw
    for d in range(cap, 7, -1):
        if hw % d == 0 and d % 8 == 0:
            return d
    for d in range(cap, 0, -1):
        if hw % d == 0:
            return d
    return hw


def _pick_row_tile(h, wp, cin_p, cout_p, d, *, acc_cap=2 << 20, buf_cap=8 << 20):
    """Largest divisor of h whose f32 accumulator / bf16 halo buffers stay small."""
    best = 1
    for th in range(1, h + 1):
        if h % th:
            continue
        acc_b = th * wp * cout_p * 4
        buf_b = 2 * ((th + 2 * d) * wp + SUBLANE) * cin_p * 2
        if acc_b <= acc_cap and buf_b <= buf_cap:
            best = th
    return best


def _params(semantics, *byte_counts):
    """CompilerParams with an explicit VMEM budget derived from the block sizes."""
    need = 2 * int(sum(byte_counts)) + (2 << 20)       # x2 double-buffering + headroom
    need = max(8 << 20, min(need, 64 << 20))
    return pltpu.CompilerParams(dimension_semantics=semantics,
                                vmem_limit_bytes=need)


# ----------------------------- Pallas kernels -----------------------------

def _conv1x1_bn_relu_kernel(x_ref, w_ref, scale_ref, bias_ref, o_ref):
    # x: (TM, Cin) bf16   w: (Cin, Cout) bf16   scale/bias: (1, Cout) f32   o: (TM, Cout) bf16
    y = jnp.dot(x_ref[...], w_ref[...], preferred_element_type=jnp.float32)
    y = y * scale_ref[...] + bias_ref[...]
    o_ref[...] = jnp.maximum(y, 0.0).astype(o_ref.dtype)


def _conv3x3_bn_relu_kernel(xp_hbm, w_ref, scale_ref, bias_ref, o_ref,
                            xbuf, sem, acc_ref, *, th, d, wp, w_out, lfix):
    # xp_hbm: (B, (H+2d)*Wp, Cin) bf16 in HBM (manual halo-row DMA, double buffered)
    # w:      (9, Cin, Cout) bf16 (resident)   scale/bias: (1, Cout) f32
    # o:      (th, W, Cout) bf16               acc: (th*Wp, Cout) f32 VMEM scratch
    b = pl.program_id(0)
    i = pl.program_id(1)
    nth = pl.num_programs(1)
    slot = i % 2

    def dma(tile, s):
        return pltpu.make_async_copy(
            xp_hbm.at[b, pl.ds(tile * th * wp, lfix)],
            xbuf.at[s, pl.ds(0, lfix)],
            sem.at[s])

    @pl.when(i == 0)                       # prime the pipeline for this batch element
    def _():
        dma(0, 0).start()

    @pl.when(i + 1 < nth)                  # prefetch next row tile while computing this one
    def _():
        dma(i + 1, 1 - slot).start()

    dma(i, slot).wait()

    cout = o_ref.shape[-1]
    # 9 taps: each lhs is a contiguous (th*Wp, Cin) slice (no reshape copies),
    # accumulated into an explicit f32 VMEM scratch (no register-spilling SSA acc).
    for kh in range(3):
        for kw in range(3):
            start = kh * d * wp + kw * d
            lhs = xbuf[slot, pl.ds(start, th * wp), :]
            partial = jnp.dot(lhs, w_ref[kh * 3 + kw],
                              preferred_element_type=jnp.float32)
            if kh == 0 and kw == 0:
                acc_ref[...] = partial
            else:
                acc_ref[...] += partial

    y = acc_ref[...] * scale_ref[...] + bias_ref[...]
    y = jnp.maximum(y, 0.0).reshape(th, wp, cout)[:, :w_out, :]
    o_ref[...] = y.astype(o_ref.dtype)


def _conv1x1_bn_add_relu_pool_kernel(x_ref, id_ref, w_ref, scale_ref, bias_ref,
                                     o_ref, psum_ref):
    # conv3 (1x1) + bn3 + residual add + ReLU, fused with per-tile SE pool partial sums.
    # x: (TM, Cin)  id: (TM, Cout) bf16  w: (Cin, Cout)  o: (TM, Cout)  psum: (1, Cout) f32
    # NOTE(synk): identity is added in bf16 (systematic but tiny precision loss vs f32 ref).
    y = jnp.dot(x_ref[...], w_ref[...], preferred_element_type=jnp.float32)
    y = y * scale_ref[...] + bias_ref[...] + id_ref[...].astype(jnp.float32)
    y = jnp.maximum(y, 0.0)
    o_ref[...] = y.astype(o_ref.dtype)
    psum_ref[...] = jnp.sum(y, axis=0, keepdims=True)


def _se_scale_nchw_kernel(act_ref, psum_ref, w1_ref, w2_ref, o_ref, *, inv_hw, out_c):
    # SE FC (mean -> fc1 -> relu -> fc2 -> sigmoid) fused with the channel scale and the
    # NHWC -> NCHW transpose.  The FC is tiny, so it is recomputed per tile to keep both
    # grid axes "parallel" (megacore-friendly at small batch).
    pooled = jnp.sum(psum_ref[...], axis=0, keepdims=True) * inv_hw        # (1, Cp) f32
    h = jnp.maximum(
        jnp.dot(pooled.astype(w1_ref.dtype), w1_ref[...],
                preferred_element_type=jnp.float32), 0.0)
    z = jnp.dot(h.astype(w2_ref.dtype), w2_ref[...],
                preferred_element_type=jnp.float32)
    s = 1.0 / (1.0 + jnp.exp(-z))                                          # sigmoid (EUP)
    scaled = act_ref[...].astype(jnp.float32) * s                          # (TM, Cp) f32
    o_ref[...] = scaled.T[:out_c, :]                                       # (out_c, TM)


# ----------------------------- pallas_call wrappers -----------------------------

def _conv1x1_bn_relu(x, w, scale, bias, *, tm):
    B, HW, Cin = x.shape
    Cout = w.shape[1]
    nm = HW // tm
    bb = tm * Cin * 2 + Cin * Cout * 2 + 2 * Cout * 4 + tm * Cout * 2
    return pl.pallas_call(
        _conv1x1_bn_relu_kernel,
        out_shape=jax.ShapeDtypeStruct((B, HW, Cout), x.dtype),
        grid=(B, nm),
        in_specs=[
            pl.BlockSpec((None, tm, Cin), lambda b, i: (b, i, 0)),
            pl.BlockSpec((Cin, Cout), lambda b, i: (0, 0)),
            pl.BlockSpec((1, Cout), lambda b, i: (0, 0)),
            pl.BlockSpec((1, Cout), lambda b, i: (0, 0)),
        ],
        out_specs=pl.BlockSpec((None, tm, Cout), lambda b, i: (b, i, 0)),
        compiler_params=_params(("parallel", "parallel"), bb),
    )(x, w, scale, bias)


def _conv3x3_bn_relu(x_nhwc, w9, scale, bias, *, dilation, th, wp):
    B, H, W, Cin = x_nhwc.shape
    Cout = w9.shape[-1]
    d = dilation
    # Spatial halo pad + right-pad W to a sublane multiple (keeps all in-kernel
    # reshapes free).  TODO(synk): fold into conv1's epilogue to save one HBM pass.
    xp = jnp.pad(x_nhwc, ((0, 0), (d, d), (d, wp - W - d), (0, 0)))
    xp = xp.reshape(B, (H + 2 * d) * wp, Cin)

    nth = H // th
    lfix = (th + 2 * d) * wp
    buf_rows = lfix + _round_up(2 * d, SUBLANE)      # slack for sublane-shifted tap reads
    kernel = functools.partial(_conv3x3_bn_relu_kernel,
                               th=th, d=d, wp=wp, w_out=W, lfix=lfix)
    bb = (2 * buf_rows * Cin * 2 + th * wp * Cout * 4 +
          9 * Cin * Cout * 2 + 2 * Cout * 4 + th * W * Cout * 2)
    return pl.pallas_call(
        kernel,
        out_shape=jax.ShapeDtypeStruct((B, H, W, Cout), x_nhwc.dtype),
        grid=(B, nth),
        in_specs=[
            pl.BlockSpec(memory_space=pl.ANY),                    # padded image stays in HBM
            pl.BlockSpec((9, Cin, Cout), lambda b, i: (0, 0, 0)),
            pl.BlockSpec((1, Cout), lambda b, i: (0, 0)),
            pl.BlockSpec((1, Cout), lambda b, i: (0, 0)),
        ],
        out_specs=pl.BlockSpec((None, th, W, Cout), lambda b, i: (b, i, 0, 0)),
        scratch_shapes=[
            pltpu.VMEM((2, buf_rows, Cin), jnp.bfloat16),         # halo-row ring buffer
            pltpu.SemaphoreType.DMA((2,)),
            pltpu.VMEM((th * wp, Cout), jnp.float32),             # explicit accumulator
        ],
        compiler_params=_params(("parallel", "arbitrary"), bb),   # i carries the DMA chain
    )(xp, w9, scale, bias)


def _conv1x1_bn_add_relu_pool(x, identity, w, scale, bias, *, tm):
    B, HW, Cin = x.shape
    Cout = w.shape[1]
    nm = HW // tm
    bb = (tm * Cin * 2 + tm * Cout * 2 + Cin * Cout * 2 + 2 * Cout * 4 +
          tm * Cout * 2 + Cout * 4)
    act, psum = pl.pallas_call(
        _conv1x1_bn_add_relu_pool_kernel,
        out_shape=(jax.ShapeDtypeStruct((B, HW, Cout), x.dtype),
                   jax.ShapeDtypeStruct((B * nm, 1, Cout), jnp.float32)),
        grid=(B, nm),
        in_specs=[
            pl.BlockSpec((None, tm, Cin), lambda b, i: (b, i, 0)),
            pl.BlockSpec((None, tm, Cout), lambda b, i: (b, i, 0)),
            pl.BlockSpec((Cin, Cout), lambda b, i: (0, 0)),
            pl.BlockSpec((1, Cout), lambda b, i: (0, 0)),
            pl.BlockSpec((1, Cout), lambda b, i: (0, 0)),
        ],
        out_specs=(
            pl.BlockSpec((None, tm, Cout), lambda b, i: (b, i, 0)),
            # per-tile partial pool sums -> no revisited accumulator, both axes parallel
            pl.BlockSpec((None, 1, Cout), lambda b, i, _nm=nm: (b * _nm + i, 0, 0)),
        ),
        compiler_params=_params(("parallel", "parallel"), bb),
    )(x, identity, w, scale, bias)
    return act, psum.reshape(B, nm, Cout)


def _se_scale_to_nchw(act, psum, w1, w2, hw, out_c, *, tm):
    B, HW, C = act.shape
    nm = HW // tm
    kernel = functools.partial(_se_scale_nchw_kernel,
                               inv_hw=1.0 / float(hw), out_c=out_c)
    bb = (tm * C * 2 + nm * C * 4 + w1.size * 2 + w2.size * 2 + out_c * tm * 4)
    return pl.pallas_call(
        kernel,
        out_shape=jax.ShapeDtypeStruct((B, out_c, HW), jnp.float32),
        grid=(B, nm),
        in_specs=[
            pl.BlockSpec((None, tm, C), lambda b, i: (b, i, 0)),
            pl.BlockSpec((None, nm, C), lambda b, i: (b, 0, 0)),
            pl.BlockSpec(w1.shape, lambda b, i: (0, 0)),
            pl.BlockSpec(w2.shape, lambda b, i: (0, 0)),
        ],
        out_specs=pl.BlockSpec((None, out_c, tm), lambda b, i: (b, 0, i)),
        compiler_params=_params(("parallel", "parallel"), bb),
    )(act, psum, w1, w2)


# ----------------------------- parameters -----------------------------

def init_params(key, in_planes, planes, reduction=16):
    expansion = 4
    width = planes
    out_c = planes * expansion
    eps = 1e-5
    ks = jax.random.split(key, 8)

    def bn_folded(k, c):
        k1, k2, k3, k4 = jax.random.split(k, 4)
        gamma = 1.0 + 0.1 * jax.random.normal(k1, (c,), jnp.float32)
        beta = 0.1 * jax.random.normal(k2, (c,), jnp.float32)
        mean = 0.1 * jax.random.normal(k3, (c,), jnp.float32)
        var = 1.0 + 0.1 * jnp.abs(jax.random.normal(k4, (c,), jnp.float32))
        scale = gamma * jax.lax.rsqrt(var + eps)
        bias = beta - mean * scale
        return scale, bias

    hidden = max(out_c // reduction, 1)
    return {
        # conv weights stored as (Cin, Cout) / (kh, kw, Cin, Cout) (transposed vs torch OIHW)
        "w1": 0.1 * jax.random.normal(ks[0], (in_planes, width), jnp.float32),
        "bn1": bn_folded(ks[1], width),
        "w2": 0.1 * jax.random.normal(ks[2], (3, 3, width, width), jnp.float32),
        "bn2": bn_folded(ks[3], width),
        "w3": 0.1 * jax.random.normal(ks[4], (width, out_c), jnp.float32),
        "bn3": bn_folded(ks[5], out_c),
        # SE linear weights stored as (in, out) = torch weight .T
        "se_w1": 0.1 * jax.random.normal(ks[6], (out_c, hidden), jnp.float32),
        "se_w2": 0.1 * jax.random.normal(ks[7], (hidden, out_c), jnp.float32),
    }


def prepare_params(params):
    """Zero-pad all channel dims to multiples of 128 lanes, cast weights to bf16."""
    w1, w2, w3 = params["w1"], params["w2"], params["w3"]
    s1, b1 = params["bn1"]
    s2, b2 = params["bn2"]
    s3, b3 = params["bn3"]
    se_w1, se_w2 = params["se_w1"], params["se_w2"]

    cin, width = w1.shape
    out_c = w3.shape[1]
    hidden = se_w1.shape[1]
    cin_p = _round_up(cin, LANE)
    width_p = _round_up(width, LANE)
    out_p = _round_up(out_c, LANE)
    hid_p = _round_up(hidden, LANE)

    def padw(a, rows, cols):
        return _pad_axis(_pad_axis(a, a.ndim - 2, rows), a.ndim - 1, cols)

    def padv(v, n):
        return _pad_axis(v, 0, n).reshape(1, n).astype(jnp.float32)

    return {
        "cin": cin, "cin_p": cin_p, "width_p": width_p, "out_c": out_c, "out_p": out_p,
        "w1": padw(w1, cin_p, width_p).astype(jnp.bfloat16),
        "s1": padv(s1, width_p), "b1": padv(b1, width_p),
        "w2": padw(w2, width_p, width_p).reshape(9, width_p, width_p).astype(jnp.bfloat16),
        "s2": padv(s2, width_p), "b2": padv(b2, width_p),
        "w3": padw(w3, width_p, out_p).astype(jnp.bfloat16),
        "s3": padv(s3, out_p), "b3": padv(b3, out_p),
        "se_w1": padw(se_w1, out_p, hid_p).astype(jnp.bfloat16),
        "se_w2": padw(se_w2, hid_p, out_p).astype(jnp.bfloat16),
    }


# ----------------------------- forward -----------------------------

def bottleneck_forward(x_nchw, pp, dilation=1):
    # stride=1, downsample=None -> identity skip requires in_planes == planes*4
    B, Cin, H, W = x_nchw.shape
    assert Cin == pp["cin"] and pp["cin_p"] == pp["out_p"], \
        "identity skip needs in_planes == planes*4"
    HW = H * W
    d = dilation
    cin_p, width_p, out_p, out_c = pp["cin_p"], pp["width_p"], pp["out_p"], pp["out_c"]

    x = jnp.transpose(x_nchw, (0, 2, 3, 1))                      # NCHW -> NHWC
    x = _pad_axis(x, 3, cin_p).astype(jnp.bfloat16)              # lane-pad channels + bf16
    identity = x.reshape(B, HW, cin_p)

    tm = _pick_pixel_tile(HW, cap=512)                           # v5e-safe pixel tile
    wp = _round_up(W + 2 * d, SUBLANE)                           # sublane-aligned halo width
    th = _pick_row_tile(H, wp, width_p, width_p, d)              # bounded acc / halo buffers

    # conv1 (1x1) + bn1 + relu
    h = _conv1x1_bn_relu(identity, pp["w1"], pp["s1"], pp["b1"], tm=tm)
    h = h.reshape(B, H, W, width_p)

    # conv2 (3x3, dilated) + bn2 + relu — halo rows DMA'd per tile, double buffered
    h = _conv3x3_bn_relu(h, pp["w2"], pp["s2"], pp["b2"], dilation=d, th=th, wp=wp)
    h = h.reshape(B, HW, width_p)

    # conv3 (1x1) + bn3 + residual add + relu, fused with per-tile SE pool partials
    h, psum = _conv1x1_bn_add_relu_pool(h, identity, pp["w3"], pp["s3"], pp["b3"], tm=tm)

    # SE (mean -> fc1 -> relu -> fc2 -> sigmoid) fused with the channel scale; output is
    # written directly in (B, C, H*W) layout so the final NCHW view is a free reshape.
    out = _se_scale_to_nchw(h, psum, pp["se_w1"], pp["se_w2"], HW, out_c, tm=tm)
    return out.reshape(B, out_c, H, W)


# ----------------------------- pure-JAX reference (for self-check) -----------------------------

def _reference_forward(x_nchw, params, dilation=1):
    x = jnp.transpose(x_nchw, (0, 2, 3, 1))
    s1, b1 = params["bn1"]
    s2, b2 = params["bn2"]
    s3, b3 = params["bn3"]
    h = jnp.maximum(jnp.einsum("bhwc,cd->bhwd", x, params["w1"]) * s1 + b1, 0.0)
    h = jax.lax.conv_general_dilated(
        h, params["w2"], window_strides=(1, 1),
        padding=[(dilation, dilation), (dilation, dilation)],
        rhs_dilation=(dilation, dilation),
        dimension_numbers=("NHWC", "HWIO", "NHWC"))
    h = jnp.maximum(h * s2 + b2, 0.0)
    h = jnp.einsum("bhwc,cd->bhwd", h, params["w3"]) * s3 + b3 + x
    h = jnp.maximum(h, 0.0)
    pooled = jnp.mean(h, axis=(1, 2))
    se = jnp.maximum(pooled @ params["se_w1"], 0.0) @ params["se_w2"]
    se = 1.0 / (1.0 + jnp.exp(-se))
    h = h * se[:, None, None, :]
    return jnp.transpose(h, (0, 3, 1, 2))


if __name__ == "__main__":
    B, H, W = 2, 16, 16
    planes = 4
    in_planes = planes * 4          # = 16 so the identity skip is valid (downsample=None)

    key = jax.random.PRNGKey(0)
    kx, kp = jax.random.split(key)
    x = jax.random.normal(kx, (B, in_planes, H, W), jnp.float32)   # NCHW like PyTorch
    params = init_params(kp, in_planes, planes, reduction=16)
    pp = prepare_params(params)

    fwd = jax.jit(lambda xx: bottleneck_forward(xx, pp, dilation=1))
    out = fwd(x)
    jax.block_until_ready(out)

    assert out.shape == (B, planes * 4, H, W), out.shape
    assert bool(jnp.all(jnp.isfinite(out)))
    ref = _reference_forward(x, params, dilation=1)
    assert bool(jnp.allclose(out, ref, atol=0.1, rtol=0.1)), "mismatch vs pure-JAX reference"
    print("KERNEL_OK")
</pallas_src>

<mosaic_0001>
module attributes {stable_mosaic.version = 11 : i64} {
  func.func @_conv1x1_bn_relu_kernel(%arg0: i32, %arg1: i32, %arg2: memref<1x256x128xbf16, #tpu.memory_space<vmem>>, %arg3: memref<128x128xbf16, #tpu.memory_space<vmem>>, %arg4: memref<1x128xf32, #tpu.memory_space<vmem>>, %arg5: memref<1x128xf32, #tpu.memory_space<vmem>>, %arg6: memref<1x256x128xbf16, #tpu.memory_space<vmem>>) attributes {dimension_semantics = [#tpu.dimension_semantics<parallel>, #tpu.dimension_semantics<parallel>], iteration_bounds = array<i64: 2, 1>, scalar_prefetch = 0 : i64, scratch_operands = 0 : i64, tpu.core_type = #tpu.core_type<tc>, window_params = [{transform_indices = @transform_0, window_bounds = array<i64: 1, 256, 128>}, {pipeline_mode = #tpu.pipeline_mode<synchronous>, transform_indices = @transform_1, window_bounds = array<i64: 128, 128>}, {pipeline_mode = #tpu.pipeline_mode<synchronous>, transform_indices = @transform_2, window_bounds = array<i64: 1, 128>}, {pipeline_mode = #tpu.pipeline_mode<synchronous>, transform_indices = @transform_3, window_bounds = array<i64: 1, 128>}, {transform_indices = @transform_4, window_bounds = array<i64: 1, 256, 128>}]} {
    %c0 = arith.constant 0 : index
    %c0_0 = arith.constant 0 : index
    %c0_1 = arith.constant 0 : index
    %0 = vector.load %arg2[%c0, %c0_0, %c0_1] : memref<1x256x128xbf16, #tpu.memory_space<vmem>>, vector<1x256x128xbf16>
    %1 = vector.shape_cast %0 : vector<1x256x128xbf16> to vector<256x128xbf16>
    %c0_2 = arith.constant 0 : index
    %c0_3 = arith.constant 0 : index
    %2 = vector.load %arg3[%c0_2, %c0_3] : memref<128x128xbf16, #tpu.memory_space<vmem>>, vector<128x128xbf16>
    %cst = arith.constant dense<0.000000e+00> : vector<256x128xf32>
    %3 = tpu.matmul %1, %2, %cst {dimension_numbers = #tpu.dot_dimension_numbers<[1], [0], [0], [1], [0, 0, 1, 1], [], []>} : vector<256x128xbf16>, vector<128x128xbf16>, vector<256x128xf32> -> vector<256x128xf32>
    %c0_4 = arith.constant 0 : index
    %c0_5 = arith.constant 0 : index
    %4 = vector.load %arg4[%c0_4, %c0_5] : memref<1x128xf32, #tpu.memory_space<vmem>>, vector<1x128xf32>
    %5 = vector.broadcast %4 : vector<1x128xf32> to vector<256x128xf32>
    %6 = arith.mulf %3, %5 : vector<256x128xf32>
    %c0_6 = arith.constant 0 : index
    %c0_7 = arith.constant 0 : index
    %7 = vector.load %arg5[%c0_6, %c0_7] : memref<1x128xf32, #tpu.memory_space<vmem>>, vector<1x128xf32>
    %8 = vector.broadcast %7 : vector<1x128xf32> to vector<256x128xf32>
    %9 = arith.addf %6, %8 : vector<256x128xf32>
    %cst_8 = arith.constant 0.000000e+00 : f32
    %10 = vector.broadcast %cst_8 : f32 to vector<256x128xf32>
    %11 = arith.maximumf %9, %10 : vector<256x128xf32>
    %12 = arith.truncf %11 : vector<256x128xf32> to vector<256x128xbf16>
    %c0_9 = arith.constant 0 : index
    %c0_10 = arith.constant 0 : index
    %c0_11 = arith.constant 0 : index
    %13 = vector.load %arg6[%c0_9, %c0_10, %c0_11] : memref<1x256x128xbf16, #tpu.memory_space<vmem>>, vector<1x256x128xbf16>
    %14 = vector.shape_cast %13 : vector<1x256x128xbf16> to vector<256x128xbf16>
    %15 = vector.shape_cast %12 : vector<256x128xbf16> to vector<1x256x128xbf16>
    tpu.vector_store %arg6[%c0_9, %c0_10, %c0_11], %15 {strides = array<i32>} : memref<1x256x128xbf16, #tpu.memory_space<vmem>>, vector<1x256x128xbf16>,
    return
  }
  func.func @transform_0(%arg0: i32, %arg1: i32) -> (i32, i32, i32) {
    %c0_i32 = arith.constant 0 : i32
    %c0_i32_0 = arith.constant 0 : i32
    return %arg0, %arg1, %c0_i32 : i32, i32, i32
  }
  func.func @transform_1(%arg0: i32, %arg1: i32) -> (i32, i32) {
    %c0_i32 = arith.constant 0 : i32
    %c0_i32_0 = arith.constant 0 : i32
    %c0_i32_1 = arith.constant 0 : i32
    return %c0_i32, %c0_i32_0 : i32, i32
  }
  func.func @transform_2(%arg0: i32, %arg1: i32) -> (i32, i32) {
    %c0_i32 = arith.constant 0 : i32
    %c0_i32_0 = arith.constant 0 : i32
    %c0_i32_1 = arith.constant 0 : i32
    return %c0_i32, %c0_i32_0 : i32, i32
  }
  func.func @transform_3(%arg0: i32, %arg1: i32) -> (i32, i32) {
    %c0_i32 = arith.constant 0 : i32
    %c0_i32_0 = arith.constant 0 : i32
    %c0_i32_1 = arith.constant 0 : i32
    return %c0_i32, %c0_i32_0 : i32, i32
  }
  func.func @transform_4(%arg0: i32, %arg1: i32) -> (i32, i32, i32) {
    %c0_i32 = arith.constant 0 : i32
    %c0_i32_0 = arith.constant 0 : i32
    return %arg0, %arg1, %c0_i32 : i32, i32, i32
  }
}

module attributes {stable_mosaic.version = 11 : i64} {
  func.func @_conv3x3_bn_relu_kernel(%arg0: i32, %arg1: i32, %arg2: memref<2x432x128xbf16, #tpu.memory_space<any>>, %arg3: memref<9x128x128xbf16, #tpu.memory_space<vmem>>, %arg4: memref<1x128xf32, #tpu.memory_space<vmem>>, %arg5: memref<1x128xf32, #tpu.memory_space<vmem>>, %arg6: memref<1x16x16x128xbf16, #tpu.memory_space<vmem>>, %arg7: memref<2x440x128xbf16, #tpu.memory_space<vmem>>, %arg8: memref<2x!tpu.dma_semaphore, #tpu.memory_space<semaphore_mem>>, %arg9: memref<384x128xf32, #tpu.memory_space<vmem>>) attributes {dimension_semantics = [#tpu.dimension_semantics<parallel>, #tpu.dimension_semantics<arbitrary>], iteration_bounds = array<i64: 2, 1>, scalar_prefetch = 0 : i64, scratch_operands = 3 : i64, tpu.core_type = #tpu.core_type<tc>, window_params = [{}, {pipeline_mode = #tpu.pipeline_mode<synchronous>, transform_indices = @transform_1, window_bounds = array<i64: 9, 128, 128>}, {pipeline_mode = #tpu.pipeline_mode<synchronous>, transform_indices = @transform_2, window_bounds = array<i64: 1, 128>}, {pipeline_mode = #tpu.pipeline_mode<synchronous>, transform_indices = @transform_3, window_bounds = array<i64: 1, 128>}, {transform_indices = @transform_4, window_bounds = array<i64: 1, 16, 16, 128>}]} {
    %c2_i32 = arith.constant 2 : i32
    %c0_i32 = arith.constant 0 : i32
    %0 = arith.cmpi eq, %c2_i32, %c0_i32 : i32
    %c1_i32 = arith.constant 1 : i32
    %1 = arith.select %0, %c1_i32, %c2_i32 : i32
    %2 = arith.remsi %arg1, %1 : i32
    %c0_i32_0 = arith.constant 0 : i32
    %3 = arith.cmpi ne, %2, %c0_i32_0 : i32
    %c0_i32_1 = arith.constant 0 : i32
    %4 = arith.cmpi slt, %2, %c0_i32_1 : i32
    %c0_i32_2 = arith.constant 0 : i32
    %5 = arith.cmpi slt, %1, %c0_i32_2 : i32
    %6 = arith.xori %4, %5 : i1
    %7 = arith.andi %6, %3 : i1
    %8 = arith.addi %2, %1 : i32
    %9 = arith.select %7, %8, %2 : i32
    %c0_i32_3 = arith.constant 0 : i32
    %10 = arith.cmpi eq, %arg1, %c0_i32_3 : i32
    %11 = arith.extui %10 : i1 to i32
    %c0_i32_4 = arith.constant 0 : i32
    %12 = arith.cmpi ne, %11, %c0_i32_4 : i32
    scf.if %12 {
      %c0_i32_94 = arith.constant 0 : i32
      %c0_i32_95 = arith.constant 0 : i32
      %c0_i32_96 = arith.constant 0 : i32
      %c0_i32_97 = arith.constant 0 : i32
      %119 = tpu.memref_slice %arg2[%arg0, %c0_i32_96, %c0_i32_97] : memref<2x432x128xbf16, #tpu.memory_space<any>> -> memref<1x432x128xbf16, #tpu.memory_space<any>>
      %120 = tpu.memref_squeeze %119 : memref<1x432x128xbf16, #tpu.memory_space<any>> -> memref<432x128xbf16, #tpu.memory_space<any>>
      %c0_i32_98 = arith.constant 0 : i32
      %c0_i32_99 = arith.constant 0 : i32
      %121 = tpu.memref_slice %arg7[%c0_i32_94, %c0_i32_98, %c0_i32_99] : memref<2x440x128xbf16, #tpu.memory_space<vmem>> -> memref<1x432x128xbf16, #tpu.memory_space<vmem>>
      %122 = tpu.memref_squeeze %121 : memref<1x432x128xbf16, #tpu.memory_space<vmem>> -> memref<432x128xbf16, #tpu.memory_space<vmem>>
      %123 = tpu.memref_slice %arg8[%c0_i32_95] : memref<2x!tpu.dma_semaphore, #tpu.memory_space<semaphore_mem>> -> memref<1x!tpu.dma_semaphore, #tpu.memory_space<semaphore_mem>>
      %124 = tpu.memref_squeeze %123 : memref<1x!tpu.dma_semaphore, #tpu.memory_space<semaphore_mem>> -> memref<!tpu.dma_semaphore, #tpu.memory_space<semaphore_mem>>
      tpu.enqueue_dma source(%120 : memref<432x128xbf16, #tpu.memory_space<any>>) target(%122 : memref<432x128xbf16, #tpu.memory_space<vmem>>) target_semaphore(%124 : memref<!tpu.dma_semaphore, #tpu.memory_space<semaphore_mem>>)
    } else {
    }
    %c1_i32_5 = arith.constant 1 : i32
    %13 = arith.addi %arg1, %c1_i32_5 : i32
    %c1_i32_6 = arith.constant 1 : i32
    %14 = arith.cmpi slt, %13, %c1_i32_6 : i32
    %15 = arith.extui %14 : i1 to i32
    %c0_i32_7 = arith.constant 0 : i32
    %16 = arith.cmpi ne, %15, %c0_i32_7 : i32
    scf.if %16 {
      %c1_i32_94 = arith.constant 1 : i32
      %119 = arith.addi %arg1, %c1_i32_94 : i32
      %c1_i32_95 = arith.constant 1 : i32
      %120 = arith.subi %c1_i32_95, %9 : i32
      %c16_i32_96 = arith.constant 16 : i32
      %121 = arith.muli %119, %c16_i32_96 : i32
      %c24_i32_97 = arith.constant 24 : i32
      %122 = arith.muli %121, %c24_i32_97 : i32
      %c0_i32_98 = arith.constant 0 : i32
      %123 = tpu.memref_slice %arg2[%arg0, %122, %c0_i32_98] : memref<2x432x128xbf16, #tpu.memory_space<any>> -> memref<1x432x128xbf16, #tpu.memory_space<any>>
      %124 = tpu.memref_squeeze %123 : memref<1x432x128xbf16, #tpu.memory_space<any>> -> memref<432x128xbf16, #tpu.memory_space<any>>
      %c0_i32_99 = arith.constant 0 : i32
      %c0_i32_100 = arith.constant 0 : i32
      %125 = tpu.memref_slice %arg7[%120, %c0_i32_99, %c0_i32_100] : memref<2x440x128xbf16, #tpu.memory_space<vmem>> -> memref<1x432x128xbf16, #tpu.memory_space<vmem>>
      %126 = tpu.memref_squeeze %125 : memref<1x432x128xbf16, #tpu.memory_space<vmem>> -> memref<432x128xbf16, #tpu.memory_space<vmem>>
      %127 = tpu.memref_slice %arg8[%120] : memref<2x!tpu.dma_semaphore, #tpu.memory_space<semaphore_mem>> -> memref<1x!tpu.dma_semaphore, #tpu.memory_space<semaphore_mem>>
      %128 = tpu.memref_squeeze %127 : memref<1x!tpu.dma_semaphore, #tpu.memory_space<semaphore_mem>> -> memref<!tpu.dma_semaphore, #tpu.memory_space<semaphore_mem>>
      tpu.enqueue_dma source(%124 : memref<432x128xbf16, #tpu.memory_space<any>>) target(%126 : memref<432x128xbf16, #tpu.memory_space<vmem>>) target_semaphore(%128 : memref<!tpu.dma_semaphore, #tpu.memory_space<semaphore_mem>>)
    } else {
    }
    %c16_i32 = arith.constant 16 : i32
    %17 = arith.muli %arg1, %c16_i32 : i32
    %c24_i32 = arith.constant 24 : i32
    %18 = arith.muli %17, %c24_i32 : i32
    %c0_i32_8 = arith.constant 0 : i32
    %19 = tpu.memref_slice %arg2[%arg0, %18, %c0_i32_8] : memref<2x432x128xbf16, #tpu.memory_space<any>> -> memref<1x432x128xbf16, #tpu.memory_space<any>>
    %20 = tpu.memref_squeeze %19 : memref<1x432x128xbf16, #tpu.memory_space<any>> -> memref<432x128xbf16, #tpu.memory_space<any>>
    %c0_i32_9 = arith.constant 0 : i32
    %c0_i32_10 = arith.constant 0 : i32
    %21 = tpu.memref_slice %arg7[%9, %c0_i32_9, %c0_i32_10] : memref<2x440x128xbf16, #tpu.memory_space<vmem>> -> memref<1x432x128xbf16, #tpu.memory_space<vmem>>
    %22 = tpu.memref_squeeze %21 : memref<1x432x128xbf16, #tpu.memory_space<vmem>> -> memref<432x128xbf16, #tpu.memory_space<vmem>>
    %23 = tpu.memref_slice %arg8[%9] : memref<2x!tpu.dma_semaphore, #tpu.memory_space<semaphore_mem>> -> memref<1x!tpu.dma_semaphore, #tpu.memory_space<semaphore_mem>>
    %24 = tpu.memref_squeeze %23 : memref<1x!tpu.dma_semaphore, #tpu.memory_space<semaphore_mem>> -> memref<!tpu.dma_semaphore, #tpu.memory_space<semaphore_mem>>
    tpu.wait_dma2 semaphore(%24 : memref<!tpu.dma_semaphore, #tpu.memory_space<semaphore_mem>>) src(%20 : memref<432x128xbf16, #tpu.memory_space<any>>) dst(%22 : memref<432x128xbf16, #tpu.memory_space<vmem>>)
    %25 = arith.index_cast %9 : i32 to index
    %c0 = arith.constant 0 : index
    %c0_11 = arith.constant 0 : index
    %26 = vector.load %arg7[%25, %c0, %c0_11] : memref<2x440x128xbf16, #tpu.memory_space<vmem>>, vector<1x384x128xbf16>
    %27 = vector.shape_cast %26 : vector<1x384x128xbf16> to vector<384x128xbf16>
    %c0_12 = arith.constant 0 : index
    %c0_13 = arith.constant 0 : index
    %c0_14 = arith.constant 0 : index
    %28 = vector.load %arg3[%c0_12, %c0_13, %c0_14] : memref<9x128x128xbf16, #tpu.memory_space<vmem>>, vector<1x128x128xbf16>
    %29 = vector.shape_cast %28 : vector<1x128x128xbf16> to vector<128x128xbf16>
    %cst = arith.constant dense<0.000000e+00> : vector<384x128xf32>
    %30 = tpu.matmul %27, %29, %cst {dimension_numbers = #tpu.dot_dimension_numbers<[1], [0], [0], [1], [0, 0, 1, 1], [], []>} : vector<384x128xbf16>, vector<128x128xbf16>, vector<384x128xf32> -> vector<384x128xf32>
    %c0_15 = arith.constant 0 : index
    %c0_16 = arith.constant 0 : index
    %31 = vector.load %arg9[%c0_15, %c0_16] : memref<384x128xf32, #tpu.memory_space<vmem>>, vector<384x128xf32>
    tpu.vector_store %arg9[%c0_15, %c0_16], %30 {strides = array<i32>} : memref<384x128xf32, #tpu.memory_space<vmem>>, vector<384x128xf32>,
    %32 = arith.index_cast %9 : i32 to index
    %c1 = arith.constant 1 : index
    %c0_17 = arith.constant 0 : index
    %33 = vector.load %arg7[%32, %c1, %c0_17] : memref<2x440x128xbf16, #tpu.memory_space<vmem>>, vector<1x384x128xbf16>
    %34 = vector.shape_cast %33 : vector<1x384x128xbf16> to vector<384x128xbf16>
    %c1_18 = arith.constant 1 : index
    %c0_19 = arith.constant 0 : index
    %c0_20 = arith.constant 0 : index
    %35 = vector.load %arg3[%c1_18, %c0_19, %c0_20] : memref<9x128x128xbf16, #tpu.memory_space<vmem>>, vector<1x128x128xbf16>
    %36 = vector.shape_cast %35 : vector<1x128x128xbf16> to vector<128x128xbf16>
    %cst_21 = arith.constant dense<0.000000e+00> : vector<384x128xf32>
    %37 = tpu.matmul %34, %36, %cst_21 {dimension_numbers = #tpu.dot_dimension_numbers<[1], [0], [0], [1], [0, 0, 1, 1], [], []>} : vector<384x128xbf16>, vector<128x128xbf16>, vector<384x128xf32> -> vector<384x128xf32>
    %c0_22 = arith.constant 0 : index
    %c0_23 = arith.constant 0 : index
    %38 = vector.load %arg9[%c0_22, %c0_23] : memref<384x128xf32, #tpu.memory_space<vmem>>, vector<384x128xf32>
    %39 = arith.addf %38, %37 : vector<384x128xf32>
    %c0_24 = arith.constant 0 : index
    %c0_25 = arith.constant 0 : index
    %40 = vector.load %arg9[%c0_24, %c0_25] : memref<384x128xf32, #tpu.memory_space<vmem>>, vector<384x128xf32>
    tpu.vector_store %arg9[%c0_24, %c0_25], %39 {strides = array<i32>} : memref<384x128xf32, #tpu.memory_space<vmem>>, vector<384x128xf32>,
    %41 = arith.index_cast %9 : i32 to index
    %c2 = arith.constant 2 : index
    %c0_26 = arith.constant 0 : index
    %42 = vector.load %arg7[%41, %c2, %c0_26] : memref<2x440x128xbf16, #tpu.memory_space<vmem>>, vector<1x384x128xbf16>
    %43 = vector.shape_cast %42 : vector<1x384x128xbf16> to vector<384x128xbf16>
    %c2_27 = arith.constant 2 : index
    %c0_28 = arith.constant 0 : index
    %c0_29 = arith.constant 0 : index
    %44 = vector.load %arg3[%c2_27, %c0_28, %c0_29] : memref<9x128x128xbf16, #tpu.memory_space<vmem>>, vector<1x128x128xbf16>
    %45 = vector.shape_cast %44 : vector<1x128x128xbf16> to vector<128x128xbf16>
    %cst_30 = arith.constant dense<0.000000e+00> : vector<384x128xf32>
    %46 = tpu.matmul %43, %45, %cst_30 {dimension_numbers = #tpu.dot_dimension_numbers<[1], [0], [0], [1], [0, 0, 1, 1], [], []>} : vector<384x128xbf16>, vector<128x128xbf16>, vector<384x128xf32> -> vector<384x128xf32>
    %c0_31 = arith.constant 0 : index
    %c0_32 = arith.constant 0 : index
    %47 = vector.load %arg9[%c0_31, %c0_32] : memref<384x128xf32, #tpu.memory_space<vmem>>, vector<384x128xf32>
    %48 = arith.addf %47, %46 : vector<384x128xf32>
    %c0_33 = arith.constant 0 : index
    %c0_34 = arith.constant 0 : index
    %49 = vector.load %arg9[%c0_33, %c0_34] : memref<384x128xf32, #tpu.memory_space<vmem>>, vector<384x128xf32>
    tpu.vector_store %arg9[%c0_33, %c0_34], %48 {strides = array<i32>} : memref<384x128xf32, #tpu.memory_space<vmem>>, vector<384x128xf32>,
    %50 = arith.index_cast %9 : i32 to index
    %c24 = arith.constant 24 : index
    %c0_35 = arith.constant 0 : index
    %51 = vector.load %arg7[%50, %c24, %c0_35] : memref<2x440x128xbf16, #tpu.memory_space<vmem>>, vector<1x384x128xbf16>
    %52 = vector.shape_cast %51 : vector<1x384x128xbf16> to vector<384x128xbf16>
    %c3 = arith.constant 3 : index
    %c0_36 = arith.constant 0 : index
    %c0_37 = arith.constant 0 : index
    %53 = vector.load %arg3[%c3, %c0_36, %c0_37] : memref<9x128x128xbf16, #tpu.memory_space<vmem>>, vector<1x128x128xbf16>
    %54 = vector.shape_cast %53 : vector<1x128x128xbf16> to vector<128x128xbf16>
    %cst_38 = arith.constant dense<0.000000e+00> : vector<384x128xf32>
    %55 = tpu.matmul %52, %54, %cst_38 {dimension_numbers = #tpu.dot_dimension_numbers<[1], [0], [0], [1], [0, 0, 1, 1], [], []>} : vector<384x128xbf16>, vector<128x128xbf16>, vector<384x128xf32> -> vector<384x128xf32>
    %c0_39 = arith.constant 0 : index
    %c0_40 = arith.constant 0 : index
    %56 = vector.load %arg9[%c0_39, %c0_40] : memref<384x128xf32, #tpu.memory_space<vmem>>, vector<384x128xf32>
    %57 = arith.addf %56, %55 : vector<384x128xf32>
    %c0_41 = arith.constant 0 : index
    %c0_42 = arith.constant 0 : index
    %58 = vector.load %arg9[%c0_41, %c0_42] : memref<384x128xf32, #tpu.memory_space<vmem>>, vector<384x128xf32>
    tpu.vector_store %arg9[%c0_41, %c0_42], %57 {strides = array<i32>} : memref<384x128xf32, #tpu.memory_space<vmem>>, vector<384x128xf32>,
    %59 = arith.index_cast %9 : i32 to index
    %c25 = arith.constant 25 : index
    %c0_43 = arith.constant 0 : index
    %60 = vector.load %arg7[%59, %c25, %c0_43] : memref<2x440x128xbf16, #tpu.memory_space<vmem>>, vector<1x384x128xbf16>
    %61 = vector.shape_cast %60 : vector<1x384x128xbf16> to vector<384x128xbf16>
    %c4 = arith.constant 4 : index
    %c0_44 = arith.constant 0 : index
    %c0_45 = arith.constant 0 : index
    %62 = vector.load %arg3[%c4, %c0_44, %c0_45] : memref<9x128x128xbf16, #tpu.memory_space<vmem>>, vector<1x128x128xbf16>
    %63 = vector.shape_cast %62 : vector<1x128x128xbf16> to vector<128x128xbf16>
    %cst_46 = arith.constant dense<0.000000e+00> : vector<384x128xf32>
    %64 = tpu.matmul %61, %63, %cst_46 {dimension_numbers = #tpu.dot_dimension_numbers<[1], [0], [0], [1], [0, 0, 1, 1], [], []>} : vector<384x128xbf16>, vector<128x128xbf16>, vector<384x128xf32> -> vector<384x128xf32>
    %c0_47 = arith.constant 0 : index
    %c0_48 = arith.constant 0 : index
    %65 = vector.load %arg9[%c0_47, %c0_48] : memref<384x128xf32, #tpu.memory_space<vmem>>, vector<384x128xf32>
    %66 = arith.addf %65, %64 : vector<384x128xf32>
    %c0_49 = arith.constant 0 : index
    %c0_50 = arith.constant 0 : index
    %67 = vector.load %arg9[%c0_49, %c0_50] : memref<384x128xf32, #tpu.memory_space<vmem>>, vector<384x128xf32>
    tpu.vector_store %arg9[%c0_49, %c0_50], %66 {strides = array<i32>} : memref<384x128xf32, #tpu.memory_space<vmem>>, vector<384x128xf32>,
    %68 = arith.index_cast %9 : i32 to index
    %c26 = arith.constant 26 : index
    %c0_51 = arith.constant 0 : index
    %69 = vector.load %arg7[%68, %c26, %c0_51] : memref<2x440x128xbf16, #tpu.memory_space<vmem>>, vector<1x384x128xbf16>
    %70 = vector.shape_cast %69 : vector<1x384x128xbf16> to vector<384x128xbf16>
    %c5 = arith.constant 5 : index
    %c0_52 = arith.constant 0 : index
    %c0_53 = arith.constant 0 : index
    %71 = vector.load %arg3[%c5, %c0_52, %c0_53] : memref<9x128x128xbf16, #tpu.memory_space<vmem>>, vector<1x128x128xbf16>
    %72 = vector.shape_cast %71 : vector<1x128x128xbf16> to vector<128x128xbf16>
    %cst_54 = arith.constant dense<0.000000e+00> : vector<384x128xf32>
    %73 = tpu.matmul %70, %72, %cst_54 {dimension_numbers = #tpu.dot_dimension_numbers<[1], [0], [0], [1], [0, 0, 1, 1], [], []>} : vector<384x128xbf16>, vector<128x128xbf16>, vector<384x128xf32> -> vector<384x128xf32>
    %c0_55 = arith.constant 0 : index
    %c0_56 = arith.constant 0 : index
    %74 = vector.load %arg9[%c0_55, %c0_56] : memref<384x128xf32, #tpu.memory_space<vmem>>, vector<384x128xf32>
    %75 = arith.addf %74, %73 : vector<384x128xf32>
    %c0_57 = arith.constant 0 : index
    %c0_58 = arith.constant 0 : index
    %76 = vector.load %arg9[%c0_57, %c0_58] : memref<384x128xf32, #tpu.memory_space<vmem>>, vector<384x128xf32>
    tpu.vector_store %arg9[%c0_57, %c0_58], %75 {strides = array<i32>} : memref<384x128xf32, #tpu.memory_space<vmem>>, vector<384x128xf32>,
    %77 = arith.index_cast %9 : i32 to index
    %c48 = arith.constant 48 : index
    %c0_59 = arith.constant 0 : index
    %78 = vector.load %arg7[%77, %c48, %c0_59] : memref<2x440x128xbf16, #tpu.memory_space<vmem>>, vector<1x384x128xbf16>
    %79 = vector.shape_cast %78 : vector<1x384x128xbf16> to vector<384x128xbf16>
    %c6 = arith.constant 6 : index
    %c0_60 = arith.constant 0 : index
    %c0_61 = arith.constant 0 : index
    %80 = vector.load %arg3[%c6, %c0_60, %c0_61] : memref<9x128x128xbf16, #tpu.memory_space<vmem>>, vector<1x128x128xbf16>
    %81 = vector.shape_cast %80 : vector<1x128x128xbf16> to vector<128x128xbf16>
    %cst_62 = arith.constant dense<0.000000e+00> : vector<384x128xf32>
    %82 = tpu.matmul %79, %81, %cst_62 {dimension_numbers = #tpu.dot_dimension_numbers<[1], [0], [0], [1], [0, 0, 1, 1], [], []>} : vector<384x128xbf16>, vector<128x128xbf16>, vector<384x128xf32> -> vector<384x128xf32>
    %c0_63 = arith.constant 0 : index
    %c0_64 = arith.constant 0 : index
    %83 = vector.load %arg9[%c0_63, %c0_64] : memref<384x128xf32, #tpu.memory_space<vmem>>, vector<384x128xf32>
    %84 = arith.addf %83, %82 : vector<384x128xf32>
    %c0_65 = arith.constant 0 : index
    %c0_66 = arith.constant 0 : index
    %85 = vector.load %arg9[%c0_65, %c0_66] : memref<384x128xf32, #tpu.memory_space<vmem>>, vector<384x128xf32>
    tpu.vector_store %arg9[%c0_65, %c0_66], %84 {strides = array<i32>} : memref<384x128xf32, #tpu.memory_space<vmem>>, vector<384x128xf32>,
    %86 = arith.index_cast %9 : i32 to index
    %c49 = arith.constant 49 : index
    %c0_67 = arith.constant 0 : index
    %87 = vector.load %arg7[%86, %c49, %c0_67] : memref<2x440x128xbf16, #tpu.memory_space<vmem>>, vector<1x384x128xbf16>
    %88 = vector.shape_cast %87 : vector<1x384x128xbf16> to vector<384x128xbf16>
    %c7 = arith.constant 7 : index
    %c0_68 = arith.constant 0 : index
    %c0_69 = arith.constant 0 : index
    %89 = vector.load %arg3[%c7, %c0_68, %c0_69] : memref<9x128x128xbf16, #tpu.memory_space<vmem>>, vector<1x128x128xbf16>
    %90 = vector.shape_cast %89 : vector<1x128x128xbf16> to vector<128x128xbf16>
    %cst_70 = arith.constant dense<0.000000e+00> : vector<384x128xf32>
    %91 = tpu.matmul %88, %90, %cst_70 {dimension_numbers = #tpu.dot_dimension_numbers<[1], [0], [0], [1], [0, 0, 1, 1], [], []>} : vector<384x128xbf16>, vector<128x128xbf16>, vector<384x128xf32> -> vector<384x128xf32>
    %c0_71 = arith.constant 0 : index
    %c0_72 = arith.constant 0 : index
    %92 = vector.load %arg9[%c0_71, %c0_72] : memref<384x128xf32, #tpu.memory_space<vmem>>, vector<384x128xf32>
    %93 = arith.addf %92, %91 : vector<384x128xf32>
    %c0_73 = arith.constant 0 : index
    %c0_74 = arith.constant 0 : index
    %94 = vector.load %arg9[%c0_73, %c0_74] : memref<384x128xf32, #tpu.memory_space<vmem>>, vector<384x128xf32>
    tpu.vector_store %arg9[%c0_73, %c0_74], %93 {strides = array<i32>} : memref<384x128xf32, #tpu.memory_space<vmem>>, vector<384x128xf32>,
    %95 = arith.index_cast %9 : i32 to index
    %c50 = arith.constant 50 : index
    %c0_75 = arith.constant 0 : index
    %96 = vector.load %arg7[%95, %c50, %c0_75] : memref<2x440x128xbf16, #tpu.memory_space<vmem>>, vector<1x384x128xbf16>
    %97 = vector.shape_cast %96 : vector<1x384x128xbf16> to vector<384x128xbf16>
    %c8 = arith.constant 8 : index
    %c0_76 = arith.constant 0 : index
    %c0_77 = arith.constant 0 : index
    %98 = vector.load %arg3[%c8, %c0_76, %c0_77] : memref<9x128x128xbf16, #tpu.memory_space<vmem>>, vector<1x128x128xbf16>
    %99 = vector.shape_cast %98 : vector<1x128x128xbf16> to vector<128x128xbf16>
    %cst_78 = arith.constant dense<0.000000e+00> : vector<384x128xf32>
    %100 = tpu.matmul %97, %99, %cst_78 {dimension_numbers = #tpu.dot_dimension_numbers<[1], [0], [0], [1], [0, 0, 1, 1], [], []>} : vector<384x128xbf16>, vector<128x128xbf16>, vector<384x128xf32> -> vector<384x128xf32>
    %c0_79 = arith.constant 0 : index
    %c0_80 = arith.constant 0 : index
    %101 = vector.load %arg9[%c0_79, %c0_80] : memref<384x128xf32, #tpu.memory_space<vmem>>, vector<384x128xf32>
    %102 = arith.addf %101, %100 : vector<384x128xf32>
    %c0_81 = arith.constant 0 : index
    %c0_82 = arith.constant 0 : index
    %103 = vector.load %arg9[%c0_81, %c0_82] : memref<384x128xf32, #tpu.memory_space<vmem>>, vector<384x128xf32>
    tpu.vector_store %arg9[%c0_81, %c0_82], %102 {strides = array<i32>} : memref<384x128xf32, #tpu.memory_space<vmem>>, vector<384x128xf32>,
    %c0_83 = arith.constant 0 : index
    %c0_84 = arith.constant 0 : index
    %104 = vector.load %arg9[%c0_83, %c0_84] : memref<384x128xf32, #tpu.memory_space<vmem>>, vector<384x128xf32>
    %c0_85 = arith.constant 0 : index
    %c0_86 = arith.constant 0 : index
    %105 = vector.load %arg4[%c0_85, %c0_86] : memref<1x128xf32, #tpu.memory_space<vmem>>, vector<1x128xf32>
    %106 = vector.broadcast %105 : vector<1x128xf32> to vector<384x128xf32>
    %107 = arith.mulf %104, %106 : vector<384x128xf32>
    %c0_87 = arith.constant 0 : index
    %c0_88 = arith.constant 0 : index
    %108 = vector.load %arg5[%c0_87, %c0_88] : memref<1x128xf32, #tpu.memory_space<vmem>>, vector<1x128xf32>
    %109 = vector.broadcast %108 : vector<1x128xf32> to vector<384x128xf32>
    %110 = arith.addf %107, %109 : vector<384x128xf32>
    %cst_89 = arith.constant 0.000000e+00 : f32
    %111 = vector.broadcast %cst_89 : f32 to vector<384x128xf32>
    %112 = arith.maximumf %110, %111 : vector<384x128xf32>
    %113 = vector.shape_cast %112 : vector<384x128xf32> to vector<16x24x128xf32>
    %114 = vector.extract_strided_slice %113 {offsets = [0, 0, 0], sizes = [16, 16, 128], strides = [1, 1, 1]} : vector<16x24x128xf32> to vector<16x16x128xf32>
    %115 = arith.truncf %114 : vector<16x16x128xf32> to vector<16x16x128xbf16>
    %c0_90 = arith.constant 0 : index
    %c0_91 = arith.constant 0 : index
    %c0_92 = arith.constant 0 : index
    %c0_93 = arith.constant 0 : index
    %116 = vector.load %arg6[%c0_90, %c0_91, %c0_92, %c0_93] : memref<1x16x16x128xbf16, #tpu.memory_space<vmem>>, vector<1x16x16x128xbf16>
    %117 = vector.shape_cast %116 : vector<1x16x16x128xbf16> to vector<16x16x128xbf16>
    %118 = vector.shape_cast %115 : vector<16x16x128xbf16> to vector<1x16x16x128xbf16>
    tpu.vector_store %arg6[%c0_90, %c0_91, %c0_92, %c0_93], %118 {strides = array<i32>} : memref<1x16x16x128xbf16, #tpu.memory_space<vmem>>, vector<1x16x16x128xbf16>,
    return
  }
  func.func @transform_1(%arg0: i32, %arg1: i32) -> (i32, i32, i32) {
    %c0_i32 = arith.constant 0 : i32
    %c0_i32_0 = arith.constant 0 : i32
    %c0_i32_1 = arith.constant 0 : i32
    %c0_i32_2 = arith.constant 0 : i32
    return %c0_i32, %c0_i32_0, %c0_i32_1 : i32, i32, i32
  }
  func.func @transform_2(%arg0: i32, %arg1: i32) -> (i32, i32) {
    %c0_i32 = arith.constant 0 : i32
    %c0_i32_0 = arith.constant 0 : i32
    %c0_i32_1 = arith.constant 0 : i32
    return %c0_i32, %c0_i32_0 : i32, i32
  }
  func.func @transform_3(%arg0: i32, %arg1: i32) -> (i32, i32) {
    %c0_i32 = arith.constant 0 : i32
    %c0_i32_0 = arith.constant 0 : i32
    %c0_i32_1 = arith.constant 0 : i32
    return %c0_i32, %c0_i32_0 : i32, i32
  }
  func.func @transform_4(%arg0: i32, %arg1: i32) -> (i32, i32, i32, i32) {
    %c0_i32 = arith.constant 0 : i32
    %c0_i32_0 = arith.constant 0 : i32
    %c0_i32_1 = arith.constant 0 : i32
    return %arg0, %arg1, %c0_i32, %c0_i32_0 : i32, i32, i32, i32
  }
}

module attributes {stable_mosaic.version = 11 : i64} {
  func.func @_conv1x1_bn_add_relu_pool_kernel(%arg0: i32, %arg1: i32, %arg2: memref<1x256x128xbf16, #tpu.memory_space<vmem>>, %arg3: memref<1x256x128xbf16, #tpu.memory_space<vmem>>, %arg4: memref<128x128xbf16, #tpu.memory_space<vmem>>, %arg5: memref<1x128xf32, #tpu.memory_space<vmem>>, %arg6: memref<1x128xf32, #tpu.memory_space<vmem>>, %arg7: memref<1x256x128xbf16, #tpu.memory_space<vmem>>, %arg8: memref<1x1x128xf32, #tpu.memory_space<vmem>>) attributes {dimension_semantics = [#tpu.dimension_semantics<parallel>, #tpu.dimension_semantics<parallel>], iteration_bounds = array<i64: 2, 1>, scalar_prefetch = 0 : i64, scratch_operands = 0 : i64, tpu.core_type = #tpu.core_type<tc>, window_params = [{transform_indices = @transform_0, window_bounds = array<i64: 1, 256, 128>}, {transform_indices = @transform_1, window_bounds = array<i64: 1, 256, 128>}, {pipeline_mode = #tpu.pipeline_mode<synchronous>, transform_indices = @transform_2, window_bounds = array<i64: 128, 128>}, {pipeline_mode = #tpu.pipeline_mode<synchronous>, transform_indices = @transform_3, window_bounds = array<i64: 1, 128>}, {pipeline_mode = #tpu.pipeline_mode<synchronous>, transform_indices = @transform_4, window_bounds = array<i64: 1, 128>}, {transform_indices = @transform_5, window_bounds = array<i64: 1, 256, 128>}, {transform_indices = @transform_6, window_bounds = array<i64: 1, 1, 128>}]} {
    %c0 = arith.constant 0 : index
    %c0_0 = arith.constant 0 : index
    %c0_1 = arith.constant 0 : index
    %0 = vector.load %arg2[%c0, %c0_0, %c0_1] : memref<1x256x128xbf16, #tpu.memory_space<vmem>>, vector<1x256x128xbf16>
    %1 = vector.shape_cast %0 : vector<1x256x128xbf16> to vector<256x128xbf16>
    %c0_2 = arith.constant 0 : index
    %c0_3 = arith.constant 0 : index
    %2 = vector.load %arg4[%c0_2, %c0_3] : memref<128x128xbf16, #tpu.memory_space<vmem>>, vector<128x128xbf16>
    %cst = arith.constant dense<0.000000e+00> : vector<256x128xf32>
    %3 = tpu.matmul %1, %2, %cst {dimension_numbers = #tpu.dot_dimension_numbers<[1], [0], [0], [1], [0, 0, 1, 1], [], []>} : vector<256x128xbf16>, vector<128x128xbf16>, vector<256x128xf32> -> vector<256x128xf32>
    %c0_4 = arith.constant 0 : index
    %c0_5 = arith.constant 0 : index
    %4 = vector.load %arg5[%c0_4, %c0_5] : memref<1x128xf32, #tpu.memory_space<vmem>>, vector<1x128xf32>
    %5 = vector.broadcast %4 : vector<1x128xf32> to vector<256x128xf32>
    %6 = arith.mulf %3, %5 : vector<256x128xf32>
    %c0_6 = arith.constant 0 : index
    %c0_7 = arith.constant 0 : index
    %7 = vector.load %arg6[%c0_6, %c0_7] : memref<1x128xf32, #tpu.memory_space<vmem>>, vector<1x128xf32>
    %8 = vector.broadcast %7 : vector<1x128xf32> to vector<256x128xf32>
    %9 = arith.addf %6, %8 : vector<256x128xf32>
    %c0_8 = arith.constant 0 : index
    %c0_9 = arith.constant 0 : index
    %c0_10 = arith.constant 0 : index
    %10 = vector.load %arg3[%c0_8, %c0_9, %c0_10] : memref<1x256x128xbf16, #tpu.memory_space<vmem>>, vector<1x256x128xbf16>
    %11 = vector.shape_cast %10 : vector<1x256x128xbf16> to vector<256x128xbf16>
    %12 = arith.extf %11 : vector<256x128xbf16> to vector<256x128xf32>
    %13 = arith.addf %9, %12 : vector<256x128xf32>
    %cst_11 = arith.constant 0.000000e+00 : f32
    %14 = vector.broadcast %cst_11 : f32 to vector<256x128xf32>
    %15 = arith.maximumf %13, %14 : vector<256x128xf32>
    %16 = arith.truncf %15 : vector<256x128xf32> to vector<256x128xbf16>
    %c0_12 = arith.constant 0 : index
    %c0_13 = arith.constant 0 : index
    %c0_14 = arith.constant 0 : index
    %17 = vector.load %arg7[%c0_12, %c0_13, %c0_14] : memref<1x256x128xbf16, #tpu.memory_space<vmem>>, vector<1x256x128xbf16>
    %18 = vector.shape_cast %17 : vector<1x256x128xbf16> to vector<256x128xbf16>
    %19 = vector.shape_cast %16 : vector<256x128xbf16> to vector<1x256x128xbf16>
    tpu.vector_store %arg7[%c0_12, %c0_13, %c0_14], %19 {strides = array<i32>} : memref<1x256x128xbf16, #tpu.memory_space<vmem>>, vector<1x256x128xbf16>,
    %cst_15 = arith.constant dense<0.000000e+00> : vector<128xf32>
    %20 = vector.multi_reduction <add>, %15, %cst_15 [0] : vector<256x128xf32> to vector<128xf32>
    %21 = vector.shape_cast %20 : vector<128xf32> to vector<1x128xf32>
    %c0_16 = arith.constant 0 : index
    %c0_17 = arith.constant 0 : index
    %c0_18 = arith.constant 0 : index
    %22 = vector.load %arg8[%c0_16, %c0_17, %c0_18] : memref<1x1x128xf32, #tpu.memory_space<vmem>>, vector<1x1x128xf32>
    %23 = vector.shape_cast %22 : vector<1x1x128xf32> to vector<1x128xf32>
    %24 = vector.shape_cast %21 : vector<1x128xf32> to vector<1x1x128xf32>
    tpu.vector_store %arg8[%c0_16, %c0_17, %c0_18], %24 {strides = array<i32>} : memref<1x1x128xf32, #tpu.memory_space<vmem>>, vector<1x1x128xf32>,
    return
  }
  func.func @transform_0(%arg0: i32, %arg1: i32) -> (i32, i32, i32) {
    %c0_i32 = arith.constant 0 : i32
    %c0_i32_0 = arith.constant 0 : i32
    return %arg0, %arg1, %c0_i32 : i32, i32, i32
  }
  func.func @transform_1(%arg0: i32, %arg1: i32) -> (i32, i32, i32) {
    %c0_i32 = arith.constant 0 : i32
    %c0_i32_0 = arith.constant 0 : i32
    return %arg0, %arg1, %c0_i32 : i32, i32, i32
  }
  func.func @transform_2(%arg0: i32, %arg1: i32) -> (i32, i32) {
    %c0_i32 = arith.constant 0 : i32
    %c0_i32_0 = arith.constant 0 : i32
    %c0_i32_1 = arith.constant 0 : i32
    return %c0_i32, %c0_i32_0 : i32, i32
  }
  func.func @transform_3(%arg0: i32, %arg1: i32) -> (i32, i32) {
    %c0_i32 = arith.constant 0 : i32
    %c0_i32_0 = arith.constant 0 : i32
    %c0_i32_1 = arith.constant 0 : i32
    return %c0_i32, %c0_i32_0 : i32, i32
  }
  func.func @transform_4(%arg0: i32, %arg1: i32) -> (i32, i32) {
    %c0_i32 = arith.constant 0 : i32
    %c0_i32_0 = arith.constant 0 : i32
    %c0_i32_1 = arith.constant 0 : i32
    return %c0_i32, %c0_i32_0 : i32, i32
  }
  func.func @transform_5(%arg0: i32, %arg1: i32) -> (i32, i32, i32) {
    %c0_i32 = arith.constant 0 : i32
    %c0_i32_0 = arith.constant 0 : i32
    return %arg0, %arg1, %c0_i32 : i32, i32, i32
  }
  func.func @transform_6(%arg0: i32, %arg1: i32) -> (i32, i32, i32) {
    %c1_i32 = arith.constant 1 : i32
    %0 = arith.muli %arg0, %c1_i32 : i32
    %1 = arith.addi %0, %arg1 : i32
    %c0_i32 = arith.constant 0 : i32
    %c0_i32_0 = arith.constant 0 : i32
    %c0_i32_1 = arith.constant 0 : i32
    return %1, %c0_i32, %c0_i32_0 : i32, i32, i32
  }
}

module attributes {stable_mosaic.version = 11 : i64} {
  func.func @_se_scale_nchw_kernel(%arg0: i32, %arg1: i32, %arg2: memref<1x256x128xbf16, #tpu.memory_space<vmem>>, %arg3: memref<1x1x128xf32, #tpu.memory_space<vmem>>, %arg4: memref<128x128xbf16, #tpu.memory_space<vmem>>, %arg5: memref<128x128xbf16, #tpu.memory_space<vmem>>, %arg6: memref<1x16x256xf32, #tpu.memory_space<vmem>>) attributes {dimension_semantics = [#tpu.dimension_semantics<parallel>, #tpu.dimension_semantics<parallel>], iteration_bounds = array<i64: 2, 1>, scalar_prefetch = 0 : i64, scratch_operands = 0 : i64, tpu.core_type = #tpu.core_type<tc>, window_params = [{transform_indices = @transform_0, window_bounds = array<i64: 1, 256, 128>}, {transform_indices = @transform_1, window_bounds = array<i64: 1, 1, 128>}, {pipeline_mode = #tpu.pipeline_mode<synchronous>, transform_indices = @transform_2, window_bounds = array<i64: 128, 128>}, {pipeline_mode = #tpu.pipeline_mode<synchronous>, transform_indices = @transform_3, window_bounds = array<i64: 128, 128>}, {transform_indices = @transform_4, window_bounds = array<i64: 1, 16, 256>}]} {
    %c0 = arith.constant 0 : index
    %c0_0 = arith.constant 0 : index
    %c0_1 = arith.constant 0 : index
    %0 = vector.load %arg3[%c0, %c0_0, %c0_1] : memref<1x1x128xf32, #tpu.memory_space<vmem>>, vector<1x1x128xf32>
    %1 = vector.shape_cast %0 : vector<1x1x128xf32> to vector<1x128xf32>
    %cst = arith.constant dense<0.000000e+00> : vector<128xf32>
    %2 = vector.multi_reduction <add>, %1, %cst [0] : vector<1x128xf32> to vector<128xf32>
    %3 = vector.shape_cast %2 : vector<128xf32> to vector<1x128xf32>
    %cst_2 = arith.constant 3.906250e-03 : f32
    %4 = vector.broadcast %cst_2 : f32 to vector<1x128xf32>
    %5 = arith.mulf %3, %4 : vector<1x128xf32>
    %6 = arith.truncf %5 : vector<1x128xf32> to vector<1x128xbf16>
    %c0_3 = arith.constant 0 : index
    %c0_4 = arith.constant 0 : index
    %7 = vector.load %arg4[%c0_3, %c0_4] : memref<128x128xbf16, #tpu.memory_space<vmem>>, vector<128x128xbf16>
    %cst_5 = arith.constant dense<0.000000e+00> : vector<1x128xf32>
    %8 = tpu.matmul %6, %7, %cst_5 {dimension_numbers = #tpu.dot_dimension_numbers<[1], [0], [0], [1], [0, 0, 1, 1], [], []>} : vector<1x128xbf16>, vector<128x128xbf16>, vector<1x128xf32> -> vector<1x128xf32>
    %cst_6 = arith.constant 0.000000e+00 : f32
    %9 = vector.broadcast %cst_6 : f32 to vector<1x128xf32>
    %10 = arith.maximumf %8, %9 : vector<1x128xf32>
    %11 = arith.truncf %10 : vector<1x128xf32> to vector<1x128xbf16>
    %c0_7 = arith.constant 0 : index
    %c0_8 = arith.constant 0 : index
    %12 = vector.load %arg5[%c0_7, %c0_8] : memref<128x128xbf16, #tpu.memory_space<vmem>>, vector<128x128xbf16>
    %cst_9 = arith.constant dense<0.000000e+00> : vector<1x128xf32>
    %13 = tpu.matmul %11, %12, %cst_9 {dimension_numbers = #tpu.dot_dimension_numbers<[1], [0], [0], [1], [0, 0, 1, 1], [], []>} : vector<1x128xbf16>, vector<128x128xbf16>, vector<1x128xf32> -> vector<1x128xf32>
    %cst_10 = arith.constant 0.000000e+00 : f32
    %14 = vector.broadcast %cst_10 : f32 to vector<1x128xf32>
    %15 = arith.subf %14, %13 : vector<1x128xf32>
    %16 = math.exp %15 : vector<1x128xf32>
    %cst_11 = arith.constant 1.000000e+00 : f32
    %17 = vector.broadcast %cst_11 : f32 to vector<1x128xf32>
    %18 = arith.addf %17, %16 : vector<1x128xf32>
    %cst_12 = arith.constant 1.000000e+00 : f32
    %19 = vector.broadcast %cst_12 : f32 to vector<1x128xf32>
    %20 = arith.divf %19, %18 : vector<1x128xf32>
    %c0_13 = arith.constant 0 : index
    %c0_14 = arith.constant 0 : index
    %c0_15 = arith.constant 0 : index
    %21 = vector.load %arg2[%c0_13, %c0_14, %c0_15] : memref<1x256x128xbf16, #tpu.memory_space<vmem>>, vector<1x256x128xbf16>
    %22 = vector.shape_cast %21 : vector<1x256x128xbf16> to vector<256x128xbf16>
    %23 = arith.extf %22 : vector<256x128xbf16> to vector<256x128xf32>
    %24 = vector.broadcast %20 : vector<1x128xf32> to vector<256x128xf32>
    %25 = arith.mulf %23, %24 : vector<256x128xf32>
    %26 = tpu.transpose %25, [1, 0] : vector<256x128xf32> -> vector<128x256xf32>
    %27 = vector.extract_strided_slice %26 {offsets = [0, 0], sizes = [16, 256], strides = [1, 1]} : vector<128x256xf32> to vector<16x256xf32>
    %c0_16 = arith.constant 0 : index
    %c0_17 = arith.constant 0 : index
    %c0_18 = arith.constant 0 : index
    %28 = vector.load %arg6[%c0_16, %c0_17, %c0_18] : memref<1x16x256xf32, #tpu.memory_space<vmem>>, vector<1x16x256xf32>
    %29 = vector.shape_cast %28 : vector<1x16x256xf32> to vector<16x256xf32>
    %30 = vector.shape_cast %27 : vector<16x256xf32> to vector<1x16x256xf32>
    tpu.vector_store %arg6[%c0_16, %c0_17, %c0_18], %30 {strides = array<i32>} : memref<1x16x256xf32, #tpu.memory_space<vmem>>, vector<1x16x256xf32>,
    return
  }
  func.func @transform_0(%arg0: i32, %arg1: i32) -> (i32, i32, i32) {
    %c0_i32 = arith.constant 0 : i32
    %c0_i32_0 = arith.constant 0 : i32
    return %arg0, %arg1, %c0_i32 : i32, i32, i32
  }
  func.func @transform_1(%arg0: i32, %arg1: i32) -> (i32, i32, i32) {
    %c0_i32 = arith.constant 0 : i32
    %c0_i32_0 = arith.constant 0 : i32
    %c0_i32_1 = arith.constant 0 : i32
    return %arg0, %c0_i32, %c0_i32_0 : i32, i32, i32
  }
  func.func @transform_2(%arg0: i32, %arg1: i32) -> (i32, i32) {
    %c0_i32 = arith.constant 0 : i32
    %c0_i32_0 = arith.constant 0 : i32
    %c0_i32_1 = arith.constant 0 : i32
    return %c0_i32, %c0_i32_0 : i32, i32
  }
  func.func @transform_3(%arg0: i32, %arg1: i32) -> (i32, i32) {
    %c0_i32 = arith.constant 0 : i32
    %c0_i32_0 = arith.constant 0 : i32
    %c0_i32_1 = arith.constant 0 : i32
    return %c0_i32, %c0_i32_0 : i32, i32
  }
  func.func @transform_4(%arg0: i32, %arg1: i32) -> (i32, i32, i32) {
    %c0_i32 = arith.constant 0 : i32
    %c0_i32_0 = arith.constant 0 : i32
    return %arg0, %c0_i32, %arg1 : i32, i32, i32
  }
}

</mosaic_0001>

<llo_original>
// kernel: _lambda_.4
$region0: #{_lambda_.4}
  #allocation0 [shape = 'u32[]', space=smem, size = 0x4, offset = 0x4, fixed_abs, tag = 'smem constant byte address 0x4 - core index']
  #allocation1 [shape = 'u32[144,128]{1,0:T(1,128)}', space=vmem, size = 0x12000, scoped, tag = 'internal scratch']
  %s0 = inlined_call_operand.vmem [shape: bf16[2,256,128], index: 0, kind: input, shape index: {}]
  %s1 = inlined_call_operand.vmem [shape: bf16[128,128], index: 1, kind: input, shape index: {}]
  %s2 = inlined_call_operand.vmem [shape: f32[1,128], index: 2, kind: input, shape index: {}]
  %s3 = inlined_call_operand.vmem [shape: f32[1,128], index: 3, kind: input, shape index: {}]
  %s4 = inlined_call_operand.vmem [shape: bf16[2,256,128], index: 4, kind: output, shape index: {}]
  %s5 = sld [smem:[#allocation0]]
  $region49: #{_lambda_.4} parent=0
    _
  %s7 = ssub.s32 1, %s5
  %s8 = scalar_select 0, %s7, %s5
  loop: start=0, step=1, limit=4
  $region2: #{_lambda_.4} parent=0 // loop_pre_header
    _
  $region3: #{_lambda_.4} parent=0 // loop_header
    %s10 = sphi 0, %s14
    %p11 = scmp.ge.s32.totalorder %s10, 4
    %s17 = sphi 0, %s29
    %s18 = sphi 0, %s25
    %s19 = sphi 0, %s17
    %s20 = sphi 0, %s18
    %s21 = sphi 0, %s19
    %s22 = sphi 0, %s20
    %s34 = sphi 0, %s36
    %s37 = sphi 0, %s34
    %s38 = sphi 0, %s37
    %s54 = sphi 0, %s38
    %s58 = sphi 0, %s58
    %s60 = sphi 0, %s58
    %s61 = sphi 0, %s60
    %s75 = sphi 0, %s61
    %s79 = sphi 0, %s79
    %s81 = sphi 0, %s79
    %s82 = sphi 0, %s81
    %s96 = sphi 0, %s82
    %s100 = sphi 0, %s100
    %s102 = sphi 0, %s100
    %s103 = sphi 0, %s102
    %s117 = sphi 0, %s103
    %s125 = sphi 0, %s127
    %s128 = sphi 0, %s125
    %s129 = sphi 0, %s128
    %s145 = sphi 0, %s129
  $region4: #{_lambda_.4} parent=0 // loop_header_branch
    %13 = sbr.rel (%p11) target = $region8
  $region5: #{_lambda_.4} parent=0 // loop_body
    %s15 = ssub.s32 %s10, 1
    %s16 = ssub.s32 %s10, 2
    %s23 = sadd.s32 1, %s18
    %p24 = scmp.ge.s32.totalorder %s23, 1
    %s25 = scalar_select %p24, 0, %s23
    %s26 = sadd.s32 1, %s17
    %s27 = scalar_select %p24, %s26, %s17
    %p28 = scmp.ge.s32.totalorder %s27, 2
    %s29 = scalar_select %p28, 0, %s27
    %s30 = ssub.s32 %s17, %s29
    %s31 = ssub.s32 %s18, %s25
    %s32 = sor.u32 %s30, %s31
    %p33 = scmp.eq.s32.totalorder %s32, 0
    %s35 = sadd.s32 %s34, 1
    %s36 = scalar_select %p33, %s34, %s35
    %p39 = pneg %p33
    %p40 = scmp.eq.s32.totalorder %s10, 1
    %p41 = por %p39, %p40
    %p42 = scmp.ne.s32.totalorder %s34, %s37
    %p43 = scmp.eq.s32.totalorder %s10, 0
    %p44 = por %p42, %p43
    %p45 = scmp.ne.s32.totalorder %s34, %s37
    %p46 = scmp.eq.s32.totalorder %s15, 1
    %p47 = por %p45, %p46
    %p48 = scmp.ne.s32.totalorder %s37, %s38
    %p49 = scmp.eq.s32.totalorder %s15, 0
    %p50 = por %p48, %p49
    %p51 = scmp.ne.s32.totalorder %s37, %s38
    %p52 = scmp.eq.s32.totalorder %s16, 1
    %p53 = por %p51, %p52
    %p55 = scmp.ne.s32.totalorder %s38, %s54
    %p56 = scmp.eq.s32.totalorder %s16, 0
    %p57 = por %p55, %p56
    %s59 = sadd.s32 %s58, 1
    %p62 = scmp.eq.s32.totalorder %s10, 1
    %p63 = scmp.ne.s32.totalorder %s58, %s60
    %p64 = scmp.eq.s32.totalorder %s10, 0
    %p65 = por %p63, %p64
    %p66 = scmp.ne.s32.totalorder %s58, %s60
    %p67 = scmp.eq.s32.totalorder %s15, 1
    %p68 = por %p66, %p67
    %p69 = scmp.ne.s32.totalorder %s60, %s61
    %p70 = scmp.eq.s32.totalorder %s15, 0
    %p71 = por %p69, %p70
    %p72 = scmp.ne.s32.totalorder %s60, %s61
    %p73 = scmp.eq.s32.totalorder %s16, 1
    %p74 = por %p72, %p73
    %p76 = scmp.ne.s32.totalorder %s61, %s75
    %p77 = scmp.eq.s32.totalorder %s16, 0
    %p78 = por %p76, %p77
    %s80 = sadd.s32 %s79, 1
    %p83 = scmp.eq.s32.totalorder %s10, 1
    %p84 = scmp.ne.s32.totalorder %s79, %s81
    %p85 = scmp.eq.s32.totalorder %s10, 0
    %p86 = por %p84, %p85
    %p87 = scmp.ne.s32.totalorder %s79, %s81
    %p88 = scmp.eq.s32.totalorder %s15, 1
    %p89 = por %p87, %p88
    %p90 = scmp.ne.s32.totalorder %s81, %s82
    %p91 = scmp.eq.s32.totalorder %s15, 0
    %p92 = por %p90, %p91
    %p93 = scmp.ne.s32.totalorder %s81, %s82
    %p94 = scmp.eq.s32.totalorder %s16, 1
    %p95 = por %p93, %p94
    %p97 = scmp.ne.s32.totalorder %s82, %s96
    %p98 = scmp.eq.s32.totalorder %s16, 0
    %p99 = por %p97, %p98
    %s101 = sadd.s32 %s100, 1
    %p104 = scmp.eq.s32.totalorder %s10, 1
    %p105 = scmp.ne.s32.totalorder %s100, %s102
    %p106 = scmp.eq.s32.totalorder %s10, 0
    %p107 = por %p105, %p106
    %p108 = scmp.ne.s32.totalorder %s100, %s102
    %p109 = scmp.eq.s32.totalorder %s15, 1
    %p110 = por %p108, %p109
    %p111 = scmp.ne.s32.totalorder %s102, %s103
    %p112 = scmp.eq.s32.totalorder %s15, 0
    %p113 = por %p111, %p112
    %p114 = scmp.ne.s32.totalorder %s102, %s103
    %p115 = scmp.eq.s32.totalorder %s16, 1
    %p116 = por %p114, %p115
    %p118 = scmp.ne.s32.totalorder %s103, %s117
    %p119 = scmp.eq.s32.totalorder %s16, 0
    %p120 = por %p118, %p119
    %s121 = ssub.s32 %s17, %s29
    %s122 = ssub.s32 %s18, %s25
    %s123 = sor.u32 %s121, %s122
    %p124 = scmp.eq.s32.totalorder %s123, 0
    %s126 = sadd.s32 %s125, 1
    %s127 = scalar_select %p124, %s125, %s126
    %p130 = pneg %p124
    %p131 = scmp.eq.s32.totalorder %s10, 1
    %p132 = por %p130, %p131
    %p133 = scmp.ne.s32.totalorder %s125, %s128
    %p134 = scmp.eq.s32.totalorder %s10, 0
    %p135 = por %p133, %p134
    %p136 = scmp.ne.s32.totalorder %s125, %s128
    %p137 = scmp.eq.s32.totalorder %s15, 1
    %p138 = por %p136, %p137
    %p139 = scmp.ne.s32.totalorder %s128, %s129
    %p140 = scmp.eq.s32.totalorder %s15, 0
    %p141 = por %p139, %p140
    %p142 = scmp.ne.s32.totalorder %s128, %s129
    %p143 = scmp.eq.s32.totalorder %s16, 1
    %p144 = por %p142, %p143
    %p146 = scmp.ne.s32.totalorder %s129, %s145
    %p147 = scmp.eq.s32.totalorder %s16, 0
    %p148 = por %p146, %p147
    %p149 = scmp.le.s32.totalorder 1, %s10
    %p150 = scmp.lt.s32.totalorder %s10, 3
    %p151 = pnand %p149, %p150
    %p152 = pneg %p151
    // Predicated region
    $region9: #{_lambda_.4} parent=5 // pred_check
      _
    $region10: #{_lambda_.4} parent=5 // pred_check_branch
      %154 = sbr.rel (%p151) target = $region12
    $region11: #{_lambda_.4} parent=5 // pred_region
      %s155 = ssub.s32 %s10, 1
      // Predicated region
      $region13: #{_lambda_.4} parent=11 // pred_check
        %p156 = pneg %p71
      $region14: #{_lambda_.4} parent=11 // pred_check_branch
        %158 = sbr.rel (%p156) target = $region16
      $region15: #{_lambda_.4} parent=11 // pred_region
        _
      $region16: #{_lambda_.4} parent=11 // pred_fallthru
        _
      // Predicated region
      $region17: #{_lambda_.4} parent=11 // pred_check
        %p159 = pneg %p92
      $region18: #{_lambda_.4} parent=11 // pred_check_branch
        %161 = sbr.rel (%p159) target = $region20
      $region19: #{_lambda_.4} parent=11 // pred_region
        _
      $region20: #{_lambda_.4} parent=11 // pred_fallthru
        _
      // Predicated region
      $region21: #{_lambda_.4} parent=11 // pred_check
        %p162 = pneg %p113
      $region22: #{_lambda_.4} parent=11 // pred_check_branch
        %164 = sbr.rel (%p162) target = $region24
      $region23: #{_lambda_.4} parent=11 // pred_region
        _
      $region24: #{_lambda_.4} parent=11 // pred_fallthru
        _
    $region12: #{_lambda_.4} parent=5 // pred_fallthru
      _
    %p165 = scmp.lt.s32.totalorder %s10, 2
    // Predicated region
    $region25: #{_lambda_.4} parent=5 // pred_check
      %p166 = pneg %p165
    $region26: #{_lambda_.4} parent=5 // pred_check_branch
      %168 = sbr.rel (%p166) target = $region28
    $region27: #{_lambda_.4} parent=5 // pred_region
      // Predicated region
      $region29: #{_lambda_.4} parent=27 // pred_check
        %p169 = pneg %p44
      $region30: #{_lambda_.4} parent=27 // pred_check_branch
        %171 = sbr.rel (%p169) target = $region32
      $region31: #{_lambda_.4} parent=27 // pred_region
        %s172 = smul.u32 32, %s18
        %p173 = scmp.lt.s32.totalorder %s17, 1
        %s174 = scalar_select %p173, %s17, 1
        %p175 = scmp.lt.s32.totalorder %s172, 31
        %s176 = scalar_select %p175, %s172, 31
        %s177 = smul.addr %s174, 32
        %s178 = sadd.s32 %s176, %s177
        %s179 = smul.addr %s178, 4
        %s180 = scalar_lea.vmem %s0, %s179
        %s181 = smul.u32 32, %s18
      $region32: #{_lambda_.4} parent=27 // pred_fallthru
        _
    $region28: #{_lambda_.4} parent=5 // pred_fallthru
      _
    %p182 = scmp.le.s32.totalorder 1, %s10
    %p183 = scmp.lt.s32.totalorder %s10, 3
    %p184 = pnand %p182, %p183
    %p185 = pneg %p184
    // Predicated region
    $region33: #{_lambda_.4} parent=5 // pred_check
      _
    $region34: #{_lambda_.4} parent=5 // pred_check_branch
      %187 = sbr.rel (%p184) target = $region36
    $region35: #{_lambda_.4} parent=5 // pred_region
      %s188 = ssub.s32 %s10, 1
      %s189 = smul.u32 32, %s20
      %p190 = scmp.lt.s32.totalorder %s19, 1
      %s191 = scalar_select %p190, %s19, 1
      %p192 = scmp.lt.s32.totalorder %s189, 31
      %s193 = scalar_select %p192, %s189, 31
      %s194 = smul.addr %s191, 32
      %s195 = sadd.s32 %s193, %s194
      %s196 = smul.addr %s195, 4
      %s197 = scalar_lea.vmem %s0, %s196
      %p198 = pneg %p50
      %p199 = pneg %p47
      %p200 = pneg %p71
      %p201 = pneg %p68
      %p202 = pneg %p92
      %p203 = pneg %p89
      %p204 = pneg %p113
      %p205 = pneg %p110
      %p206 = pneg %p141
      %p207 = pneg %p138
      %s208 = smul.u32 32, %s20
      %p209 = scmp.lt.s32.totalorder %s19, 1
      %s210 = scalar_select %p209, %s19, 1
      %p211 = scmp.lt.s32.totalorder %s208, 31
      %s212 = scalar_select %p211, %s208, 31
      %s213 = smul.addr %s210, 32
      %s214 = sadd.s32 %s212, %s213
      %s215 = smul.addr %s214, 4
      %s216 = scalar_lea.vmem %s4, %s215
      %s217 = smul.u32 32, %s20
      %p218 = scmp.lt.s32.totalorder %s19, 1
      %s219 = scalar_select %p218, %s19, 1
      %p220 = scmp.lt.s32.totalorder %s217, 31
      %s221 = scalar_select %p220, %s217, 31
      %s222 = smul.addr %s219, 32
      %s223 = sadd.s32 %s221, %s222
      %s224 = smul.addr %s223, 4
      %s225 = scalar_lea.vmem %s0, %s224
      %s226 = smul.u32 32, %s20
      %s227 = smul.u32 32, %s20
      %p228 = scmp.lt.s32.totalorder %s19, 1
      %s229 = scalar_select %p228, %s19, 1
      %p230 = scmp.lt.s32.totalorder %s227, 31
      %s231 = scalar_select %p230, %s227, 31
      %s232 = smul.addr %s229, 32
      %s233 = sadd.s32 %s231, %s232
      %s234 = smul.addr %s233, 4
      %s235 = scalar_lea.vmem %s4, %s234
      %s236 = smul.u32 32, %s20
      %v238 = vld [vmem:[%s225] sm:$0xf]
      %v239 = vld [vmem:[%s225 + $0x4] sm:$0xf]
      %v240 = vld [vmem:[%s225 + $0x8] sm:$0xf]
      %v241 = vld [vmem:[%s225 + $0xc] sm:$0xf]
      %v242 = vld [vmem:[%s225 + $0x10] sm:$0xf]
      %v243 = vld [vmem:[%s225 + $0x14] sm:$0xf]
      %v244 = vld [vmem:[%s225 + $0x18] sm:$0xf]
      %v245 = vld [vmem:[%s225 + $0x1c] sm:$0xf]
      %v246 = vld [vmem:[%s225 + $0x20] sm:$0xf]
      %v247 = vld [vmem:[%s225 + $0x24] sm:$0xf]
      %v248 = vld [vmem:[%s225 + $0x28] sm:$0xf]
      %v249 = vld [vmem:[%s225 + $0x2c] sm:$0xf]
      %v250 = vld [vmem:[%s225 + $0x30] sm:$0xf]
      %v251 = vld [vmem:[%s225 + $0x34] sm:$0xf]
      %v252 = vld [vmem:[%s225 + $0x38] sm:$0xf]
      %v253 = vld [vmem:[%s225 + $0x3c] sm:$0xf]
      %v254 = vld [vmem:[%s225 + $0x40] sm:$0xf]
      %v255 = vld [vmem:[%s225 + $0x44] sm:$0xf]
      %v256 = vld [vmem:[%s225 + $0x48] sm:$0xf]
      %v257 = vld [vmem:[%s225 + $0x4c] sm:$0xf]
      %v258 = vld [vmem:[%s225 + $0x50] sm:$0xf]
      %v259 = vld [vmem:[%s225 + $0x54] sm:$0xf]
      %v260 = vld [vmem:[%s225 + $0x58] sm:$0xf]
      %v261 = vld [vmem:[%s225 + $0x5c] sm:$0xf]
      %v262 = vld [vmem:[%s225 + $0x60] sm:$0xf]
      %v263 = vld [vmem:[%s225 + $0x64] sm:$0xf]
      %v264 = vld [vmem:[%s225 + $0x68] sm:$0xf]
      %v265 = vld [vmem:[%s225 + $0x6c] sm:$0xf]
      %v266 = vld [vmem:[%s225 + $0x70] sm:$0xf]
      %v267 = vld [vmem:[%s225 + $0x74] sm:$0xf]
      %v268 = vld [vmem:[%s225 + $0x78] sm:$0xf]
      %v269 = vld [vmem:[%s225 + $0x7c] sm:$0xf]
      %v270 = vld [vmem:[%s1] sm:$0xf]
      %v271 = vld [vmem:[%s1 + $0x4] sm:$0xf]
      %v272 = vld [vmem:[%s1 + $0x8] sm:$0xf]
      %v273 = vld [vmem:[%s1 + $0xc] sm:$0xf]
      %v274 = vld [vmem:[%s1 + $0x10] sm:$0xf]
      %v275 = vld [vmem:[%s1 + $0x14] sm:$0xf]
      %v276 = vld [vmem:[%s1 + $0x18] sm:$0xf]
      %v277 = vld [vmem:[%s1 + $0x1c] sm:$0xf]
      %v278 = vld [vmem:[%s1 + $0x20] sm:$0xf]
      %v279 = vld [vmem:[%s1 + $0x24] sm:$0xf]
      %v280 = vld [vmem:[%s1 + $0x28] sm:$0xf]
      %v281 = vld [vmem:[%s1 + $0x2c] sm:$0xf]
      %v282 = vld [vmem:[%s1 + $0x30] sm:$0xf]
      %v283 = vld [vmem:[%s1 + $0x34] sm:$0xf]
      %v284 = vld [vmem:[%s1 + $0x38] sm:$0xf]
      %v285 = vld [vmem:[%s1 + $0x3c] sm:$0xf]
      %v318 = vunpack.c.l.b16 %v238
      %v319 = vunpack.c.l.b16 %v239
      %v320 = vunpack.c.l.b16 %v240
      %v321 = vunpack.c.l.b16 %v241
      %v322 = vunpack.c.l.b16 %v242
      %v323 = vunpack.c.l.b16 %v243
      %v324 = vunpack.c.l.b16 %v244
      %v325 = vunpack.c.l.b16 %v245
      %v326 = vunpack.c.l.b16 %v246
      %v327 = vunpack.c.l.b16 %v247
      %v328 = vunpack.c.l.b16 %v248
      %v329 = vunpack.c.l.b16 %v249
      %v330 = vunpack.c.l.b16 %v250
      %v331 = vunpack.c.l.b16 %v251
      %v332 = vunpack.c.l.b16 %v252
      %v333 = vunpack.c.l.b16 %v253
      %v334 = vunpack.c.l.b16 %v254
      %v335 = vunpack.c.l.b16 %v255
      %v336 = vunpack.c.l.b16 %v256
      %v337 = vunpack.c.l.b16 %v257
      %v338 = vunpack.c.l.b16 %v258
      %v339 = vunpack.c.l.b16 %v259
      %v340 = vunpack.c.l.b16 %v260
      %v341 = vunpack.c.l.b16 %v261
      %v342 = vunpack.c.l.b16 %v262
      %v343 = vunpack.c.l.b16 %v263
      %v344 = vunpack.c.l.b16 %v264
      %v345 = vunpack.c.l.b16 %v265
      %v346 = vunpack.c.l.b16 %v266
      %v347 = vunpack.c.l.b16 %v267
      %v348 = vunpack.c.l.b16 %v268
      %v349 = vunpack.c.l.b16 %v269
      %v350 = vpack.c.b16 %v319, %v318
      %v351 = vpack.c.b16 %v321, %v320
      %v352 = vpack.c.b16 %v323, %v322
      %v353 = vpack.c.b16 %v325, %v324
      %v354 = vpack.c.b16 %v327, %v326
      %v355 = vpack.c.b16 %v329, %v328
      %v356 = vpack.c.b16 %v331, %v330
      %v357 = vpack.c.b16 %v333, %v332
      %v358 = vpack.c.b16 %v335, %v334
      %v359 = vpack.c.b16 %v337, %v336
      %v360 = vpack.c.b16 %v339, %v338
      %v361 = vpack.c.b16 %v341, %v340
      %v362 = vpack.c.b16 %v343, %v342
      %v363 = vpack.c.b16 %v345, %v344
      %v364 = vpack.c.b16 %v347, %v346
      %v365 = vpack.c.b16 %v349, %v348
      %v398 = vunpack.c.l.b16 %v270
      %v399 = vunpack.c.l.b16 %v271
      %v400 = vunpack.c.l.b16 %v272
      %v401 = vunpack.c.l.b16 %v273
      %v402 = vunpack.c.l.b16 %v274
      %v403 = vunpack.c.l.b16 %v275
      %v404 = vunpack.c.l.b16 %v276
      %v405 = vunpack.c.l.b16 %v277
      %v406 = vunpack.c.l.b16 %v278
      %v407 = vunpack.c.l.b16 %v279
      %v408 = vunpack.c.l.b16 %v280
      %v409 = vunpack.c.l.b16 %v281
      %v410 = vunpack.c.l.b16 %v282
      %v411 = vunpack.c.l.b16 %v283
      %v412 = vunpack.c.l.b16 %v284
      %v413 = vunpack.c.l.b16 %v285
      %v414 = vpack.c.b16 %v399, %v398
      %v415 = vpack.c.b16 %v401, %v400
      %v416 = vpack.c.b16 %v403, %v402
      %v417 = vpack.c.b16 %v405, %v404
      %v418 = vpack.c.b16 %v407, %v406
      %v419 = vpack.c.b16 %v409, %v408
      %v420 = vpack.c.b16 %v411, %v410
      %v421 = vpack.c.b16 %v413, %v412
      %430 = vmatprep.subr.bf16.mxu0 0
      %431 = vmatpush1.bf16.msra.mxu0 %v414
      %432 = vmatprep.subr.bf16.mxu0 0
      %433 = vmatpush1.bf16.msra.mxu0 %v415
      %434 = vmatprep.subr.bf16.mxu0 0
      %435 = vmatpush1.bf16.msra.mxu0 %v416
      %436 = vmatprep.subr.bf16.mxu0 0
      %437 = vmatpush1.bf16.msra.mxu0 %v417
      %438 = vmatprep.subr.bf16.mxu0 0
      %439 = vmatpush1.bf16.msra.mxu0 %v418
      %440 = vmatprep.subr.bf16.mxu0 0
      %441 = vmatpush1.bf16.msra.mxu0 %v419
      %442 = vmatprep.subr.bf16.mxu0 0
      %443 = vmatpush1.bf16.msra.mxu0 %v420
      %444 = vmatprep.subr.bf16.mxu0 0
      %445 = vmatpush1.bf16.msra.mxu0 %v421
      %446 = vmatprep.subr.bf16.mxu0 0
      %447 = vmatpush1.bf16.msra.mxu0 0
      %448 = vmatprep.subr.bf16.mxu0 0
      %449 = vmatpush1.bf16.msra.mxu0 0
      %450 = vmatprep.subr.bf16.mxu0 0
      %451 = vmatpush1.bf16.msra.mxu0 0
      %452 = vmatprep.subr.bf16.mxu0 0
      %453 = vmatpush1.bf16.msra.mxu0 0
      %454 = vmatprep.subr.bf16.mxu0 0
      %455 = vmatpush1.bf16.msra.mxu0 0
      %456 = vmatprep.subr.bf16.mxu0 0
      %457 = vmatpush1.bf16.msra.mxu0 0
      %458 = vmatprep.subr.bf16.mxu0 0
      %459 = vmatpush1.bf16.msra.mxu0 0
      %460 = vmatprep.subr.bf16.mxu0 0
      %461 = vmatpush1.bf16.msra.mxu0 0
      %462 = vmatprep.mubr.bf16.mxu0 0
      %463 = vmatmul.mubr.bf16.gmra.mrb[0].mxu0 %v350
      %v464 = vpop.f32.mrb[0].mxu0
      %v465 = vadd.f32 0.0, %v464
      %v466 = vpop.f32.mrb[0].mxu0
      %v467 = vpop.f32.mrb[0].mxu0
      %v468 = vadd.f32 0.0, %v467
      %v469 = vpop.f32.mrb[0].mxu0
      %470 = vmatprep.mubr.bf16.mxu0 0
      %471 = vmatmul.mubr.bf16.gmra.mrb[0].mxu0 %v351
      %v472 = vpop.f32.mrb[0].mxu0
      %v473 = vadd.f32 0.0, %v472
      %v474 = vpop.f32.mrb[0].mxu0
      %v475 = vpop.f32.mrb[0].mxu0
      %v476 = vadd.f32 0.0, %v475
      %v477 = vpop.f32.mrb[0].mxu0
      %478 = vmatprep.mubr.bf16.mxu0 0
      %479 = vmatmul.mubr.bf16.gmra.mrb[0].mxu0 %v352
      %v480 = vpop.f32.mrb[0].mxu0
      %v481 = vadd.f32 0.0, %v480
      %v482 = vpop.f32.mrb[0].mxu0
      %v483 = vpop.f32.mrb[0].mxu0
      %v484 = vadd.f32 0.0, %v483
      %v485 = vpop.f32.mrb[0].mxu0
      %486 = vmatprep.mubr.bf16.mxu0 0
      %487 = vmatmul.mubr.bf16.gmra.mrb[0].mxu0 %v353
      %v488 = vpop.f32.mrb[0].mxu0
      %v489 = vadd.f32 0.0, %v488
      %v490 = vpop.f32.mrb[0].mxu0
      %v491 = vpop.f32.mrb[0].mxu0
      %v492 = vadd.f32 0.0, %v491
      %v493 = vpop.f32.mrb[0].mxu0
      %494 = vmatprep.mubr.bf16.mxu0 0
      %495 = vmatmul.mubr.bf16.gmra.mrb[0].mxu0 %v354
      %v496 = vpop.f32.mrb[0].mxu0
      %v497 = vadd.f32 0.0, %v496
      %v498 = vpop.f32.mrb[0].mxu0
      %v499 = vpop.f32.mrb[0].mxu0
      %v500 = vadd.f32 0.0, %v499
      %v501 = vpop.f32.mrb[0].mxu0
      %502 = vmatprep.mubr.bf16.mxu0 0
      %503 = vmatmul.mubr.bf16.gmra.mrb[0].mxu0 %v355
      %v504 = vpop.f32.mrb[0].mxu0
      %v505 = vadd.f32 0.0, %v504
      %v506 = vpop.f32.mrb[0].mxu0
      %v507 = vpop.f32.mrb[0].mxu0
      %v508 = vadd.f32 0.0, %v507
      %v509 = vpop.f32.mrb[0].mxu0
      %510 = vmatprep.mubr.bf16.mxu0 0
      %511 = vmatmul.mubr.bf16.gmra.mrb[0].mxu0 %v356
      %v512 = vpop.f32.mrb[0].mxu0
      %v513 = vadd.f32 0.0, %v512
      %v514 = vpop.f32.mrb[0].mxu0
      %v515 = vpop.f32.mrb[0].mxu0
      %v516 = vadd.f32 0.0, %v515
      %v517 = vpop.f32.mrb[0].mxu0
      %518 = vmatprep.mubr.bf16.mxu0 0
      %519 = vmatmul.mubr.bf16.gmra.mrb[0].mxu0 %v357
      %v520 = vpop.f32.mrb[0].mxu0
      %v521 = vadd.f32 0.0, %v520
      %v522 = vpop.f32.mrb[0].mxu0
      %v523 = vpop.f32.mrb[0].mxu0
      %v524 = vadd.f32 0.0, %v523
      %v525 = vpop.f32.mrb[0].mxu0
      %526 = vmatprep.mubr.bf16.mxu0 0
      %527 = vmatmul.mubr.bf16.gmra.mrb[0].mxu0 %v358
      %v528 = vpop.f32.mrb[0].mxu0
      %v529 = vadd.f32 0.0, %v528
      %v530 = vpop.f32.mrb[0].mxu0
      %v531 = vpop.f32.mrb[0].mxu0
      %v532 = vadd.f32 0.0, %v531
      %v533 = vpop.f32.mrb[0].mxu0
      %534 = vmatprep.mubr.bf16.mxu0 0
      %535 = vmatmul.mubr.bf16.gmra.mrb[0].mxu0 %v359
      %v536 = vpop.f32.mrb[0].mxu0
      %v537 = vadd.f32 0.0, %v536
      %v538 = vpop.f32.mrb[0].mxu0
      %v539 = vpop.f32.mrb[0].mxu0
      %v540 = vadd.f32 0.0, %v539
      %v541 = vpop.f32.mrb[0].mxu0
      %542 = vmatprep.mubr.bf16.mxu0 0
      %543 = vmatmul.mubr.bf16.gmra.mrb[0].mxu0 %v360
      %v544 = vpop.f32.mrb[0].mxu0
      %v545 = vadd.f32 0.0, %v544
      %v546 = vpop.f32.mrb[0].mxu0
      %v547 = vpop.f32.mrb[0].mxu0
      %v548 = vadd.f32 0.0, %v547
      %v549 = vpop.f32.mrb[0].mxu0
      %550 = vmatprep.mubr.bf16.mxu0 0
      %551 = vmatmul.mubr.bf16.gmra.mrb[0].mxu0 %v361
      %v552 = vpop.f32.mrb[0].mxu0
      %v553 = vadd.f32 0.0, %v552
      %v554 = vpop.f32.mrb[0].mxu0
      %v555 = vpop.f32.mrb[0].mxu0
      %v556 = vadd.f32 0.0, %v555
      %v557 = vpop.f32.mrb[0].mxu0
      %558 = vmatprep.mubr.bf16.mxu0 0
      %559 = vmatmul.mubr.bf16.gmra.mrb[0].mxu0 %v362
      %v560 = vpop.f32.mrb[0].mxu0
      %v561 = vadd.f32 0.0, %v560
      %v562 = vpop.f32.mrb[0].mxu0
      %v563 = vpop.f32.mrb[0].mxu0
      %v564 = vadd.f32 0.0, %v563
      %v565 = vpop.f32.mrb[0].mxu0
      %566 = vmatprep.mubr.bf16.mxu0 0
      %567 = vmatmul.mubr.bf16.gmra.mrb[0].mxu0 %v363
      %v568 = vpop.f32.mrb[0].mxu0
      %v569 = vadd.f32 0.0, %v568
      %v570 = vpop.f32.mrb[0].mxu0
      %v571 = vpop.f32.mrb[0].mxu0
      %v572 = vadd.f32 0.0, %v571
      %v573 = vpop.f32.mrb[0].mxu0
      %574 = vmatprep.mubr.bf16.mxu0 0
      %575 = vmatmul.mubr.bf16.gmra.mrb[0].mxu0 %v364
      %v576 = vpop.f32.mrb[0].mxu0
      %v577 = vadd.f32 0.0, %v576
      %v578 = vpop.f32.mrb[0].mxu0
      %v579 = vpop.f32.mrb[0].mxu0
      %v580 = vadd.f32 0.0, %v579
      %v581 = vpop.f32.mrb[0].mxu0
      %582 = vmatprep.mubr.bf16.mxu0 0
      %583 = vmatmul.mubr.bf16.gmra.mrb[0].mxu0 %v365
      %v584 = vpop.f32.mrb[0].mxu0
      %v585 = vadd.f32 0.0, %v584
      %v586 = vpop.f32.mrb[0].mxu0
      %v587 = vpop.f32.mrb[0].mxu0
      %v588 = vadd.f32 0.0, %v587
      %v589 = vpop.f32.mrb[0].mxu0
      %590 = vdwg.mxu0
      %v591 = vld [vmem:[%s2] sm:$0x1]
      %v593 = vlaneseq
      %v594 = vshrl.u32 %v593, 7
      %v595 = vsub.s32 0, %v594
      %v596 = vrot.slane %v591, %v595
      %v598 = vmul.f32 %v465, %v596
      %v599 = vmul.f32 %v468, %v596
      %v600 = vmul.f32 %v473, %v596
      %v601 = vmul.f32 %v476, %v596
      %v602 = vmul.f32 %v481, %v596
      %v603 = vmul.f32 %v484, %v596
      %v604 = vmul.f32 %v489, %v596
      %v605 = vmul.f32 %v492, %v596
      %v606 = vmul.f32 %v497, %v596
      %v607 = vmul.f32 %v500, %v596
      %v608 = vmul.f32 %v505, %v596
      %v609 = vmul.f32 %v508, %v596
      %v610 = vmul.f32 %v513, %v596
      %v611 = vmul.f32 %v516, %v596
      %v612 = vmul.f32 %v521, %v596
      %v613 = vmul.f32 %v524, %v596
      %v614 = vmul.f32 %v529, %v596
      %v615 = vmul.f32 %v532, %v596
      %v616 = vmul.f32 %v537, %v596
      %v617 = vmul.f32 %v540, %v596
      %v618 = vmul.f32 %v545, %v596
      %v619 = vmul.f32 %v548, %v596
      %v620 = vmul.f32 %v553, %v596
      %v621 = vmul.f32 %v556, %v596
      %v622 = vmul.f32 %v561, %v596
      %v623 = vmul.f32 %v564, %v596
      %v624 = vmul.f32 %v569, %v596
      %v625 = vmul.f32 %v572, %v596
      %v626 = vmul.f32 %v577, %v596
      %v627 = vmul.f32 %v580, %v596
      %v628 = vmul.f32 %v585, %v596
      %v629 = vmul.f32 %v588, %v596
      %v630 = vld [vmem:[%s3] sm:$0x1]
      %v632 = vlaneseq
      %v633 = vshrl.u32 %v632, 7
      %v634 = vsub.s32 0, %v633
      %v635 = vrot.slane %v630, %v634
      %v637 = vadd.f32 %v598, %v635
      %v638 = vadd.f32 %v599, %v635
      %v639 = vadd.f32 %v600, %v635
      %v640 = vadd.f32 %v601, %v635
      %v641 = vadd.f32 %v602, %v635
      %v642 = vadd.f32 %v603, %v635
      %v643 = vadd.f32 %v604, %v635
      %v644 = vadd.f32 %v605, %v635
      %v645 = vadd.f32 %v606, %v635
      %v646 = vadd.f32 %v607, %v635
      %v647 = vadd.f32 %v608, %v635
      %v648 = vadd.f32 %v609, %v635
      %v649 = vadd.f32 %v610, %v635
      %v650 = vadd.f32 %v611, %v635
      %v651 = vadd.f32 %v612, %v635
      %v652 = vadd.f32 %v613, %v635
      %v653 = vadd.f32 %v614, %v635
      %v654 = vadd.f32 %v615, %v635
      %v655 = vadd.f32 %v616, %v635
      %v656 = vadd.f32 %v617, %v635
      %v657 = vadd.f32 %v618, %v635
      %v658 = vadd.f32 %v619, %v635
      %v659 = vadd.f32 %v620, %v635
      %v660 = vadd.f32 %v621, %v635
      %v661 = vadd.f32 %v622, %v635
      %v662 = vadd.f32 %v623, %v635
      %v663 = vadd.f32 %v624, %v635
      %v664 = vadd.f32 %v625, %v635
      %v665 = vadd.f32 %v626, %v635
      %v666 = vadd.f32 %v627, %v635
      %v667 = vadd.f32 %v628, %v635
      %v668 = vadd.f32 %v629, %v635
      %v669 = vmax.f32 %v637, 0.0
      %v670 = vmax.f32 %v638, 0.0
      %v671 = vmax.f32 %v639, 0.0
      %v672 = vmax.f32 %v640, 0.0
      %v673 = vmax.f32 %v641, 0.0
      %v674 = vmax.f32 %v642, 0.0
      %v675 = vmax.f32 %v643, 0.0
      %v676 = vmax.f32 %v644, 0.0
      %v677 = vmax.f32 %v645, 0.0
      %v678 = vmax.f32 %v646, 0.0
      %v679 = vmax.f32 %v647, 0.0
      %v680 = vmax.f32 %v648, 0.0
      %v681 = vmax.f32 %v649, 0.0
      %v682 = vmax.f32 %v650, 0.0
      %v683 = vmax.f32 %v651, 0.0
      %v684 = vmax.f32 %v652, 0.0
      %v685 = vmax.f32 %v653, 0.0
      %v686 = vmax.f32 %v654, 0.0
      %v687 = vmax.f32 %v655, 0.0
      %v688 = vmax.f32 %v656, 0.0
      %v689 = vmax.f32 %v657, 0.0
      %v690 = vmax.f32 %v658, 0.0
      %v691 = vmax.f32 %v659, 0.0
      %v692 = vmax.f32 %v660, 0.0
      %v693 = vmax.f32 %v661, 0.0
      %v694 = vmax.f32 %v662, 0.0
      %v695 = vmax.f32 %v663, 0.0
      %v696 = vmax.f32 %v664, 0.0
      %v697 = vmax.f32 %v665, 0.0
      %v698 = vmax.f32 %v666, 0.0
      %v699 = vmax.f32 %v667, 0.0
      %v700 = vmax.f32 %v668, 0.0
      %v701 = vpack.c.bf16 %v670, %v669
      %v702 = vpack.c.bf16 %v672, %v671
      %v703 = vpack.c.bf16 %v674, %v673
      %v704 = vpack.c.bf16 %v676, %v675
      %v705 = vpack.c.bf16 %v678, %v677
      %v706 = vpack.c.bf16 %v680, %v679
      %v707 = vpack.c.bf16 %v682, %v681
      %v708 = vpack.c.bf16 %v684, %v683
      %v709 = vpack.c.bf16 %v686, %v685
      %v710 = vpack.c.bf16 %v688, %v687
      %v711 = vpack.c.bf16 %v690, %v689
      %v712 = vpack.c.bf16 %v692, %v691
      %v713 = vpack.c.bf16 %v694, %v693
      %v714 = vpack.c.bf16 %v696, %v695
      %v715 = vpack.c.bf16 %v698, %v697
      %v716 = vpack.c.bf16 %v700, %v699
      %v733 = vunpack.c.l.b16 %v701
      %v734 = vunpack.c.h.b16 %v701
      %v735 = vunpack.c.l.b16 %v702
      %v736 = vunpack.c.h.b16 %v702
      %v737 = vunpack.c.l.b16 %v703
      %v738 = vunpack.c.h.b16 %v703
      %v739 = vunpack.c.l.b16 %v704
      %v740 = vunpack.c.h.b16 %v704
      %v741 = vunpack.c.l.b16 %v705
      %v742 = vunpack.c.h.b16 %v705
      %v743 = vunpack.c.l.b16 %v706
      %v744 = vunpack.c.h.b16 %v706
      %v745 = vunpack.c.l.b16 %v707
      %v746 = vunpack.c.h.b16 %v707
      %v747 = vunpack.c.l.b16 %v708
      %v748 = vunpack.c.h.b16 %v708
      %v749 = vunpack.c.l.b16 %v709
      %v750 = vunpack.c.h.b16 %v709
      %v751 = vunpack.c.l.b16 %v710
      %v752 = vunpack.c.h.b16 %v710
      %v753 = vunpack.c.l.b16 %v711
      %v754 = vunpack.c.h.b16 %v711
      %v755 = vunpack.c.l.b16 %v712
      %v756 = vunpack.c.h.b16 %v712
      %v757 = vunpack.c.l.b16 %v713
      %v758 = vunpack.c.h.b16 %v713
      %v759 = vunpack.c.l.b16 %v714
      %v760 = vunpack.c.h.b16 %v714
      %v761 = vunpack.c.l.b16 %v715
      %v762 = vunpack.c.h.b16 %v715
      %v763 = vunpack.c.l.b16 %v716
      %v764 = vunpack.c.h.b16 %v716
      %v765 = vpack.c.b16 %v733, %v733
      %v766 = vpack.c.b16 %v734, %v734
      %v767 = vpack.c.b16 %v735, %v735
      %v768 = vpack.c.b16 %v736, %v736
      %v769 = vpack.c.b16 %v737, %v737
      %v770 = vpack.c.b16 %v738, %v738
      %v771 = vpack.c.b16 %v739, %v739
      %v772 = vpack.c.b16 %v740, %v740
      %v773 = vpack.c.b16 %v741, %v741
      %v774 = vpack.c.b16 %v742, %v742
      %v775 = vpack.c.b16 %v743, %v743
      %v776 = vpack.c.b16 %v744, %v744
      %v777 = vpack.c.b16 %v745, %v745
      %v778 = vpack.c.b16 %v746, %v746
      %v779 = vpack.c.b16 %v747, %v747
      %v780 = vpack.c.b16 %v748, %v748
      %v781 = vpack.c.b16 %v749, %v749
      %v782 = vpack.c.b16 %v750, %v750
      %v783 = vpack.c.b16 %v751, %v751
      %v784 = vpack.c.b16 %v752, %v752
      %v785 = vpack.c.b16 %v753, %v753
      %v786 = vpack.c.b16 %v754, %v754
      %v787 = vpack.c.b16 %v755, %v755
      %v788 = vpack.c.b16 %v756, %v756
      %v789 = vpack.c.b16 %v757, %v757
      %v790 = vpack.c.b16 %v758, %v758
      %v791 = vpack.c.b16 %v759, %v759
      %v792 = vpack.c.b16 %v760, %v760
      %v793 = vpack.c.b16 %v761, %v761
      %v794 = vpack.c.b16 %v762, %v762
      %v795 = vpack.c.b16 %v763, %v763
      %v796 = vpack.c.b16 %v764, %v764
      %829 = vst [vmem:[%s235] sm:$0xf] %v765
      %830 = vst [vmem:[%s235 + $0x4] sm:$0xf] %v766
      %831 = vst [vmem:[%s235 + $0x8] sm:$0xf] %v767
      %832 = vst [vmem:[%s235 + $0xc] sm:$0xf] %v768
      %833 = vst [vmem:[%s235 + $0x10] sm:$0xf] %v769
      %834 = vst [vmem:[%s235 + $0x14] sm:$0xf] %v770
      %835 = vst [vmem:[%s235 + $0x18] sm:$0xf] %v771
      %836 = vst [vmem:[%s235 + $0x1c] sm:$0xf] %v772
      %837 = vst [vmem:[%s235 + $0x20] sm:$0xf] %v773
      %838 = vst [vmem:[%s235 + $0x24] sm:$0xf] %v774
      %839 = vst [vmem:[%s235 + $0x28] sm:$0xf] %v775
      %840 = vst [vmem:[%s235 + $0x2c] sm:$0xf] %v776
      %841 = vst [vmem:[%s235 + $0x30] sm:$0xf] %v777
      %842 = vst [vmem:[%s235 + $0x34] sm:$0xf] %v778
      %843 = vst [vmem:[%s235 + $0x38] sm:$0xf] %v779
      %844 = vst [vmem:[%s235 + $0x3c] sm:$0xf] %v780
      %845 = vst [vmem:[%s235 + $0x40] sm:$0xf] %v781
      %846 = vst [vmem:[%s235 + $0x44] sm:$0xf] %v782
      %847 = vst [vmem:[%s235 + $0x48] sm:$0xf] %v783
      %848 = vst [vmem:[%s235 + $0x4c] sm:$0xf] %v784
      %849 = vst [vmem:[%s235 + $0x50] sm:$0xf] %v785
      %850 = vst [vmem:[%s235 + $0x54] sm:$0xf] %v786
      %851 = vst [vmem:[%s235 + $0x58] sm:$0xf] %v787
      %852 = vst [vmem:[%s235 + $0x5c] sm:$0xf] %v788
      %853 = vst [vmem:[%s235 + $0x60] sm:$0xf] %v789
      %854 = vst [vmem:[%s235 + $0x64] sm:$0xf] %v790
      %855 = vst [vmem:[%s235 + $0x68] sm:$0xf] %v791
      %856 = vst [vmem:[%s235 + $0x6c] sm:$0xf] %v792
      %857 = vst [vmem:[%s235 + $0x70] sm:$0xf] %v793
      %858 = vst [vmem:[%s235 + $0x74] sm:$0xf] %v794
      %859 = vst [vmem:[%s235 + $0x78] sm:$0xf] %v795
      %860 = vst [vmem:[%s235 + $0x7c] sm:$0xf] %v796
      %s861 = smul.u32 32, %s20
      %p862 = scmp.lt.s32.totalorder %s19, 1
      %s863 = scalar_select %p862, %s19, 1
      %p864 = scmp.lt.s32.totalorder %s861, 31
      %s865 = scalar_select %p864, %s861, 31
      %s866 = smul.addr %s863, 32
      %s867 = sadd.s32 %s865, %s866
      %s868 = smul.addr %s867, 4
      %s869 = scalar_lea.vmem %s4, %s868
      // Predicated region
      $region37: #{_lambda_.4} parent=35 // pred_check
        %p870 = pneg %p138
      $region38: #{_lambda_.4} parent=35 // pred_check_branch
        %872 = sbr.rel (%p870) target = $region40
      $region39: #{_lambda_.4} parent=35 // pred_region
        %s873 = smul.u32 32, %s20
      $region40: #{_lambda_.4} parent=35 // pred_fallthru
        _
    $region36: #{_lambda_.4} parent=5 // pred_fallthru
      _
    %p874 = scmp.le.s32.totalorder 2, %s10
    // Predicated region
    $region41: #{_lambda_.4} parent=5 // pred_check
      %p875 = pneg %p874
    $region42: #{_lambda_.4} parent=5 // pred_check_branch
      %877 = sbr.rel (%p875) target = $region44
    $region43: #{_lambda_.4} parent=5 // pred_region
      %s878 = ssub.s32 %s10, 2
      // Predicated region
      $region45: #{_lambda_.4} parent=43 // pred_check
        %p879 = pneg %p144
      $region46: #{_lambda_.4} parent=43 // pred_check_branch
        %881 = sbr.rel (%p879) target = $region48
      $region47: #{_lambda_.4} parent=43 // pred_region
        %s882 = smul.u32 32, %s22
        %p883 = scmp.lt.s32.totalorder %s21, 1
        %s884 = scalar_select %p883, %s21, 1
        %p885 = scmp.lt.s32.totalorder %s882, 31
        %s886 = scalar_select %p885, %s882, 31
        %s887 = smul.addr %s884, 32
        %s888 = sadd.s32 %s886, %s887
        %s889 = smul.addr %s888, 4
        %s890 = scalar_lea.vmem %s4, %s889
      $region48: #{_lambda_.4} parent=43 // pred_fallthru
        _
    $region44: #{_lambda_.4} parent=5 // pred_fallthru
      _
  $region6: #{_lambda_.4} parent=0 // loop_footer
    %s14 = sadd.s32 1, %s10
  $region7: #{_lambda_.4} parent=0 // loop_footer_branch
    %9 = sbr.rel target = $region3
  $region8: #{_lambda_.4} parent=0 // loop_exit
    _

// kernel: _lambda_.6
$region0: #{_lambda_.6}
  #allocation0 [shape = 'u32[]', space=smem, size = 0x4, offset = 0x4, fixed_abs, tag = 'smem constant byte address 0x4 - core index']
  #allocation1 [shape = 'u32[144,128]{1,0:T(1,128)}', space=vmem, size = 0x12000, scoped, tag = 'internal scratch']
  %s0 = inlined_call_operand.vmem [shape: bf16[2,256,128], index: 0, kind: input, shape index: {}]
  %s1 = inlined_call_operand.vmem [shape: bf16[2,256,128], index: 1, kind: input, shape index: {}]
  %s2 = inlined_call_operand.vmem [shape: bf16[128,128], index: 2, kind: input, shape index: {}]
  %s3 = inlined_call_operand.vmem [shape: f32[1,128], index: 3, kind: input, shape index: {}]
  %s4 = inlined_call_operand.vmem [shape: f32[1,128], index: 4, kind: input, shape index: {}]
  %s5 = inlined_call_operand.vmem [shape: bf16[2,256,128], index: 5, kind: output, shape index: {0}]
  %s6 = inlined_call_operand.vmem [shape: f32[2,1,128], index: 6, kind: output, shape index: {1}]
  %7 = xla_tuple %s5, %s6
  %s8 = sld [smem:[#allocation0]]
  $region61: #{_lambda_.6} parent=0
    _
  %s10 = ssub.s32 1, %s8
  %s11 = scalar_select 0, %s10, %s8
  loop: start=0, step=1, limit=4
  $region2: #{_lambda_.6} parent=0 // loop_pre_header
    _
  $region3: #{_lambda_.6} parent=0 // loop_header
    %s13 = sphi 0, %s17
    %p14 = scmp.ge.s32.totalorder %s13, 4
    %s20 = sphi 0, %s32
    %s21 = sphi 0, %s28
    %s22 = sphi 0, %s20
    %s23 = sphi 0, %s21
    %s24 = sphi 0, %s22
    %s25 = sphi 0, %s23
    %s37 = sphi 0, %s39
    %s40 = sphi 0, %s37
    %s41 = sphi 0, %s40
    %s57 = sphi 0, %s41
    %s65 = sphi 0, %s67
    %s68 = sphi 0, %s65
    %s69 = sphi 0, %s68
    %s85 = sphi 0, %s69
    %s89 = sphi 0, %s89
    %s91 = sphi 0, %s89
    %s92 = sphi 0, %s91
    %s106 = sphi 0, %s92
    %s110 = sphi 0, %s110
    %s112 = sphi 0, %s110
    %s113 = sphi 0, %s112
    %s127 = sphi 0, %s113
    %s131 = sphi 0, %s131
    %s133 = sphi 0, %s131
    %s134 = sphi 0, %s133
    %s148 = sphi 0, %s134
    %s156 = sphi 0, %s158
    %s159 = sphi 0, %s156
    %s160 = sphi 0, %s159
    %s176 = sphi 0, %s160
    %s184 = sphi 0, %s186
    %s187 = sphi 0, %s184
    %s188 = sphi 0, %s187
    %s204 = sphi 0, %s188
  $region4: #{_lambda_.6} parent=0 // loop_header_branch
    %16 = sbr.rel (%p14) target = $region8
  $region5: #{_lambda_.6} parent=0 // loop_body
    %s18 = ssub.s32 %s13, 1
    %s19 = ssub.s32 %s13, 2
    %s26 = sadd.s32 1, %s21
    %p27 = scmp.ge.s32.totalorder %s26, 1
    %s28 = scalar_select %p27, 0, %s26
    %s29 = sadd.s32 1, %s20
    %s30 = scalar_select %p27, %s29, %s20
    %p31 = scmp.ge.s32.totalorder %s30, 2
    %s32 = scalar_select %p31, 0, %s30
    %s33 = ssub.s32 %s20, %s32
    %s34 = ssub.s32 %s21, %s28
    %s35 = sor.u32 %s33, %s34
    %p36 = scmp.eq.s32.totalorder %s35, 0
    %s38 = sadd.s32 %s37, 1
    %s39 = scalar_select %p36, %s37, %s38
    %p42 = pneg %p36
    %p43 = scmp.eq.s32.totalorder %s13, 1
    %p44 = por %p42, %p43
    %p45 = scmp.ne.s32.totalorder %s37, %s40
    %p46 = scmp.eq.s32.totalorder %s13, 0
    %p47 = por %p45, %p46
    %p48 = scmp.ne.s32.totalorder %s37, %s40
    %p49 = scmp.eq.s32.totalorder %s18, 1
    %p50 = por %p48, %p49
    %p51 = scmp.ne.s32.totalorder %s40, %s41
    %p52 = scmp.eq.s32.totalorder %s18, 0
    %p53 = por %p51, %p52
    %p54 = scmp.ne.s32.totalorder %s40, %s41
    %p55 = scmp.eq.s32.totalorder %s19, 1
    %p56 = por %p54, %p55
    %p58 = scmp.ne.s32.totalorder %s41, %s57
    %p59 = scmp.eq.s32.totalorder %s19, 0
    %p60 = por %p58, %p59
    %s61 = ssub.s32 %s20, %s32
    %s62 = ssub.s32 %s21, %s28
    %s63 = sor.u32 %s61, %s62
    %p64 = scmp.eq.s32.totalorder %s63, 0
    %s66 = sadd.s32 %s65, 1
    %s67 = scalar_select %p64, %s65, %s66
    %p70 = pneg %p64
    %p71 = scmp.eq.s32.totalorder %s13, 1
    %p72 = por %p70, %p71
    %p73 = scmp.ne.s32.totalorder %s65, %s68
    %p74 = scmp.eq.s32.totalorder %s13, 0
    %p75 = por %p73, %p74
    %p76 = scmp.ne.s32.totalorder %s65, %s68
    %p77 = scmp.eq.s32.totalorder %s18, 1
    %p78 = por %p76, %p77
    %p79 = scmp.ne.s32.totalorder %s68, %s69
    %p80 = scmp.eq.s32.totalorder %s18, 0
    %p81 = por %p79, %p80
    %p82 = scmp.ne.s32.totalorder %s68, %s69
    %p83 = scmp.eq.s32.totalorder %s19, 1
    %p84 = por %p82, %p83
    %p86 = scmp.ne.s32.totalorder %s69, %s85
    %p87 = scmp.eq.s32.totalorder %s19, 0
    %p88 = por %p86, %p87
    %s90 = sadd.s32 %s89, 1
    %p93 = scmp.eq.s32.totalorder %s13, 1
    %p94 = scmp.ne.s32.totalorder %s89, %s91
    %p95 = scmp.eq.s32.totalorder %s13, 0
    %p96 = por %p94, %p95
    %p97 = scmp.ne.s32.totalorder %s89, %s91
    %p98 = scmp.eq.s32.totalorder %s18, 1
    %p99 = por %p97, %p98
    %p100 = scmp.ne.s32.totalorder %s91, %s92
    %p101 = scmp.eq.s32.totalorder %s18, 0
    %p102 = por %p100, %p101
    %p103 = scmp.ne.s32.totalorder %s91, %s92
    %p104 = scmp.eq.s32.totalorder %s19, 1
    %p105 = por %p103, %p104
    %p107 = scmp.ne.s32.totalorder %s92, %s106
    %p108 = scmp.eq.s32.totalorder %s19, 0
    %p109 = por %p107, %p108
    %s111 = sadd.s32 %s110, 1
    %p114 = scmp.eq.s32.totalorder %s13, 1
    %p115 = scmp.ne.s32.totalorder %s110, %s112
    %p116 = scmp.eq.s32.totalorder %s13, 0
    %p117 = por %p115, %p116
    %p118 = scmp.ne.s32.totalorder %s110, %s112
    %p119 = scmp.eq.s32.totalorder %s18, 1
    %p120 = por %p118, %p119
    %p121 = scmp.ne.s32.totalorder %s112, %s113
    %p122 = scmp.eq.s32.totalorder %s18, 0
    %p123 = por %p121, %p122
    %p124 = scmp.ne.s32.totalorder %s112, %s113
    %p125 = scmp.eq.s32.totalorder %s19, 1
    %p126 = por %p124, %p125
    %p128 = scmp.ne.s32.totalorder %s113, %s127
    %p129 = scmp.eq.s32.totalorder %s19, 0
    %p130 = por %p128, %p129
    %s132 = sadd.s32 %s131, 1
    %p135 = scmp.eq.s32.totalorder %s13, 1
    %p136 = scmp.ne.s32.totalorder %s131, %s133
    %p137 = scmp.eq.s32.totalorder %s13, 0
    %p138 = por %p136, %p137
    %p139 = scmp.ne.s32.totalorder %s131, %s133
    %p140 = scmp.eq.s32.totalorder %s18, 1
    %p141 = por %p139, %p140
    %p142 = scmp.ne.s32.totalorder %s133, %s134
    %p143 = scmp.eq.s32.totalorder %s18, 0
    %p144 = por %p142, %p143
    %p145 = scmp.ne.s32.totalorder %s133, %s134
    %p146 = scmp.eq.s32.totalorder %s19, 1
    %p147 = por %p145, %p146
    %p149 = scmp.ne.s32.totalorder %s134, %s148
    %p150 = scmp.eq.s32.totalorder %s19, 0
    %p151 = por %p149, %p150
    %s152 = ssub.s32 %s20, %s32
    %s153 = ssub.s32 %s21, %s28
    %s154 = sor.u32 %s152, %s153
    %p155 = scmp.eq.s32.totalorder %s154, 0
    %s157 = sadd.s32 %s156, 1
    %s158 = scalar_select %p155, %s156, %s157
    %p161 = pneg %p155
    %p162 = scmp.eq.s32.totalorder %s13, 1
    %p163 = por %p161, %p162
    %p164 = scmp.ne.s32.totalorder %s156, %s159
    %p165 = scmp.eq.s32.totalorder %s13, 0
    %p166 = por %p164, %p165
    %p167 = scmp.ne.s32.totalorder %s156, %s159
    %p168 = scmp.eq.s32.totalorder %s18, 1
    %p169 = por %p167, %p168
    %p170 = scmp.ne.s32.totalorder %s159, %s160
    %p171 = scmp.eq.s32.totalorder %s18, 0
    %p172 = por %p170, %p171
    %p173 = scmp.ne.s32.totalorder %s159, %s160
    %p174 = scmp.eq.s32.totalorder %s19, 1
    %p175 = por %p173, %p174
    %p177 = scmp.ne.s32.totalorder %s160, %s176
    %p178 = scmp.eq.s32.totalorder %s19, 0
    %p179 = por %p177, %p178
    %s180 = sadd.s32 %s20, %s21
    %s181 = sadd.s32 %s32, %s28
    %s182 = ssub.s32 %s180, %s181
    %p183 = scmp.eq.s32.totalorder %s182, 0
    %s185 = sadd.s32 %s184, 1
    %s186 = scalar_select %p183, %s184, %s185
    %p189 = pneg %p183
    %p190 = scmp.eq.s32.totalorder %s13, 1
    %p191 = por %p189, %p190
    %p192 = scmp.ne.s32.totalorder %s184, %s187
    %p193 = scmp.eq.s32.totalorder %s13, 0
    %p194 = por %p192, %p193
    %p195 = scmp.ne.s32.totalorder %s184, %s187
    %p196 = scmp.eq.s32.totalorder %s18, 1
    %p197 = por %p195, %p196
    %p198 = scmp.ne.s32.totalorder %s187, %s188
    %p199 = scmp.eq.s32.totalorder %s18, 0
    %p200 = por %p198, %p199
    %p201 = scmp.ne.s32.totalorder %s187, %s188
    %p202 = scmp.eq.s32.totalorder %s19, 1
    %p203 = por %p201, %p202
    %p205 = scmp.ne.s32.totalorder %s188, %s204
    %p206 = scmp.eq.s32.totalorder %s19, 0
    %p207 = por %p205, %p206
    %p208 = scmp.le.s32.totalorder 1, %s13
    %p209 = scmp.lt.s32.totalorder %s13, 3
    %p210 = pnand %p208, %p209
    %p211 = pneg %p210
    // Predicated region
    $region9: #{_lambda_.6} parent=5 // pred_check
      _
    $region10: #{_lambda_.6} parent=5 // pred_check_branch
      %213 = sbr.rel (%p210) target = $region12
    $region11: #{_lambda_.6} parent=5 // pred_region
      %s214 = ssub.s32 %s13, 1
      // Predicated region
      $region13: #{_lambda_.6} parent=11 // pred_check
        %p215 = pneg %p102
      $region14: #{_lambda_.6} parent=11 // pred_check_branch
        %217 = sbr.rel (%p215) target = $region16
      $region15: #{_lambda_.6} parent=11 // pred_region
        _
      $region16: #{_lambda_.6} parent=11 // pred_fallthru
        _
      // Predicated region
      $region17: #{_lambda_.6} parent=11 // pred_check
        %p218 = pneg %p123
      $region18: #{_lambda_.6} parent=11 // pred_check_branch
        %220 = sbr.rel (%p218) target = $region20
      $region19: #{_lambda_.6} parent=11 // pred_region
        _
      $region20: #{_lambda_.6} parent=11 // pred_fallthru
        _
      // Predicated region
      $region21: #{_lambda_.6} parent=11 // pred_check
        %p221 = pneg %p144
      $region22: #{_lambda_.6} parent=11 // pred_check_branch
        %223 = sbr.rel (%p221) target = $region24
      $region23: #{_lambda_.6} parent=11 // pred_region
        _
      $region24: #{_lambda_.6} parent=11 // pred_fallthru
        _
    $region12: #{_lambda_.6} parent=5 // pred_fallthru
      _
    %p224 = scmp.lt.s32.totalorder %s13, 2
    // Predicated region
    $region25: #{_lambda_.6} parent=5 // pred_check
      %p225 = pneg %p224
    $region26: #{_lambda_.6} parent=5 // pred_check_branch
      %227 = sbr.rel (%p225) target = $region28
    $region27: #{_lambda_.6} parent=5 // pred_region
      // Predicated region
      $region29: #{_lambda_.6} parent=27 // pred_check
        %p228 = pneg %p47
      $region30: #{_lambda_.6} parent=27 // pred_check_branch
        %230 = sbr.rel (%p228) target = $region32
      $region31: #{_lambda_.6} parent=27 // pred_region
        %s231 = smul.u32 32, %s21
        %p232 = scmp.lt.s32.totalorder %s20, 1
        %s233 = scalar_select %p232, %s20, 1
        %p234 = scmp.lt.s32.totalorder %s231, 31
        %s235 = scalar_select %p234, %s231, 31
        %s236 = smul.addr %s233, 32
        %s237 = sadd.s32 %s235, %s236
        %s238 = smul.addr %s237, 4
        %s239 = scalar_lea.vmem %s0, %s238
        %s240 = smul.u32 32, %s21
      $region32: #{_lambda_.6} parent=27 // pred_fallthru
        _
      // Predicated region
      $region33: #{_lambda_.6} parent=27 // pred_check
        %p241 = pneg %p75
      $region34: #{_lambda_.6} parent=27 // pred_check_branch
        %243 = sbr.rel (%p241) target = $region36
      $region35: #{_lambda_.6} parent=27 // pred_region
        %s244 = smul.u32 32, %s21
        %p245 = scmp.lt.s32.totalorder %s20, 1
        %s246 = scalar_select %p245, %s20, 1
        %p247 = scmp.lt.s32.totalorder %s244, 31
        %s248 = scalar_select %p247, %s244, 31
        %s249 = smul.addr %s246, 32
        %s250 = sadd.s32 %s248, %s249
        %s251 = smul.addr %s250, 4
        %s252 = scalar_lea.vmem %s1, %s251
        %s253 = smul.u32 32, %s21
      $region36: #{_lambda_.6} parent=27 // pred_fallthru
        _
    $region28: #{_lambda_.6} parent=5 // pred_fallthru
      _
    %p254 = scmp.le.s32.totalorder 1, %s13
    %p255 = scmp.lt.s32.totalorder %s13, 3
    %p256 = pnand %p254, %p255
    %p257 = pneg %p256
    // Predicated region
    $region37: #{_lambda_.6} parent=5 // pred_check
      _
    $region38: #{_lambda_.6} parent=5 // pred_check_branch
      %259 = sbr.rel (%p256) target = $region40
    $region39: #{_lambda_.6} parent=5 // pred_region
      %s260 = ssub.s32 %s13, 1
      %s261 = smul.u32 32, %s23
      %p262 = scmp.lt.s32.totalorder %s22, 1
      %s263 = scalar_select %p262, %s22, 1
      %p264 = scmp.lt.s32.totalorder %s261, 31
      %s265 = scalar_select %p264, %s261, 31
      %s266 = smul.addr %s263, 32
      %s267 = sadd.s32 %s265, %s266
      %s268 = smul.addr %s267, 4
      %s269 = scalar_lea.vmem %s0, %s268
      %p270 = pneg %p53
      %p271 = pneg %p50
      %s272 = smul.u32 32, %s23
      %p273 = scmp.lt.s32.totalorder %s22, 1
      %s274 = scalar_select %p273, %s22, 1
      %p275 = scmp.lt.s32.totalorder %s272, 31
      %s276 = scalar_select %p275, %s272, 31
      %s277 = smul.addr %s274, 32
      %s278 = sadd.s32 %s276, %s277
      %s279 = smul.addr %s278, 4
      %s280 = scalar_lea.vmem %s1, %s279
      %p281 = pneg %p81
      %p282 = pneg %p78
      %p283 = pneg %p102
      %p284 = pneg %p99
      %p285 = pneg %p123
      %p286 = pneg %p120
      %p287 = pneg %p144
      %p288 = pneg %p141
      %p289 = pneg %p172
      %p290 = pneg %p169
      %s291 = smul.u32 32, %s23
      %p292 = scmp.lt.s32.totalorder %s22, 1
      %s293 = scalar_select %p292, %s22, 1
      %p294 = scmp.lt.s32.totalorder %s291, 31
      %s295 = scalar_select %p294, %s291, 31
      %s296 = smul.addr %s293, 32
      %s297 = sadd.s32 %s295, %s296
      %s298 = smul.addr %s297, 4
      %s299 = scalar_lea.vmem %s5, %s298
      %p300 = pneg %p200
      %p301 = pneg %p197
      %s302 = sadd.s32 %s22, %s23
      %p303 = scmp.lt.s32.totalorder %s302, 1
      %s304 = scalar_select %p303, %s302, 1
      %s305 = scalar_lea.vmem %s6, %s304
      %s306 = smul.u32 32, %s23
      %p307 = scmp.lt.s32.totalorder %s22, 1
      %s308 = scalar_select %p307, %s22, 1
      %p309 = scmp.lt.s32.totalorder %s306, 31
      %s310 = scalar_select %p309, %s306, 31
      %s311 = smul.addr %s308, 32
      %s312 = sadd.s32 %s310, %s311
      %s313 = smul.addr %s312, 4
      %s314 = scalar_lea.vmem %s0, %s313
      %s315 = smul.u32 32, %s23
      %s316 = smul.u32 32, %s23
      %p317 = scmp.lt.s32.totalorder %s22, 1
      %s318 = scalar_select %p317, %s22, 1
      %p319 = scmp.lt.s32.totalorder %s316, 31
      %s320 = scalar_select %p319, %s316, 31
      %s321 = smul.addr %s318, 32
      %s322 = sadd.s32 %s320, %s321
      %s323 = smul.addr %s322, 4
      %s324 = scalar_lea.vmem %s1, %s323
      %s325 = smul.u32 32, %s23
      %s326 = smul.u32 32, %s23
      %p327 = scmp.lt.s32.totalorder %s22, 1
      %s328 = scalar_select %p327, %s22, 1
      %p329 = scmp.lt.s32.totalorder %s326, 31
      %s330 = scalar_select %p329, %s326, 31
      %s331 = smul.addr %s328, 32
      %s332 = sadd.s32 %s330, %s331
      %s333 = smul.addr %s332, 4
      %s334 = scalar_lea.vmem %s5, %s333
      %s335 = smul.u32 32, %s23
      %s336 = sadd.s32 %s22, %s23
      %p337 = scmp.lt.s32.totalorder %s336, 1
      %s338 = scalar_select %p337, %s336, 1
      %s339 = scalar_lea.vmem %s6, %s338
      %s340 = sadd.s32 %s22, %s23
      %v342 = vld [vmem:[%s314] sm:$0xf]
      %v343 = vld [vmem:[%s314 + $0x4] sm:$0xf]
      %v344 = vld [vmem:[%s314 + $0x8] sm:$0xf]
      %v345 = vld [vmem:[%s314 + $0xc] sm:$0xf]
      %v346 = vld [vmem:[%s314 + $0x10] sm:$0xf]
      %v347 = vld [vmem:[%s314 + $0x14] sm:$0xf]
      %v348 = vld [vmem:[%s314 + $0x18] sm:$0xf]
      %v349 = vld [vmem:[%s314 + $0x1c] sm:$0xf]
      %v350 = vld [vmem:[%s314 + $0x20] sm:$0xf]
      %v351 = vld [vmem:[%s314 + $0x24] sm:$0xf]
      %v352 = vld [vmem:[%s314 + $0x28] sm:$0xf]
      %v353 = vld [vmem:[%s314 + $0x2c] sm:$0xf]
      %v354 = vld [vmem:[%s314 + $0x30] sm:$0xf]
      %v355 = vld [vmem:[%s314 + $0x34] sm:$0xf]
      %v356 = vld [vmem:[%s314 + $0x38] sm:$0xf]
      %v357 = vld [vmem:[%s314 + $0x3c] sm:$0xf]
      %v358 = vld [vmem:[%s314 + $0x40] sm:$0xf]
      %v359 = vld [vmem:[%s314 + $0x44] sm:$0xf]
      %v360 = vld [vmem:[%s314 + $0x48] sm:$0xf]
      %v361 = vld [vmem:[%s314 + $0x4c] sm:$0xf]
      %v362 = vld [vmem:[%s314 + $0x50] sm:$0xf]
      %v363 = vld [vmem:[%s314 + $0x54] sm:$0xf]
      %v364 = vld [vmem:[%s314 + $0x58] sm:$0xf]
      %v365 = vld [vmem:[%s314 + $0x5c] sm:$0xf]
      %v366 = vld [vmem:[%s314 + $0x60] sm:$0xf]
      %v367 = vld [vmem:[%s314 + $0x64] sm:$0xf]
      %v368 = vld [vmem:[%s314 + $0x68] sm:$0xf]
      %v369 = vld [vmem:[%s314 + $0x6c] sm:$0xf]
      %v370 = vld [vmem:[%s314 + $0x70] sm:$0xf]
      %v371 = vld [vmem:[%s314 + $0x74] sm:$0xf]
      %v372 = vld [vmem:[%s314 + $0x78] sm:$0xf]
      %v373 = vld [vmem:[%s314 + $0x7c] sm:$0xf]
      %v374 = vld [vmem:[%s2] sm:$0xf]
      %v375 = vld [vmem:[%s2 + $0x4] sm:$0xf]
      %v376 = vld [vmem:[%s2 + $0x8] sm:$0xf]
      %v377 = vld [vmem:[%s2 + $0xc] sm:$0xf]
      %v378 = vld [vmem:[%s2 + $0x10] sm:$0xf]
      %v379 = vld [vmem:[%s2 + $0x14] sm:$0xf]
      %v380 = vld [vmem:[%s2 + $0x18] sm:$0xf]
      %v381 = vld [vmem:[%s2 + $0x1c] sm:$0xf]
      %v382 = vld [vmem:[%s2 + $0x20] sm:$0xf]
      %v383 = vld [vmem:[%s2 + $0x24] sm:$0xf]
      %v384 = vld [vmem:[%s2 + $0x28] sm:$0xf]
      %v385 = vld [vmem:[%s2 + $0x2c] sm:$0xf]
      %v386 = vld [vmem:[%s2 + $0x30] sm:$0xf]
      %v387 = vld [vmem:[%s2 + $0x34] sm:$0xf]
      %v388 = vld [vmem:[%s2 + $0x38] sm:$0xf]
      %v389 = vld [vmem:[%s2 + $0x3c] sm:$0xf]
      %v422 = vunpack.c.l.b16 %v342
      %v423 = vunpack.c.l.b16 %v343
      %v424 = vunpack.c.l.b16 %v344
      %v425 = vunpack.c.l.b16 %v345
      %v426 = vunpack.c.l.b16 %v346
      %v427 = vunpack.c.l.b16 %v347
      %v428 = vunpack.c.l.b16 %v348
      %v429 = vunpack.c.l.b16 %v349
      %v430 = vunpack.c.l.b16 %v350
      %v431 = vunpack.c.l.b16 %v351
      %v432 = vunpack.c.l.b16 %v352
      %v433 = vunpack.c.l.b16 %v353
      %v434 = vunpack.c.l.b16 %v354
      %v435 = vunpack.c.l.b16 %v355
      %v436 = vunpack.c.l.b16 %v356
      %v437 = vunpack.c.l.b16 %v357
      %v438 = vunpack.c.l.b16 %v358
      %v439 = vunpack.c.l.b16 %v359
      %v440 = vunpack.c.l.b16 %v360
      %v441 = vunpack.c.l.b16 %v361
      %v442 = vunpack.c.l.b16 %v362
      %v443 = vunpack.c.l.b16 %v363
      %v444 = vunpack.c.l.b16 %v364
      %v445 = vunpack.c.l.b16 %v365
      %v446 = vunpack.c.l.b16 %v366
      %v447 = vunpack.c.l.b16 %v367
      %v448 = vunpack.c.l.b16 %v368
      %v449 = vunpack.c.l.b16 %v369
      %v450 = vunpack.c.l.b16 %v370
      %v451 = vunpack.c.l.b16 %v371
      %v452 = vunpack.c.l.b16 %v372
      %v453 = vunpack.c.l.b16 %v373
      %v454 = vpack.c.b16 %v423, %v422
      %v455 = vpack.c.b16 %v425, %v424
      %v456 = vpack.c.b16 %v427, %v426
      %v457 = vpack.c.b16 %v429, %v428
      %v458 = vpack.c.b16 %v431, %v430
      %v459 = vpack.c.b16 %v433, %v432
      %v460 = vpack.c.b16 %v435, %v434
      %v461 = vpack.c.b16 %v437, %v436
      %v462 = vpack.c.b16 %v439, %v438
      %v463 = vpack.c.b16 %v441, %v440
      %v464 = vpack.c.b16 %v443, %v442
      %v465 = vpack.c.b16 %v445, %v444
      %v466 = vpack.c.b16 %v447, %v446
      %v467 = vpack.c.b16 %v449, %v448
      %v468 = vpack.c.b16 %v451, %v450
      %v469 = vpack.c.b16 %v453, %v452
      %v502 = vunpack.c.l.b16 %v374
      %v503 = vunpack.c.l.b16 %v375
      %v504 = vunpack.c.l.b16 %v376
      %v505 = vunpack.c.l.b16 %v377
      %v506 = vunpack.c.l.b16 %v378
      %v507 = vunpack.c.l.b16 %v379
      %v508 = vunpack.c.l.b16 %v380
      %v509 = vunpack.c.l.b16 %v381
      %v510 = vunpack.c.l.b16 %v382
      %v511 = vunpack.c.l.b16 %v383
      %v512 = vunpack.c.l.b16 %v384
      %v513 = vunpack.c.l.b16 %v385
      %v514 = vunpack.c.l.b16 %v386
      %v515 = vunpack.c.l.b16 %v387
      %v516 = vunpack.c.l.b16 %v388
      %v517 = vunpack.c.l.b16 %v389
      %v518 = vpack.c.b16 %v503, %v502
      %v519 = vpack.c.b16 %v505, %v504
      %v520 = vpack.c.b16 %v507, %v506
      %v521 = vpack.c.b16 %v509, %v508
      %v522 = vpack.c.b16 %v511, %v510
      %v523 = vpack.c.b16 %v513, %v512
      %v524 = vpack.c.b16 %v515, %v514
      %v525 = vpack.c.b16 %v517, %v516
      %534 = vmatprep.subr.bf16.mxu0 0
      %535 = vmatpush1.bf16.msra.mxu0 %v518
      %536 = vmatprep.subr.bf16.mxu0 0
      %537 = vmatpush1.bf16.msra.mxu0 %v519
      %538 = vmatprep.subr.bf16.mxu0 0
      %539 = vmatpush1.bf16.msra.mxu0 %v520
      %540 = vmatprep.subr.bf16.mxu0 0
      %541 = vmatpush1.bf16.msra.mxu0 %v521
      %542 = vmatprep.subr.bf16.mxu0 0
      %543 = vmatpush1.bf16.msra.mxu0 %v522
      %544 = vmatprep.subr.bf16.mxu0 0
      %545 = vmatpush1.bf16.msra.mxu0 %v523
      %546 = vmatprep.subr.bf16.mxu0 0
      %547 = vmatpush1.bf16.msra.mxu0 %v524
      %548 = vmatprep.subr.bf16.mxu0 0
      %549 = vmatpush1.bf16.msra.mxu0 %v525
      %550 = vmatprep.subr.bf16.mxu0 0
      %551 = vmatpush1.bf16.msra.mxu0 0
      %552 = vmatprep.subr.bf16.mxu0 0
      %553 = vmatpush1.bf16.msra.mxu0 0
      %554 = vmatprep.subr.bf16.mxu0 0
      %555 = vmatpush1.bf16.msra.mxu0 0
      %556 = vmatprep.subr.bf16.mxu0 0
      %557 = vmatpush1.bf16.msra.mxu0 0
      %558 = vmatprep.subr.bf16.mxu0 0
      %559 = vmatpush1.bf16.msra.mxu0 0
      %560 = vmatprep.subr.bf16.mxu0 0
      %561 = vmatpush1.bf16.msra.mxu0 0
      %562 = vmatprep.subr.bf16.mxu0 0
      %563 = vmatpush1.bf16.msra.mxu0 0
      %564 = vmatprep.subr.bf16.mxu0 0
      %565 = vmatpush1.bf16.msra.mxu0 0
      %566 = vmatprep.mubr.bf16.mxu0 0
      %567 = vmatmul.mubr.bf16.gmra.mrb[0].mxu0 %v454
      %v568 = vpop.f32.mrb[0].mxu0
      %v569 = vadd.f32 0.0, %v568
      %v570 = vpop.f32.mrb[0].mxu0
      %v571 = vpop.f32.mrb[0].mxu0
      %v572 = vadd.f32 0.0, %v571
      %v573 = vpop.f32.mrb[0].mxu0
      %574 = vmatprep.mubr.bf16.mxu0 0
      %575 = vmatmul.mubr.bf16.gmra.mrb[0].mxu0 %v455
      %v576 = vpop.f32.mrb[0].mxu0
      %v577 = vadd.f32 0.0, %v576
      %v578 = vpop.f32.mrb[0].mxu0
      %v579 = vpop.f32.mrb[0].mxu0
      %v580 = vadd.f32 0.0, %v579
      %v581 = vpop.f32.mrb[0].mxu0
      %582 = vmatprep.mubr.bf16.mxu0 0
      %583 = vmatmul.mubr.bf16.gmra.mrb[0].mxu0 %v456
      %v584 = vpop.f32.mrb[0].mxu0
      %v585 = vadd.f32 0.0, %v584
      %v586 = vpop.f32.mrb[0].mxu0
      %v587 = vpop.f32.mrb[0].mxu0
      %v588 = vadd.f32 0.0, %v587
      %v589 = vpop.f32.mrb[0].mxu0
      %590 = vmatprep.mubr.bf16.mxu0 0
      %591 = vmatmul.mubr.bf16.gmra.mrb[0].mxu0 %v457
      %v592 = vpop.f32.mrb[0].mxu0
      %v593 = vadd.f32 0.0, %v592
      %v594 = vpop.f32.mrb[0].mxu0
      %v595 = vpop.f32.mrb[0].mxu0
      %v596 = vadd.f32 0.0, %v595
      %v597 = vpop.f32.mrb[0].mxu0
      %598 = vmatprep.mubr.bf16.mxu0 0
      %599 = vmatmul.mubr.bf16.gmra.mrb[0].mxu0 %v458
      %v600 = vpop.f32.mrb[0].mxu0
      %v601 = vadd.f32 0.0, %v600
      %v602 = vpop.f32.mrb[0].mxu0
      %v603 = vpop.f32.mrb[0].mxu0
      %v604 = vadd.f32 0.0, %v603
      %v605 = vpop.f32.mrb[0].mxu0
      %606 = vmatprep.mubr.bf16.mxu0 0
      %607 = vmatmul.mubr.bf16.gmra.mrb[0].mxu0 %v459
      %v608 = vpop.f32.mrb[0].mxu0
      %v609 = vadd.f32 0.0, %v608
      %v610 = vpop.f32.mrb[0].mxu0
      %v611 = vpop.f32.mrb[0].mxu0
      %v612 = vadd.f32 0.0, %v611
      %v613 = vpop.f32.mrb[0].mxu0
      %614 = vmatprep.mubr.bf16.mxu0 0
      %615 = vmatmul.mubr.bf16.gmra.mrb[0].mxu0 %v460
      %v616 = vpop.f32.mrb[0].mxu0
      %v617 = vadd.f32 0.0, %v616
      %v618 = vpop.f32.mrb[0].mxu0
      %v619 = vpop.f32.mrb[0].mxu0
      %v620 = vadd.f32 0.0, %v619
      %v621 = vpop.f32.mrb[0].mxu0
      %622 = vmatprep.mubr.bf16.mxu0 0
      %623 = vmatmul.mubr.bf16.gmra.mrb[0].mxu0 %v461
      %v624 = vpop.f32.mrb[0].mxu0
      %v625 = vadd.f32 0.0, %v624
      %v626 = vpop.f32.mrb[0].mxu0
      %v627 = vpop.f32.mrb[0].mxu0
      %v628 = vadd.f32 0.0, %v627
      %v629 = vpop.f32.mrb[0].mxu0
      %630 = vmatprep.mubr.bf16.mxu0 0
      %631 = vmatmul.mubr.bf16.gmra.mrb[0].mxu0 %v462
      %v632 = vpop.f32.mrb[0].mxu0
      %v633 = vadd.f32 0.0, %v632
      %v634 = vpop.f32.mrb[0].mxu0
      %v635 = vpop.f32.mrb[0].mxu0
      %v636 = vadd.f32 0.0, %v635
      %v637 = vpop.f32.mrb[0].mxu0
      %638 = vmatprep.mubr.bf16.mxu0 0
      %639 = vmatmul.mubr.bf16.gmra.mrb[0].mxu0 %v463
      %v640 = vpop.f32.mrb[0].mxu0
      %v641 = vadd.f32 0.0, %v640
      %v642 = vpop.f32.mrb[0].mxu0
      %v643 = vpop.f32.mrb[0].mxu0
      %v644 = vadd.f32 0.0, %v643
      %v645 = vpop.f32.mrb[0].mxu0
      %646 = vmatprep.mubr.bf16.mxu0 0
      %647 = vmatmul.mubr.bf16.gmra.mrb[0].mxu0 %v464
      %v648 = vpop.f32.mrb[0].mxu0
      %v649 = vadd.f32 0.0, %v648
      %v650 = vpop.f32.mrb[0].mxu0
      %v651 = vpop.f32.mrb[0].mxu0
      %v652 = vadd.f32 0.0, %v651
      %v653 = vpop.f32.mrb[0].mxu0
      %654 = vmatprep.mubr.bf16.mxu0 0
      %655 = vmatmul.mubr.bf16.gmra.mrb[0].mxu0 %v465
      %v656 = vpop.f32.mrb[0].mxu0
      %v657 = vadd.f32 0.0, %v656
      %v658 = vpop.f32.mrb[0].mxu0
      %v659 = vpop.f32.mrb[0].mxu0
      %v660 = vadd.f32 0.0, %v659
      %v661 = vpop.f32.mrb[0].mxu0
      %662 = vmatprep.mubr.bf16.mxu0 0
      %663 = vmatmul.mubr.bf16.gmra.mrb[0].mxu0 %v466
      %v664 = vpop.f32.mrb[0].mxu0
      %v665 = vadd.f32 0.0, %v664
      %v666 = vpop.f32.mrb[0].mxu0
      %v667 = vpop.f32.mrb[0].mxu0
      %v668 = vadd.f32 0.0, %v667
      %v669 = vpop.f32.mrb[0].mxu0
      %670 = vmatprep.mubr.bf16.mxu0 0
      %671 = vmatmul.mubr.bf16.gmra.mrb[0].mxu0 %v467
      %v672 = vpop.f32.mrb[0].mxu0
      %v673 = vadd.f32 0.0, %v672
      %v674 = vpop.f32.mrb[0].mxu0
      %v675 = vpop.f32.mrb[0].mxu0
      %v676 = vadd.f32 0.0, %v675
      %v677 = vpop.f32.mrb[0].mxu0
      %678 = vmatprep.mubr.bf16.mxu0 0
      %679 = vmatmul.mubr.bf16.gmra.mrb[0].mxu0 %v468
      %v680 = vpop.f32.mrb[0].mxu0
      %v681 = vadd.f32 0.0, %v680
      %v682 = vpop.f32.mrb[0].mxu0
      %v683 = vpop.f32.mrb[0].mxu0
      %v684 = vadd.f32 0.0, %v683
      %v685 = vpop.f32.mrb[0].mxu0
      %686 = vmatprep.mubr.bf16.mxu0 0
      %687 = vmatmul.mubr.bf16.gmra.mrb[0].mxu0 %v469
      %v688 = vpop.f32.mrb[0].mxu0
      %v689 = vadd.f32 0.0, %v688
      %v690 = vpop.f32.mrb[0].mxu0
      %v691 = vpop.f32.mrb[0].mxu0
      %v692 = vadd.f32 0.0, %v691
      %v693 = vpop.f32.mrb[0].mxu0
      %694 = vdwg.mxu0
      %v695 = vld [vmem:[%s3] sm:$0x1]
      %v697 = vlaneseq
      %v698 = vshrl.u32 %v697, 7
      %v699 = vsub.s32 0, %v698
      %v700 = vrot.slane %v695, %v699
      %v702 = vmul.f32 %v569, %v700
      %v703 = vmul.f32 %v572, %v700
      %v704 = vmul.f32 %v577, %v700
      %v705 = vmul.f32 %v580, %v700
      %v706 = vmul.f32 %v585, %v700
      %v707 = vmul.f32 %v588, %v700
      %v708 = vmul.f32 %v593, %v700
      %v709 = vmul.f32 %v596, %v700
      %v710 = vmul.f32 %v601, %v700
      %v711 = vmul.f32 %v604, %v700
      %v712 = vmul.f32 %v609, %v700
      %v713 = vmul.f32 %v612, %v700
      %v714 = vmul.f32 %v617, %v700
      %v715 = vmul.f32 %v620, %v700
      %v716 = vmul.f32 %v625, %v700
      %v717 = vmul.f32 %v628, %v700
      %v718 = vmul.f32 %v633, %v700
      %v719 = vmul.f32 %v636, %v700
      %v720 = vmul.f32 %v641, %v700
      %v721 = vmul.f32 %v644, %v700
      %v722 = vmul.f32 %v649, %v700
      %v723 = vmul.f32 %v652, %v700
      %v724 = vmul.f32 %v657, %v700
      %v725 = vmul.f32 %v660, %v700
      %v726 = vmul.f32 %v665, %v700
      %v727 = vmul.f32 %v668, %v700
      %v728 = vmul.f32 %v673, %v700
      %v729 = vmul.f32 %v676, %v700
      %v730 = vmul.f32 %v681, %v700
      %v731 = vmul.f32 %v684, %v700
      %v732 = vmul.f32 %v689, %v700
      %v733 = vmul.f32 %v692, %v700
      %v734 = vld [vmem:[%s4] sm:$0x1]
      %v736 = vlaneseq
      %v737 = vshrl.u32 %v736, 7
      %v738 = vsub.s32 0, %v737
      %v739 = vrot.slane %v734, %v738
      %v741 = vadd.f32 %v702, %v739
      %v742 = vadd.f32 %v703, %v739
      %v743 = vadd.f32 %v704, %v739
      %v744 = vadd.f32 %v705, %v739
      %v745 = vadd.f32 %v706, %v739
      %v746 = vadd.f32 %v707, %v739
      %v747 = vadd.f32 %v708, %v739
      %v748 = vadd.f32 %v709, %v739
      %v749 = vadd.f32 %v710, %v739
      %v750 = vadd.f32 %v711, %v739
      %v751 = vadd.f32 %v712, %v739
      %v752 = vadd.f32 %v713, %v739
      %v753 = vadd.f32 %v714, %v739
      %v754 = vadd.f32 %v715, %v739
      %v755 = vadd.f32 %v716, %v739
      %v756 = vadd.f32 %v717, %v739
      %v757 = vadd.f32 %v718, %v739
      %v758 = vadd.f32 %v719, %v739
      %v759 = vadd.f32 %v720, %v739
      %v760 = vadd.f32 %v721, %v739
      %v761 = vadd.f32 %v722, %v739
      %v762 = vadd.f32 %v723, %v739
      %v763 = vadd.f32 %v724, %v739
      %v764 = vadd.f32 %v725, %v739
      %v765 = vadd.f32 %v726, %v739
      %v766 = vadd.f32 %v727, %v739
      %v767 = vadd.f32 %v728, %v739
      %v768 = vadd.f32 %v729, %v739
      %v769 = vadd.f32 %v730, %v739
      %v770 = vadd.f32 %v731, %v739
      %v771 = vadd.f32 %v732, %v739
      %v772 = vadd.f32 %v733, %v739
      %v773 = vld [vmem:[%s324] sm:$0xf]
      %v774 = vld [vmem:[%s324 + $0x4] sm:$0xf]
      %v775 = vld [vmem:[%s324 + $0x8] sm:$0xf]
      %v776 = vld [vmem:[%s324 + $0xc] sm:$0xf]
      %v777 = vld [vmem:[%s324 + $0x10] sm:$0xf]
      %v778 = vld [vmem:[%s324 + $0x14] sm:$0xf]
      %v779 = vld [vmem:[%s324 + $0x18] sm:$0xf]
      %v780 = vld [vmem:[%s324 + $0x1c] sm:$0xf]
      %v781 = vld [vmem:[%s324 + $0x20] sm:$0xf]
      %v782 = vld [vmem:[%s324 + $0x24] sm:$0xf]
      %v783 = vld [vmem:[%s324 + $0x28] sm:$0xf]
      %v784 = vld [vmem:[%s324 + $0x2c] sm:$0xf]
      %v785 = vld [vmem:[%s324 + $0x30] sm:$0xf]
      %v786 = vld [vmem:[%s324 + $0x34] sm:$0xf]
      %v787 = vld [vmem:[%s324 + $0x38] sm:$0xf]
      %v788 = vld [vmem:[%s324 + $0x3c] sm:$0xf]
      %v789 = vld [vmem:[%s324 + $0x40] sm:$0xf]
      %v790 = vld [vmem:[%s324 + $0x44] sm:$0xf]
      %v791 = vld [vmem:[%s324 + $0x48] sm:$0xf]
      %v792 = vld [vmem:[%s324 + $0x4c] sm:$0xf]
      %v793 = vld [vmem:[%s324 + $0x50] sm:$0xf]
      %v794 = vld [vmem:[%s324 + $0x54] sm:$0xf]
      %v795 = vld [vmem:[%s324 + $0x58] sm:$0xf]
      %v796 = vld [vmem:[%s324 + $0x5c] sm:$0xf]
      %v797 = vld [vmem:[%s324 + $0x60] sm:$0xf]
      %v798 = vld [vmem:[%s324 + $0x64] sm:$0xf]
      %v799 = vld [vmem:[%s324 + $0x68] sm:$0xf]
      %v800 = vld [vmem:[%s324 + $0x6c] sm:$0xf]
      %v801 = vld [vmem:[%s324 + $0x70] sm:$0xf]
      %v802 = vld [vmem:[%s324 + $0x74] sm:$0xf]
      %v803 = vld [vmem:[%s324 + $0x78] sm:$0xf]
      %v804 = vld [vmem:[%s324 + $0x7c] sm:$0xf]
      %v805 = vunpack.c.l.bf16 %v773
      %v806 = vunpack.c.l.bf16 %v774
      %v807 = vunpack.c.l.bf16 %v775
      %v808 = vunpack.c.l.bf16 %v776
      %v809 = vunpack.c.l.bf16 %v777
      %v810 = vunpack.c.l.bf16 %v778
      %v811 = vunpack.c.l.bf16 %v779
      %v812 = vunpack.c.l.bf16 %v780
      %v813 = vunpack.c.l.bf16 %v781
      %v814 = vunpack.c.l.bf16 %v782
      %v815 = vunpack.c.l.bf16 %v783
      %v816 = vunpack.c.l.bf16 %v784
      %v817 = vunpack.c.l.bf16 %v785
      %v818 = vunpack.c.l.bf16 %v786
      %v819 = vunpack.c.l.bf16 %v787
      %v820 = vunpack.c.l.bf16 %v788
      %v821 = vunpack.c.l.bf16 %v789
      %v822 = vunpack.c.l.bf16 %v790
      %v823 = vunpack.c.l.bf16 %v791
      %v824 = vunpack.c.l.bf16 %v792
      %v825 = vunpack.c.l.bf16 %v793
      %v826 = vunpack.c.l.bf16 %v794
      %v827 = vunpack.c.l.bf16 %v795
      %v828 = vunpack.c.l.bf16 %v796
      %v829 = vunpack.c.l.bf16 %v797
      %v830 = vunpack.c.l.bf16 %v798
      %v831 = vunpack.c.l.bf16 %v799
      %v832 = vunpack.c.l.bf16 %v800
      %v833 = vunpack.c.l.bf16 %v801
      %v834 = vunpack.c.l.bf16 %v802
      %v835 = vunpack.c.l.bf16 %v803
      %v836 = vunpack.c.l.bf16 %v804
      %v837 = vadd.f32 %v741, %v805
      %v838 = vadd.f32 %v742, %v806
      %v839 = vadd.f32 %v743, %v807
      %v840 = vadd.f32 %v744, %v808
      %v841 = vadd.f32 %v745, %v809
      %v842 = vadd.f32 %v746, %v810
      %v843 = vadd.f32 %v747, %v811
      %v844 = vadd.f32 %v748, %v812
      %v845 = vadd.f32 %v749, %v813
      %v846 = vadd.f32 %v750, %v814
      %v847 = vadd.f32 %v751, %v815
      %v848 = vadd.f32 %v752, %v816
      %v849 = vadd.f32 %v753, %v817
      %v850 = vadd.f32 %v754, %v818
      %v851 = vadd.f32 %v755, %v819
      %v852 = vadd.f32 %v756, %v820
      %v853 = vadd.f32 %v757, %v821
      %v854 = vadd.f32 %v758, %v822
      %v855 = vadd.f32 %v759, %v823
      %v856 = vadd.f32 %v760, %v824
      %v857 = vadd.f32 %v761, %v825
      %v858 = vadd.f32 %v762, %v826
      %v859 = vadd.f32 %v763, %v827
      %v860 = vadd.f32 %v764, %v828
      %v861 = vadd.f32 %v765, %v829
      %v862 = vadd.f32 %v766, %v830
      %v863 = vadd.f32 %v767, %v831
      %v864 = vadd.f32 %v768, %v832
      %v865 = vadd.f32 %v769, %v833
      %v866 = vadd.f32 %v770, %v834
      %v867 = vadd.f32 %v771, %v835
      %v868 = vadd.f32 %v772, %v836
      %v869 = vmax.f32 %v837, 0.0
      %v870 = vmax.f32 %v838, 0.0
      %v871 = vmax.f32 %v839, 0.0
      %v872 = vmax.f32 %v840, 0.0
      %v873 = vmax.f32 %v841, 0.0
      %v874 = vmax.f32 %v842, 0.0
      %v875 = vmax.f32 %v843, 0.0
      %v876 = vmax.f32 %v844, 0.0
      %v877 = vmax.f32 %v845, 0.0
      %v878 = vmax.f32 %v846, 0.0
      %v879 = vmax.f32 %v847, 0.0
      %v880 = vmax.f32 %v848, 0.0
      %v881 = vmax.f32 %v849, 0.0
      %v882 = vmax.f32 %v850, 0.0
      %v883 = vmax.f32 %v851, 0.0
      %v884 = vmax.f32 %v852, 0.0
      %v885 = vmax.f32 %v853, 0.0
      %v886 = vmax.f32 %v854, 0.0
      %v887 = vmax.f32 %v855, 0.0
      %v888 = vmax.f32 %v856, 0.0
      %v889 = vmax.f32 %v857, 0.0
      %v890 = vmax.f32 %v858, 0.0
      %v891 = vmax.f32 %v859, 0.0
      %v892 = vmax.f32 %v860, 0.0
      %v893 = vmax.f32 %v861, 0.0
      %v894 = vmax.f32 %v862, 0.0
      %v895 = vmax.f32 %v863, 0.0
      %v896 = vmax.f32 %v864, 0.0
      %v897 = vmax.f32 %v865, 0.0
      %v898 = vmax.f32 %v866, 0.0
      %v899 = vmax.f32 %v867, 0.0
      %v900 = vmax.f32 %v868, 0.0
      %v901 = vpack.c.bf16 %v870, %v869
      %v902 = vpack.c.bf16 %v872, %v871
      %v903 = vpack.c.bf16 %v874, %v873
      %v904 = vpack.c.bf16 %v876, %v875
      %v905 = vpack.c.bf16 %v878, %v877
      %v906 = vpack.c.bf16 %v880, %v879
      %v907 = vpack.c.bf16 %v882, %v881
      %v908 = vpack.c.bf16 %v884, %v883
      %v909 = vpack.c.bf16 %v886, %v885
      %v910 = vpack.c.bf16 %v888, %v887
      %v911 = vpack.c.bf16 %v890, %v889
      %v912 = vpack.c.bf16 %v892, %v891
      %v913 = vpack.c.bf16 %v894, %v893
      %v914 = vpack.c.bf16 %v896, %v895
      %v915 = vpack.c.bf16 %v898, %v897
      %v916 = vpack.c.bf16 %v900, %v899
      %v933 = vunpack.c.l.b16 %v901
      %v934 = vunpack.c.h.b16 %v901
      %v935 = vunpack.c.l.b16 %v902
      %v936 = vunpack.c.h.b16 %v902
      %v937 = vunpack.c.l.b16 %v903
      %v938 = vunpack.c.h.b16 %v903
      %v939 = vunpack.c.l.b16 %v904
      %v940 = vunpack.c.h.b16 %v904
      %v941 = vunpack.c.l.b16 %v905
      %v942 = vunpack.c.h.b16 %v905
      %v943 = vunpack.c.l.b16 %v906
      %v944 = vunpack.c.h.b16 %v906
      %v945 = vunpack.c.l.b16 %v907
      %v946 = vunpack.c.h.b16 %v907
      %v947 = vunpack.c.l.b16 %v908
      %v948 = vunpack.c.h.b16 %v908
      %v949 = vunpack.c.l.b16 %v909
      %v950 = vunpack.c.h.b16 %v909
      %v951 = vunpack.c.l.b16 %v910
      %v952 = vunpack.c.h.b16 %v910
      %v953 = vunpack.c.l.b16 %v911
      %v954 = vunpack.c.h.b16 %v911
      %v955 = vunpack.c.l.b16 %v912
      %v956 = vunpack.c.h.b16 %v912
      %v957 = vunpack.c.l.b16 %v913
      %v958 = vunpack.c.h.b16 %v913
      %v959 = vunpack.c.l.b16 %v914
      %v960 = vunpack.c.h.b16 %v914
      %v961 = vunpack.c.l.b16 %v915
      %v962 = vunpack.c.h.b16 %v915
      %v963 = vunpack.c.l.b16 %v916
      %v964 = vunpack.c.h.b16 %v916
      %v965 = vpack.c.b16 %v933, %v933
      %v966 = vpack.c.b16 %v934, %v934
      %v967 = vpack.c.b16 %v935, %v935
      %v968 = vpack.c.b16 %v936, %v936
      %v969 = vpack.c.b16 %v937, %v937
      %v970 = vpack.c.b16 %v938, %v938
      %v971 = vpack.c.b16 %v939, %v939
      %v972 = vpack.c.b16 %v940, %v940
      %v973 = vpack.c.b16 %v941, %v941
      %v974 = vpack.c.b16 %v942, %v942
      %v975 = vpack.c.b16 %v943, %v943
      %v976 = vpack.c.b16 %v944, %v944
      %v977 = vpack.c.b16 %v945, %v945
      %v978 = vpack.c.b16 %v946, %v946
      %v979 = vpack.c.b16 %v947, %v947
      %v980 = vpack.c.b16 %v948, %v948
      %v981 = vpack.c.b16 %v949, %v949
      %v982 = vpack.c.b16 %v950, %v950
      %v983 = vpack.c.b16 %v951, %v951
      %v984 = vpack.c.b16 %v952, %v952
      %v985 = vpack.c.b16 %v953, %v953
      %v986 = vpack.c.b16 %v954, %v954
      %v987 = vpack.c.b16 %v955, %v955
      %v988 = vpack.c.b16 %v956, %v956
      %v989 = vpack.c.b16 %v957, %v957
      %v990 = vpack.c.b16 %v958, %v958
      %v991 = vpack.c.b16 %v959, %v959
      %v992 = vpack.c.b16 %v960, %v960
      %v993 = vpack.c.b16 %v961, %v961
      %v994 = vpack.c.b16 %v962, %v962
      %v995 = vpack.c.b16 %v963, %v963
      %v996 = vpack.c.b16 %v964, %v964
      %1029 = vst [vmem:[%s334] sm:$0xf] %v965
      %1030 = vst [vmem:[%s334 + $0x4] sm:$0xf] %v966
      %1031 = vst [vmem:[%s334 + $0x8] sm:$0xf] %v967
      %1032 = vst [vmem:[%s334 + $0xc] sm:$0xf] %v968
      %1033 = vst [vmem:[%s334 + $0x10] sm:$0xf] %v969
      %1034 = vst [vmem:[%s334 + $0x14] sm:$0xf] %v970
      %1035 = vst [vmem:[%s334 + $0x18] sm:$0xf] %v971
      %1036 = vst [vmem:[%s334 + $0x1c] sm:$0xf] %v972
      %1037 = vst [vmem:[%s334 + $0x20] sm:$0xf] %v973
      %1038 = vst [vmem:[%s334 + $0x24] sm:$0xf] %v974
      %1039 = vst [vmem:[%s334 + $0x28] sm:$0xf] %v975
      %1040 = vst [vmem:[%s334 + $0x2c] sm:$0xf] %v976
      %1041 = vst [vmem:[%s334 + $0x30] sm:$0xf] %v977
      %1042 = vst [vmem:[%s334 + $0x34] sm:$0xf] %v978
      %1043 = vst [vmem:[%s334 + $0x38] sm:$0xf] %v979
      %1044 = vst [vmem:[%s334 + $0x3c] sm:$0xf] %v980
      %1045 = vst [vmem:[%s334 + $0x40] sm:$0xf] %v981
      %1046 = vst [vmem:[%s334 + $0x44] sm:$0xf] %v982
      %1047 = vst [vmem:[%s334 + $0x48] sm:$0xf] %v983
      %1048 = vst [vmem:[%s334 + $0x4c] sm:$0xf] %v984
      %1049 = vst [vmem:[%s334 + $0x50] sm:$0xf] %v985
      %1050 = vst [vmem:[%s334 + $0x54] sm:$0xf] %v986
      %1051 = vst [vmem:[%s334 + $0x58] sm:$0xf] %v987
      %1052 = vst [vmem:[%s334 + $0x5c] sm:$0xf] %v988
      %1053 = vst [vmem:[%s334 + $0x60] sm:$0xf] %v989
      %1054 = vst [vmem:[%s334 + $0x64] sm:$0xf] %v990
      %1055 = vst [vmem:[%s334 + $0x68] sm:$0xf] %v991
      %1056 = vst [vmem:[%s334 + $0x6c] sm:$0xf] %v992
      %1057 = vst [vmem:[%s334 + $0x70] sm:$0xf] %v993
      %1058 = vst [vmem:[%s334 + $0x74] sm:$0xf] %v994
      %1059 = vst [vmem:[%s334 + $0x78] sm:$0xf] %v995
      %1060 = vst [vmem:[%s334 + $0x7c] sm:$0xf] %v996
      %v1061 = vadd.f32 %v869, %v870
      %v1062 = vadd.f32 %v1061, %v871
      %v1063 = vadd.f32 %v1062, %v872
      %v1064 = vadd.f32 %v1063, %v873
      %v1065 = vadd.f32 %v1064, %v874
      %v1066 = vadd.f32 %v1065, %v875
      %v1067 = vadd.f32 %v1066, %v876
      %v1068 = vadd.f32 %v1067, %v877
      %v1069 = vadd.f32 %v1068, %v878
      %v1070 = vadd.f32 %v1069, %v879
      %v1071 = vadd.f32 %v1070, %v880
      %v1072 = vadd.f32 %v1071, %v881
      %v1073 = vadd.f32 %v1072, %v882
      %v1074 = vadd.f32 %v1073, %v883
      %v1075 = vadd.f32 %v1074, %v884
      %v1076 = vadd.f32 %v1075, %v885
      %v1077 = vadd.f32 %v1076, %v886
      %v1078 = vadd.f32 %v1077, %v887
      %v1079 = vadd.f32 %v1078, %v888
      %v1080 = vadd.f32 %v1079, %v889
      %v1081 = vadd.f32 %v1080, %v890
      %v1082 = vadd.f32 %v1081, %v891
      %v1083 = vadd.f32 %v1082, %v892
      %v1084 = vadd.f32 %v1083, %v893
      %v1085 = vadd.f32 %v1084, %v894
      %v1086 = vadd.f32 %v1085, %v895
      %v1087 = vadd.f32 %v1086, %v896
      %v1088 = vadd.f32 %v1087, %v897
      %v1089 = vadd.f32 %v1088, %v898
      %v1090 = vadd.f32 %v1089, %v899
      %v1091 = vadd.f32 %v1090, %v900
      %v1092 = vrot.slane %v1091, 4
      %v1093 = vadd.f32 %v1091, %v1092
      %v1094 = vrot.slane %v1093, 2
      %v1095 = vadd.f32 %v1093, %v1094
      %v1096 = vrot.slane %v1095, 1
      %v1097 = vadd.f32 %v1095, %v1096
      %1098 = vst [vmem:[%s339] sm:$0x1] %v1097
      %s1099 = smul.u32 32, %s23
      %p1100 = scmp.lt.s32.totalorder %s22, 1
      %s1101 = scalar_select %p1100, %s22, 1
      %p1102 = scmp.lt.s32.totalorder %s1099, 31
      %s1103 = scalar_select %p1102, %s1099, 31
      %s1104 = smul.addr %s1101, 32
      %s1105 = sadd.s32 %s1103, %s1104
      %s1106 = smul.addr %s1105, 4
      %s1107 = scalar_lea.vmem %s5, %s1106
      %s1108 = sadd.s32 %s22, %s23
      %p1109 = scmp.lt.s32.totalorder %s1108, 1
      %s1110 = scalar_select %p1109, %s1108, 1
      %s1111 = scalar_lea.vmem %s6, %s1110
      // Predicated region
      $region41: #{_lambda_.6} parent=39 // pred_check
        %p1112 = pneg %p169
      $region42: #{_lambda_.6} parent=39 // pred_check_branch
        %1114 = sbr.rel (%p1112) target = $region44
      $region43: #{_lambda_.6} parent=39 // pred_region
        %s1115 = smul.u32 32, %s23
      $region44: #{_lambda_.6} parent=39 // pred_fallthru
        _
      // Predicated region
      $region45: #{_lambda_.6} parent=39 // pred_check
        %p1116 = pneg %p197
      $region46: #{_lambda_.6} parent=39 // pred_check_branch
        %1118 = sbr.rel (%p1116) target = $region48
      $region47: #{_lambda_.6} parent=39 // pred_region
        %s1119 = sadd.s32 %s22, %s23
      $region48: #{_lambda_.6} parent=39 // pred_fallthru
        _
    $region40: #{_lambda_.6} parent=5 // pred_fallthru
      _
    %p1120 = scmp.le.s32.totalorder 2, %s13
    // Predicated region
    $region49: #{_lambda_.6} parent=5 // pred_check
      %p1121 = pneg %p1120
    $region50: #{_lambda_.6} parent=5 // pred_check_branch
      %1123 = sbr.rel (%p1121) target = $region52
    $region51: #{_lambda_.6} parent=5 // pred_region
      %s1124 = ssub.s32 %s13, 2
      // Predicated region
      $region53: #{_lambda_.6} parent=51 // pred_check
        %p1125 = pneg %p175
      $region54: #{_lambda_.6} parent=51 // pred_check_branch
        %1127 = sbr.rel (%p1125) target = $region56
      $region55: #{_lambda_.6} parent=51 // pred_region
        %s1128 = smul.u32 32, %s25
        %p1129 = scmp.lt.s32.totalorder %s24, 1
        %s1130 = scalar_select %p1129, %s24, 1
        %p1131 = scmp.lt.s32.totalorder %s1128, 31
        %s1132 = scalar_select %p1131, %s1128, 31
        %s1133 = smul.addr %s1130, 32
        %s1134 = sadd.s32 %s1132, %s1133
        %s1135 = smul.addr %s1134, 4
        %s1136 = scalar_lea.vmem %s5, %s1135
      $region56: #{_lambda_.6} parent=51 // pred_fallthru
        _
      // Predicated region
      $region57: #{_lambda_.6} parent=51 // pred_check
        %p1137 = pneg %p203
      $region58: #{_lambda_.6} parent=51 // pred_check_branch
        %1139 = sbr.rel (%p1137) target = $region60
      $region59: #{_lambda_.6} parent=51 // pred_region
        %s1140 = sadd.s32 %s24, %s25
        %p1141 = scmp.lt.s32.totalorder %s1140, 1
        %s1142 = scalar_select %p1141, %s1140, 1
        %s1143 = scalar_lea.vmem %s6, %s1142
      $region60: #{_lambda_.6} parent=51 // pred_fallthru
        _
    $region52: #{_lambda_.6} parent=5 // pred_fallthru
      _
  $region6: #{_lambda_.6} parent=0 // loop_footer
    %s17 = sadd.s32 1, %s13
  $region7: #{_lambda_.6} parent=0 // loop_footer_branch
    %12 = sbr.rel target = $region3
  $region8: #{_lambda_.6} parent=0 // loop_exit
    _

// kernel: _lambda_.7
$region0: #{_lambda_.7}
  #allocation0 [shape = 'u32[]', space=smem, size = 0x4, offset = 0x4, fixed_abs, tag = 'smem constant byte address 0x4 - core index']
  #allocation1 [shape = 'u32[144,128]{1,0:T(1,128)}', space=vmem, size = 0x12000, scoped, tag = 'internal scratch']
  %s0 = inlined_call_operand.vmem [shape: bf16[2,256,128], index: 0, kind: input, shape index: {}]
  %s1 = inlined_call_operand.vmem [shape: f32[2,1,128], index: 1, kind: input, shape index: {}]
  %s2 = inlined_call_operand.vmem [shape: bf16[128,128], index: 2, kind: input, shape index: {}]
  %s3 = inlined_call_operand.vmem [shape: bf16[128,128], index: 3, kind: input, shape index: {}]
  %s4 = inlined_call_operand.vmem [shape: f32[2,16,256], index: 4, kind: output, shape index: {}]
  %s5 = sld [smem:[#allocation0]]
  $region49: #{_lambda_.7} parent=0
    _
  %s7 = ssub.s32 1, %s5
  %s8 = scalar_select 0, %s7, %s5
  loop: start=0, step=1, limit=4
  $region2: #{_lambda_.7} parent=0 // loop_pre_header
    _
  $region3: #{_lambda_.7} parent=0 // loop_header
    %s10 = sphi 0, %s14
    %p11 = scmp.ge.s32.totalorder %s10, 4
    %s17 = sphi 0, %s29
    %s18 = sphi 0, %s25
    %s19 = sphi 0, %s17
    %s20 = sphi 0, %s18
    %s21 = sphi 0, %s19
    %s22 = sphi 0, %s20
    %s34 = sphi 0, %s36
    %s37 = sphi 0, %s34
    %s38 = sphi 0, %s37
    %s54 = sphi 0, %s38
    %s60 = sphi 0, %s62
    %s63 = sphi 0, %s60
    %s64 = sphi 0, %s63
    %s80 = sphi 0, %s64
    %s84 = sphi 0, %s84
    %s86 = sphi 0, %s84
    %s87 = sphi 0, %s86
    %s101 = sphi 0, %s87
    %s105 = sphi 0, %s105
    %s107 = sphi 0, %s105
    %s108 = sphi 0, %s107
    %s122 = sphi 0, %s108
    %s130 = sphi 0, %s132
    %s133 = sphi 0, %s130
    %s134 = sphi 0, %s133
    %s150 = sphi 0, %s134
  $region4: #{_lambda_.7} parent=0 // loop_header_branch
    %13 = sbr.rel (%p11) target = $region8
  $region5: #{_lambda_.7} parent=0 // loop_body
    %s15 = ssub.s32 %s10, 1
    %s16 = ssub.s32 %s10, 2
    %s23 = sadd.s32 1, %s18
    %p24 = scmp.ge.s32.totalorder %s23, 1
    %s25 = scalar_select %p24, 0, %s23
    %s26 = sadd.s32 1, %s17
    %s27 = scalar_select %p24, %s26, %s17
    %p28 = scmp.ge.s32.totalorder %s27, 2
    %s29 = scalar_select %p28, 0, %s27
    %s30 = ssub.s32 %s17, %s29
    %s31 = ssub.s32 %s18, %s25
    %s32 = sor.u32 %s30, %s31
    %p33 = scmp.eq.s32.totalorder %s32, 0
    %s35 = sadd.s32 %s34, 1
    %s36 = scalar_select %p33, %s34, %s35
    %p39 = pneg %p33
    %p40 = scmp.eq.s32.totalorder %s10, 1
    %p41 = por %p39, %p40
    %p42 = scmp.ne.s32.totalorder %s34, %s37
    %p43 = scmp.eq.s32.totalorder %s10, 0
    %p44 = por %p42, %p43
    %p45 = scmp.ne.s32.totalorder %s34, %s37
    %p46 = scmp.eq.s32.totalorder %s15, 1
    %p47 = por %p45, %p46
    %p48 = scmp.ne.s32.totalorder %s37, %s38
    %p49 = scmp.eq.s32.totalorder %s15, 0
    %p50 = por %p48, %p49
    %p51 = scmp.ne.s32.totalorder %s37, %s38
    %p52 = scmp.eq.s32.totalorder %s16, 1
    %p53 = por %p51, %p52
    %p55 = scmp.ne.s32.totalorder %s38, %s54
    %p56 = scmp.eq.s32.totalorder %s16, 0
    %p57 = por %p55, %p56
    %s58 = ssub.s32 %s17, %s29
    %p59 = scmp.eq.s32.totalorder %s58, 0
    %s61 = sadd.s32 %s60, 1
    %s62 = scalar_select %p59, %s60, %s61
    %p65 = pneg %p59
    %p66 = scmp.eq.s32.totalorder %s10, 1
    %p67 = por %p65, %p66
    %p68 = scmp.ne.s32.totalorder %s60, %s63
    %p69 = scmp.eq.s32.totalorder %s10, 0
    %p70 = por %p68, %p69
    %p71 = scmp.ne.s32.totalorder %s60, %s63
    %p72 = scmp.eq.s32.totalorder %s15, 1
    %p73 = por %p71, %p72
    %p74 = scmp.ne.s32.totalorder %s63, %s64
    %p75 = scmp.eq.s32.totalorder %s15, 0
    %p76 = por %p74, %p75
    %p77 = scmp.ne.s32.totalorder %s63, %s64
    %p78 = scmp.eq.s32.totalorder %s16, 1
    %p79 = por %p77, %p78
    %p81 = scmp.ne.s32.totalorder %s64, %s80
    %p82 = scmp.eq.s32.totalorder %s16, 0
    %p83 = por %p81, %p82
    %s85 = sadd.s32 %s84, 1
    %p88 = scmp.eq.s32.totalorder %s10, 1
    %p89 = scmp.ne.s32.totalorder %s84, %s86
    %p90 = scmp.eq.s32.totalorder %s10, 0
    %p91 = por %p89, %p90
    %p92 = scmp.ne.s32.totalorder %s84, %s86
    %p93 = scmp.eq.s32.totalorder %s15, 1
    %p94 = por %p92, %p93
    %p95 = scmp.ne.s32.totalorder %s86, %s87
    %p96 = scmp.eq.s32.totalorder %s15, 0
    %p97 = por %p95, %p96
    %p98 = scmp.ne.s32.totalorder %s86, %s87
    %p99 = scmp.eq.s32.totalorder %s16, 1
    %p100 = por %p98, %p99
    %p102 = scmp.ne.s32.totalorder %s87, %s101
    %p103 = scmp.eq.s32.totalorder %s16, 0
    %p104 = por %p102, %p103
    %s106 = sadd.s32 %s105, 1
    %p109 = scmp.eq.s32.totalorder %s10, 1
    %p110 = scmp.ne.s32.totalorder %s105, %s107
    %p111 = scmp.eq.s32.totalorder %s10, 0
    %p112 = por %p110, %p111
    %p113 = scmp.ne.s32.totalorder %s105, %s107
    %p114 = scmp.eq.s32.totalorder %s15, 1
    %p115 = por %p113, %p114
    %p116 = scmp.ne.s32.totalorder %s107, %s108
    %p117 = scmp.eq.s32.totalorder %s15, 0
    %p118 = por %p116, %p117
    %p119 = scmp.ne.s32.totalorder %s107, %s108
    %p120 = scmp.eq.s32.totalorder %s16, 1
    %p121 = por %p119, %p120
    %p123 = scmp.ne.s32.totalorder %s108, %s122
    %p124 = scmp.eq.s32.totalorder %s16, 0
    %p125 = por %p123, %p124
    %s126 = ssub.s32 %s17, %s29
    %s127 = ssub.s32 %s18, %s25
    %s128 = sor.u32 %s126, %s127
    %p129 = scmp.eq.s32.totalorder %s128, 0
    %s131 = sadd.s32 %s130, 1
    %s132 = scalar_select %p129, %s130, %s131
    %p135 = pneg %p129
    %p136 = scmp.eq.s32.totalorder %s10, 1
    %p137 = por %p135, %p136
    %p138 = scmp.ne.s32.totalorder %s130, %s133
    %p139 = scmp.eq.s32.totalorder %s10, 0
    %p140 = por %p138, %p139
    %p141 = scmp.ne.s32.totalorder %s130, %s133
    %p142 = scmp.eq.s32.totalorder %s15, 1
    %p143 = por %p141, %p142
    %p144 = scmp.ne.s32.totalorder %s133, %s134
    %p145 = scmp.eq.s32.totalorder %s15, 0
    %p146 = por %p144, %p145
    %p147 = scmp.ne.s32.totalorder %s133, %s134
    %p148 = scmp.eq.s32.totalorder %s16, 1
    %p149 = por %p147, %p148
    %p151 = scmp.ne.s32.totalorder %s134, %s150
    %p152 = scmp.eq.s32.totalorder %s16, 0
    %p153 = por %p151, %p152
    %p154 = scmp.le.s32.totalorder 1, %s10
    %p155 = scmp.lt.s32.totalorder %s10, 3
    %p156 = pnand %p154, %p155
    %p157 = pneg %p156
    // Predicated region
    $region9: #{_lambda_.7} parent=5 // pred_check
      _
    $region10: #{_lambda_.7} parent=5 // pred_check_branch
      %159 = sbr.rel (%p156) target = $region12
    $region11: #{_lambda_.7} parent=5 // pred_region
      %s160 = ssub.s32 %s10, 1
      // Predicated region
      $region13: #{_lambda_.7} parent=11 // pred_check
        %p161 = pneg %p97
      $region14: #{_lambda_.7} parent=11 // pred_check_branch
        %163 = sbr.rel (%p161) target = $region16
      $region15: #{_lambda_.7} parent=11 // pred_region
        _
      $region16: #{_lambda_.7} parent=11 // pred_fallthru
        _
      // Predicated region
      $region17: #{_lambda_.7} parent=11 // pred_check
        %p164 = pneg %p118
      $region18: #{_lambda_.7} parent=11 // pred_check_branch
        %166 = sbr.rel (%p164) target = $region20
      $region19: #{_lambda_.7} parent=11 // pred_region
        _
      $region20: #{_lambda_.7} parent=11 // pred_fallthru
        _
    $region12: #{_lambda_.7} parent=5 // pred_fallthru
      _
    %p167 = scmp.lt.s32.totalorder %s10, 2
    // Predicated region
    $region21: #{_lambda_.7} parent=5 // pred_check
      %p168 = pneg %p167
    $region22: #{_lambda_.7} parent=5 // pred_check_branch
      %170 = sbr.rel (%p168) target = $region24
    $region23: #{_lambda_.7} parent=5 // pred_region
      // Predicated region
      $region25: #{_lambda_.7} parent=23 // pred_check
        %p171 = pneg %p44
      $region26: #{_lambda_.7} parent=23 // pred_check_branch
        %173 = sbr.rel (%p171) target = $region28
      $region27: #{_lambda_.7} parent=23 // pred_region
        %s174 = smul.u32 32, %s18
        %p175 = scmp.lt.s32.totalorder %s17, 1
        %s176 = scalar_select %p175, %s17, 1
        %p177 = scmp.lt.s32.totalorder %s174, 31
        %s178 = scalar_select %p177, %s174, 31
        %s179 = smul.addr %s176, 32
        %s180 = sadd.s32 %s178, %s179
        %s181 = smul.addr %s180, 4
        %s182 = scalar_lea.vmem %s0, %s181
        %s183 = smul.u32 32, %s18
      $region28: #{_lambda_.7} parent=23 // pred_fallthru
        _
      // Predicated region
      $region29: #{_lambda_.7} parent=23 // pred_check
        %p184 = pneg %p70
      $region30: #{_lambda_.7} parent=23 // pred_check_branch
        %186 = sbr.rel (%p184) target = $region32
      $region31: #{_lambda_.7} parent=23 // pred_region
        %p187 = scmp.lt.s32.totalorder %s17, 1
        %s188 = scalar_select %p187, %s17, 1
        %s189 = scalar_lea.vmem %s1, %s188
      $region32: #{_lambda_.7} parent=23 // pred_fallthru
        _
    $region24: #{_lambda_.7} parent=5 // pred_fallthru
      _
    %p190 = scmp.le.s32.totalorder 1, %s10
    %p191 = scmp.lt.s32.totalorder %s10, 3
    %p192 = pnand %p190, %p191
    %p193 = pneg %p192
    // Predicated region
    $region33: #{_lambda_.7} parent=5 // pred_check
      _
    $region34: #{_lambda_.7} parent=5 // pred_check_branch
      %195 = sbr.rel (%p192) target = $region36
    $region35: #{_lambda_.7} parent=5 // pred_region
      %s196 = ssub.s32 %s10, 1
      %s197 = smul.u32 32, %s20
      %p198 = scmp.lt.s32.totalorder %s19, 1
      %s199 = scalar_select %p198, %s19, 1
      %p200 = scmp.lt.s32.totalorder %s197, 31
      %s201 = scalar_select %p200, %s197, 31
      %s202 = smul.addr %s199, 32
      %s203 = sadd.s32 %s201, %s202
      %s204 = smul.addr %s203, 4
      %s205 = scalar_lea.vmem %s0, %s204
      %p206 = pneg %p50
      %p207 = pneg %p47
      %p208 = scmp.lt.s32.totalorder %s19, 1
      %s209 = scalar_select %p208, %s19, 1
      %s210 = scalar_lea.vmem %s1, %s209
      %p211 = pneg %p76
      %p212 = pneg %p73
      %p213 = pneg %p97
      %p214 = pneg %p94
      %p215 = pneg %p118
      %p216 = pneg %p115
      %p217 = pneg %p146
      %p218 = pneg %p143
      %s219 = smul.u32 2, %s20
      %p220 = scmp.lt.s32.totalorder %s19, 1
      %s221 = scalar_select %p220, %s19, 1
      %p222 = scmp.lt.s32.totalorder %s219, 1
      %s223 = scalar_select %p222, %s219, 1
      %s224 = smul.addr %s221, 4
      %s225 = sadd.s32 %s223, %s224
      %s226 = smul.addr %s225, 8
      %s227 = scalar_lea.vmem %s4, %s226
      %s228 = smul.u32 32, %s20
      %p229 = scmp.lt.s32.totalorder %s19, 1
      %s230 = scalar_select %p229, %s19, 1
      %p231 = scmp.lt.s32.totalorder %s228, 31
      %s232 = scalar_select %p231, %s228, 31
      %s233 = smul.addr %s230, 32
      %s234 = sadd.s32 %s232, %s233
      %s235 = smul.addr %s234, 4
      %s236 = scalar_lea.vmem %s0, %s235
      %s237 = smul.u32 32, %s20
      %p238 = scmp.lt.s32.totalorder %s19, 1
      %s239 = scalar_select %p238, %s19, 1
      %s240 = scalar_lea.vmem %s1, %s239
      %s241 = smul.u32 2, %s20
      %p242 = scmp.lt.s32.totalorder %s19, 1
      %s243 = scalar_select %p242, %s19, 1
      %p244 = scmp.lt.s32.totalorder %s241, 1
      %s245 = scalar_select %p244, %s241, 1
      %s246 = smul.addr %s243, 4
      %s247 = sadd.s32 %s245, %s246
      %s248 = smul.addr %s247, 8
      %s249 = scalar_lea.vmem %s4, %s248
      %s250 = smul.u32 2, %s20
      %v252 = vld [vmem:[%s240] sm:$0x1]
      %v253 = vadd.f32 %v252, 0.0
      %v254 = vmul.f32 %v253, 0.00390625
      %v255 = vpack.c.bf16 %v254, %v254
      %v256 = vld [vmem:[%s2] sm:$0xf]
      %v257 = vld [vmem:[%s2 + $0x4] sm:$0xf]
      %v258 = vld [vmem:[%s2 + $0x8] sm:$0xf]
      %v259 = vld [vmem:[%s2 + $0xc] sm:$0xf]
      %v260 = vld [vmem:[%s2 + $0x10] sm:$0xf]
      %v261 = vld [vmem:[%s2 + $0x14] sm:$0xf]
      %v262 = vld [vmem:[%s2 + $0x18] sm:$0xf]
      %v263 = vld [vmem:[%s2 + $0x1c] sm:$0xf]
      %v264 = vld [vmem:[%s2 + $0x20] sm:$0xf]
      %v265 = vld [vmem:[%s2 + $0x24] sm:$0xf]
      %v266 = vld [vmem:[%s2 + $0x28] sm:$0xf]
      %v267 = vld [vmem:[%s2 + $0x2c] sm:$0xf]
      %v268 = vld [vmem:[%s2 + $0x30] sm:$0xf]
      %v269 = vld [vmem:[%s2 + $0x34] sm:$0xf]
      %v270 = vld [vmem:[%s2 + $0x38] sm:$0xf]
      %v271 = vld [vmem:[%s2 + $0x3c] sm:$0xf]
      %v288 = vunpack.c.l.b16 %v256
      %v289 = vunpack.c.l.b16 %v257
      %v290 = vunpack.c.l.b16 %v258
      %v291 = vunpack.c.l.b16 %v259
      %v292 = vunpack.c.l.b16 %v260
      %v293 = vunpack.c.l.b16 %v261
      %v294 = vunpack.c.l.b16 %v262
      %v295 = vunpack.c.l.b16 %v263
      %v296 = vunpack.c.l.b16 %v264
      %v297 = vunpack.c.l.b16 %v265
      %v298 = vunpack.c.l.b16 %v266
      %v299 = vunpack.c.l.b16 %v267
      %v300 = vunpack.c.l.b16 %v268
      %v301 = vunpack.c.l.b16 %v269
      %v302 = vunpack.c.l.b16 %v270
      %v303 = vunpack.c.l.b16 %v271
      %v304 = vpack.c.b16 %v289, %v288
      %v305 = vpack.c.b16 %v291, %v290
      %v306 = vpack.c.b16 %v293, %v292
      %v307 = vpack.c.b16 %v295, %v294
      %v308 = vpack.c.b16 %v297, %v296
      %v309 = vpack.c.b16 %v299, %v298
      %v310 = vpack.c.b16 %v301, %v300
      %v311 = vpack.c.b16 %v303, %v302
      %320 = vmatprep.subr.bf16.mxu0 0
      %321 = vmatpush1.bf16.msra.mxu0 %v304
      %322 = vmatprep.subr.bf16.mxu0 0
      %323 = vmatpush1.bf16.msra.mxu0 %v305
      %324 = vmatprep.subr.bf16.mxu0 0
      %325 = vmatpush1.bf16.msra.mxu0 %v306
      %326 = vmatprep.subr.bf16.mxu0 0
      %327 = vmatpush1.bf16.msra.mxu0 %v307
      %328 = vmatprep.subr.bf16.mxu0 0
      %329 = vmatpush1.bf16.msra.mxu0 %v308
      %330 = vmatprep.subr.bf16.mxu0 0
      %331 = vmatpush1.bf16.msra.mxu0 %v309
      %332 = vmatprep.subr.bf16.mxu0 0
      %333 = vmatpush1.bf16.msra.mxu0 %v310
      %334 = vmatprep.subr.bf16.mxu0 0
      %335 = vmatpush1.bf16.msra.mxu0 %v311
      %336 = vmatprep.subr.bf16.mxu0 0
      %337 = vmatpush1.bf16.msra.mxu0 0
      %338 = vmatprep.subr.bf16.mxu0 0
      %339 = vmatpush1.bf16.msra.mxu0 0
      %340 = vmatprep.subr.bf16.mxu0 0
      %341 = vmatpush1.bf16.msra.mxu0 0
      %342 = vmatprep.subr.bf16.mxu0 0
      %343 = vmatpush1.bf16.msra.mxu0 0
      %344 = vmatprep.subr.bf16.mxu0 0
      %345 = vmatpush1.bf16.msra.mxu0 0
      %346 = vmatprep.subr.bf16.mxu0 0
      %347 = vmatpush1.bf16.msra.mxu0 0
      %348 = vmatprep.subr.bf16.mxu0 0
      %349 = vmatpush1.bf16.msra.mxu0 0
      %350 = vmatprep.subr.bf16.mxu0 0
      %351 = vmatpush1.bf16.msra.mxu0 0
      %352 = vmatprep.mubr.bf16.mxu0 0
      %353 = vmatmul.mubr.bf16.gmra.mrb[0].mxu0 %v255
      %v354 = vpop.f32.mrb[0].mxu0
      %v355 = vadd.f32 0.0, %v354
      %v356 = vpop.f32.mrb[0].mxu0
      %v357 = vpop.f32.mrb[0].mxu0
      %v358 = vpop.f32.mrb[0].mxu0
      %359 = vdwg.mxu0
      %v360 = vmax.f32 %v355, 0.0
      %v361 = vpack.c.bf16 %v360, %v360
      %v362 = vld [vmem:[%s3] sm:$0xf]
      %v363 = vld [vmem:[%s3 + $0x4] sm:$0xf]
      %v364 = vld [vmem:[%s3 + $0x8] sm:$0xf]
      %v365 = vld [vmem:[%s3 + $0xc] sm:$0xf]
      %v366 = vld [vmem:[%s3 + $0x10] sm:$0xf]
      %v367 = vld [vmem:[%s3 + $0x14] sm:$0xf]
      %v368 = vld [vmem:[%s3 + $0x18] sm:$0xf]
      %v369 = vld [vmem:[%s3 + $0x1c] sm:$0xf]
      %v370 = vld [vmem:[%s3 + $0x20] sm:$0xf]
      %v371 = vld [vmem:[%s3 + $0x24] sm:$0xf]
      %v372 = vld [vmem:[%s3 + $0x28] sm:$0xf]
      %v373 = vld [vmem:[%s3 + $0x2c] sm:$0xf]
      %v374 = vld [vmem:[%s3 + $0x30] sm:$0xf]
      %v375 = vld [vmem:[%s3 + $0x34] sm:$0xf]
      %v376 = vld [vmem:[%s3 + $0x38] sm:$0xf]
      %v377 = vld [vmem:[%s3 + $0x3c] sm:$0xf]
      %v394 = vunpack.c.l.b16 %v362
      %v395 = vunpack.c.l.b16 %v363
      %v396 = vunpack.c.l.b16 %v364
      %v397 = vunpack.c.l.b16 %v365
      %v398 = vunpack.c.l.b16 %v366
      %v399 = vunpack.c.l.b16 %v367
      %v400 = vunpack.c.l.b16 %v368
      %v401 = vunpack.c.l.b16 %v369
      %v402 = vunpack.c.l.b16 %v370
      %v403 = vunpack.c.l.b16 %v371
      %v404 = vunpack.c.l.b16 %v372
      %v405 = vunpack.c.l.b16 %v373
      %v406 = vunpack.c.l.b16 %v374
      %v407 = vunpack.c.l.b16 %v375
      %v408 = vunpack.c.l.b16 %v376
      %v409 = vunpack.c.l.b16 %v377
      %v410 = vpack.c.b16 %v395, %v394
      %v411 = vpack.c.b16 %v397, %v396
      %v412 = vpack.c.b16 %v399, %v398
      %v413 = vpack.c.b16 %v401, %v400
      %v414 = vpack.c.b16 %v403, %v402
      %v415 = vpack.c.b16 %v405, %v404
      %v416 = vpack.c.b16 %v407, %v406
      %v417 = vpack.c.b16 %v409, %v408
      %426 = vmatprep.subr.bf16.mxu0 0
      %427 = vmatpush1.bf16.msra.mxu0 %v410
      %428 = vmatprep.subr.bf16.mxu0 0
      %429 = vmatpush1.bf16.msra.mxu0 %v411
      %430 = vmatprep.subr.bf16.mxu0 0
      %431 = vmatpush1.bf16.msra.mxu0 %v412
      %432 = vmatprep.subr.bf16.mxu0 0
      %433 = vmatpush1.bf16.msra.mxu0 %v413
      %434 = vmatprep.subr.bf16.mxu0 0
      %435 = vmatpush1.bf16.msra.mxu0 %v414
      %436 = vmatprep.subr.bf16.mxu0 0
      %437 = vmatpush1.bf16.msra.mxu0 %v415
      %438 = vmatprep.subr.bf16.mxu0 0
      %439 = vmatpush1.bf16.msra.mxu0 %v416
      %440 = vmatprep.subr.bf16.mxu0 0
      %441 = vmatpush1.bf16.msra.mxu0 %v417
      %442 = vmatprep.subr.bf16.mxu0 0
      %443 = vmatpush1.bf16.msra.mxu0 0
      %444 = vmatprep.subr.bf16.mxu0 0
      %445 = vmatpush1.bf16.msra.mxu0 0
      %446 = vmatprep.subr.bf16.mxu0 0
      %447 = vmatpush1.bf16.msra.mxu0 0
      %448 = vmatprep.subr.bf16.mxu0 0
      %449 = vmatpush1.bf16.msra.mxu0 0
      %450 = vmatprep.subr.bf16.mxu0 0
      %451 = vmatpush1.bf16.msra.mxu0 0
      %452 = vmatprep.subr.bf16.mxu0 0
      %453 = vmatpush1.bf16.msra.mxu0 0
      %454 = vmatprep.subr.bf16.mxu0 0
      %455 = vmatpush1.bf16.msra.mxu0 0
      %456 = vmatprep.subr.bf16.mxu0 0
      %457 = vmatpush1.bf16.msra.mxu0 0
      %458 = vmatprep.mubr.bf16.mxu0 0
      %459 = vmatmul.mubr.bf16.gmra.mrb[0].mxu0 %v361
      %v460 = vpop.f32.mrb[0].mxu0
      %v461 = vadd.f32 0.0, %v460
      %v462 = vpop.f32.mrb[0].mxu0
      %v463 = vpop.f32.mrb[0].mxu0
      %v464 = vpop.f32.mrb[0].mxu0
      %465 = vdwg.mxu0
      %v466 = vsub.f32 0.0, %v461
      %v467 = vmul.f32 %v466, 1.442695
      %v468 = vpow.pop %v467
      %v469 = vadd.f32 %v468, 1.0
      %v470 = vrcp.pop %v469
      %v471 = vmul.f32 1.0, %v470
      %v472 = vld [vmem:[%s236] sm:$0xf]
      %v473 = vld [vmem:[%s236 + $0x4] sm:$0xf]
      %v474 = vld [vmem:[%s236 + $0x8] sm:$0xf]
      %v475 = vld [vmem:[%s236 + $0xc] sm:$0xf]
      %v476 = vld [vmem:[%s236 + $0x10] sm:$0xf]
      %v477 = vld [vmem:[%s236 + $0x14] sm:$0xf]
      %v478 = vld [vmem:[%s236 + $0x18] sm:$0xf]
      %v479 = vld [vmem:[%s236 + $0x1c] sm:$0xf]
      %v480 = vld [vmem:[%s236 + $0x20] sm:$0xf]
      %v481 = vld [vmem:[%s236 + $0x24] sm:$0xf]
      %v482 = vld [vmem:[%s236 + $0x28] sm:$0xf]
      %v483 = vld [vmem:[%s236 + $0x2c] sm:$0xf]
      %v484 = vld [vmem:[%s236 + $0x30] sm:$0xf]
      %v485 = vld [vmem:[%s236 + $0x34] sm:$0xf]
      %v486 = vld [vmem:[%s236 + $0x38] sm:$0xf]
      %v487 = vld [vmem:[%s236 + $0x3c] sm:$0xf]
      %v488 = vld [vmem:[%s236 + $0x40] sm:$0xf]
      %v489 = vld [vmem:[%s236 + $0x44] sm:$0xf]
      %v490 = vld [vmem:[%s236 + $0x48] sm:$0xf]
      %v491 = vld [vmem:[%s236 + $0x4c] sm:$0xf]
      %v492 = vld [vmem:[%s236 + $0x50] sm:$0xf]
      %v493 = vld [vmem:[%s236 + $0x54] sm:$0xf]
      %v494 = vld [vmem:[%s236 + $0x58] sm:$0xf]
      %v495 = vld [vmem:[%s236 + $0x5c] sm:$0xf]
      %v496 = vld [vmem:[%s236 + $0x60] sm:$0xf]
      %v497 = vld [vmem:[%s236 + $0x64] sm:$0xf]
      %v498 = vld [vmem:[%s236 + $0x68] sm:$0xf]
      %v499 = vld [vmem:[%s236 + $0x6c] sm:$0xf]
      %v500 = vld [vmem:[%s236 + $0x70] sm:$0xf]
      %v501 = vld [vmem:[%s236 + $0x74] sm:$0xf]
      %v502 = vld [vmem:[%s236 + $0x78] sm:$0xf]
      %v503 = vld [vmem:[%s236 + $0x7c] sm:$0xf]
      %v504 = vunpack.c.l.bf16 %v472
      %v505 = vunpack.c.l.bf16 %v473
      %v506 = vunpack.c.l.bf16 %v474
      %v507 = vunpack.c.l.bf16 %v475
      %v508 = vunpack.c.l.bf16 %v476
      %v509 = vunpack.c.l.bf16 %v477
      %v510 = vunpack.c.l.bf16 %v478
      %v511 = vunpack.c.l.bf16 %v479
      %v512 = vunpack.c.l.bf16 %v480
      %v513 = vunpack.c.l.bf16 %v481
      %v514 = vunpack.c.l.bf16 %v482
      %v515 = vunpack.c.l.bf16 %v483
      %v516 = vunpack.c.l.bf16 %v484
      %v517 = vunpack.c.l.bf16 %v485
      %v518 = vunpack.c.l.bf16 %v486
      %v519 = vunpack.c.l.bf16 %v487
      %v520 = vunpack.c.l.bf16 %v488
      %v521 = vunpack.c.l.bf16 %v489
      %v522 = vunpack.c.l.bf16 %v490
      %v523 = vunpack.c.l.bf16 %v491
      %v524 = vunpack.c.l.bf16 %v492
      %v525 = vunpack.c.l.bf16 %v493
      %v526 = vunpack.c.l.bf16 %v494
      %v527 = vunpack.c.l.bf16 %v495
      %v528 = vunpack.c.l.bf16 %v496
      %v529 = vunpack.c.l.bf16 %v497
      %v530 = vunpack.c.l.bf16 %v498
      %v531 = vunpack.c.l.bf16 %v499
      %v532 = vunpack.c.l.bf16 %v500
      %v533 = vunpack.c.l.bf16 %v501
      %v534 = vunpack.c.l.bf16 %v502
      %v535 = vunpack.c.l.bf16 %v503
      %v536 = vlaneseq
      %v537 = vshrl.u32 %v536, 7
      %v538 = vsub.s32 0, %v537
      %v539 = vrot.slane %v471, %v538
      %v540 = vmul.f32 %v504, %v539
      %v541 = vmul.f32 %v505, %v539
      %v542 = vmul.f32 %v506, %v539
      %v543 = vmul.f32 %v507, %v539
      %v544 = vmul.f32 %v508, %v539
      %v545 = vmul.f32 %v509, %v539
      %v546 = vmul.f32 %v510, %v539
      %v547 = vmul.f32 %v511, %v539
      %v548 = vmul.f32 %v512, %v539
      %v549 = vmul.f32 %v513, %v539
      %v550 = vmul.f32 %v514, %v539
      %v551 = vmul.f32 %v515, %v539
      %v552 = vmul.f32 %v516, %v539
      %v553 = vmul.f32 %v517, %v539
      %v554 = vmul.f32 %v518, %v539
      %v555 = vmul.f32 %v519, %v539
      %v556 = vmul.f32 %v520, %v539
      %v557 = vmul.f32 %v521, %v539
      %v558 = vmul.f32 %v522, %v539
      %v559 = vmul.f32 %v523, %v539
      %v560 = vmul.f32 %v524, %v539
      %v561 = vmul.f32 %v525, %v539
      %v562 = vmul.f32 %v526, %v539
      %v563 = vmul.f32 %v527, %v539
      %v564 = vmul.f32 %v528, %v539
      %v565 = vmul.f32 %v529, %v539
      %v566 = vmul.f32 %v530, %v539
      %v567 = vmul.f32 %v531, %v539
      %v568 = vmul.f32 %v532, %v539
      %v569 = vmul.f32 %v533, %v539
      %v570 = vmul.f32 %v534, %v539
      %v571 = vmul.f32 %v535, %v539
      %572 = vxpose.xlu0.b32.start [1/16] %v540, 128
      %573 = vxpose.xlu0.b32.cont [2/16] %v541, 128
      %574 = vxpose.xlu0.b32.cont [3/16] %v542, 128
      %575 = vxpose.xlu0.b32.cont [4/16] %v543, 128
      %576 = vxpose.xlu0.b32.cont [5/16] %v544, 128
      %577 = vxpose.xlu0.b32.cont [6/16] %v545, 128
      %578 = vxpose.xlu0.b32.cont [7/16] %v546, 128
      %579 = vxpose.xlu0.b32.cont [8/16] %v547, 128
      %580 = vxpose.xlu0.b32.cont [9/16] %v548, 128
      %581 = vxpose.xlu0.b32.cont [10/16] %v549, 128
      %582 = vxpose.xlu0.b32.cont [11/16] %v550, 128
      %583 = vxpose.xlu0.b32.cont [12/16] %v551, 128
      %584 = vxpose.xlu0.b32.cont [13/16] %v552, 128
      %585 = vxpose.xlu0.b32.cont [14/16] %v553, 128
      %586 = vxpose.xlu0.b32.cont [15/16] %v554, 128
      %587 = vxpose.xlu0.b32.end [16/16] %v555, 128
      %v588 = vpop.trf.xlu0
      %v589 = vpop.trf.xlu0
      %v590 = vpop.trf.xlu0
      %v591 = vpop.trf.xlu0
      %v592 = vpop.trf.xlu0
      %v593 = vpop.trf.xlu0
      %v594 = vpop.trf.xlu0
      %v595 = vpop.trf.xlu0
      %v596 = vpop.trf.xlu0
      %v597 = vpop.trf.xlu0
      %v598 = vpop.trf.xlu0
      %v599 = vpop.trf.xlu0
      %v600 = vpop.trf.xlu0
      %v601 = vpop.trf.xlu0
      %v602 = vpop.trf.xlu0
      %v603 = vpop.trf.xlu0
      %604 = vxpose.xlu0.b32.start [1/16] %v556, 128
      %605 = vxpose.xlu0.b32.cont [2/16] %v557, 128
      %606 = vxpose.xlu0.b32.cont [3/16] %v558, 128
      %607 = vxpose.xlu0.b32.cont [4/16] %v559, 128
      %608 = vxpose.xlu0.b32.cont [5/16] %v560, 128
      %609 = vxpose.xlu0.b32.cont [6/16] %v561, 128
      %610 = vxpose.xlu0.b32.cont [7/16] %v562, 128
      %611 = vxpose.xlu0.b32.cont [8/16] %v563, 128
      %612 = vxpose.xlu0.b32.cont [9/16] %v564, 128
      %613 = vxpose.xlu0.b32.cont [10/16] %v565, 128
      %614 = vxpose.xlu0.b32.cont [11/16] %v566, 128
      %615 = vxpose.xlu0.b32.cont [12/16] %v567, 128
      %616 = vxpose.xlu0.b32.cont [13/16] %v568, 128
      %617 = vxpose.xlu0.b32.cont [14/16] %v569, 128
      %618 = vxpose.xlu0.b32.cont [15/16] %v570, 128
      %619 = vxpose.xlu0.b32.end [16/16] %v571, 128
      %v620 = vpop.trf.xlu0
      %v621 = vpop.trf.xlu0
      %v622 = vpop.trf.xlu0
      %v623 = vpop.trf.xlu0
      %v624 = vpop.trf.xlu0
      %v625 = vpop.trf.xlu0
      %v626 = vpop.trf.xlu0
      %v627 = vpop.trf.xlu0
      %v628 = vpop.trf.xlu0
      %v629 = vpop.trf.xlu0
      %v630 = vpop.trf.xlu0
      %v631 = vpop.trf.xlu0
      %v632 = vpop.trf.xlu0
      %v633 = vpop.trf.xlu0
      %v634 = vpop.trf.xlu0
      %v635 = vpop.trf.xlu0
      %636 = vst [vmem:[%s249] sm:$0xff] %v588
      %637 = vst [vmem:[%s249 + $0x8] sm:$0xff] %v620
      %638 = vst [vmem:[%s249 + $0x10] sm:$0xff] %v589
      %639 = vst [vmem:[%s249 + $0x18] sm:$0xff] %v621
      %s640 = smul.u32 2, %s20
      %p641 = scmp.lt.s32.totalorder %s19, 1
      %s642 = scalar_select %p641, %s19, 1
      %p643 = scmp.lt.s32.totalorder %s640, 1
      %s644 = scalar_select %p643, %s640, 1
      %s645 = smul.addr %s642, 4
      %s646 = sadd.s32 %s644, %s645
      %s647 = smul.addr %s646, 8
      %s648 = scalar_lea.vmem %s4, %s647
      // Predicated region
      $region37: #{_lambda_.7} parent=35 // pred_check
        %p649 = pneg %p143
      $region38: #{_lambda_.7} parent=35 // pred_check_branch
        %651 = sbr.rel (%p649) target = $region40
      $region39: #{_lambda_.7} parent=35 // pred_region
        %s652 = smul.u32 2, %s20
      $region40: #{_lambda_.7} parent=35 // pred_fallthru
        _
    $region36: #{_lambda_.7} parent=5 // pred_fallthru
      _
    %p653 = scmp.le.s32.totalorder 2, %s10
    // Predicated region
    $region41: #{_lambda_.7} parent=5 // pred_check
      %p654 = pneg %p653
    $region42: #{_lambda_.7} parent=5 // pred_check_branch
      %656 = sbr.rel (%p654) target = $region44
    $region43: #{_lambda_.7} parent=5 // pred_region
      %s657 = ssub.s32 %s10, 2
      // Predicated region
      $region45: #{_lambda_.7} parent=43 // pred_check
        %p658 = pneg %p149
      $region46: #{_lambda_.7} parent=43 // pred_check_branch
        %660 = sbr.rel (%p658) target = $region48
      $region47: #{_lambda_.7} parent=43 // pred_region
        %s661 = smul.u32 2, %s22
        %p662 = scmp.lt.s32.totalorder %s21, 1
        %s663 = scalar_select %p662, %s21, 1
        %p664 = scmp.lt.s32.totalorder %s661, 1
        %s665 = scalar_select %p664, %s661, 1
        %s666 = smul.addr %s663, 4
        %s667 = sadd.s32 %s665, %s666
        %s668 = smul.addr %s667, 8
        %s669 = scalar_lea.vmem %s4, %s668
      $region48: #{_lambda_.7} parent=43 // pred_fallthru
        _
    $region44: #{_lambda_.7} parent=5 // pred_fallthru
      _
  $region6: #{_lambda_.7} parent=0 // loop_footer
    %s14 = sadd.s32 1, %s10
  $region7: #{_lambda_.7} parent=0 // loop_footer_branch
    %9 = sbr.rel target = $region3
  $region8: #{_lambda_.7} parent=0 // loop_exit
    _

// kernel: _lambda_.5
$region0: #{_lambda_.5}
  #allocation0 [shape = 'u32[]', space=smem, size = 0x4, offset = 0x4, fixed_abs, tag = 'smem constant byte address 0x4 - core index']
  #allocation1 [shape = 'u32[144,128]{1,0:T(1,128)}', space=vmem, size = 0x12000, scoped, tag = 'internal scratch']
  #allocation2 [shape = 'bf16[2,440,128]{2,1,0:T(8,128)(2,1)}', space=vmem, size = 0x37000, scoped, tag = 'scratch operand']
  #allocation3 [shape = 's32[2]{0}', space=sflag, size = 0x8, scoped, tag = 'scratch operand']
  #allocation4 [shape = 'f32[384,128]{1,0:T(8,128)}', space=vmem, size = 0x30000, scoped, tag = 'scratch operand']
  #allocation5 [shape = 's32[]', space=sflag, size = 0x4, offset = 0, fixed_abs, tag = 'sflag constant byte address 0x0 - dummy sync flag']
  #allocation6 [shape = 's32[]', space=sflag, size = 0x4, offset = 0, fixed_abs, tag = 'sflag constant byte address 0x0 - dummy sync flag']
  %s0 = inlined_call_operand.vmem [shape: bf16[2,432,128], index: 0, kind: input, shape index: {}]
  %s1 = inlined_call_operand.vmem [shape: bf16[9,128,128], index: 1, kind: input, shape index: {}]
  %s2 = inlined_call_operand.vmem [shape: f32[1,128], index: 2, kind: input, shape index: {}]
  %s3 = inlined_call_operand.vmem [shape: f32[1,128], index: 3, kind: input, shape index: {}]
  %s4 = inlined_call_operand.vmem [shape: bf16[2,16,16,128], index: 4, kind: output, shape index: {}]
  %s5 = sld [smem:[#allocation0]]
  $region121: #{_lambda_.5} parent=0
    _
  %s7 = ssub.s32 1, %s5
  %s8 = scalar_select 0, %s7, %s5
  loop: start=0, step=1, limit=4
  $region2: #{_lambda_.5} parent=0 // loop_pre_header
    _
  $region3: #{_lambda_.5} parent=0 // loop_header
    %s10 = sphi 0, %s14
    %p11 = scmp.ge.s32.totalorder %s10, 4
    %s17 = sphi 0, %s29
    %s18 = sphi 0, %s25
    %s19 = sphi 0, %s17
    %s20 = sphi 0, %s18
    %s21 = sphi 0, %s19
    %s22 = sphi 0, %s20
    %s30 = sphi 0, %s30
    %s32 = sphi 0, %s30
    %s33 = sphi 0, %s32
    %s47 = sphi 0, %s33
    %s51 = sphi 0, %s51
    %s53 = sphi 0, %s51
    %s54 = sphi 0, %s53
    %s68 = sphi 0, %s54
    %s72 = sphi 0, %s72
    %s74 = sphi 0, %s72
    %s75 = sphi 0, %s74
    %s89 = sphi 0, %s75
    %s97 = sphi 0, %s99
    %s100 = sphi 0, %s97
    %s101 = sphi 0, %s100
    %s117 = sphi 0, %s101
  $region4: #{_lambda_.5} parent=0 // loop_header_branch
    %13 = sbr.rel (%p11) target = $region8
  $region5: #{_lambda_.5} parent=0 // loop_body
    %s15 = ssub.s32 %s10, 1
    %s16 = ssub.s32 %s10, 2
    %s23 = sadd.s32 1, %s18
    %p24 = scmp.ge.s32.totalorder %s23, 1
    %s25 = scalar_select %p24, 0, %s23
    %s26 = sadd.s32 1, %s17
    %s27 = scalar_select %p24, %s26, %s17
    %p28 = scmp.ge.s32.totalorder %s27, 2
    %s29 = scalar_select %p28, 0, %s27
    %s31 = sadd.s32 %s30, 1
    %p34 = scmp.eq.s32.totalorder %s10, 1
    %p35 = scmp.ne.s32.totalorder %s30, %s32
    %p36 = scmp.eq.s32.totalorder %s10, 0
    %p37 = por %p35, %p36
    %p38 = scmp.ne.s32.totalorder %s30, %s32
    %p39 = scmp.eq.s32.totalorder %s15, 1
    %p40 = por %p38, %p39
    %p41 = scmp.ne.s32.totalorder %s32, %s33
    %p42 = scmp.eq.s32.totalorder %s15, 0
    %p43 = por %p41, %p42
    %p44 = scmp.ne.s32.totalorder %s32, %s33
    %p45 = scmp.eq.s32.totalorder %s16, 1
    %p46 = por %p44, %p45
    %p48 = scmp.ne.s32.totalorder %s33, %s47
    %p49 = scmp.eq.s32.totalorder %s16, 0
    %p50 = por %p48, %p49
    %s52 = sadd.s32 %s51, 1
    %p55 = scmp.eq.s32.totalorder %s10, 1
    %p56 = scmp.ne.s32.totalorder %s51, %s53
    %p57 = scmp.eq.s32.totalorder %s10, 0
    %p58 = por %p56, %p57
    %p59 = scmp.ne.s32.totalorder %s51, %s53
    %p60 = scmp.eq.s32.totalorder %s15, 1
    %p61 = por %p59, %p60
    %p62 = scmp.ne.s32.totalorder %s53, %s54
    %p63 = scmp.eq.s32.totalorder %s15, 0
    %p64 = por %p62, %p63
    %p65 = scmp.ne.s32.totalorder %s53, %s54
    %p66 = scmp.eq.s32.totalorder %s16, 1
    %p67 = por %p65, %p66
    %p69 = scmp.ne.s32.totalorder %s54, %s68
    %p70 = scmp.eq.s32.totalorder %s16, 0
    %p71 = por %p69, %p70
    %s73 = sadd.s32 %s72, 1
    %p76 = scmp.eq.s32.totalorder %s10, 1
    %p77 = scmp.ne.s32.totalorder %s72, %s74
    %p78 = scmp.eq.s32.totalorder %s10, 0
    %p79 = por %p77, %p78
    %p80 = scmp.ne.s32.totalorder %s72, %s74
    %p81 = scmp.eq.s32.totalorder %s15, 1
    %p82 = por %p80, %p81
    %p83 = scmp.ne.s32.totalorder %s74, %s75
    %p84 = scmp.eq.s32.totalorder %s15, 0
    %p85 = por %p83, %p84
    %p86 = scmp.ne.s32.totalorder %s74, %s75
    %p87 = scmp.eq.s32.totalorder %s16, 1
    %p88 = por %p86, %p87
    %p90 = scmp.ne.s32.totalorder %s75, %s89
    %p91 = scmp.eq.s32.totalorder %s16, 0
    %p92 = por %p90, %p91
    %s93 = ssub.s32 %s17, %s29
    %s94 = ssub.s32 %s18, %s25
    %s95 = sor.u32 %s93, %s94
    %p96 = scmp.eq.s32.totalorder %s95, 0
    %s98 = sadd.s32 %s97, 1
    %s99 = scalar_select %p96, %s97, %s98
    %p102 = pneg %p96
    %p103 = scmp.eq.s32.totalorder %s10, 1
    %p104 = por %p102, %p103
    %p105 = scmp.ne.s32.totalorder %s97, %s100
    %p106 = scmp.eq.s32.totalorder %s10, 0
    %p107 = por %p105, %p106
    %p108 = scmp.ne.s32.totalorder %s97, %s100
    %p109 = scmp.eq.s32.totalorder %s15, 1
    %p110 = por %p108, %p109
    %p111 = scmp.ne.s32.totalorder %s100, %s101
    %p112 = scmp.eq.s32.totalorder %s15, 0
    %p113 = por %p111, %p112
    %p114 = scmp.ne.s32.totalorder %s100, %s101
    %p115 = scmp.eq.s32.totalorder %s16, 1
    %p116 = por %p114, %p115
    %p118 = scmp.ne.s32.totalorder %s101, %s117
    %p119 = scmp.eq.s32.totalorder %s16, 0
    %p120 = por %p118, %p119
    %p121 = scmp.le.s32.totalorder 1, %s10
    %p122 = scmp.lt.s32.totalorder %s10, 3
    %p123 = pnand %p121, %p122
    %p124 = pneg %p123
    // Predicated region
    $region9: #{_lambda_.5} parent=5 // pred_check
      _
    $region10: #{_lambda_.5} parent=5 // pred_check_branch
      %126 = sbr.rel (%p123) target = $region12
    $region11: #{_lambda_.5} parent=5 // pred_region
      %s127 = ssub.s32 %s10, 1
      // Predicated region
      $region13: #{_lambda_.5} parent=11 // pred_check
        %p128 = pneg %p43
      $region14: #{_lambda_.5} parent=11 // pred_check_branch
        %130 = sbr.rel (%p128) target = $region16
      $region15: #{_lambda_.5} parent=11 // pred_region
        _
      $region16: #{_lambda_.5} parent=11 // pred_fallthru
        _
      // Predicated region
      $region17: #{_lambda_.5} parent=11 // pred_check
        %p131 = pneg %p64
      $region18: #{_lambda_.5} parent=11 // pred_check_branch
        %133 = sbr.rel (%p131) target = $region20
      $region19: #{_lambda_.5} parent=11 // pred_region
        _
      $region20: #{_lambda_.5} parent=11 // pred_fallthru
        _
      // Predicated region
      $region21: #{_lambda_.5} parent=11 // pred_check
        %p134 = pneg %p85
      $region22: #{_lambda_.5} parent=11 // pred_check_branch
        %136 = sbr.rel (%p134) target = $region24
      $region23: #{_lambda_.5} parent=11 // pred_region
        _
      $region24: #{_lambda_.5} parent=11 // pred_fallthru
        _
    $region12: #{_lambda_.5} parent=5 // pred_fallthru
      _
    %p137 = scmp.lt.s32.totalorder %s10, 2
    // Predicated region
    $region25: #{_lambda_.5} parent=5 // pred_check
      %p138 = pneg %p137
    $region26: #{_lambda_.5} parent=5 // pred_check_branch
      %140 = sbr.rel (%p138) target = $region28
    $region27: #{_lambda_.5} parent=5 // pred_region
      _
    $region28: #{_lambda_.5} parent=5 // pred_fallthru
      _
    %p141 = scmp.le.s32.totalorder 1, %s10
    %p142 = scmp.lt.s32.totalorder %s10, 3
    %p143 = pnand %p141, %p142
    %p144 = pneg %p143
    // Predicated region
    $region29: #{_lambda_.5} parent=5 // pred_check
      _
    $region30: #{_lambda_.5} parent=5 // pred_check_branch
      %146 = sbr.rel (%p143) target = $region32
    $region31: #{_lambda_.5} parent=5 // pred_region
      %s147 = ssub.s32 %s10, 1
      %p148 = pneg %p43
      %p149 = pneg %p40
      %p150 = pneg %p64
      %p151 = pneg %p61
      %p152 = pneg %p85
      %p153 = pneg %p82
      %p154 = pneg %p113
      %p155 = pneg %p110
      %s156 = smul.u32 16, %s20
      %p157 = scmp.lt.s32.totalorder %s19, 1
      %s158 = scalar_select %p157, %s19, 1
      %p159 = scmp.lt.s32.totalorder %s156, 15
      %s160 = scalar_select %p159, %s156, 15
      %s161 = smul.addr %s160, 2
      %s162 = smul.addr %s158, 32
      %s163 = sadd.s32 %s161, %s162
      %s164 = smul.addr %s163, 4
      %s165 = scalar_lea.vmem %s4, %s164
      %s166 = smul.u32 16, %s20
      %p167 = scmp.lt.s32.totalorder %s19, 1
      %s168 = scalar_select %p167, %s19, 1
      %p169 = scmp.lt.s32.totalorder %s166, 15
      %s170 = scalar_select %p169, %s166, 15
      %s171 = smul.addr %s170, 2
      %s172 = smul.addr %s168, 32
      %s173 = sadd.s32 %s171, %s172
      %s174 = smul.addr %s173, 4
      %s175 = scalar_lea.vmem %s4, %s174
      %s176 = smul.u32 16, %s20
      %p178 = scmp.lt.s32.totalorder %s20, 0
      %s179 = ssub.s32 0, %s20
      %s180 = scalar_select %p178, %s179, %s20
      %s181 = sand.u32 %s180, 1
      %s182 = ssub.s32 0, %s181
      %s183 = scalar_select %p178, %s182, %s181
      %p184 = scmp.ne.s32.totalorder %s183, 0
      %p185 = scmp.lt.s32.totalorder %s183, 0
      %p186 = pnand %p185, %p184
      %p187 = pneg %p186
      %s188 = sadd.s32 %s183, 2
      %s189 = scalar_select %p187, %s188, %s183
      %p190 = scmp.eq.s32.totalorder %s20, 0
      // Predicated region
      $region33: #{_lambda_.5} parent=31 // pred_check
        %p191 = pneg %p190
      $region34: #{_lambda_.5} parent=31 // pred_check_branch
        %193 = sbr.rel (%p191) target = $region36
      $region35: #{_lambda_.5} parent=31 // pred_region
        %s194 = smul.u32 %s19, 54
        %s195 = smul.addr %s194, 4
        %s196 = scalar_lea.vmem %s0, %s195
        %p198 = scmp.lt.u32.totalorder 216, 8
        %p199 = pneg %p198
        // Predicated region
        $region37: #{_lambda_.5} parent=35 // pred_check
          _
        $region38: #{_lambda_.5} parent=35 // pred_check_branch
          %201 = sbr.rel (%p198) target = $region40
        $region39: #{_lambda_.5} parent=35 // pred_region
          %s216 = sand.u32 216, 7
          %p217 = scmp.eq.s32.totalorder %s216, 0
          // Predicated region
          $region52: #{_lambda_.5} parent=39 // pred_check
            %p218 = pneg %p217
          $region53: #{_lambda_.5} parent=39 // pred_check_branch
            %220 = sbr.rel (%p218) target = $region55
          $region54: #{_lambda_.5} parent=39 // pred_region
            loop: start=0, step=1, limit=1
            $region56: #{_lambda_.5} parent=54 // loop_pre_header
              _
            $region57: #{_lambda_.5} parent=54 // loop_header
              %s222 = sphi 0, %s226
              %p223 = scmp.ge.s32.totalorder %s222, 1
              %s227 = sphi %s196, %s196
              %s228 = sphi [#allocation2], [#allocation2]
            $region58: #{_lambda_.5} parent=54 // loop_header_branch
              %225 = sbr.rel (%p223) target = $region62
            $region59: #{_lambda_.5} parent=54 // loop_body
              %v229 = vld [vmem:[%s227] sm:$0xff]
              %230 = vst [vmem:[%s228] sm:$0xff] %v229
              %v231 = vld [vmem:[%s227 + $0x8] sm:$0xff]
              %232 = vst [vmem:[%s228 + $0x8] sm:$0xff] %v231
              %v233 = vld [vmem:[%s227 + $0x10] sm:$0xff]
              %234 = vst [vmem:[%s228 + $0x10] sm:$0xff] %v233
              %v235 = vld [vmem:[%s227 + $0x18] sm:$0xff]
              %236 = vst [vmem:[%s228 + $0x18] sm:$0xff] %v235
              %v237 = vld [vmem:[%s227 + $0x20] sm:$0xff]
              %238 = vst [vmem:[%s228 + $0x20] sm:$0xff] %v237
              %v239 = vld [vmem:[%s227 + $0x28] sm:$0xff]
              %240 = vst [vmem:[%s228 + $0x28] sm:$0xff] %v239
              %v241 = vld [vmem:[%s227 + $0x30] sm:$0xff]
              %242 = vst [vmem:[%s228 + $0x30] sm:$0xff] %v241
              %v243 = vld [vmem:[%s227 + $0x38] sm:$0xff]
              %244 = vst [vmem:[%s228 + $0x38] sm:$0xff] %v243
              %v245 = vld [vmem:[%s227 + $0x40] sm:$0xff]
              %246 = vst [vmem:[%s228 + $0x40] sm:$0xff] %v245
              %v247 = vld [vmem:[%s227 + $0x48] sm:$0xff]
              %248 = vst [vmem:[%s228 + $0x48] sm:$0xff] %v247
              %v249 = vld [vmem:[%s227 + $0x50] sm:$0xff]
              %250 = vst [vmem:[%s228 + $0x50] sm:$0xff] %v249
              %v251 = vld [vmem:[%s227 + $0x58] sm:$0xff]
              %252 = vst [vmem:[%s228 + $0x58] sm:$0xff] %v251
              %v253 = vld [vmem:[%s227 + $0x60] sm:$0xff]
              %254 = vst [vmem:[%s228 + $0x60] sm:$0xff] %v253
              %v255 = vld [vmem:[%s227 + $0x68] sm:$0xff]
              %256 = vst [vmem:[%s228 + $0x68] sm:$0xff] %v255
              %v257 = vld [vmem:[%s227 + $0x70] sm:$0xff]
              %258 = vst [vmem:[%s228 + $0x70] sm:$0xff] %v257
              %v259 = vld [vmem:[%s227 + $0x78] sm:$0xff]
              %260 = vst [vmem:[%s228 + $0x78] sm:$0xff] %v259
              %v261 = vld [vmem:[%s227 + $0x80] sm:$0xff]
              %262 = vst [vmem:[%s228 + $0x80] sm:$0xff] %v261
              %v263 = vld [vmem:[%s227 + $0x88] sm:$0xff]
              %264 = vst [vmem:[%s228 + $0x88] sm:$0xff] %v263
              %v265 = vld [vmem:[%s227 + $0x90] sm:$0xff]
              %266 = vst [vmem:[%s228 + $0x90] sm:$0xff] %v265
              %v267 = vld [vmem:[%s227 + $0x98] sm:$0xff]
              %268 = vst [vmem:[%s228 + $0x98] sm:$0xff] %v267
              %v269 = vld [vmem:[%s227 + $0xa0] sm:$0xff]
              %270 = vst [vmem:[%s228 + $0xa0] sm:$0xff] %v269
              %v271 = vld [vmem:[%s227 + $0xa8] sm:$0xff]
              %272 = vst [vmem:[%s228 + $0xa8] sm:$0xff] %v271
              %v273 = vld [vmem:[%s227 + $0xb0] sm:$0xff]
              %274 = vst [vmem:[%s228 + $0xb0] sm:$0xff] %v273
              %v275 = vld [vmem:[%s227 + $0xb8] sm:$0xff]
              %276 = vst [vmem:[%s228 + $0xb8] sm:$0xff] %v275
              %v277 = vld [vmem:[%s227 + $0xc0] sm:$0xff]
              %278 = vst [vmem:[%s228 + $0xc0] sm:$0xff] %v277
              %v279 = vld [vmem:[%s227 + $0xc8] sm:$0xff]
              %280 = vst [vmem:[%s228 + $0xc8] sm:$0xff] %v279
              %v281 = vld [vmem:[%s227 + $0xd0] sm:$0xff]
              %282 = vst [vmem:[%s228 + $0xd0] sm:$0xff] %v281
            $region60: #{_lambda_.5} parent=54 // loop_footer
              %s226 = sadd.s32 1, %s222
            $region61: #{_lambda_.5} parent=54 // loop_footer_branch
              %221 = sbr.rel target = $region57
            $region62: #{_lambda_.5} parent=54 // loop_exit
              _
          $region55: #{_lambda_.5} parent=39 // pred_fallthru
            _
          %p283 = pneg %p217
          // Predicated region
          $region63: #{_lambda_.5} parent=39 // pred_check
            _
          $region64: #{_lambda_.5} parent=39 // pred_check_branch
            %285 = sbr.rel (%p217) target = $region66
          $region65: #{_lambda_.5} parent=39 // pred_region
            %s286 = sand.u32 216, 7
          $region66: #{_lambda_.5} parent=39 // pred_fallthru
            _
        $region40: #{_lambda_.5} parent=35 // pred_fallthru
          _
        // Predicated region
        $region41: #{_lambda_.5} parent=35 // pred_check
          %p202 = pneg %p198
        $region42: #{_lambda_.5} parent=35 // pred_check_branch
          %204 = sbr.rel (%p202) target = $region44
        $region43: #{_lambda_.5} parent=35 // pred_region
          %s205 = sshllo.u32 0, 216
          loop: start=0, step=1, limit=1
          $region45: #{_lambda_.5} parent=43 // loop_pre_header
            _
          $region46: #{_lambda_.5} parent=43 // loop_header
            %s207 = sphi 0, %s211
            %p208 = scmp.ge.s32.totalorder %s207, 1
            %s212 = sphi %s196, %s196
            %s213 = sphi [#allocation2], [#allocation2]
          $region47: #{_lambda_.5} parent=43 // loop_header_branch
            %210 = sbr.rel (%p208) target = $region51
          $region48: #{_lambda_.5} parent=43 // loop_body
            %v214 = vld [vmem:[%s212] sm:%s205]
            %215 = vst [vmem:[%s213] sm:%s205] %v214
          $region49: #{_lambda_.5} parent=43 // loop_footer
            %s211 = sadd.s32 1, %s207
          $region50: #{_lambda_.5} parent=43 // loop_footer_branch
            %206 = sbr.rel target = $region46
          $region51: #{_lambda_.5} parent=43 // loop_exit
            _
        $region44: #{_lambda_.5} parent=35 // pred_fallthru
          _
        // Predicated region
        $region67: #{_lambda_.5} parent=35 // pred_check
          _
        $region68: #{_lambda_.5} parent=35 // pred_check_branch
          %289 = sbr.rel (0) target = $region70
        $region69: #{_lambda_.5} parent=35 // pred_region
          %290 = vsyncadd [#allocation3], 3456
        $region70: #{_lambda_.5} parent=35 // pred_fallthru
          _
      $region36: #{_lambda_.5} parent=31 // pred_fallthru
        _
      %s291 = sadd.s32 %s20, 1
      %p292 = scmp.lt.s32.totalorder %s291, 1
      // Predicated region
      $region71: #{_lambda_.5} parent=31 // pred_check
        %p293 = pneg %p292
      $region72: #{_lambda_.5} parent=31 // pred_check_branch
        %295 = sbr.rel (%p293) target = $region74
      $region73: #{_lambda_.5} parent=31 // pred_region
        %s296 = ssub.s32 1, %s189
        %s297 = smul.u32 %s291, 384
        %s298 = sshra.s32 %s297, 3
        %s299 = sand.u32 %s297, 7
        %s300 = smul.u32 %s19, 54
        %s301 = sadd.s32 %s298, %s300
        %s302 = smul.addr %s301, 4
        %s303 = scalar_lea.vmem %s0, %s302
        %s304 = smul.u32 %s296, 55
        %s305 = smul.addr %s304, 4
        %s306 = scalar_lea.vmem [#allocation2], %s305
        %s307 = scalar_lea.sflag [#allocation3], %s296
        %p309 = scmp.lt.u32.totalorder 216, 8
        %p310 = pneg %p309
        // Predicated region
        $region75: #{_lambda_.5} parent=73 // pred_check
          _
        $region76: #{_lambda_.5} parent=73 // pred_check_branch
          %312 = sbr.rel (%p309) target = $region78
        $region77: #{_lambda_.5} parent=73 // pred_region
          %s327 = sand.u32 216, 7
          %p328 = scmp.eq.s32.totalorder %s327, 0
          // Predicated region
          $region90: #{_lambda_.5} parent=77 // pred_check
            %p329 = pneg %p328
          $region91: #{_lambda_.5} parent=77 // pred_check_branch
            %331 = sbr.rel (%p329) target = $region93
          $region92: #{_lambda_.5} parent=77 // pred_region
            loop: start=0, step=1, limit=1
            $region94: #{_lambda_.5} parent=92 // loop_pre_header
              _
            $region95: #{_lambda_.5} parent=92 // loop_header
              %s333 = sphi 0, %s337
              %p334 = scmp.ge.s32.totalorder %s333, 1
              %s338 = sphi %s303, %s303
              %s339 = sphi %s306, %s306
            $region96: #{_lambda_.5} parent=92 // loop_header_branch
              %336 = sbr.rel (%p334) target = $region100
            $region97: #{_lambda_.5} parent=92 // loop_body
              %v340 = vld [vmem:[%s338] sm:$0xff]
              %341 = vst [vmem:[%s339] sm:$0xff] %v340
              %v342 = vld [vmem:[%s338 + $0x8] sm:$0xff]
              %343 = vst [vmem:[%s339 + $0x8] sm:$0xff] %v342
              %v344 = vld [vmem:[%s338 + $0x10] sm:$0xff]
              %345 = vst [vmem:[%s339 + $0x10] sm:$0xff] %v344
              %v346 = vld [vmem:[%s338 + $0x18] sm:$0xff]
              %347 = vst [vmem:[%s339 + $0x18] sm:$0xff] %v346
              %v348 = vld [vmem:[%s338 + $0x20] sm:$0xff]
              %349 = vst [vmem:[%s339 + $0x20] sm:$0xff] %v348
              %v350 = vld [vmem:[%s338 + $0x28] sm:$0xff]
              %351 = vst [vmem:[%s339 + $0x28] sm:$0xff] %v350
              %v352 = vld [vmem:[%s338 + $0x30] sm:$0xff]
              %353 = vst [vmem:[%s339 + $0x30] sm:$0xff] %v352
              %v354 = vld [vmem:[%s338 + $0x38] sm:$0xff]
              %355 = vst [vmem:[%s339 + $0x38] sm:$0xff] %v354
              %v356 = vld [vmem:[%s338 + $0x40] sm:$0xff]
              %357 = vst [vmem:[%s339 + $0x40] sm:$0xff] %v356
              %v358 = vld [vmem:[%s338 + $0x48] sm:$0xff]
              %359 = vst [vmem:[%s339 + $0x48] sm:$0xff] %v358
              %v360 = vld [vmem:[%s338 + $0x50] sm:$0xff]
              %361 = vst [vmem:[%s339 + $0x50] sm:$0xff] %v360
              %v362 = vld [vmem:[%s338 + $0x58] sm:$0xff]
              %363 = vst [vmem:[%s339 + $0x58] sm:$0xff] %v362
              %v364 = vld [vmem:[%s338 + $0x60] sm:$0xff]
              %365 = vst [vmem:[%s339 + $0x60] sm:$0xff] %v364
              %v366 = vld [vmem:[%s338 + $0x68] sm:$0xff]
              %367 = vst [vmem:[%s339 + $0x68] sm:$0xff] %v366
              %v368 = vld [vmem:[%s338 + $0x70] sm:$0xff]
              %369 = vst [vmem:[%s339 + $0x70] sm:$0xff] %v368
              %v370 = vld [vmem:[%s338 + $0x78] sm:$0xff]
              %371 = vst [vmem:[%s339 + $0x78] sm:$0xff] %v370
              %v372 = vld [vmem:[%s338 + $0x80] sm:$0xff]
              %373 = vst [vmem:[%s339 + $0x80] sm:$0xff] %v372
              %v374 = vld [vmem:[%s338 + $0x88] sm:$0xff]
              %375 = vst [vmem:[%s339 + $0x88] sm:$0xff] %v374
              %v376 = vld [vmem:[%s338 + $0x90] sm:$0xff]
              %377 = vst [vmem:[%s339 + $0x90] sm:$0xff] %v376
              %v378 = vld [vmem:[%s338 + $0x98] sm:$0xff]
              %379 = vst [vmem:[%s339 + $0x98] sm:$0xff] %v378
              %v380 = vld [vmem:[%s338 + $0xa0] sm:$0xff]
              %381 = vst [vmem:[%s339 + $0xa0] sm:$0xff] %v380
              %v382 = vld [vmem:[%s338 + $0xa8] sm:$0xff]
              %383 = vst [vmem:[%s339 + $0xa8] sm:$0xff] %v382
              %v384 = vld [vmem:[%s338 + $0xb0] sm:$0xff]
              %385 = vst [vmem:[%s339 + $0xb0] sm:$0xff] %v384
              %v386 = vld [vmem:[%s338 + $0xb8] sm:$0xff]
              %387 = vst [vmem:[%s339 + $0xb8] sm:$0xff] %v386
              %v388 = vld [vmem:[%s338 + $0xc0] sm:$0xff]
              %389 = vst [vmem:[%s339 + $0xc0] sm:$0xff] %v388
              %v390 = vld [vmem:[%s338 + $0xc8] sm:$0xff]
              %391 = vst [vmem:[%s339 + $0xc8] sm:$0xff] %v390
              %v392 = vld [vmem:[%s338 + $0xd0] sm:$0xff]
              %393 = vst [vmem:[%s339 + $0xd0] sm:$0xff] %v392
            $region98: #{_lambda_.5} parent=92 // loop_footer
              %s337 = sadd.s32 1, %s333
            $region99: #{_lambda_.5} parent=92 // loop_footer_branch
              %332 = sbr.rel target = $region95
            $region100: #{_lambda_.5} parent=92 // loop_exit
              _
          $region93: #{_lambda_.5} parent=77 // pred_fallthru
            _
          %p394 = pneg %p328
          // Predicated region
          $region101: #{_lambda_.5} parent=77 // pred_check
            _
          $region102: #{_lambda_.5} parent=77 // pred_check_branch
            %396 = sbr.rel (%p328) target = $region104
          $region103: #{_lambda_.5} parent=77 // pred_region
            %s397 = sand.u32 216, 7
          $region104: #{_lambda_.5} parent=77 // pred_fallthru
            _
        $region78: #{_lambda_.5} parent=73 // pred_fallthru
          _
        // Predicated region
        $region79: #{_lambda_.5} parent=73 // pred_check
          %p313 = pneg %p309
        $region80: #{_lambda_.5} parent=73 // pred_check_branch
          %315 = sbr.rel (%p313) target = $region82
        $region81: #{_lambda_.5} parent=73 // pred_region
          %s316 = sshllo.u32 0, 216
          loop: start=0, step=1, limit=1
          $region83: #{_lambda_.5} parent=81 // loop_pre_header
            _
          $region84: #{_lambda_.5} parent=81 // loop_header
            %s318 = sphi 0, %s322
            %p319 = scmp.ge.s32.totalorder %s318, 1
            %s323 = sphi %s303, %s303
            %s324 = sphi %s306, %s306
          $region85: #{_lambda_.5} parent=81 // loop_header_branch
            %321 = sbr.rel (%p319) target = $region89
          $region86: #{_lambda_.5} parent=81 // loop_body
            %v325 = vld [vmem:[%s323] sm:%s316]
            %326 = vst [vmem:[%s324] sm:%s316] %v325
          $region87: #{_lambda_.5} parent=81 // loop_footer
            %s322 = sadd.s32 1, %s318
          $region88: #{_lambda_.5} parent=81 // loop_footer_branch
            %317 = sbr.rel target = $region84
          $region89: #{_lambda_.5} parent=81 // loop_exit
            _
        $region82: #{_lambda_.5} parent=73 // pred_fallthru
          _
        // Predicated region
        $region105: #{_lambda_.5} parent=73 // pred_check
          _
        $region106: #{_lambda_.5} parent=73 // pred_check_branch
          %400 = sbr.rel (0) target = $region108
        $region107: #{_lambda_.5} parent=73 // pred_region
          %401 = vsyncadd %s307, 3456
        $region108: #{_lambda_.5} parent=73 // pred_fallthru
          _
      $region74: #{_lambda_.5} parent=31 // pred_fallthru
        _
      %s402 = smul.u32 %s189, 55
      %s403 = smul.addr %s402, 4
      %s404 = scalar_lea.vmem [#allocation2], %s403
      %s405 = scalar_lea.sflag [#allocation3], %s189
      %s406 = smul.u32 4, 54
      %s407 = smul.u32 %s406, 1
      %s408 = sshll.u32 %s407, 4
      %409 = dma.done %s405, %s408
      %v410 = vld [vmem:[%s404] sm:$0xf]
      %v411 = vld [vmem:[%s404 + $0x4] sm:$0xf]
      %v412 = vld [vmem:[%s404 + $0x8] sm:$0xf]
      %v413 = vld [vmem:[%s404 + $0xc] sm:$0xf]
      %v414 = vld [vmem:[%s404 + $0x10] sm:$0xf]
      %v415 = vld [vmem:[%s404 + $0x14] sm:$0xf]
      %v416 = vld [vmem:[%s404 + $0x18] sm:$0xf]
      %v417 = vld [vmem:[%s404 + $0x1c] sm:$0xf]
      %v418 = vld [vmem:[%s404 + $0x20] sm:$0xf]
      %v419 = vld [vmem:[%s404 + $0x24] sm:$0xf]
      %v420 = vld [vmem:[%s404 + $0x28] sm:$0xf]
      %v421 = vld [vmem:[%s404 + $0x2c] sm:$0xf]
      %v422 = vld [vmem:[%s404 + $0x30] sm:$0xf]
      %v423 = vld [vmem:[%s404 + $0x34] sm:$0xf]
      %v424 = vld [vmem:[%s404 + $0x38] sm:$0xf]
      %v425 = vld [vmem:[%s404 + $0x3c] sm:$0xf]
      %v426 = vld [vmem:[%s404 + $0x40] sm:$0xf]
      %v427 = vld [vmem:[%s404 + $0x44] sm:$0xf]
      %v428 = vld [vmem:[%s404 + $0x48] sm:$0xf]
      %v429 = vld [vmem:[%s404 + $0x4c] sm:$0xf]
      %v430 = vld [vmem:[%s404 + $0x50] sm:$0xf]
      %v431 = vld [vmem:[%s404 + $0x54] sm:$0xf]
      %v432 = vld [vmem:[%s404 + $0x58] sm:$0xf]
      %v433 = vld [vmem:[%s404 + $0x5c] sm:$0xf]
      %v434 = vld [vmem:[%s404 + $0x60] sm:$0xf]
      %v435 = vld [vmem:[%s404 + $0x64] sm:$0xf]
      %v436 = vld [vmem:[%s404 + $0x68] sm:$0xf]
      %v437 = vld [vmem:[%s404 + $0x6c] sm:$0xf]
      %v438 = vld [vmem:[%s404 + $0x70] sm:$0xf]
      %v439 = vld [vmem:[%s404 + $0x74] sm:$0xf]
      %v440 = vld [vmem:[%s404 + $0x78] sm:$0xf]
      %v441 = vld [vmem:[%s404 + $0x7c] sm:$0xf]
      %v442 = vld [vmem:[%s404 + $0x80] sm:$0xf]
      %v443 = vld [vmem:[%s404 + $0x84] sm:$0xf]
      %v444 = vld [vmem:[%s404 + $0x88] sm:$0xf]
      %v445 = vld [vmem:[%s404 + $0x8c] sm:$0xf]
      %v446 = vld [vmem:[%s404 + $0x90] sm:$0xf]
      %v447 = vld [vmem:[%s404 + $0x94] sm:$0xf]
      %v448 = vld [vmem:[%s404 + $0x98] sm:$0xf]
      %v449 = vld [vmem:[%s404 + $0x9c] sm:$0xf]
      %v450 = vld [vmem:[%s404 + $0xa0] sm:$0xf]
      %v451 = vld [vmem:[%s404 + $0xa4] sm:$0xf]
      %v452 = vld [vmem:[%s404 + $0xa8] sm:$0xf]
      %v453 = vld [vmem:[%s404 + $0xac] sm:$0xf]
      %v454 = vld [vmem:[%s404 + $0xb0] sm:$0xf]
      %v455 = vld [vmem:[%s404 + $0xb4] sm:$0xf]
      %v456 = vld [vmem:[%s404 + $0xb8] sm:$0xf]
      %v457 = vld [vmem:[%s404 + $0xbc] sm:$0xf]
      %v458 = vld [vmem:[%s1] sm:$0xf]
      %v459 = vld [vmem:[%s1 + $0x4] sm:$0xf]
      %v460 = vld [vmem:[%s1 + $0x8] sm:$0xf]
      %v461 = vld [vmem:[%s1 + $0xc] sm:$0xf]
      %v462 = vld [vmem:[%s1 + $0x10] sm:$0xf]
      %v463 = vld [vmem:[%s1 + $0x14] sm:$0xf]
      %v464 = vld [vmem:[%s1 + $0x18] sm:$0xf]
      %v465 = vld [vmem:[%s1 + $0x1c] sm:$0xf]
      %v466 = vld [vmem:[%s1 + $0x20] sm:$0xf]
      %v467 = vld [vmem:[%s1 + $0x24] sm:$0xf]
      %v468 = vld [vmem:[%s1 + $0x28] sm:$0xf]
      %v469 = vld [vmem:[%s1 + $0x2c] sm:$0xf]
      %v470 = vld [vmem:[%s1 + $0x30] sm:$0xf]
      %v471 = vld [vmem:[%s1 + $0x34] sm:$0xf]
      %v472 = vld [vmem:[%s1 + $0x38] sm:$0xf]
      %v473 = vld [vmem:[%s1 + $0x3c] sm:$0xf]
      %v522 = vunpack.c.l.b16 %v410
      %v523 = vunpack.c.l.b16 %v411
      %v524 = vunpack.c.l.b16 %v412
      %v525 = vunpack.c.l.b16 %v413
      %v526 = vunpack.c.l.b16 %v414
      %v527 = vunpack.c.l.b16 %v415
      %v528 = vunpack.c.l.b16 %v416
      %v529 = vunpack.c.l.b16 %v417
      %v530 = vunpack.c.l.b16 %v418
      %v531 = vunpack.c.l.b16 %v419
      %v532 = vunpack.c.l.b16 %v420
      %v533 = vunpack.c.l.b16 %v421
      %v534 = vunpack.c.l.b16 %v422
      %v535 = vunpack.c.l.b16 %v423
      %v536 = vunpack.c.l.b16 %v424
      %v537 = vunpack.c.l.b16 %v425
      %v538 = vunpack.c.l.b16 %v426
      %v539 = vunpack.c.l.b16 %v427
      %v540 = vunpack.c.l.b16 %v428
      %v541 = vunpack.c.l.b16 %v429
      %v542 = vunpack.c.l.b16 %v430
      %v543 = vunpack.c.l.b16 %v431
      %v544 = vunpack.c.l.b16 %v432
      %v545 = vunpack.c.l.b16 %v433
      %v546 = vunpack.c.l.b16 %v434
      %v547 = vunpack.c.l.b16 %v435
      %v548 = vunpack.c.l.b16 %v436
      %v549 = vunpack.c.l.b16 %v437
      %v550 = vunpack.c.l.b16 %v438
      %v551 = vunpack.c.l.b16 %v439
      %v552 = vunpack.c.l.b16 %v440
      %v553 = vunpack.c.l.b16 %v441
      %v554 = vunpack.c.l.b16 %v442
      %v555 = vunpack.c.l.b16 %v443
      %v556 = vunpack.c.l.b16 %v444
      %v557 = vunpack.c.l.b16 %v445
      %v558 = vunpack.c.l.b16 %v446
      %v559 = vunpack.c.l.b16 %v447
      %v560 = vunpack.c.l.b16 %v448
      %v561 = vunpack.c.l.b16 %v449
      %v562 = vunpack.c.l.b16 %v450
      %v563 = vunpack.c.l.b16 %v451
      %v564 = vunpack.c.l.b16 %v452
      %v565 = vunpack.c.l.b16 %v453
      %v566 = vunpack.c.l.b16 %v454
      %v567 = vunpack.c.l.b16 %v455
      %v568 = vunpack.c.l.b16 %v456
      %v569 = vunpack.c.l.b16 %v457
      %v570 = vpack.c.b16 %v523, %v522
      %v571 = vpack.c.b16 %v525, %v524
      %v572 = vpack.c.b16 %v527, %v526
      %v573 = vpack.c.b16 %v529, %v528
      %v574 = vpack.c.b16 %v531, %v530
      %v575 = vpack.c.b16 %v533, %v532
      %v576 = vpack.c.b16 %v535, %v534
      %v577 = vpack.c.b16 %v537, %v536
      %v578 = vpack.c.b16 %v539, %v538
      %v579 = vpack.c.b16 %v541, %v540
      %v580 = vpack.c.b16 %v543, %v542
      %v581 = vpack.c.b16 %v545, %v544
      %v582 = vpack.c.b16 %v547, %v546
      %v583 = vpack.c.b16 %v549, %v548
      %v584 = vpack.c.b16 %v551, %v550
      %v585 = vpack.c.b16 %v553, %v552
      %v586 = vpack.c.b16 %v555, %v554
      %v587 = vpack.c.b16 %v557, %v556
      %v588 = vpack.c.b16 %v559, %v558
      %v589 = vpack.c.b16 %v561, %v560
      %v590 = vpack.c.b16 %v563, %v562
      %v591 = vpack.c.b16 %v565, %v564
      %v592 = vpack.c.b16 %v567, %v566
      %v593 = vpack.c.b16 %v569, %v568
      %v634 = vunpack.c.l.b16 %v458
      %v635 = vunpack.c.l.b16 %v459
      %v636 = vunpack.c.l.b16 %v460
      %v637 = vunpack.c.l.b16 %v461
      %v638 = vunpack.c.l.b16 %v462
      %v639 = vunpack.c.l.b16 %v463
      %v640 = vunpack.c.l.b16 %v464
      %v641 = vunpack.c.l.b16 %v465
      %v642 = vunpack.c.l.b16 %v466
      %v643 = vunpack.c.l.b16 %v467
      %v644 = vunpack.c.l.b16 %v468
      %v645 = vunpack.c.l.b16 %v469
      %v646 = vunpack.c.l.b16 %v470
      %v647 = vunpack.c.l.b16 %v471
      %v648 = vunpack.c.l.b16 %v472
      %v649 = vunpack.c.l.b16 %v473
      %v650 = vpack.c.b16 %v635, %v634
      %v651 = vpack.c.b16 %v637, %v636
      %v652 = vpack.c.b16 %v639, %v638
      %v653 = vpack.c.b16 %v641, %v640
      %v654 = vpack.c.b16 %v643, %v642
      %v655 = vpack.c.b16 %v645, %v644
      %v656 = vpack.c.b16 %v647, %v646
      %v657 = vpack.c.b16 %v649, %v648
      %666 = vmatprep.subr.bf16.mxu0 0
      %667 = vmatpush1.bf16.msra.mxu0 %v650
      %668 = vmatprep.subr.bf16.mxu0 0
      %669 = vmatpush1.bf16.msra.mxu0 %v651
      %670 = vmatprep.subr.bf16.mxu0 0
      %671 = vmatpush1.bf16.msra.mxu0 %v652
      %672 = vmatprep.subr.bf16.mxu0 0
      %673 = vmatpush1.bf16.msra.mxu0 %v653
      %674 = vmatprep.subr.bf16.mxu0 0
      %675 = vmatpush1.bf16.msra.mxu0 %v654
      %676 = vmatprep.subr.bf16.mxu0 0
      %677 = vmatpush1.bf16.msra.mxu0 %v655
      %678 = vmatprep.subr.bf16.mxu0 0
      %679 = vmatpush1.bf16.msra.mxu0 %v656
      %680 = vmatprep.subr.bf16.mxu0 0
      %681 = vmatpush1.bf16.msra.mxu0 %v657
      %682 = vmatprep.subr.bf16.mxu0 0
      %683 = vmatpush1.bf16.msra.mxu0 0
      %684 = vmatprep.subr.bf16.mxu0 0
      %685 = vmatpush1.bf16.msra.mxu0 0
      %686 = vmatprep.subr.bf16.mxu0 0
      %687 = vmatpush1.bf16.msra.mxu0 0
      %688 = vmatprep.subr.bf16.mxu0 0
      %689 = vmatpush1.bf16.msra.mxu0 0
      %690 = vmatprep.subr.bf16.mxu0 0
      %691 = vmatpush1.bf16.msra.mxu0 0
      %692 = vmatprep.subr.bf16.mxu0 0
      %693 = vmatpush1.bf16.msra.mxu0 0
      %694 = vmatprep.subr.bf16.mxu0 0
      %695 = vmatpush1.bf16.msra.mxu0 0
      %696 = vmatprep.subr.bf16.mxu0 0
      %697 = vmatpush1.bf16.msra.mxu0 0
      %698 = vmatprep.mubr.bf16.mxu0 0
      %699 = vmatmul.mubr.bf16.gmra.mrb[0].mxu0 %v570
      %v700 = vpop.f32.mrb[0].mxu0
      %v701 = vadd.f32 0.0, %v700
      %v702 = vpop.f32.mrb[0].mxu0
      %v703 = vpop.f32.mrb[0].mxu0
      %v704 = vadd.f32 0.0, %v703
      %v705 = vpop.f32.mrb[0].mxu0
      %706 = vmatprep.mubr.bf16.mxu0 0
      %707 = vmatmul.mubr.bf16.gmra.mrb[0].mxu0 %v571
      %v708 = vpop.f32.mrb[0].mxu0
      %v709 = vadd.f32 0.0, %v708
      %v710 = vpop.f32.mrb[0].mxu0
      %v711 = vpop.f32.mrb[0].mxu0
      %v712 = vadd.f32 0.0, %v711
      %v713 = vpop.f32.mrb[0].mxu0
      %714 = vmatprep.mubr.bf16.mxu0 0
      %715 = vmatmul.mubr.bf16.gmra.mrb[0].mxu0 %v572
      %v716 = vpop.f32.mrb[0].mxu0
      %v717 = vadd.f32 0.0, %v716
      %v718 = vpop.f32.mrb[0].mxu0
      %v719 = vpop.f32.mrb[0].mxu0
      %v720 = vadd.f32 0.0, %v719
      %v721 = vpop.f32.mrb[0].mxu0
      %722 = vmatprep.mubr.bf16.mxu0 0
      %723 = vmatmul.mubr.bf16.gmra.mrb[0].mxu0 %v573
      %v724 = vpop.f32.mrb[0].mxu0
      %v725 = vadd.f32 0.0, %v724
      %v726 = vpop.f32.mrb[0].mxu0
      %v727 = vpop.f32.mrb[0].mxu0
      %v728 = vadd.f32 0.0, %v727
      %v729 = vpop.f32.mrb[0].mxu0
      %730 = vmatprep.mubr.bf16.mxu0 0
      %731 = vmatmul.mubr.bf16.gmra.mrb[0].mxu0 %v574
      %v732 = vpop.f32.mrb[0].mxu0
      %v733 = vadd.f32 0.0, %v732
      %v734 = vpop.f32.mrb[0].mxu0
      %v735 = vpop.f32.mrb[0].mxu0
      %v736 = vadd.f32 0.0, %v735
      %v737 = vpop.f32.mrb[0].mxu0
      %738 = vmatprep.mubr.bf16.mxu0 0
      %739 = vmatmul.mubr.bf16.gmra.mrb[0].mxu0 %v575
      %v740 = vpop.f32.mrb[0].mxu0
      %v741 = vadd.f32 0.0, %v740
      %v742 = vpop.f32.mrb[0].mxu0
      %v743 = vpop.f32.mrb[0].mxu0
      %v744 = vadd.f32 0.0, %v743
      %v745 = vpop.f32.mrb[0].mxu0
      %746 = vmatprep.mubr.bf16.mxu0 0
      %747 = vmatmul.mubr.bf16.gmra.mrb[0].mxu0 %v576
      %v748 = vpop.f32.mrb[0].mxu0
      %v749 = vadd.f32 0.0, %v748
      %v750 = vpop.f32.mrb[0].mxu0
      %v751 = vpop.f32.mrb[0].mxu0
      %v752 = vadd.f32 0.0, %v751
      %v753 = vpop.f32.mrb[0].mxu0
      %754 = vmatprep.mubr.bf16.mxu0 0
      %755 = vmatmul.mubr.bf16.gmra.mrb[0].mxu0 %v577
      %v756 = vpop.f32.mrb[0].mxu0
      %v757 = vadd.f32 0.0, %v756
      %v758 = vpop.f32.mrb[0].mxu0
      %v759 = vpop.f32.mrb[0].mxu0
      %v760 = vadd.f32 0.0, %v759
      %v761 = vpop.f32.mrb[0].mxu0
      %762 = vmatprep.mubr.bf16.mxu0 0
      %763 = vmatmul.mubr.bf16.gmra.mrb[0].mxu0 %v578
      %v764 = vpop.f32.mrb[0].mxu0
      %v765 = vadd.f32 0.0, %v764
      %v766 = vpop.f32.mrb[0].mxu0
      %v767 = vpop.f32.mrb[0].mxu0
      %v768 = vadd.f32 0.0, %v767
      %v769 = vpop.f32.mrb[0].mxu0
      %770 = vmatprep.mubr.bf16.mxu0 0
      %771 = vmatmul.mubr.bf16.gmra.mrb[0].mxu0 %v579
      %v772 = vpop.f32.mrb[0].mxu0
      %v773 = vadd.f32 0.0, %v772
      %v774 = vpop.f32.mrb[0].mxu0
      %v775 = vpop.f32.mrb[0].mxu0
      %v776 = vadd.f32 0.0, %v775
      %v777 = vpop.f32.mrb[0].mxu0
      %778 = vmatprep.mubr.bf16.mxu0 0
      %779 = vmatmul.mubr.bf16.gmra.mrb[0].mxu0 %v580
      %v780 = vpop.f32.mrb[0].mxu0
      %v781 = vadd.f32 0.0, %v780
      %v782 = vpop.f32.mrb[0].mxu0
      %v783 = vpop.f32.mrb[0].mxu0
      %v784 = vadd.f32 0.0, %v783
      %v785 = vpop.f32.mrb[0].mxu0
      %786 = vmatprep.mubr.bf16.mxu0 0
      %787 = vmatmul.mubr.bf16.gmra.mrb[0].mxu0 %v581
      %v788 = vpop.f32.mrb[0].mxu0
      %v789 = vadd.f32 0.0, %v788
      %v790 = vpop.f32.mrb[0].mxu0
      %v791 = vpop.f32.mrb[0].mxu0
      %v792 = vadd.f32 0.0, %v791
      %v793 = vpop.f32.mrb[0].mxu0
      %794 = vmatprep.mubr.bf16.mxu0 0
      %795 = vmatmul.mubr.bf16.gmra.mrb[0].mxu0 %v582
      %v796 = vpop.f32.mrb[0].mxu0
      %v797 = vadd.f32 0.0, %v796
      %v798 = vpop.f32.mrb[0].mxu0
      %v799 = vpop.f32.mrb[0].mxu0
      %v800 = vadd.f32 0.0, %v799
      %v801 = vpop.f32.mrb[0].mxu0
      %802 = vmatprep.mubr.bf16.mxu0 0
      %803 = vmatmul.mubr.bf16.gmra.mrb[0].mxu0 %v583
      %v804 = vpop.f32.mrb[0].mxu0
      %v805 = vadd.f32 0.0, %v804
      %v806 = vpop.f32.mrb[0].mxu0
      %v807 = vpop.f32.mrb[0].mxu0
      %v808 = vadd.f32 0.0, %v807
      %v809 = vpop.f32.mrb[0].mxu0
      %810 = vmatprep.mubr.bf16.mxu0 0
      %811 = vmatmul.mubr.bf16.gmra.mrb[0].mxu0 %v584
      %v812 = vpop.f32.mrb[0].mxu0
      %v813 = vadd.f32 0.0, %v812
      %v814 = vpop.f32.mrb[0].mxu0
      %v815 = vpop.f32.mrb[0].mxu0
      %v816 = vadd.f32 0.0, %v815
      %v817 = vpop.f32.mrb[0].mxu0
      %818 = vmatprep.mubr.bf16.mxu0 0
      %819 = vmatmul.mubr.bf16.gmra.mrb[0].mxu0 %v585
      %v820 = vpop.f32.mrb[0].mxu0
      %v821 = vadd.f32 0.0, %v820
      %v822 = vpop.f32.mrb[0].mxu0
      %v823 = vpop.f32.mrb[0].mxu0
      %v824 = vadd.f32 0.0, %v823
      %v825 = vpop.f32.mrb[0].mxu0
      %826 = vmatprep.mubr.bf16.mxu0 0
      %827 = vmatmul.mubr.bf16.gmra.mrb[0].mxu0 %v586
      %v828 = vpop.f32.mrb[0].mxu0
      %v829 = vadd.f32 0.0, %v828
      %v830 = vpop.f32.mrb[0].mxu0
      %v831 = vpop.f32.mrb[0].mxu0
      %v832 = vadd.f32 0.0, %v831
      %v833 = vpop.f32.mrb[0].mxu0
      %834 = vmatprep.mubr.bf16.mxu0 0
      %835 = vmatmul.mubr.bf16.gmra.mrb[0].mxu0 %v587
      %v836 = vpop.f32.mrb[0].mxu0
      %v837 = vadd.f32 0.0, %v836
      %v838 = vpop.f32.mrb[0].mxu0
      %v839 = vpop.f32.mrb[0].mxu0
      %v840 = vadd.f32 0.0, %v839
      %v841 = vpop.f32.mrb[0].mxu0
      %842 = vmatprep.mubr.bf16.mxu0 0
      %843 = vmatmul.mubr.bf16.gmra.mrb[0].mxu0 %v588
      %v844 = vpop.f32.mrb[0].mxu0
      %v845 = vadd.f32 0.0, %v844
      %v846 = vpop.f32.mrb[0].mxu0
      %v847 = vpop.f32.mrb[0].mxu0
      %v848 = vadd.f32 0.0, %v847
      %v849 = vpop.f32.mrb[0].mxu0
      %850 = vmatprep.mubr.bf16.mxu0 0
      %851 = vmatmul.mubr.bf16.gmra.mrb[0].mxu0 %v589
      %v852 = vpop.f32.mrb[0].mxu0
      %v853 = vadd.f32 0.0, %v852
      %v854 = vpop.f32.mrb[0].mxu0
      %v855 = vpop.f32.mrb[0].mxu0
      %v856 = vadd.f32 0.0, %v855
      %v857 = vpop.f32.mrb[0].mxu0
      %858 = vmatprep.mubr.bf16.mxu0 0
      %859 = vmatmul.mubr.bf16.gmra.mrb[0].mxu0 %v590
      %v860 = vpop.f32.mrb[0].mxu0
      %v861 = vadd.f32 0.0, %v860
      %v862 = vpop.f32.mrb[0].mxu0
      %v863 = vpop.f32.mrb[0].mxu0
      %v864 = vadd.f32 0.0, %v863
      %v865 = vpop.f32.mrb[0].mxu0
      %866 = vmatprep.mubr.bf16.mxu0 0
      %867 = vmatmul.mubr.bf16.gmra.mrb[0].mxu0 %v591
      %v868 = vpop.f32.mrb[0].mxu0
      %v869 = vadd.f32 0.0, %v868
      %v870 = vpop.f32.mrb[0].mxu0
      %v871 = vpop.f32.mrb[0].mxu0
      %v872 = vadd.f32 0.0, %v871
      %v873 = vpop.f32.mrb[0].mxu0
      %874 = vmatprep.mubr.bf16.mxu0 0
      %875 = vmatmul.mubr.bf16.gmra.mrb[0].mxu0 %v592
      %v876 = vpop.f32.mrb[0].mxu0
      %v877 = vadd.f32 0.0, %v876
      %v878 = vpop.f32.mrb[0].mxu0
      %v879 = vpop.f32.mrb[0].mxu0
      %v880 = vadd.f32 0.0, %v879
      %v881 = vpop.f32.mrb[0].mxu0
      %882 = vmatprep.mubr.bf16.mxu0 0
      %883 = vmatmul.mubr.bf16.gmra.mrb[0].mxu0 %v593
      %v884 = vpop.f32.mrb[0].mxu0
      %v885 = vadd.f32 0.0, %v884
      %v886 = vpop.f32.mrb[0].mxu0
      %v887 = vpop.f32.mrb[0].mxu0
      %v888 = vadd.f32 0.0, %v887
      %v889 = vpop.f32.mrb[0].mxu0
      %890 = vdwg.mxu0
      %891 = vst [vmem:[#allocation4] sm:$0xff] %v701
      %892 = vst [vmem:[#allocation4 + $0x8] sm:$0xff] %v704
      %893 = vst [vmem:[#allocation4 + $0x10] sm:$0xff] %v709
      %894 = vst [vmem:[#allocation4 + $0x18] sm:$0xff] %v712
      %895 = vst [vmem:[#allocation4 + $0x20] sm:$0xff] %v717
      %896 = vst [vmem:[#allocation4 + $0x28] sm:$0xff] %v720
      %897 = vst [vmem:[#allocation4 + $0x30] sm:$0xff] %v725
      %898 = vst [vmem:[#allocation4 + $0x38] sm:$0xff] %v728
      %899 = vst [vmem:[#allocation4 + $0x40] sm:$0xff] %v733
      %900 = vst [vmem:[#allocation4 + $0x48] sm:$0xff] %v736
      %901 = vst [vmem:[#allocation4 + $0x50] sm:$0xff] %v741
      %902 = vst [vmem:[#allocation4 + $0x58] sm:$0xff] %v744
      %903 = vst [vmem:[#allocation4 + $0x60] sm:$0xff] %v749
      %904 = vst [vmem:[#allocation4 + $0x68] sm:$0xff] %v752
      %905 = vst [vmem:[#allocation4 + $0x70] sm:$0xff] %v757
      %906 = vst [vmem:[#allocation4 + $0x78] sm:$0xff] %v760
      %907 = vst [vmem:[#allocation4 + $0x80] sm:$0xff] %v765
      %908 = vst [vmem:[#allocation4 + $0x88] sm:$0xff] %v768
      %909 = vst [vmem:[#allocation4 + $0x90] sm:$0xff] %v773
      %910 = vst [vmem:[#allocation4 + $0x98] sm:$0xff] %v776
      %911 = vst [vmem:[#allocation4 + $0xa0] sm:$0xff] %v781
      %912 = vst [vmem:[#allocation4 + $0xa8] sm:$0xff] %v784
      %913 = vst [vmem:[#allocation4 + $0xb0] sm:$0xff] %v789
      %914 = vst [vmem:[#allocation4 + $0xb8] sm:$0xff] %v792
      %915 = vst [vmem:[#allocation4 + $0xc0] sm:$0xff] %v797
      %916 = vst [vmem:[#allocation4 + $0xc8] sm:$0xff] %v800
      %917 = vst [vmem:[#allocation4 + $0xd0] sm:$0xff] %v805
      %918 = vst [vmem:[#allocation4 + $0xd8] sm:$0xff] %v808
      %919 = vst [vmem:[#allocation4 + $0xe0] sm:$0xff] %v813
      %920 = vst [vmem:[#allocation4 + $0xe8] sm:$0xff] %v816
      %921 = vst [vmem:[#allocation4 + $0xf0] sm:$0xff] %v821
      %922 = vst [vmem:[#allocation4 + $0xf8] sm:$0xff] %v824
      %923 = vst [vmem:[#allocation4 + $0x100] sm:$0xff] %v829
      %924 = vst [vmem:[#allocation4 + $0x108] sm:$0xff] %v832
      %925 = vst [vmem:[#allocation4 + $0x110] sm:$0xff] %v837
      %926 = vst [vmem:[#allocation4 + $0x118] sm:$0xff] %v840
      %927 = vst [vmem:[#allocation4 + $0x120] sm:$0xff] %v845
      %928 = vst [vmem:[#allocation4 + $0x128] sm:$0xff] %v848
      %929 = vst [vmem:[#allocation4 + $0x130] sm:$0xff] %v853
      %930 = vst [vmem:[#allocation4 + $0x138] sm:$0xff] %v856
      %931 = vst [vmem:[#allocation4 + $0x140] sm:$0xff] %v861
      %932 = vst [vmem:[#allocation4 + $0x148] sm:$0xff] %v864
      %933 = vst [vmem:[#allocation4 + $0x150] sm:$0xff] %v869
      %934 = vst [vmem:[#allocation4 + $0x158] sm:$0xff] %v872
      %935 = vst [vmem:[#allocation4 + $0x160] sm:$0xff] %v877
      %936 = vst [vmem:[#allocation4 + $0x168] sm:$0xff] %v880
      %937 = vst [vmem:[#allocation4 + $0x170] sm:$0xff] %v885
      %938 = vst [vmem:[#allocation4 + $0x178] sm:$0xff] %v888
      %v939 = vld [vmem:[%s404] sm:$0xf]
      %v940 = vld [vmem:[%s404 + $0x4] sm:$0xf]
      %v941 = vld [vmem:[%s404 + $0x8] sm:$0xf]
      %v942 = vld [vmem:[%s404 + $0xc] sm:$0xf]
      %v943 = vld [vmem:[%s404 + $0x10] sm:$0xf]
      %v944 = vld [vmem:[%s404 + $0x14] sm:$0xf]
      %v945 = vld [vmem:[%s404 + $0x18] sm:$0xf]
      %v946 = vld [vmem:[%s404 + $0x1c] sm:$0xf]
      %v947 = vld [vmem:[%s404 + $0x20] sm:$0xf]
      %v948 = vld [vmem:[%s404 + $0x24] sm:$0xf]
      %v949 = vld [vmem:[%s404 + $0x28] sm:$0xf]
      %v950 = vld [vmem:[%s404 + $0x2c] sm:$0xf]
      %v951 = vld [vmem:[%s404 + $0x30] sm:$0xf]
      %v952 = vld [vmem:[%s404 + $0x34] sm:$0xf]
      %v953 = vld [vmem:[%s404 + $0x38] sm:$0xf]
      %v954 = vld [vmem:[%s404 + $0x3c] sm:$0xf]
      %v955 = vld [vmem:[%s404 + $0x40] sm:$0xf]
      %v956 = vld [vmem:[%s404 + $0x44] sm:$0xf]
      %v957 = vld [vmem:[%s404 + $0x48] sm:$0xf]
      %v958 = vld [vmem:[%s404 + $0x4c] sm:$0xf]
      %v959 = vld [vmem:[%s404 + $0x50] sm:$0xf]
      %v960 = vld [vmem:[%s404 + $0x54] sm:$0xf]
      %v961 = vld [vmem:[%s404 + $0x58] sm:$0xf]
      %v962 = vld [vmem:[%s404 + $0x5c] sm:$0xf]
      %v963 = vld [vmem:[%s404 + $0x60] sm:$0xf]
      %v964 = vld [vmem:[%s404 + $0x64] sm:$0xf]
      %v965 = vld [vmem:[%s404 + $0x68] sm:$0xf]
      %v966 = vld [vmem:[%s404 + $0x6c] sm:$0xf]
      %v967 = vld [vmem:[%s404 + $0x70] sm:$0xf]
      %v968 = vld [vmem:[%s404 + $0x74] sm:$0xf]
      %v969 = vld [vmem:[%s404 + $0x78] sm:$0xf]
      %v970 = vld [vmem:[%s404 + $0x7c] sm:$0xf]
      %v971 = vld [vmem:[%s404 + $0x80] sm:$0xf]
      %v972 = vld [vmem:[%s404 + $0x84] sm:$0xf]
      %v973 = vld [vmem:[%s404 + $0x88] sm:$0xf]
      %v974 = vld [vmem:[%s404 + $0x8c] sm:$0xf]
      %v975 = vld [vmem:[%s404 + $0x90] sm:$0xf]
      %v976 = vld [vmem:[%s404 + $0x94] sm:$0xf]
      %v977 = vld [vmem:[%s404 + $0x98] sm:$0xf]
      %v978 = vld [vmem:[%s404 + $0x9c] sm:$0xf]
      %v979 = vld [vmem:[%s404 + $0xa0] sm:$0xf]
      %v980 = vld [vmem:[%s404 + $0xa4] sm:$0xf]
      %v981 = vld [vmem:[%s404 + $0xa8] sm:$0xf]
      %v982 = vld [vmem:[%s404 + $0xac] sm:$0xf]
      %v983 = vld [vmem:[%s404 + $0xb0] sm:$0xf]
      %v984 = vld [vmem:[%s404 + $0xb4] sm:$0xf]
      %v985 = vld [vmem:[%s404 + $0xb8] sm:$0xf]
      %v986 = vld [vmem:[%s404 + $0xbc] sm:$0xf]
      %v987 = vld [vmem:[%s404 + $0xc0] sm:$0x1]
      %s988 = scalar_lea.vmem %s1, 64
      %v989 = vld [vmem:[%s988] sm:$0xf]
      %v990 = vld [vmem:[%s988 + $0x4] sm:$0xf]
      %v991 = vld [vmem:[%s988 + $0x8] sm:$0xf]
      %v992 = vld [vmem:[%s988 + $0xc] sm:$0xf]
      %v993 = vld [vmem:[%s988 + $0x10] sm:$0xf]
      %v994 = vld [vmem:[%s988 + $0x14] sm:$0xf]
      %v995 = vld [vmem:[%s988 + $0x18] sm:$0xf]
      %v996 = vld [vmem:[%s988 + $0x1c] sm:$0xf]
      %v997 = vld [vmem:[%s988 + $0x20] sm:$0xf]
      %v998 = vld [vmem:[%s988 + $0x24] sm:$0xf]
      %v999 = vld [vmem:[%s988 + $0x28] sm:$0xf]
      %v1000 = vld [vmem:[%s988 + $0x2c] sm:$0xf]
      %v1001 = vld [vmem:[%s988 + $0x30] sm:$0xf]
      %v1002 = vld [vmem:[%s988 + $0x34] sm:$0xf]
      %v1003 = vld [vmem:[%s988 + $0x38] sm:$0xf]
      %v1004 = vld [vmem:[%s988 + $0x3c] sm:$0xf]
      %v1054 = vunpack.c.l.b16 %v939
      %v1055 = vunpack.c.l.b16 %v940
      %v1056 = vunpack.c.l.b16 %v941
      %v1057 = vunpack.c.l.b16 %v942
      %v1058 = vunpack.c.l.b16 %v943
      %v1059 = vunpack.c.l.b16 %v944
      %v1060 = vunpack.c.l.b16 %v945
      %v1061 = vunpack.c.l.b16 %v946
      %v1062 = vunpack.c.l.b16 %v947
      %v1063 = vunpack.c.l.b16 %v948
      %v1064 = vunpack.c.l.b16 %v949
      %v1065 = vunpack.c.l.b16 %v950
      %v1066 = vunpack.c.l.b16 %v951
      %v1067 = vunpack.c.l.b16 %v952
      %v1068 = vunpack.c.l.b16 %v953
      %v1069 = vunpack.c.l.b16 %v954
      %v1070 = vunpack.c.l.b16 %v955
      %v1071 = vunpack.c.l.b16 %v956
      %v1072 = vunpack.c.l.b16 %v957
      %v1073 = vunpack.c.l.b16 %v958
      %v1074 = vunpack.c.l.b16 %v959
      %v1075 = vunpack.c.l.b16 %v960
      %v1076 = vunpack.c.l.b16 %v961
      %v1077 = vunpack.c.l.b16 %v962
      %v1078 = vunpack.c.l.b16 %v963
      %v1079 = vunpack.c.l.b16 %v964
      %v1080 = vunpack.c.l.b16 %v965
      %v1081 = vunpack.c.l.b16 %v966
      %v1082 = vunpack.c.l.b16 %v967
      %v1083 = vunpack.c.l.b16 %v968
      %v1084 = vunpack.c.l.b16 %v969
      %v1085 = vunpack.c.l.b16 %v970
      %v1086 = vunpack.c.l.b16 %v971
      %v1087 = vunpack.c.l.b16 %v972
      %v1088 = vunpack.c.l.b16 %v973
      %v1089 = vunpack.c.l.b16 %v974
      %v1090 = vunpack.c.l.b16 %v975
      %v1091 = vunpack.c.l.b16 %v976
      %v1092 = vunpack.c.l.b16 %v977
      %v1093 = vunpack.c.l.b16 %v978
      %v1094 = vunpack.c.l.b16 %v979
      %v1095 = vunpack.c.l.b16 %v980
      %v1096 = vunpack.c.l.b16 %v981
      %v1097 = vunpack.c.l.b16 %v982
      %v1098 = vunpack.c.l.b16 %v983
      %v1099 = vunpack.c.l.b16 %v984
      %v1100 = vunpack.c.l.b16 %v985
      %v1101 = vunpack.c.l.b16 %v986
      %v1102 = vunpack.c.l.b16 %v987
      %v1103 = vpack.c.b16 %v1055, %v1054
      %v1104 = vpack.c.b16 %v1057, %v1056
      %v1105 = vpack.c.b16 %v1059, %v1058
      %v1106 = vpack.c.b16 %v1061, %v1060
      %v1107 = vpack.c.b16 %v1063, %v1062
      %v1108 = vpack.c.b16 %v1065, %v1064
      %v1109 = vpack.c.b16 %v1067, %v1066
      %v1110 = vpack.c.b16 %v1069, %v1068
      %v1111 = vpack.c.b16 %v1071, %v1070
      %v1112 = vpack.c.b16 %v1073, %v1072
      %v1113 = vpack.c.b16 %v1075, %v1074
      %v1114 = vpack.c.b16 %v1077, %v1076
      %v1115 = vpack.c.b16 %v1079, %v1078
      %v1116 = vpack.c.b16 %v1081, %v1080
      %v1117 = vpack.c.b16 %v1083, %v1082
      %v1118 = vpack.c.b16 %v1085, %v1084
      %v1119 = vpack.c.b16 %v1087, %v1086
      %v1120 = vpack.c.b16 %v1089, %v1088
      %v1121 = vpack.c.b16 %v1091, %v1090
      %v1122 = vpack.c.b16 %v1093, %v1092
      %v1123 = vpack.c.b16 %v1095, %v1094
      %v1124 = vpack.c.b16 %v1097, %v1096
      %v1125 = vpack.c.b16 %v1099, %v1098
      %v1126 = vpack.c.b16 %v1101, %v1100
      %v1127 = vpack.c.b16 %v1102, %v1102
      %vm1128 = vsmask.f32 7424
      %v1130 = vshrl.u32 %v1103, 16
      %v1132 = vshll.u32 %v1103, 16
      %v1134 = vrot.slane %v1132, 1
      %v1135 = vor.u32 %v1130, %v1134
      %v1137 = vshll.u32 %v1104, 16
      %v1139 = vrot.slane %v1137, 1
      %v1140 = vsel %vm1128, %v1135, %v1139
      %v1141 = vshrl.u32 %v1104, 16
      %v1143 = vor.u32 %v1141, %v1139
      %v1145 = vshll.u32 %v1105, 16
      %v1147 = vrot.slane %v1145, 1
      %v1148 = vsel %vm1128, %v1143, %v1147
      %v1149 = vshrl.u32 %v1105, 16
      %v1151 = vor.u32 %v1149, %v1147
      %v1153 = vshll.u32 %v1106, 16
      %v1155 = vrot.slane %v1153, 1
      %v1156 = vsel %vm1128, %v1151, %v1155
      %v1157 = vshrl.u32 %v1106, 16
      %v1159 = vor.u32 %v1157, %v1155
      %v1161 = vshll.u32 %v1107, 16
      %v1163 = vrot.slane %v1161, 1
      %v1164 = vsel %vm1128, %v1159, %v1163
      %v1165 = vshrl.u32 %v1107, 16
      %v1167 = vor.u32 %v1165, %v1163
      %v1169 = vshll.u32 %v1108, 16
      %v1171 = vrot.slane %v1169, 1
      %v1172 = vsel %vm1128, %v1167, %v1171
      %v1173 = vshrl.u32 %v1108, 16
      %v1175 = vor.u32 %v1173, %v1171
      %v1177 = vshll.u32 %v1109, 16
      %v1179 = vrot.slane %v1177, 1
      %v1180 = vsel %vm1128, %v1175, %v1179
      %v1181 = vshrl.u32 %v1109, 16
      %v1183 = vor.u32 %v1181, %v1179
      %v1185 = vshll.u32 %v1110, 16
      %v1187 = vrot.slane %v1185, 1
      %v1188 = vsel %vm1128, %v1183, %v1187
      %v1189 = vshrl.u32 %v1110, 16
      %v1191 = vor.u32 %v1189, %v1187
      %v1193 = vshll.u32 %v1111, 16
      %v1195 = vrot.slane %v1193, 1
      %v1196 = vsel %vm1128, %v1191, %v1195
      %v1197 = vshrl.u32 %v1111, 16
      %v1199 = vor.u32 %v1197, %v1195
      %v1201 = vshll.u32 %v1112, 16
      %v1203 = vrot.slane %v1201, 1
      %v1204 = vsel %vm1128, %v1199, %v1203
      %v1205 = vshrl.u32 %v1112, 16
      %v1207 = vor.u32 %v1205, %v1203
      %v1209 = vshll.u32 %v1113, 16
      %v1211 = vrot.slane %v1209, 1
      %v1212 = vsel %vm1128, %v1207, %v1211
      %v1213 = vshrl.u32 %v1113, 16
      %v1215 = vor.u32 %v1213, %v1211
      %v1217 = vshll.u32 %v1114, 16
      %v1219 = vrot.slane %v1217, 1
      %v1220 = vsel %vm1128, %v1215, %v1219
      %v1221 = vshrl.u32 %v1114, 16
      %v1223 = vor.u32 %v1221, %v1219
      %v1225 = vshll.u32 %v1115, 16
      %v1227 = vrot.slane %v1225, 1
      %v1228 = vsel %vm1128, %v1223, %v1227
      %v1229 = vshrl.u32 %v1115, 16
      %v1231 = vor.u32 %v1229, %v1227
      %v1233 = vshll.u32 %v1116, 16
      %v1235 = vrot.slane %v1233, 1
      %v1236 = vsel %vm1128, %v1231, %v1235
      %v1237 = vshrl.u32 %v1116, 16
      %v1239 = vor.u32 %v1237, %v1235
      %v1241 = vshll.u32 %v1117, 16
      %v1243 = vrot.slane %v1241, 1
      %v1244 = vsel %vm1128, %v1239, %v1243
      %v1245 = vshrl.u32 %v1117, 16
      %v1247 = vor.u32 %v1245, %v1243
      %v1249 = vshll.u32 %v1118, 16
      %v1251 = vrot.slane %v1249, 1
      %v1252 = vsel %vm1128, %v1247, %v1251
      %v1253 = vshrl.u32 %v1118, 16
      %v1255 = vor.u32 %v1253, %v1251
      %v1257 = vshll.u32 %v1119, 16
      %v1259 = vrot.slane %v1257, 1
      %v1260 = vsel %vm1128, %v1255, %v1259
      %v1261 = vshrl.u32 %v1119, 16
      %v1263 = vor.u32 %v1261, %v1259
      %v1265 = vshll.u32 %v1120, 16
      %v1267 = vrot.slane %v1265, 1
      %v1268 = vsel %vm1128, %v1263, %v1267
      %v1269 = vshrl.u32 %v1120, 16
      %v1271 = vor.u32 %v1269, %v1267
      %v1273 = vshll.u32 %v1121, 16
      %v1275 = vrot.slane %v1273, 1
      %v1276 = vsel %vm1128, %v1271, %v1275
      %v1277 = vshrl.u32 %v1121, 16
      %v1279 = vor.u32 %v1277, %v1275
      %v1281 = vshll.u32 %v1122, 16
      %v1283 = vrot.slane %v1281, 1
      %v1284 = vsel %vm1128, %v1279, %v1283
      %v1285 = vshrl.u32 %v1122, 16
      %v1287 = vor.u32 %v1285, %v1283
      %v1289 = vshll.u32 %v1123, 16
      %v1291 = vrot.slane %v1289, 1
      %v1292 = vsel %vm1128, %v1287, %v1291
      %v1293 = vshrl.u32 %v1123, 16
      %v1295 = vor.u32 %v1293, %v1291
      %v1297 = vshll.u32 %v1124, 16
      %v1299 = vrot.slane %v1297, 1
      %v1300 = vsel %vm1128, %v1295, %v1299
      %v1301 = vshrl.u32 %v1124, 16
      %v1303 = vor.u32 %v1301, %v1299
      %v1305 = vshll.u32 %v1125, 16
      %v1307 = vrot.slane %v1305, 1
      %v1308 = vsel %vm1128, %v1303, %v1307
      %v1309 = vshrl.u32 %v1125, 16
      %v1311 = vor.u32 %v1309, %v1307
      %v1313 = vshll.u32 %v1126, 16
      %v1315 = vrot.slane %v1313, 1
      %v1316 = vsel %vm1128, %v1311, %v1315
      %v1317 = vshrl.u32 %v1126, 16
      %v1319 = vor.u32 %v1317, %v1315
      %v1321 = vshll.u32 %v1127, 16
      %v1323 = vrot.slane %v1321, 1
      %v1324 = vsel %vm1128, %v1319, %v1323
      %v1365 = vunpack.c.l.b16 %v989
      %v1366 = vunpack.c.l.b16 %v990
      %v1367 = vunpack.c.l.b16 %v991
      %v1368 = vunpack.c.l.b16 %v992
      %v1369 = vunpack.c.l.b16 %v993
      %v1370 = vunpack.c.l.b16 %v994
      %v1371 = vunpack.c.l.b16 %v995
      %v1372 = vunpack.c.l.b16 %v996
      %v1373 = vunpack.c.l.b16 %v997
      %v1374 = vunpack.c.l.b16 %v998
      %v1375 = vunpack.c.l.b16 %v999
      %v1376 = vunpack.c.l.b16 %v1000
      %v1377 = vunpack.c.l.b16 %v1001
      %v1378 = vunpack.c.l.b16 %v1002
      %v1379 = vunpack.c.l.b16 %v1003
      %v1380 = vunpack.c.l.b16 %v1004
      %v1381 = vpack.c.b16 %v1366, %v1365
      %v1382 = vpack.c.b16 %v1368, %v1367
      %v1383 = vpack.c.b16 %v1370, %v1369
      %v1384 = vpack.c.b16 %v1372, %v1371
      %v1385 = vpack.c.b16 %v1374, %v1373
      %v1386 = vpack.c.b16 %v1376, %v1375
      %v1387 = vpack.c.b16 %v1378, %v1377
      %v1388 = vpack.c.b16 %v1380, %v1379
      %1397 = vmatprep.subr.bf16.mxu0 0
      %1398 = vmatpush1.bf16.msra.mxu0 %v1381
      %1399 = vmatprep.subr.bf16.mxu0 0
      %1400 = vmatpush1.bf16.msra.mxu0 %v1382
      %1401 = vmatprep.subr.bf16.mxu0 0
      %1402 = vmatpush1.bf16.msra.mxu0 %v1383
      %1403 = vmatprep.subr.bf16.mxu0 0
      %1404 = vmatpush1.bf16.msra.mxu0 %v1384
      %1405 = vmatprep.subr.bf16.mxu0 0
      %1406 = vmatpush1.bf16.msra.mxu0 %v1385
      %1407 = vmatprep.subr.bf16.mxu0 0
      %1408 = vmatpush1.bf16.msra.mxu0 %v1386
      %1409 = vmatprep.subr.bf16.mxu0 0
      %1410 = vmatpush1.bf16.msra.mxu0 %v1387
      %1411 = vmatprep.subr.bf16.mxu0 0
      %1412 = vmatpush1.bf16.msra.mxu0 %v1388
      %1413 = vmatprep.subr.bf16.mxu0 0
      %1414 = vmatpush1.bf16.msra.mxu0 0
      %1415 = vmatprep.subr.bf16.mxu0 0
      %1416 = vmatpush1.bf16.msra.mxu0 0
      %1417 = vmatprep.subr.bf16.mxu0 0
      %1418 = vmatpush1.bf16.msra.mxu0 0
      %1419 = vmatprep.subr.bf16.mxu0 0
      %1420 = vmatpush1.bf16.msra.mxu0 0
      %1421 = vmatprep.subr.bf16.mxu0 0
      %1422 = vmatpush1.bf16.msra.mxu0 0
      %1423 = vmatprep.subr.bf16.mxu0 0
      %1424 = vmatpush1.bf16.msra.mxu0 0
      %1425 = vmatprep.subr.bf16.mxu0 0
      %1426 = vmatpush1.bf16.msra.mxu0 0
      %1427 = vmatprep.subr.bf16.mxu0 0
      %1428 = vmatpush1.bf16.msra.mxu0 0
      %1429 = vmatprep.mubr.bf16.mxu0 0
      %1430 = vmatmul.mubr.bf16.gmra.mrb[0].mxu0 %v1140
      %v1431 = vpop.f32.mrb[0].mxu0
      %v1432 = vadd.f32 0.0, %v1431
      %v1433 = vpop.f32.mrb[0].mxu0
      %v1434 = vpop.f32.mrb[0].mxu0
      %v1435 = vadd.f32 0.0, %v1434
      %v1436 = vpop.f32.mrb[0].mxu0
      %1437 = vmatprep.mubr.bf16.mxu0 0
      %1438 = vmatmul.mubr.bf16.gmra.mrb[0].mxu0 %v1148
      %v1439 = vpop.f32.mrb[0].mxu0
      %v1440 = vadd.f32 0.0, %v1439
      %v1441 = vpop.f32.mrb[0].mxu0
      %v1442 = vpop.f32.mrb[0].mxu0
      %v1443 = vadd.f32 0.0, %v1442
      %v1444 = vpop.f32.mrb[0].mxu0
      %1445 = vmatprep.mubr.bf16.mxu0 0
      %1446 = vmatmul.mubr.bf16.gmra.mrb[0].mxu0 %v1156
      %v1447 = vpop.f32.mrb[0].mxu0
      %v1448 = vadd.f32 0.0, %v1447
      %v1449 = vpop.f32.mrb[0].mxu0
      %v1450 = vpop.f32.mrb[0].mxu0
      %v1451 = vadd.f32 0.0, %v1450
      %v1452 = vpop.f32.mrb[0].mxu0
      %1453 = vmatprep.mubr.bf16.mxu0 0
      %1454 = vmatmul.mubr.bf16.gmra.mrb[0].mxu0 %v1164
      %v1455 = vpop.f32.mrb[0].mxu0
      %v1456 = vadd.f32 0.0, %v1455
      %v1457 = vpop.f32.mrb[0].mxu0
      %v1458 = vpop.f32.mrb[0].mxu0
      %v1459 = vadd.f32 0.0, %v1458
      %v1460 = vpop.f32.mrb[0].mxu0
      %1461 = vmatprep.mubr.bf16.mxu0 0
      %1462 = vmatmul.mubr.bf16.gmra.mrb[0].mxu0 %v1172
      %v1463 = vpop.f32.mrb[0].mxu0
      %v1464 = vadd.f32 0.0, %v1463
      %v1465 = vpop.f32.mrb[0].mxu0
      %v1466 = vpop.f32.mrb[0].mxu0
      %v1467 = vadd.f32 0.0, %v1466
      %v1468 = vpop.f32.mrb[0].mxu0
      %1469 = vmatprep.mubr.bf16.mxu0 0
      %1470 = vmatmul.mubr.bf16.gmra.mrb[0].mxu0 %v1180
      %v1471 = vpop.f32.mrb[0].mxu0
      %v1472 = vadd.f32 0.0, %v1471
      %v1473 = vpop.f32.mrb[0].mxu0
      %v1474 = vpop.f32.mrb[0].mxu0
      %v1475 = vadd.f32 0.0, %v1474
      %v1476 = vpop.f32.mrb[0].mxu0
      %1477 = vmatprep.mubr.bf16.mxu0 0
      %1478 = vmatmul.mubr.bf16.gmra.mrb[0].mxu0 %v1188
      %v1479 = vpop.f32.mrb[0].mxu0
      %v1480 = vadd.f32 0.0, %v1479
      %v1481 = vpop.f32.mrb[0].mxu0
      %v1482 = vpop.f32.mrb[0].mxu0
      %v1483 = vadd.f32 0.0, %v1482
      %v1484 = vpop.f32.mrb[0].mxu0
      %1485 = vmatprep.mubr.bf16.mxu0 0
      %1486 = vmatmul.mubr.bf16.gmra.mrb[0].mxu0 %v1196
      %v1487 = vpop.f32.mrb[0].mxu0
      %v1488 = vadd.f32 0.0, %v1487
      %v1489 = vpop.f32.mrb[0].mxu0
      %v1490 = vpop.f32.mrb[0].mxu0
      %v1491 = vadd.f32 0.0, %v1490
      %v1492 = vpop.f32.mrb[0].mxu0
      %1493 = vmatprep.mubr.bf16.mxu0 0
      %1494 = vmatmul.mubr.bf16.gmra.mrb[0].mxu0 %v1204
      %v1495 = vpop.f32.mrb[0].mxu0
      %v1496 = vadd.f32 0.0, %v1495
      %v1497 = vpop.f32.mrb[0].mxu0
      %v1498 = vpop.f32.mrb[0].mxu0
      %v1499 = vadd.f32 0.0, %v1498
      %v1500 = vpop.f32.mrb[0].mxu0
      %1501 = vmatprep.mubr.bf16.mxu0 0
      %1502 = vmatmul.mubr.bf16.gmra.mrb[0].mxu0 %v1212
      %v1503 = vpop.f32.mrb[0].mxu0
      %v1504 = vadd.f32 0.0, %v1503
      %v1505 = vpop.f32.mrb[0].mxu0
      %v1506 = vpop.f32.mrb[0].mxu0
      %v1507 = vadd.f32 0.0, %v1506
      %v1508 = vpop.f32.mrb[0].mxu0
      %1509 = vmatprep.mubr.bf16.mxu0 0
      %1510 = vmatmul.mubr.bf16.gmra.mrb[0].mxu0 %v1220
      %v1511 = vpop.f32.mrb[0].mxu0
      %v1512 = vadd.f32 0.0, %v1511
      %v1513 = vpop.f32.mrb[0].mxu0
      %v1514 = vpop.f32.mrb[0].mxu0
      %v1515 = vadd.f32 0.0, %v1514
      %v1516 = vpop.f32.mrb[0].mxu0
      %1517 = vmatprep.mubr.bf16.mxu0 0
      %1518 = vmatmul.mubr.bf16.gmra.mrb[0].mxu0 %v1228
      %v1519 = vpop.f32.mrb[0].mxu0
      %v1520 = vadd.f32 0.0, %v1519
      %v1521 = vpop.f32.mrb[0].mxu0
      %v1522 = vpop.f32.mrb[0].mxu0
      %v1523 = vadd.f32 0.0, %v1522
      %v1524 = vpop.f32.mrb[0].mxu0
      %1525 = vmatprep.mubr.bf16.mxu0 0
      %1526 = vmatmul.mubr.bf16.gmra.mrb[0].mxu0 %v1236
      %v1527 = vpop.f32.mrb[0].mxu0
      %v1528 = vadd.f32 0.0, %v1527
      %v1529 = vpop.f32.mrb[0].mxu0
      %v1530 = vpop.f32.mrb[0].mxu0
      %v1531 = vadd.f32 0.0, %v1530
      %v1532 = vpop.f32.mrb[0].mxu0
      %1533 = vmatprep.mubr.bf16.mxu0 0
      %1534 = vmatmul.mubr.bf16.gmra.mrb[0].mxu0 %v1244
      %v1535 = vpop.f32.mrb[0].mxu0
      %v1536 = vadd.f32 0.0, %v1535
      %v1537 = vpop.f32.mrb[0].mxu0
      %v1538 = vpop.f32.mrb[0].mxu0
      %v1539 = vadd.f32 0.0, %v1538
      %v1540 = vpop.f32.mrb[0].mxu0
      %1541 = vmatprep.mubr.bf16.mxu0 0
      %1542 = vmatmul.mubr.bf16.gmra.mrb[0].mxu0 %v1252
      %v1543 = vpop.f32.mrb[0].mxu0
      %v1544 = vadd.f32 0.0, %v1543
      %v1545 = vpop.f32.mrb[0].mxu0
      %v1546 = vpop.f32.mrb[0].mxu0
      %v1547 = vadd.f32 0.0, %v1546
      %v1548 = vpop.f32.mrb[0].mxu0
      %1549 = vmatprep.mubr.bf16.mxu0 0
      %1550 = vmatmul.mubr.bf16.gmra.mrb[0].mxu0 %v1260
      %v1551 = vpop.f32.mrb[0].mxu0
      %v1552 = vadd.f32 0.0, %v1551
      %v1553 = vpop.f32.mrb[0].mxu0
      %v1554 = vpop.f32.mrb[0].mxu0
      %v1555 = vadd.f32 0.0, %v1554
      %v1556 = vpop.f32.mrb[0].mxu0
      %1557 = vmatprep.mubr.bf16.mxu0 0
      %1558 = vmatmul.mubr.bf16.gmra.mrb[0].mxu0 %v1268
      %v1559 = vpop.f32.mrb[0].mxu0
      %v1560 = vadd.f32 0.0, %v1559
      %v1561 = vpop.f32.mrb[0].mxu0
      %v1562 = vpop.f32.mrb[0].mxu0
      %v1563 = vadd.f32 0.0, %v1562
      %v1564 = vpop.f32.mrb[0].mxu0
      %1565 = vmatprep.mubr.bf16.mxu0 0
      %1566 = vmatmul.mubr.bf16.gmra.mrb[0].mxu0 %v1276
      %v1567 = vpop.f32.mrb[0].mxu0
      %v1568 = vadd.f32 0.0, %v1567
      %v1569 = vpop.f32.mrb[0].mxu0
      %v1570 = vpop.f32.mrb[0].mxu0
      %v1571 = vadd.f32 0.0, %v1570
      %v1572 = vpop.f32.mrb[0].mxu0
      %1573 = vmatprep.mubr.bf16.mxu0 0
      %1574 = vmatmul.mubr.bf16.gmra.mrb[0].mxu0 %v1284
      %v1575 = vpop.f32.mrb[0].mxu0
      %v1576 = vadd.f32 0.0, %v1575
      %v1577 = vpop.f32.mrb[0].mxu0
      %v1578 = vpop.f32.mrb[0].mxu0
      %v1579 = vadd.f32 0.0, %v1578
      %v1580 = vpop.f32.mrb[0].mxu0
      %1581 = vmatprep.mubr.bf16.mxu0 0
      %1582 = vmatmul.mubr.bf16.gmra.mrb[0].mxu0 %v1292
      %v1583 = vpop.f32.mrb[0].mxu0
      %v1584 = vadd.f32 0.0, %v1583
      %v1585 = vpop.f32.mrb[0].mxu0
      %v1586 = vpop.f32.mrb[0].mxu0
      %v1587 = vadd.f32 0.0, %v1586
      %v1588 = vpop.f32.mrb[0].mxu0
      %1589 = vmatprep.mubr.bf16.mxu0 0
      %1590 = vmatmul.mubr.bf16.gmra.mrb[0].mxu0 %v1300
      %v1591 = vpop.f32.mrb[0].mxu0
      %v1592 = vadd.f32 0.0, %v1591
      %v1593 = vpop.f32.mrb[0].mxu0
      %v1594 = vpop.f32.mrb[0].mxu0
      %v1595 = vadd.f32 0.0, %v1594
      %v1596 = vpop.f32.mrb[0].mxu0
      %1597 = vmatprep.mubr.bf16.mxu0 0
      %1598 = vmatmul.mubr.bf16.gmra.mrb[0].mxu0 %v1308
      %v1599 = vpop.f32.mrb[0].mxu0
      %v1600 = vadd.f32 0.0, %v1599
      %v1601 = vpop.f32.mrb[0].mxu0
      %v1602 = vpop.f32.mrb[0].mxu0
      %v1603 = vadd.f32 0.0, %v1602
      %v1604 = vpop.f32.mrb[0].mxu0
      %1605 = vmatprep.mubr.bf16.mxu0 0
      %1606 = vmatmul.mubr.bf16.gmra.mrb[0].mxu0 %v1316
      %v1607 = vpop.f32.mrb[0].mxu0
      %v1608 = vadd.f32 0.0, %v1607
      %v1609 = vpop.f32.mrb[0].mxu0
      %v1610 = vpop.f32.mrb[0].mxu0
      %v1611 = vadd.f32 0.0, %v1610
      %v1612 = vpop.f32.mrb[0].mxu0
      %1613 = vmatprep.mubr.bf16.mxu0 0
      %1614 = vmatmul.mubr.bf16.gmra.mrb[0].mxu0 %v1324
      %v1615 = vpop.f32.mrb[0].mxu0
      %v1616 = vadd.f32 0.0, %v1615
      %v1617 = vpop.f32.mrb[0].mxu0
      %v1618 = vpop.f32.mrb[0].mxu0
      %v1619 = vadd.f32 0.0, %v1618
      %v1620 = vpop.f32.mrb[0].mxu0
      %1621 = vdwg.mxu0
      %v1622 = vld [vmem:[#allocation4] sm:$0xff]
      %v1623 = vld [vmem:[#allocation4 + $0x8] sm:$0xff]
      %v1624 = vld [vmem:[#allocation4 + $0x10] sm:$0xff]
      %v1625 = vld [vmem:[#allocation4 + $0x18] sm:$0xff]
      %v1626 = vld [vmem:[#allocation4 + $0x20] sm:$0xff]
      %v1627 = vld [vmem:[#allocation4 + $0x28] sm:$0xff]
      %v1628 = vld [vmem:[#allocation4 + $0x30] sm:$0xff]
      %v1629 = vld [vmem:[#allocation4 + $0x38] sm:$0xff]
      %v1630 = vld [vmem:[#allocation4 + $0x40] sm:$0xff]
      %v1631 = vld [vmem:[#allocation4 + $0x48] sm:$0xff]
      %v1632 = vld [vmem:[#allocation4 + $0x50] sm:$0xff]
      %v1633 = vld [vmem:[#allocation4 + $0x58] sm:$0xff]
      %v1634 = vld [vmem:[#allocation4 + $0x60] sm:$0xff]
      %v1635 = vld [vmem:[#allocation4 + $0x68] sm:$0xff]
      %v1636 = vld [vmem:[#allocation4 + $0x70] sm:$0xff]
      %v1637 = vld [vmem:[#allocation4 + $0x78] sm:$0xff]
      %v1638 = vld [vmem:[#allocation4 + $0x80] sm:$0xff]
      %v1639 = vld [vmem:[#allocation4 + $0x88] sm:$0xff]
      %v1640 = vld [vmem:[#allocation4 + $0x90] sm:$0xff]
      %v1641 = vld [vmem:[#allocation4 + $0x98] sm:$0xff]
      %v1642 = vld [vmem:[#allocation4 + $0xa0] sm:$0xff]
      %v1643 = vld [vmem:[#allocation4 + $0xa8] sm:$0xff]
      %v1644 = vld [vmem:[#allocation4 + $0xb0] sm:$0xff]
      %v1645 = vld [vmem:[#allocation4 + $0xb8] sm:$0xff]
      %v1646 = vld [vmem:[#allocation4 + $0xc0] sm:$0xff]
      %v1647 = vld [vmem:[#allocation4 + $0xc8] sm:$0xff]
      %v1648 = vld [vmem:[#allocation4 + $0xd0] sm:$0xff]
      %v1649 = vld [vmem:[#allocation4 + $0xd8] sm:$0xff]
      %v1650 = vld [vmem:[#allocation4 + $0xe0] sm:$0xff]
      %v1651 = vld [vmem:[#allocation4 + $0xe8] sm:$0xff]
      %v1652 = vld [vmem:[#allocation4 + $0xf0] sm:$0xff]
      %v1653 = vld [vmem:[#allocation4 + $0xf8] sm:$0xff]
      %v1654 = vld [vmem:[#allocation4 + $0x100] sm:$0xff]
      %v1655 = vld [vmem:[#allocation4 + $0x108] sm:$0xff]
      %v1656 = vld [vmem:[#allocation4 + $0x110] sm:$0xff]
      %v1657 = vld [vmem:[#allocation4 + $0x118] sm:$0xff]
      %v1658 = vld [vmem:[#allocation4 + $0x120] sm:$0xff]
      %v1659 = vld [vmem:[#allocation4 + $0x128] sm:$0xff]
      %v1660 = vld [vmem:[#allocation4 + $0x130] sm:$0xff]
      %v1661 = vld [vmem:[#allocation4 + $0x138] sm:$0xff]
      %v1662 = vld [vmem:[#allocation4 + $0x140] sm:$0xff]
      %v1663 = vld [vmem:[#allocation4 + $0x148] sm:$0xff]
      %v1664 = vld [vmem:[#allocation4 + $0x150] sm:$0xff]
      %v1665 = vld [vmem:[#allocation4 + $0x158] sm:$0xff]
      %v1666 = vld [vmem:[#allocation4 + $0x160] sm:$0xff]
      %v1667 = vld [vmem:[#allocation4 + $0x168] sm:$0xff]
      %v1668 = vld [vmem:[#allocation4 + $0x170] sm:$0xff]
      %v1669 = vld [vmem:[#allocation4 + $0x178] sm:$0xff]
      %v1670 = vadd.f32 %v1622, %v1432
      %v1671 = vadd.f32 %v1623, %v1435
      %v1672 = vadd.f32 %v1624, %v1440
      %v1673 = vadd.f32 %v1625, %v1443
      %v1674 = vadd.f32 %v1626, %v1448
      %v1675 = vadd.f32 %v1627, %v1451
      %v1676 = vadd.f32 %v1628, %v1456
      %v1677 = vadd.f32 %v1629, %v1459
      %v1678 = vadd.f32 %v1630, %v1464
      %v1679 = vadd.f32 %v1631, %v1467
      %v1680 = vadd.f32 %v1632, %v1472
      %v1681 = vadd.f32 %v1633, %v1475
      %v1682 = vadd.f32 %v1634, %v1480
      %v1683 = vadd.f32 %v1635, %v1483
      %v1684 = vadd.f32 %v1636, %v1488
      %v1685 = vadd.f32 %v1637, %v1491
      %v1686 = vadd.f32 %v1638, %v1496
      %v1687 = vadd.f32 %v1639, %v1499
      %v1688 = vadd.f32 %v1640, %v1504
      %v1689 = vadd.f32 %v1641, %v1507
      %v1690 = vadd.f32 %v1642, %v1512
      %v1691 = vadd.f32 %v1643, %v1515
      %v1692 = vadd.f32 %v1644, %v1520
      %v1693 = vadd.f32 %v1645, %v1523
      %v1694 = vadd.f32 %v1646, %v1528
      %v1695 = vadd.f32 %v1647, %v1531
      %v1696 = vadd.f32 %v1648, %v1536
      %v1697 = vadd.f32 %v1649, %v1539
      %v1698 = vadd.f32 %v1650, %v1544
      %v1699 = vadd.f32 %v1651, %v1547
      %v1700 = vadd.f32 %v1652, %v1552
      %v1701 = vadd.f32 %v1653, %v1555
      %v1702 = vadd.f32 %v1654, %v1560
      %v1703 = vadd.f32 %v1655, %v1563
      %v1704 = vadd.f32 %v1656, %v1568
      %v1705 = vadd.f32 %v1657, %v1571
      %v1706 = vadd.f32 %v1658, %v1576
      %v1707 = vadd.f32 %v1659, %v1579
      %v1708 = vadd.f32 %v1660, %v1584
      %v1709 = vadd.f32 %v1661, %v1587
      %v1710 = vadd.f32 %v1662, %v1592
      %v1711 = vadd.f32 %v1663, %v1595
      %v1712 = vadd.f32 %v1664, %v1600
      %v1713 = vadd.f32 %v1665, %v1603
      %v1714 = vadd.f32 %v1666, %v1608
      %v1715 = vadd.f32 %v1667, %v1611
      %v1716 = vadd.f32 %v1668, %v1616
      %v1717 = vadd.f32 %v1669, %v1619
      %1718 = vst [vmem:[#allocation4] sm:$0xff] %v1670
      %1719 = vst [vmem:[#allocation4 + $0x8] sm:$0xff] %v1671
      %1720 = vst [vmem:[#allocation4 + $0x10] sm:$0xff] %v1672
      %1721 = vst [vmem:[#allocation4 + $0x18] sm:$0xff] %v1673
      %1722 = vst [vmem:[#allocation4 + $0x20] sm:$0xff] %v1674
      %1723 = vst [vmem:[#allocation4 + $0x28] sm:$0xff] %v1675
      %1724 = vst [vmem:[#allocation4 + $0x30] sm:$0xff] %v1676
      %1725 = vst [vmem:[#allocation4 + $0x38] sm:$0xff] %v1677
      %1726 = vst [vmem:[#allocation4 + $0x40] sm:$0xff] %v1678
      %1727 = vst [vmem:[#allocation4 + $0x48] sm:$0xff] %v1679
      %1728 = vst [vmem:[#allocation4 + $0x50] sm:$0xff] %v1680
      %1729 = vst [vmem:[#allocation4 + $0x58] sm:$0xff] %v1681
      %1730 = vst [vmem:[#allocation4 + $0x60] sm:$0xff] %v1682
      %1731 = vst [vmem:[#allocation4 + $0x68] sm:$0xff] %v1683
      %1732 = vst [vmem:[#allocation4 + $0x70] sm:$0xff] %v1684
      %1733 = vst [vmem:[#allocation4 + $0x78] sm:$0xff] %v1685
      %1734 = vst [vmem:[#allocation4 + $0x80] sm:$0xff] %v1686
      %1735 = vst [vmem:[#allocation4 + $0x88] sm:$0xff] %v1687
      %1736 = vst [vmem:[#allocation4 + $0x90] sm:$0xff] %v1688
      %1737 = vst [vmem:[#allocation4 + $0x98] sm:$0xff] %v1689
      %1738 = vst [vmem:[#allocation4 + $0xa0] sm:$0xff] %v1690
      %1739 = vst [vmem:[#allocation4 + $0xa8] sm:$0xff] %v1691
      %1740 = vst [vmem:[#allocation4 + $0xb0] sm:$0xff] %v1692
      %1741 = vst [vmem:[#allocation4 + $0xb8] sm:$0xff] %v1693
      %1742 = vst [vmem:[#allocation4 + $0xc0] sm:$0xff] %v1694
      %1743 = vst [vmem:[#allocation4 + $0xc8] sm:$0xff] %v1695
      %1744 = vst [vmem:[#allocation4 + $0xd0] sm:$0xff] %v1696
      %1745 = vst [vmem:[#allocation4 + $0xd8] sm:$0xff] %v1697
      %1746 = vst [vmem:[#allocation4 + $0xe0] sm:$0xff] %v1698
      %1747 = vst [vmem:[#allocation4 + $0xe8] sm:$0xff] %v1699
      %1748 = vst [vmem:[#allocation4 + $0xf0] sm:$0xff] %v1700
      %1749 = vst [vmem:[#allocation4 + $0xf8] sm:$0xff] %v1701
      %1750 = vst [vmem:[#allocation4 + $0x100] sm:$0xff] %v1702
      %1751 = vst [vmem:[#allocation4 + $0x108] sm:$0xff] %v1703
      %1752 = vst [vmem:[#allocation4 + $0x110] sm:$0xff] %v1704
      %1753 = vst [vmem:[#allocation4 + $0x118] sm:$0xff] %v1705
      %1754 = vst [vmem:[#allocation4 + $0x120] sm:$0xff] %v1706
      %1755 = vst [vmem:[#allocation4 + $0x128] sm:$0xff] %v1707
      %1756 = vst [vmem:[#allocation4 + $0x130] sm:$0xff] %v1708
      %1757 = vst [vmem:[#allocation4 + $0x138] sm:$0xff] %v1709
      %1758 = vst [vmem:[#allocation4 + $0x140] sm:$0xff] %v1710
      %1759 = vst [vmem:[#allocation4 + $0x148] sm:$0xff] %v1711
      %1760 = vst [vmem:[#allocation4 + $0x150] sm:$0xff] %v1712
      %1761 = vst [vmem:[#allocation4 + $0x158] sm:$0xff] %v1713
      %1762 = vst [vmem:[#allocation4 + $0x160] sm:$0xff] %v1714
      %1763 = vst [vmem:[#allocation4 + $0x168] sm:$0xff] %v1715
      %1764 = vst [vmem:[#allocation4 + $0x170] sm:$0xff] %v1716
      %1765 = vst [vmem:[#allocation4 + $0x178] sm:$0xff] %v1717
      %v1766 = vld [vmem:[%s404] sm:$0xe]
      %v1767 = vld [vmem:[%s404 + $0x4] sm:$0xf]
      %v1768 = vld [vmem:[%s404 + $0x8] sm:$0xf]
      %v1769 = vld [vmem:[%s404 + $0xc] sm:$0xf]
      %v1770 = vld [vmem:[%s404 + $0x10] sm:$0xf]
      %v1771 = vld [vmem:[%s404 + $0x14] sm:$0xf]
      %v1772 = vld [vmem:[%s404 + $0x18] sm:$0xf]
      %v1773 = vld [vmem:[%s404 + $0x1c] sm:$0xf]
      %v1774 = vld [vmem:[%s404 + $0x20] sm:$0xf]
      %v1775 = vld [vmem:[%s404 + $0x24] sm:$0xf]
      %v1776 = vld [vmem:[%s404 + $0x28] sm:$0xf]
      %v1777 = vld [vmem:[%s404 + $0x2c] sm:$0xf]
      %v1778 = vld [vmem:[%s404 + $0x30] sm:$0xf]
      %v1779 = vld [vmem:[%s404 + $0x34] sm:$0xf]
      %v1780 = vld [vmem:[%s404 + $0x38] sm:$0xf]
      %v1781 = vld [vmem:[%s404 + $0x3c] sm:$0xf]
      %v1782 = vld [vmem:[%s404 + $0x40] sm:$0xf]
      %v1783 = vld [vmem:[%s404 + $0x44] sm:$0xf]
      %v1784 = vld [vmem:[%s404 + $0x48] sm:$0xf]
      %v1785 = vld [vmem:[%s404 + $0x4c] sm:$0xf]
      %v1786 = vld [vmem:[%s404 + $0x50] sm:$0xf]
      %v1787 = vld [vmem:[%s404 + $0x54] sm:$0xf]
      %v1788 = vld [vmem:[%s404 + $0x58] sm:$0xf]
      %v1789 = vld [vmem:[%s404 + $0x5c] sm:$0xf]
      %v1790 = vld [vmem:[%s404 + $0x60] sm:$0xf]
      %v1791 = vld [vmem:[%s404 + $0x64] sm:$0xf]
      %v1792 = vld [vmem:[%s404 + $0x68] sm:$0xf]
      %v1793 = vld [vmem:[%s404 + $0x6c] sm:$0xf]
      %v1794 = vld [vmem:[%s404 + $0x70] sm:$0xf]
      %v1795 = vld [vmem:[%s404 + $0x74] sm:$0xf]
      %v1796 = vld [vmem:[%s404 + $0x78] sm:$0xf]
      %v1797 = vld [vmem:[%s404 + $0x7c] sm:$0xf]
      %v1798 = vld [vmem:[%s404 + $0x80] sm:$0xf]
      %v1799 = vld [vmem:[%s404 + $0x84] sm:$0xf]
      %v1800 = vld [vmem:[%s404 + $0x88] sm:$0xf]
      %v1801 = vld [vmem:[%s404 + $0x8c] sm:$0xf]
      %v1802 = vld [vmem:[%s404 + $0x90] sm:$0xf]
      %v1803 = vld [vmem:[%s404 + $0x94] sm:$0xf]
      %v1804 = vld [vmem:[%s404 + $0x98] sm:$0xf]
      %v1805 = vld [vmem:[%s404 + $0x9c] sm:$0xf]
      %v1806 = vld [vmem:[%s404 + $0xa0] sm:$0xf]
      %v1807 = vld [vmem:[%s404 + $0xa4] sm:$0xf]
      %v1808 = vld [vmem:[%s404 + $0xa8] sm:$0xf]
      %v1809 = vld [vmem:[%s404 + $0xac] sm:$0xf]
      %v1810 = vld [vmem:[%s404 + $0xb0] sm:$0xf]
      %v1811 = vld [vmem:[%s404 + $0xb4] sm:$0xf]
      %v1812 = vld [vmem:[%s404 + $0xb8] sm:$0xf]
      %v1813 = vld [vmem:[%s404 + $0xbc] sm:$0xf]
      %v1814 = vld [vmem:[%s404 + $0xc0] sm:$0x1]
      %s1815 = scalar_lea.vmem %s1, 128
      %v1816 = vld [vmem:[%s1815] sm:$0xf]
      %v1817 = vld [vmem:[%s1815 + $0x4] sm:$0xf]
      %v1818 = vld [vmem:[%s1815 + $0x8] sm:$0xf]
      %v1819 = vld [vmem:[%s1815 + $0xc] sm:$0xf]
      %v1820 = vld [vmem:[%s1815 + $0x10] sm:$0xf]
      %v1821 = vld [vmem:[%s1815 + $0x14] sm:$0xf]
      %v1822 = vld [vmem:[%s1815 + $0x18] sm:$0xf]
      %v1823 = vld [vmem:[%s1815 + $0x1c] sm:$0xf]
      %v1824 = vld [vmem:[%s1815 + $0x20] sm:$0xf]
      %v1825 = vld [vmem:[%s1815 + $0x24] sm:$0xf]
      %v1826 = vld [vmem:[%s1815 + $0x28] sm:$0xf]
      %v1827 = vld [vmem:[%s1815 + $0x2c] sm:$0xf]
      %v1828 = vld [vmem:[%s1815 + $0x30] sm:$0xf]
      %v1829 = vld [vmem:[%s1815 + $0x34] sm:$0xf]
      %v1830 = vld [vmem:[%s1815 + $0x38] sm:$0xf]
      %v1831 = vld [vmem:[%s1815 + $0x3c] sm:$0xf]
      %v1881 = vunpack.c.l.b16 %v1766
      %v1882 = vunpack.c.l.b16 %v1767
      %v1883 = vunpack.c.l.b16 %v1768
      %v1884 = vunpack.c.l.b16 %v1769
      %v1885 = vunpack.c.l.b16 %v1770
      %v1886 = vunpack.c.l.b16 %v1771
      %v1887 = vunpack.c.l.b16 %v1772
      %v1888 = vunpack.c.l.b16 %v1773
      %v1889 = vunpack.c.l.b16 %v1774
      %v1890 = vunpack.c.l.b16 %v1775
      %v1891 = vunpack.c.l.b16 %v1776
      %v1892 = vunpack.c.l.b16 %v1777
      %v1893 = vunpack.c.l.b16 %v1778
      %v1894 = vunpack.c.l.b16 %v1779
      %v1895 = vunpack.c.l.b16 %v1780
      %v1896 = vunpack.c.l.b16 %v1781
      %v1897 = vunpack.c.l.b16 %v1782
      %v1898 = vunpack.c.l.b16 %v1783
      %v1899 = vunpack.c.l.b16 %v1784
      %v1900 = vunpack.c.l.b16 %v1785
      %v1901 = vunpack.c.l.b16 %v1786
      %v1902 = vunpack.c.l.b16 %v1787
      %v1903 = vunpack.c.l.b16 %v1788
      %v1904 = vunpack.c.l.b16 %v1789
      %v1905 = vunpack.c.l.b16 %v1790
      %v1906 = vunpack.c.l.b16 %v1791
      %v1907 = vunpack.c.l.b16 %v1792
      %v1908 = vunpack.c.l.b16 %v1793
      %v1909 = vunpack.c.l.b16 %v1794
      %v1910 = vunpack.c.l.b16 %v1795
      %v1911 = vunpack.c.l.b16 %v1796
      %v1912 = vunpack.c.l.b16 %v1797
      %v1913 = vunpack.c.l.b16 %v1798
      %v1914 = vunpack.c.l.b16 %v1799
      %v1915 = vunpack.c.l.b16 %v1800
      %v1916 = vunpack.c.l.b16 %v1801
      %v1917 = vunpack.c.l.b16 %v1802
      %v1918 = vunpack.c.l.b16 %v1803
      %v1919 = vunpack.c.l.b16 %v1804
      %v1920 = vunpack.c.l.b16 %v1805
      %v1921 = vunpack.c.l.b16 %v1806
      %v1922 = vunpack.c.l.b16 %v1807
      %v1923 = vunpack.c.l.b16 %v1808
      %v1924 = vunpack.c.l.b16 %v1809
      %v1925 = vunpack.c.l.b16 %v1810
      %v1926 = vunpack.c.l.b16 %v1811
      %v1927 = vunpack.c.l.b16 %v1812
      %v1928 = vunpack.c.l.b16 %v1813
      %v1929 = vunpack.c.l.b16 %v1814
      %v1930 = vpack.c.b16 %v1882, %v1881
      %v1931 = vpack.c.b16 %v1884, %v1883
      %v1932 = vpack.c.b16 %v1886, %v1885
      %v1933 = vpack.c.b16 %v1888, %v1887
      %v1934 = vpack.c.b16 %v1890, %v1889
      %v1935 = vpack.c.b16 %v1892, %v1891
      %v1936 = vpack.c.b16 %v1894, %v1893
      %v1937 = vpack.c.b16 %v1896, %v1895
      %v1938 = vpack.c.b16 %v1898, %v1897
      %v1939 = vpack.c.b16 %v1900, %v1899
      %v1940 = vpack.c.b16 %v1902, %v1901
      %v1941 = vpack.c.b16 %v1904, %v1903
      %v1942 = vpack.c.b16 %v1906, %v1905
      %v1943 = vpack.c.b16 %v1908, %v1907
      %v1944 = vpack.c.b16 %v1910, %v1909
      %v1945 = vpack.c.b16 %v1912, %v1911
      %v1946 = vpack.c.b16 %v1914, %v1913
      %v1947 = vpack.c.b16 %v1916, %v1915
      %v1948 = vpack.c.b16 %v1918, %v1917
      %v1949 = vpack.c.b16 %v1920, %v1919
      %v1950 = vpack.c.b16 %v1922, %v1921
      %v1951 = vpack.c.b16 %v1924, %v1923
      %v1952 = vpack.c.b16 %v1926, %v1925
      %v1953 = vpack.c.b16 %v1928, %v1927
      %v1954 = vpack.c.b16 %v1929, %v1929
      %vm1955 = vcmask 1046528
      %v1956 = vrot.slane %v1930, 1
      %v1957 = vrot.slane %v1931, 1
      %v1958 = vsel %vm1955, %v1956, %v1957
      %v1959 = vrot.slane %v1932, 1
      %v1960 = vsel %vm1955, %v1957, %v1959
      %v1961 = vrot.slane %v1933, 1
      %v1962 = vsel %vm1955, %v1959, %v1961
      %v1963 = vrot.slane %v1934, 1
      %v1964 = vsel %vm1955, %v1961, %v1963
      %v1965 = vrot.slane %v1935, 1
      %v1966 = vsel %vm1955, %v1963, %v1965
      %v1967 = vrot.slane %v1936, 1
      %v1968 = vsel %vm1955, %v1965, %v1967
      %v1969 = vrot.slane %v1937, 1
      %v1970 = vsel %vm1955, %v1967, %v1969
      %v1971 = vrot.slane %v1938, 1
      %v1972 = vsel %vm1955, %v1969, %v1971
      %v1973 = vrot.slane %v1939, 1
      %v1974 = vsel %vm1955, %v1971, %v1973
      %v1975 = vrot.slane %v1940, 1
      %v1976 = vsel %vm1955, %v1973, %v1975
      %v1977 = vrot.slane %v1941, 1
      %v1978 = vsel %vm1955, %v1975, %v1977
      %v1979 = vrot.slane %v1942, 1
      %v1980 = vsel %vm1955, %v1977, %v1979
      %v1981 = vrot.slane %v1943, 1
      %v1982 = vsel %vm1955, %v1979, %v1981
      %v1983 = vrot.slane %v1944, 1
      %v1984 = vsel %vm1955, %v1981, %v1983
      %v1985 = vrot.slane %v1945, 1
      %v1986 = vsel %vm1955, %v1983, %v1985
      %v1987 = vrot.slane %v1946, 1
      %v1988 = vsel %vm1955, %v1985, %v1987
      %v1989 = vrot.slane %v1947, 1
      %v1990 = vsel %vm1955, %v1987, %v1989
      %v1991 = vrot.slane %v1948, 1
      %v1992 = vsel %vm1955, %v1989, %v1991
      %v1993 = vrot.slane %v1949, 1
      %v1994 = vsel %vm1955, %v1991, %v1993
      %v1995 = vrot.slane %v1950, 1
      %v1996 = vsel %vm1955, %v1993, %v1995
      %v1997 = vrot.slane %v1951, 1
      %v1998 = vsel %vm1955, %v1995, %v1997
      %v1999 = vrot.slane %v1952, 1
      %v2000 = vsel %vm1955, %v1997, %v1999
      %v2001 = vrot.slane %v1953, 1
      %v2002 = vsel %vm1955, %v1999, %v2001
      %v2003 = vrot.slane %v1954, 1
      %v2004 = vsel %vm1955, %v2001, %v2003
      %v2045 = vunpack.c.l.b16 %v1816
      %v2046 = vunpack.c.l.b16 %v1817
      %v2047 = vunpack.c.l.b16 %v1818
      %v2048 = vunpack.c.l.b16 %v1819
      %v2049 = vunpack.c.l.b16 %v1820
      %v2050 = vunpack.c.l.b16 %v1821
      %v2051 = vunpack.c.l.b16 %v1822
      %v2052 = vunpack.c.l.b16 %v1823
      %v2053 = vunpack.c.l.b16 %v1824
      %v2054 = vunpack.c.l.b16 %v1825
      %v2055 = vunpack.c.l.b16 %v1826
      %v2056 = vunpack.c.l.b16 %v1827
      %v2057 = vunpack.c.l.b16 %v1828
      %v2058 = vunpack.c.l.b16 %v1829
      %v2059 = vunpack.c.l.b16 %v1830
      %v2060 = vunpack.c.l.b16 %v1831
      %v2061 = vpack.c.b16 %v2046, %v2045
      %v2062 = vpack.c.b16 %v2048, %v2047
      %v2063 = vpack.c.b16 %v2050, %v2049
      %v2064 = vpack.c.b16 %v2052, %v2051
      %v2065 = vpack.c.b16 %v2054, %v2053
      %v2066 = vpack.c.b16 %v2056, %v2055
      %v2067 = vpack.c.b16 %v2058, %v2057
      %v2068 = vpack.c.b16 %v2060, %v2059
      %2077 = vmatprep.subr.bf16.mxu0 0
      %2078 = vmatpush1.bf16.msra.mxu0 %v2061
      %2079 = vmatprep.subr.bf16.mxu0 0
      %2080 = vmatpush1.bf16.msra.mxu0 %v2062
      %2081 = vmatprep.subr.bf16.mxu0 0
      %2082 = vmatpush1.bf16.msra.mxu0 %v2063
      %2083 = vmatprep.subr.bf16.mxu0 0
      %2084 = vmatpush1.bf16.msra.mxu0 %v2064
      %2085 = vmatprep.subr.bf16.mxu0 0
      %2086 = vmatpush1.bf16.msra.mxu0 %v2065
      %2087 = vmatprep.subr.bf16.mxu0 0
      %2088 = vmatpush1.bf16.msra.mxu0 %v2066
      %2089 = vmatprep.subr.bf16.mxu0 0
      %2090 = vmatpush1.bf16.msra.mxu0 %v2067
      %2091 = vmatprep.subr.bf16.mxu0 0
      %2092 = vmatpush1.bf16.msra.mxu0 %v2068
      %2093 = vmatprep.subr.bf16.mxu0 0
      %2094 = vmatpush1.bf16.msra.mxu0 0
      %2095 = vmatprep.subr.bf16.mxu0 0
      %2096 = vmatpush1.bf16.msra.mxu0 0
      %2097 = vmatprep.subr.bf16.mxu0 0
      %2098 = vmatpush1.bf16.msra.mxu0 0
      %2099 = vmatprep.subr.bf16.mxu0 0
      %2100 = vmatpush1.bf16.msra.mxu0 0
      %2101 = vmatprep.subr.bf16.mxu0 0
      %2102 = vmatpush1.bf16.msra.mxu0 0
      %2103 = vmatprep.subr.bf16.mxu0 0
      %2104 = vmatpush1.bf16.msra.mxu0 0
      %2105 = vmatprep.subr.bf16.mxu0 0
      %2106 = vmatpush1.bf16.msra.mxu0 0
      %2107 = vmatprep.subr.bf16.mxu0 0
      %2108 = vmatpush1.bf16.msra.mxu0 0
      %2109 = vmatprep.mubr.bf16.mxu0 0
      %2110 = vmatmul.mubr.bf16.gmra.mrb[0].mxu0 %v1958
      %v2111 = vpop.f32.mrb[0].mxu0
      %v2112 = vadd.f32 0.0, %v2111
      %v2113 = vpop.f32.mrb[0].mxu0
      %v2114 = vpop.f32.mrb[0].mxu0
      %v2115 = vadd.f32 0.0, %v2114
      %v2116 = vpop.f32.mrb[0].mxu0
      %2117 = vmatprep.mubr.bf16.mxu0 0
      %2118 = vmatmul.mubr.bf16.gmra.mrb[0].mxu0 %v1960
      %v2119 = vpop.f32.mrb[0].mxu0
      %v2120 = vadd.f32 0.0, %v2119
      %v2121 = vpop.f32.mrb[0].mxu0
      %v2122 = vpop.f32.mrb[0].mxu0
      %v2123 = vadd.f32 0.0, %v2122
      %v2124 = vpop.f32.mrb[0].mxu0
      %2125 = vmatprep.mubr.bf16.mxu0 0
      %2126 = vmatmul.mubr.bf16.gmra.mrb[0].mxu0 %v1962
      %v2127 = vpop.f32.mrb[0].mxu0
      %v2128 = vadd.f32 0.0, %v2127
      %v2129 = vpop.f32.mrb[0].mxu0
      %v2130 = vpop.f32.mrb[0].mxu0
      %v2131 = vadd.f32 0.0, %v2130
      %v2132 = vpop.f32.mrb[0].mxu0
      %2133 = vmatprep.mubr.bf16.mxu0 0
      %2134 = vmatmul.mubr.bf16.gmra.mrb[0].mxu0 %v1964
      %v2135 = vpop.f32.mrb[0].mxu0
      %v2136 = vadd.f32 0.0, %v2135
      %v2137 = vpop.f32.mrb[0].mxu0
      %v2138 = vpop.f32.mrb[0].mxu0
      %v2139 = vadd.f32 0.0, %v2138
      %v2140 = vpop.f32.mrb[0].mxu0
      %2141 = vmatprep.mubr.bf16.mxu0 0
      %2142 = vmatmul.mubr.bf16.gmra.mrb[0].mxu0 %v1966
      %v2143 = vpop.f32.mrb[0].mxu0
      %v2144 = vadd.f32 0.0, %v2143
      %v2145 = vpop.f32.mrb[0].mxu0
      %v2146 = vpop.f32.mrb[0].mxu0
      %v2147 = vadd.f32 0.0, %v2146
      %v2148 = vpop.f32.mrb[0].mxu0
      %2149 = vmatprep.mubr.bf16.mxu0 0
      %2150 = vmatmul.mubr.bf16.gmra.mrb[0].mxu0 %v1968
      %v2151 = vpop.f32.mrb[0].mxu0
      %v2152 = vadd.f32 0.0, %v2151
      %v2153 = vpop.f32.mrb[0].mxu0
      %v2154 = vpop.f32.mrb[0].mxu0
      %v2155 = vadd.f32 0.0, %v2154
      %v2156 = vpop.f32.mrb[0].mxu0
      %2157 = vmatprep.mubr.bf16.mxu0 0
      %2158 = vmatmul.mubr.bf16.gmra.mrb[0].mxu0 %v1970
      %v2159 = vpop.f32.mrb[0].mxu0
      %v2160 = vadd.f32 0.0, %v2159
      %v2161 = vpop.f32.mrb[0].mxu0
      %v2162 = vpop.f32.mrb[0].mxu0
      %v2163 = vadd.f32 0.0, %v2162
      %v2164 = vpop.f32.mrb[0].mxu0
      %2165 = vmatprep.mubr.bf16.mxu0 0
      %2166 = vmatmul.mubr.bf16.gmra.mrb[0].mxu0 %v1972
      %v2167 = vpop.f32.mrb[0].mxu0
      %v2168 = vadd.f32 0.0, %v2167
      %v2169 = vpop.f32.mrb[0].mxu0
      %v2170 = vpop.f32.mrb[0].mxu0
      %v2171 = vadd.f32 0.0, %v2170
      %v2172 = vpop.f32.mrb[0].mxu0
      %2173 = vmatprep.mubr.bf16.mxu0 0
      %2174 = vmatmul.mubr.bf16.gmra.mrb[0].mxu0 %v1974
      %v2175 = vpop.f32.mrb[0].mxu0
      %v2176 = vadd.f32 0.0, %v2175
      %v2177 = vpop.f32.mrb[0].mxu0
      %v2178 = vpop.f32.mrb[0].mxu0
      %v2179 = vadd.f32 0.0, %v2178
      %v2180 = vpop.f32.mrb[0].mxu0
      %2181 = vmatprep.mubr.bf16.mxu0 0
      %2182 = vmatmul.mubr.bf16.gmra.mrb[0].mxu0 %v1976
      %v2183 = vpop.f32.mrb[0].mxu0
      %v2184 = vadd.f32 0.0, %v2183
      %v2185 = vpop.f32.mrb[0].mxu0
      %v2186 = vpop.f32.mrb[0].mxu0
      %v2187 = vadd.f32 0.0, %v2186
      %v2188 = vpop.f32.mrb[0].mxu0
      %2189 = vmatprep.mubr.bf16.mxu0 0
      %2190 = vmatmul.mubr.bf16.gmra.mrb[0].mxu0 %v1978
      %v2191 = vpop.f32.mrb[0].mxu0
      %v2192 = vadd.f32 0.0, %v2191
      %v2193 = vpop.f32.mrb[0].mxu0
      %v2194 = vpop.f32.mrb[0].mxu0
      %v2195 = vadd.f32 0.0, %v2194
      %v2196 = vpop.f32.mrb[0].mxu0
      %2197 = vmatprep.mubr.bf16.mxu0 0
      %2198 = vmatmul.mubr.bf16.gmra.mrb[0].mxu0 %v1980
      %v2199 = vpop.f32.mrb[0].mxu0
      %v2200 = vadd.f32 0.0, %v2199
      %v2201 = vpop.f32.mrb[0].mxu0
      %v2202 = vpop.f32.mrb[0].mxu0
      %v2203 = vadd.f32 0.0, %v2202
      %v2204 = vpop.f32.mrb[0].mxu0
      %2205 = vmatprep.mubr.bf16.mxu0 0
      %2206 = vmatmul.mubr.bf16.gmra.mrb[0].mxu0 %v1982
      %v2207 = vpop.f32.mrb[0].mxu0
      %v2208 = vadd.f32 0.0, %v2207
      %v2209 = vpop.f32.mrb[0].mxu0
      %v2210 = vpop.f32.mrb[0].mxu0
      %v2211 = vadd.f32 0.0, %v2210
      %v2212 = vpop.f32.mrb[0].mxu0
      %2213 = vmatprep.mubr.bf16.mxu0 0
      %2214 = vmatmul.mubr.bf16.gmra.mrb[0].mxu0 %v1984
      %v2215 = vpop.f32.mrb[0].mxu0
      %v2216 = vadd.f32 0.0, %v2215
      %v2217 = vpop.f32.mrb[0].mxu0
      %v2218 = vpop.f32.mrb[0].mxu0
      %v2219 = vadd.f32 0.0, %v2218
      %v2220 = vpop.f32.mrb[0].mxu0
      %2221 = vmatprep.mubr.bf16.mxu0 0
      %2222 = vmatmul.mubr.bf16.gmra.mrb[0].mxu0 %v1986
      %v2223 = vpop.f32.mrb[0].mxu0
      %v2224 = vadd.f32 0.0, %v2223
      %v2225 = vpop.f32.mrb[0].mxu0
      %v2226 = vpop.f32.mrb[0].mxu0
      %v2227 = vadd.f32 0.0, %v2226
      %v2228 = vpop.f32.mrb[0].mxu0
      %2229 = vmatprep.mubr.bf16.mxu0 0
      %2230 = vmatmul.mubr.bf16.gmra.mrb[0].mxu0 %v1988
      %v2231 = vpop.f32.mrb[0].mxu0
      %v2232 = vadd.f32 0.0, %v2231
      %v2233 = vpop.f32.mrb[0].mxu0
      %v2234 = vpop.f32.mrb[0].mxu0
      %v2235 = vadd.f32 0.0, %v2234
      %v2236 = vpop.f32.mrb[0].mxu0
      %2237 = vmatprep.mubr.bf16.mxu0 0
      %2238 = vmatmul.mubr.bf16.gmra.mrb[0].mxu0 %v1990
      %v2239 = vpop.f32.mrb[0].mxu0
      %v2240 = vadd.f32 0.0, %v2239
      %v2241 = vpop.f32.mrb[0].mxu0
      %v2242 = vpop.f32.mrb[0].mxu0
      %v2243 = vadd.f32 0.0, %v2242
      %v2244 = vpop.f32.mrb[0].mxu0
      %2245 = vmatprep.mubr.bf16.mxu0 0
      %2246 = vmatmul.mubr.bf16.gmra.mrb[0].mxu0 %v1992
      %v2247 = vpop.f32.mrb[0].mxu0
      %v2248 = vadd.f32 0.0, %v2247
      %v2249 = vpop.f32.mrb[0].mxu0
      %v2250 = vpop.f32.mrb[0].mxu0
      %v2251 = vadd.f32 0.0, %v2250
      %v2252 = vpop.f32.mrb[0].mxu0
      %2253 = vmatprep.mubr.bf16.mxu0 0
      %2254 = vmatmul.mubr.bf16.gmra.mrb[0].mxu0 %v1994
      %v2255 = vpop.f32.mrb[0].mxu0
      %v2256 = vadd.f32 0.0, %v2255
      %v2257 = vpop.f32.mrb[0].mxu0
      %v2258 = vpop.f32.mrb[0].mxu0
      %v2259 = vadd.f32 0.0, %v2258
      %v2260 = vpop.f32.mrb[0].mxu0
      %2261 = vmatprep.mubr.bf16.mxu0 0
      %2262 = vmatmul.mubr.bf16.gmra.mrb[0].mxu0 %v1996
      %v2263 = vpop.f32.mrb[0].mxu0
      %v2264 = vadd.f32 0.0, %v2263
      %v2265 = vpop.f32.mrb[0].mxu0
      %v2266 = vpop.f32.mrb[0].mxu0
      %v2267 = vadd.f32 0.0, %v2266
      %v2268 = vpop.f32.mrb[0].mxu0
      %2269 = vmatprep.mubr.bf16.mxu0 0
      %2270 = vmatmul.mubr.bf16.gmra.mrb[0].mxu0 %v1998
      %v2271 = vpop.f32.mrb[0].mxu0
      %v2272 = vadd.f32 0.0, %v2271
      %v2273 = vpop.f32.mrb[0].mxu0
      %v2274 = vpop.f32.mrb[0].mxu0
      %v2275 = vadd.f32 0.0, %v2274
      %v2276 = vpop.f32.mrb[0].mxu0
      %2277 = vmatprep.mubr.bf16.mxu0 0
      %2278 = vmatmul.mubr.bf16.gmra.mrb[0].mxu0 %v2000
      %v2279 = vpop.f32.mrb[0].mxu0
      %v2280 = vadd.f32 0.0, %v2279
      %v2281 = vpop.f32.mrb[0].mxu0
      %v2282 = vpop.f32.mrb[0].mxu0
      %v2283 = vadd.f32 0.0, %v2282
      %v2284 = vpop.f32.mrb[0].mxu0
      %2285 = vmatprep.mubr.bf16.mxu0 0
      %2286 = vmatmul.mubr.bf16.gmra.mrb[0].mxu0 %v2002
      %v2287 = vpop.f32.mrb[0].mxu0
      %v2288 = vadd.f32 0.0, %v2287
      %v2289 = vpop.f32.mrb[0].mxu0
      %v2290 = vpop.f32.mrb[0].mxu0
      %v2291 = vadd.f32 0.0, %v2290
      %v2292 = vpop.f32.mrb[0].mxu0
      %2293 = vmatprep.mubr.bf16.mxu0 0
      %2294 = vmatmul.mubr.bf16.gmra.mrb[0].mxu0 %v2004
      %v2295 = vpop.f32.mrb[0].mxu0
      %v2296 = vadd.f32 0.0, %v2295
      %v2297 = vpop.f32.mrb[0].mxu0
      %v2298 = vpop.f32.mrb[0].mxu0
      %v2299 = vadd.f32 0.0, %v2298
      %v2300 = vpop.f32.mrb[0].mxu0
      %2301 = vdwg.mxu0
      %v2302 = vld [vmem:[#allocation4] sm:$0xff]
      %v2303 = vld [vmem:[#allocation4 + $0x8] sm:$0xff]
      %v2304 = vld [vmem:[#allocation4 + $0x10] sm:$0xff]
      %v2305 = vld [vmem:[#allocation4 + $0x18] sm:$0xff]
      %v2306 = vld [vmem:[#allocation4 + $0x20] sm:$0xff]
      %v2307 = vld [vmem:[#allocation4 + $0x28] sm:$0xff]
      %v2308 = vld [vmem:[#allocation4 + $0x30] sm:$0xff]
      %v2309 = vld [vmem:[#allocation4 + $0x38] sm:$0xff]
      %v2310 = vld [vmem:[#allocation4 + $0x40] sm:$0xff]
      %v2311 = vld [vmem:[#allocation4 + $0x48] sm:$0xff]
      %v2312 = vld [vmem:[#allocation4 + $0x50] sm:$0xff]
      %v2313 = vld [vmem:[#allocation4 + $0x58] sm:$0xff]
      %v2314 = vld [vmem:[#allocation4 + $0x60] sm:$0xff]
      %v2315 = vld [vmem:[#allocation4 + $0x68] sm:$0xff]
      %v2316 = vld [vmem:[#allocation4 + $0x70] sm:$0xff]
      %v2317 = vld [vmem:[#allocation4 + $0x78] sm:$0xff]
      %v2318 = vld [vmem:[#allocation4 + $0x80] sm:$0xff]
      %v2319 = vld [vmem:[#allocation4 + $0x88] sm:$0xff]
      %v2320 = vld [vmem:[#allocation4 + $0x90] sm:$0xff]
      %v2321 = vld [vmem:[#allocation4 + $0x98] sm:$0xff]
      %v2322 = vld [vmem:[#allocation4 + $0xa0] sm:$0xff]
      %v2323 = vld [vmem:[#allocation4 + $0xa8] sm:$0xff]
      %v2324 = vld [vmem:[#allocation4 + $0xb0] sm:$0xff]
      %v2325 = vld [vmem:[#allocation4 + $0xb8] sm:$0xff]
      %v2326 = vld [vmem:[#allocation4 + $0xc0] sm:$0xff]
      %v2327 = vld [vmem:[#allocation4 + $0xc8] sm:$0xff]
      %v2328 = vld [vmem:[#allocation4 + $0xd0] sm:$0xff]
      %v2329 = vld [vmem:[#allocation4 + $0xd8] sm:$0xff]
      %v2330 = vld [vmem:[#allocation4 + $0xe0] sm:$0xff]
      %v2331 = vld [vmem:[#allocation4 + $0xe8] sm:$0xff]
      %v2332 = vld [vmem:[#allocation4 + $0xf0] sm:$0xff]
      %v2333 = vld [vmem:[#allocation4 + $0xf8] sm:$0xff]
      %v2334 = vld [vmem:[#allocation4 + $0x100] sm:$0xff]
      %v2335 = vld [vmem:[#allocation4 + $0x108] sm:$0xff]
      %v2336 = vld [vmem:[#allocation4 + $0x110] sm:$0xff]
      %v2337 = vld [vmem:[#allocation4 + $0x118] sm:$0xff]
      %v2338 = vld [vmem:[#allocation4 + $0x120] sm:$0xff]
      %v2339 = vld [vmem:[#allocation4 + $0x128] sm:$0xff]
      %v2340 = vld [vmem:[#allocation4 + $0x130] sm:$0xff]
      %v2341 = vld [vmem:[#allocation4 + $0x138] sm:$0xff]
      %v2342 = vld [vmem:[#allocation4 + $0x140] sm:$0xff]
      %v2343 = vld [vmem:[#allocation4 + $0x148] sm:$0xff]
      %v2344 = vld [vmem:[#allocation4 + $0x150] sm:$0xff]
      %v2345 = vld [vmem:[#allocation4 + $0x158] sm:$0xff]
      %v2346 = vld [vmem:[#allocation4 + $0x160] sm:$0xff]
      %v2347 = vld [vmem:[#allocation4 + $0x168] sm:$0xff]
      %v2348 = vld [vmem:[#allocation4 + $0x170] sm:$0xff]
      %v2349 = vld [vmem:[#allocation4 + $0x178] sm:$0xff]
      %v2350 = vadd.f32 %v2302, %v2112
      %v2351 = vadd.f32 %v2303, %v2115
      %v2352 = vadd.f32 %v2304, %v2120
      %v2353 = vadd.f32 %v2305, %v2123
      %v2354 = vadd.f32 %v2306, %v2128
      %v2355 = vadd.f32 %v2307, %v2131
      %v2356 = vadd.f32 %v2308, %v2136
      %v2357 = vadd.f32 %v2309, %v2139
      %v2358 = vadd.f32 %v2310, %v2144
      %v2359 = vadd.f32 %v2311, %v2147
      %v2360 = vadd.f32 %v2312, %v2152
      %v2361 = vadd.f32 %v2313, %v2155
      %v2362 = vadd.f32 %v2314, %v2160
      %v2363 = vadd.f32 %v2315, %v2163
      %v2364 = vadd.f32 %v2316, %v2168
      %v2365 = vadd.f32 %v2317, %v2171
      %v2366 = vadd.f32 %v2318, %v2176
      %v2367 = vadd.f32 %v2319, %v2179
      %v2368 = vadd.f32 %v2320, %v2184
      %v2369 = vadd.f32 %v2321, %v2187
      %v2370 = vadd.f32 %v2322, %v2192
      %v2371 = vadd.f32 %v2323, %v2195
      %v2372 = vadd.f32 %v2324, %v2200
      %v2373 = vadd.f32 %v2325, %v2203
      %v2374 = vadd.f32 %v2326, %v2208
      %v2375 = vadd.f32 %v2327, %v2211
      %v2376 = vadd.f32 %v2328, %v2216
      %v2377 = vadd.f32 %v2329, %v2219
      %v2378 = vadd.f32 %v2330, %v2224
      %v2379 = vadd.f32 %v2331, %v2227
      %v2380 = vadd.f32 %v2332, %v2232
      %v2381 = vadd.f32 %v2333, %v2235
      %v2382 = vadd.f32 %v2334, %v2240
      %v2383 = vadd.f32 %v2335, %v2243
      %v2384 = vadd.f32 %v2336, %v2248
      %v2385 = vadd.f32 %v2337, %v2251
      %v2386 = vadd.f32 %v2338, %v2256
      %v2387 = vadd.f32 %v2339, %v2259
      %v2388 = vadd.f32 %v2340, %v2264
      %v2389 = vadd.f32 %v2341, %v2267
      %v2390 = vadd.f32 %v2342, %v2272
      %v2391 = vadd.f32 %v2343, %v2275
      %v2392 = vadd.f32 %v2344, %v2280
      %v2393 = vadd.f32 %v2345, %v2283
      %v2394 = vadd.f32 %v2346, %v2288
      %v2395 = vadd.f32 %v2347, %v2291
      %v2396 = vadd.f32 %v2348, %v2296
      %v2397 = vadd.f32 %v2349, %v2299
      %2398 = vst [vmem:[#allocation4] sm:$0xff] %v2350
      %2399 = vst [vmem:[#allocation4 + $0x8] sm:$0xff] %v2351
      %2400 = vst [vmem:[#allocation4 + $0x10] sm:$0xff] %v2352
      %2401 = vst [vmem:[#allocation4 + $0x18] sm:$0xff] %v2353
      %2402 = vst [vmem:[#allocation4 + $0x20] sm:$0xff] %v2354
      %2403 = vst [vmem:[#allocation4 + $0x28] sm:$0xff] %v2355
      %2404 = vst [vmem:[#allocation4 + $0x30] sm:$0xff] %v2356
      %2405 = vst [vmem:[#allocation4 + $0x38] sm:$0xff] %v2357
      %2406 = vst [vmem:[#allocation4 + $0x40] sm:$0xff] %v2358
      %2407 = vst [vmem:[#allocation4 + $0x48] sm:$0xff] %v2359
      %2408 = vst [vmem:[#allocation4 + $0x50] sm:$0xff] %v2360
      %2409 = vst [vmem:[#allocation4 + $0x58] sm:$0xff] %v2361
      %2410 = vst [vmem:[#allocation4 + $0x60] sm:$0xff] %v2362
      %2411 = vst [vmem:[#allocation4 + $0x68] sm:$0xff] %v2363
      %2412 = vst [vmem:[#allocation4 + $0x70] sm:$0xff] %v2364
      %2413 = vst [vmem:[#allocation4 + $0x78] sm:$0xff] %v2365
      %2414 = vst [vmem:[#allocation4 + $0x80] sm:$0xff] %v2366
      %2415 = vst [vmem:[#allocation4 + $0x88] sm:$0xff] %v2367
      %2416 = vst [vmem:[#allocation4 + $0x90] sm:$0xff] %v2368
      %2417 = vst [vmem:[#allocation4 + $0x98] sm:$0xff] %v2369
      %2418 = vst [vmem:[#allocation4 + $0xa0] sm:$0xff] %v2370
      %2419 = vst [vmem:[#allocation4 + $0xa8] sm:$0xff] %v2371
      %2420 = vst [vmem:[#allocation4 + $0xb0] sm:$0xff] %v2372
      %2421 = vst [vmem:[#allocation4 + $0xb8] sm:$0xff] %v2373
      %2422 = vst [vmem:[#allocation4 + $0xc0] sm:$0xff] %v2374
      %2423 = vst [vmem:[#allocation4 + $0xc8] sm:$0xff] %v2375
      %2424 = vst [vmem:[#allocation4 + $0xd0] sm:$0xff] %v2376
      %2425 = vst [vmem:[#allocation4 + $0xd8] sm:$0xff] %v2377
      %2426 = vst [vmem:[#allocation4 + $0xe0] sm:$0xff] %v2378
      %2427 = vst [vmem:[#allocation4 + $0xe8] sm:$0xff] %v2379
      %2428 = vst [vmem:[#allocation4 + $0xf0] sm:$0xff] %v2380
      %2429 = vst [vmem:[#allocation4 + $0xf8] sm:$0xff] %v2381
      %2430 = vst [vmem:[#allocation4 + $0x100] sm:$0xff] %v2382
      %2431 = vst [vmem:[#allocation4 + $0x108] sm:$0xff] %v2383
      %2432 = vst [vmem:[#allocation4 + $0x110] sm:$0xff] %v2384
      %2433 = vst [vmem:[#allocation4 + $0x118] sm:$0xff] %v2385
      %2434 = vst [vmem:[#allocation4 + $0x120] sm:$0xff] %v2386
      %2435 = vst [vmem:[#allocation4 + $0x128] sm:$0xff] %v2387
      %2436 = vst [vmem:[#allocation4 + $0x130] sm:$0xff] %v2388
      %2437 = vst [vmem:[#allocation4 + $0x138] sm:$0xff] %v2389
      %2438 = vst [vmem:[#allocation4 + $0x140] sm:$0xff] %v2390
      %2439 = vst [vmem:[#allocation4 + $0x148] sm:$0xff] %v2391
      %2440 = vst [vmem:[#allocation4 + $0x150] sm:$0xff] %v2392
      %2441 = vst [vmem:[#allocation4 + $0x158] sm:$0xff] %v2393
      %2442 = vst [vmem:[#allocation4 + $0x160] sm:$0xff] %v2394
      %2443 = vst [vmem:[#allocation4 + $0x168] sm:$0xff] %v2395
      %2444 = vst [vmem:[#allocation4 + $0x170] sm:$0xff] %v2396
      %2445 = vst [vmem:[#allocation4 + $0x178] sm:$0xff] %v2397
      %v2446 = vld [vmem:[%s404 + $0xc] sm:$0xf]
      %v2447 = vld [vmem:[%s404 + $0x10] sm:$0xf]
      %v2448 = vld [vmem:[%s404 + $0x14] sm:$0xf]
      %v2449 = vld [vmem:[%s404 + $0x18] sm:$0xf]
      %v2450 = vld [vmem:[%s404 + $0x1c] sm:$0xf]
      %v2451 = vld [vmem:[%s404 + $0x20] sm:$0xf]
      %v2452 = vld [vmem:[%s404 + $0x24] sm:$0xf]
      %v2453 = vld [vmem:[%s404 + $0x28] sm:$0xf]
      %v2454 = vld [vmem:[%s404 + $0x2c] sm:$0xf]
      %v2455 = vld [vmem:[%s404 + $0x30] sm:$0xf]
      %v2456 = vld [vmem:[%s404 + $0x34] sm:$0xf]
      %v2457 = vld [vmem:[%s404 + $0x38] sm:$0xf]
      %v2458 = vld [vmem:[%s404 + $0x3c] sm:$0xf]
      %v2459 = vld [vmem:[%s404 + $0x40] sm:$0xf]
      %v2460 = vld [vmem:[%s404 + $0x44] sm:$0xf]
      %v2461 = vld [vmem:[%s404 + $0x48] sm:$0xf]
      %v2462 = vld [vmem:[%s404 + $0x4c] sm:$0xf]
      %v2463 = vld [vmem:[%s404 + $0x50] sm:$0xf]
      %v2464 = vld [vmem:[%s404 + $0x54] sm:$0xf]
      %v2465 = vld [vmem:[%s404 + $0x58] sm:$0xf]
      %v2466 = vld [vmem:[%s404 + $0x5c] sm:$0xf]
      %v2467 = vld [vmem:[%s404 + $0x60] sm:$0xf]
      %v2468 = vld [vmem:[%s404 + $0x64] sm:$0xf]
      %v2469 = vld [vmem:[%s404 + $0x68] sm:$0xf]
      %v2470 = vld [vmem:[%s404 + $0x6c] sm:$0xf]
      %v2471 = vld [vmem:[%s404 + $0x70] sm:$0xf]
      %v2472 = vld [vmem:[%s404 + $0x74] sm:$0xf]
      %v2473 = vld [vmem:[%s404 + $0x78] sm:$0xf]
      %v2474 = vld [vmem:[%s404 + $0x7c] sm:$0xf]
      %v2475 = vld [vmem:[%s404 + $0x80] sm:$0xf]
      %v2476 = vld [vmem:[%s404 + $0x84] sm:$0xf]
      %v2477 = vld [vmem:[%s404 + $0x88] sm:$0xf]
      %v2478 = vld [vmem:[%s404 + $0x8c] sm:$0xf]
      %v2479 = vld [vmem:[%s404 + $0x90] sm:$0xf]
      %v2480 = vld [vmem:[%s404 + $0x94] sm:$0xf]
      %v2481 = vld [vmem:[%s404 + $0x98] sm:$0xf]
      %v2482 = vld [vmem:[%s404 + $0x9c] sm:$0xf]
      %v2483 = vld [vmem:[%s404 + $0xa0] sm:$0xf]
      %v2484 = vld [vmem:[%s404 + $0xa4] sm:$0xf]
      %v2485 = vld [vmem:[%s404 + $0xa8] sm:$0xf]
      %v2486 = vld [vmem:[%s404 + $0xac] sm:$0xf]
      %v2487 = vld [vmem:[%s404 + $0xb0] sm:$0xf]
      %v2488 = vld [vmem:[%s404 + $0xb4] sm:$0xf]
      %v2489 = vld [vmem:[%s404 + $0xb8] sm:$0xf]
      %v2490 = vld [vmem:[%s404 + $0xbc] sm:$0xf]
      %v2491 = vld [vmem:[%s404 + $0xc0] sm:$0xf]
      %v2492 = vld [vmem:[%s404 + $0xc4] sm:$0xf]
      %v2493 = vld [vmem:[%s404 + $0xc8] sm:$0xf]
      %s2494 = scalar_lea.vmem %s1, 192
      %v2495 = vld [vmem:[%s2494] sm:$0xf]
      %v2496 = vld [vmem:[%s2494 + $0x4] sm:$0xf]
      %v2497 = vld [vmem:[%s2494 + $0x8] sm:$0xf]
      %v2498 = vld [vmem:[%s2494 + $0xc] sm:$0xf]
      %v2499 = vld [vmem:[%s2494 + $0x10] sm:$0xf]
      %v2500 = vld [vmem:[%s2494 + $0x14] sm:$0xf]
      %v2501 = vld [vmem:[%s2494 + $0x18] sm:$0xf]
      %v2502 = vld [vmem:[%s2494 + $0x1c] sm:$0xf]
      %v2503 = vld [vmem:[%s2494 + $0x20] sm:$0xf]
      %v2504 = vld [vmem:[%s2494 + $0x24] sm:$0xf]
      %v2505 = vld [vmem:[%s2494 + $0x28] sm:$0xf]
      %v2506 = vld [vmem:[%s2494 + $0x2c] sm:$0xf]
      %v2507 = vld [vmem:[%s2494 + $0x30] sm:$0xf]
      %v2508 = vld [vmem:[%s2494 + $0x34] sm:$0xf]
      %v2509 = vld [vmem:[%s2494 + $0x38] sm:$0xf]
      %v2510 = vld [vmem:[%s2494 + $0x3c] sm:$0xf]
      %v2559 = vunpack.c.l.b16 %v2446
      %v2560 = vunpack.c.l.b16 %v2447
      %v2561 = vunpack.c.l.b16 %v2448
      %v2562 = vunpack.c.l.b16 %v2449
      %v2563 = vunpack.c.l.b16 %v2450
      %v2564 = vunpack.c.l.b16 %v2451
      %v2565 = vunpack.c.l.b16 %v2452
      %v2566 = vunpack.c.l.b16 %v2453
      %v2567 = vunpack.c.l.b16 %v2454
      %v2568 = vunpack.c.l.b16 %v2455
      %v2569 = vunpack.c.l.b16 %v2456
      %v2570 = vunpack.c.l.b16 %v2457
      %v2571 = vunpack.c.l.b16 %v2458
      %v2572 = vunpack.c.l.b16 %v2459
      %v2573 = vunpack.c.l.b16 %v2460
      %v2574 = vunpack.c.l.b16 %v2461
      %v2575 = vunpack.c.l.b16 %v2462
      %v2576 = vunpack.c.l.b16 %v2463
      %v2577 = vunpack.c.l.b16 %v2464
      %v2578 = vunpack.c.l.b16 %v2465
      %v2579 = vunpack.c.l.b16 %v2466
      %v2580 = vunpack.c.l.b16 %v2467
      %v2581 = vunpack.c.l.b16 %v2468
      %v2582 = vunpack.c.l.b16 %v2469
      %v2583 = vunpack.c.l.b16 %v2470
      %v2584 = vunpack.c.l.b16 %v2471
      %v2585 = vunpack.c.l.b16 %v2472
      %v2586 = vunpack.c.l.b16 %v2473
      %v2587 = vunpack.c.l.b16 %v2474
      %v2588 = vunpack.c.l.b16 %v2475
      %v2589 = vunpack.c.l.b16 %v2476
      %v2590 = vunpack.c.l.b16 %v2477
      %v2591 = vunpack.c.l.b16 %v2478
      %v2592 = vunpack.c.l.b16 %v2479
      %v2593 = vunpack.c.l.b16 %v2480
      %v2594 = vunpack.c.l.b16 %v2481
      %v2595 = vunpack.c.l.b16 %v2482
      %v2596 = vunpack.c.l.b16 %v2483
      %v2597 = vunpack.c.l.b16 %v2484
      %v2598 = vunpack.c.l.b16 %v2485
      %v2599 = vunpack.c.l.b16 %v2486
      %v2600 = vunpack.c.l.b16 %v2487
      %v2601 = vunpack.c.l.b16 %v2488
      %v2602 = vunpack.c.l.b16 %v2489
      %v2603 = vunpack.c.l.b16 %v2490
      %v2604 = vunpack.c.l.b16 %v2491
      %v2605 = vunpack.c.l.b16 %v2492
      %v2606 = vunpack.c.l.b16 %v2493
      %v2607 = vpack.c.b16 %v2560, %v2559
      %v2608 = vpack.c.b16 %v2562, %v2561
      %v2609 = vpack.c.b16 %v2564, %v2563
      %v2610 = vpack.c.b16 %v2566, %v2565
      %v2611 = vpack.c.b16 %v2568, %v2567
      %v2612 = vpack.c.b16 %v2570, %v2569
      %v2613 = vpack.c.b16 %v2572, %v2571
      %v2614 = vpack.c.b16 %v2574, %v2573
      %v2615 = vpack.c.b16 %v2576, %v2575
      %v2616 = vpack.c.b16 %v2578, %v2577
      %v2617 = vpack.c.b16 %v2580, %v2579
      %v2618 = vpack.c.b16 %v2582, %v2581
      %v2619 = vpack.c.b16 %v2584, %v2583
      %v2620 = vpack.c.b16 %v2586, %v2585
      %v2621 = vpack.c.b16 %v2588, %v2587
      %v2622 = vpack.c.b16 %v2590, %v2589
      %v2623 = vpack.c.b16 %v2592, %v2591
      %v2624 = vpack.c.b16 %v2594, %v2593
      %v2625 = vpack.c.b16 %v2596, %v2595
      %v2626 = vpack.c.b16 %v2598, %v2597
      %v2627 = vpack.c.b16 %v2600, %v2599
      %v2628 = vpack.c.b16 %v2602, %v2601
      %v2629 = vpack.c.b16 %v2604, %v2603
      %v2630 = vpack.c.b16 %v2606, %v2605
      %v2671 = vunpack.c.l.b16 %v2495
      %v2672 = vunpack.c.l.b16 %v2496
      %v2673 = vunpack.c.l.b16 %v2497
      %v2674 = vunpack.c.l.b16 %v2498
      %v2675 = vunpack.c.l.b16 %v2499
      %v2676 = vunpack.c.l.b16 %v2500
      %v2677 = vunpack.c.l.b16 %v2501
      %v2678 = vunpack.c.l.b16 %v2502
      %v2679 = vunpack.c.l.b16 %v2503
      %v2680 = vunpack.c.l.b16 %v2504
      %v2681 = vunpack.c.l.b16 %v2505
      %v2682 = vunpack.c.l.b16 %v2506
      %v2683 = vunpack.c.l.b16 %v2507
      %v2684 = vunpack.c.l.b16 %v2508
      %v2685 = vunpack.c.l.b16 %v2509
      %v2686 = vunpack.c.l.b16 %v2510
      %v2687 = vpack.c.b16 %v2672, %v2671
      %v2688 = vpack.c.b16 %v2674, %v2673
      %v2689 = vpack.c.b16 %v2676, %v2675
      %v2690 = vpack.c.b16 %v2678, %v2677
      %v2691 = vpack.c.b16 %v2680, %v2679
      %v2692 = vpack.c.b16 %v2682, %v2681
      %v2693 = vpack.c.b16 %v2684, %v2683
      %v2694 = vpack.c.b16 %v2686, %v2685
      %2703 = vmatprep.subr.bf16.mxu0 0
      %2704 = vmatpush1.bf16.msra.mxu0 %v2687
      %2705 = vmatprep.subr.bf16.mxu0 0
      %2706 = vmatpush1.bf16.msra.mxu0 %v2688
      %2707 = vmatprep.subr.bf16.mxu0 0
      %2708 = vmatpush1.bf16.msra.mxu0 %v2689
      %2709 = vmatprep.subr.bf16.mxu0 0
      %2710 = vmatpush1.bf16.msra.mxu0 %v2690
      %2711 = vmatprep.subr.bf16.mxu0 0
      %2712 = vmatpush1.bf16.msra.mxu0 %v2691
      %2713 = vmatprep.subr.bf16.mxu0 0
      %2714 = vmatpush1.bf16.msra.mxu0 %v2692
      %2715 = vmatprep.subr.bf16.mxu0 0
      %2716 = vmatpush1.bf16.msra.mxu0 %v2693
      %2717 = vmatprep.subr.bf16.mxu0 0
      %2718 = vmatpush1.bf16.msra.mxu0 %v2694
      %2719 = vmatprep.subr.bf16.mxu0 0
      %2720 = vmatpush1.bf16.msra.mxu0 0
      %2721 = vmatprep.subr.bf16.mxu0 0
      %2722 = vmatpush1.bf16.msra.mxu0 0
      %2723 = vmatprep.subr.bf16.mxu0 0
      %2724 = vmatpush1.bf16.msra.mxu0 0
      %2725 = vmatprep.subr.bf16.mxu0 0
      %2726 = vmatpush1.bf16.msra.mxu0 0
      %2727 = vmatprep.subr.bf16.mxu0 0
      %2728 = vmatpush1.bf16.msra.mxu0 0
      %2729 = vmatprep.subr.bf16.mxu0 0
      %2730 = vmatpush1.bf16.msra.mxu0 0
      %2731 = vmatprep.subr.bf16.mxu0 0
      %2732 = vmatpush1.bf16.msra.mxu0 0
      %2733 = vmatprep.subr.bf16.mxu0 0
      %2734 = vmatpush1.bf16.msra.mxu0 0
      %2735 = vmatprep.mubr.bf16.mxu0 0
      %2736 = vmatmul.mubr.bf16.gmra.mrb[0].mxu0 %v2607
      %v2737 = vpop.f32.mrb[0].mxu0
      %v2738 = vadd.f32 0.0, %v2737
      %v2739 = vpop.f32.mrb[0].mxu0
      %v2740 = vpop.f32.mrb[0].mxu0
      %v2741 = vadd.f32 0.0, %v2740
      %v2742 = vpop.f32.mrb[0].mxu0
      %2743 = vmatprep.mubr.bf16.mxu0 0
      %2744 = vmatmul.mubr.bf16.gmra.mrb[0].mxu0 %v2608
      %v2745 = vpop.f32.mrb[0].mxu0
      %v2746 = vadd.f32 0.0, %v2745
      %v2747 = vpop.f32.mrb[0].mxu0
      %v2748 = vpop.f32.mrb[0].mxu0
      %v2749 = vadd.f32 0.0, %v2748
      %v2750 = vpop.f32.mrb[0].mxu0
      %2751 = vmatprep.mubr.bf16.mxu0 0
      %2752 = vmatmul.mubr.bf16.gmra.mrb[0].mxu0 %v2609
      %v2753 = vpop.f32.mrb[0].mxu0
      %v2754 = vadd.f32 0.0, %v2753
      %v2755 = vpop.f32.mrb[0].mxu0
      %v2756 = vpop.f32.mrb[0].mxu0
      %v2757 = vadd.f32 0.0, %v2756
      %v2758 = vpop.f32.mrb[0].mxu0
      %2759 = vmatprep.mubr.bf16.mxu0 0
      %2760 = vmatmul.mubr.bf16.gmra.mrb[0].mxu0 %v2610
      %v2761 = vpop.f32.mrb[0].mxu0
      %v2762 = vadd.f32 0.0, %v2761
      %v2763 = vpop.f32.mrb[0].mxu0
      %v2764 = vpop.f32.mrb[0].mxu0
      %v2765 = vadd.f32 0.0, %v2764
      %v2766 = vpop.f32.mrb[0].mxu0
      %2767 = vmatprep.mubr.bf16.mxu0 0
      %2768 = vmatmul.mubr.bf16.gmra.mrb[0].mxu0 %v2611
      %v2769 = vpop.f32.mrb[0].mxu0
      %v2770 = vadd.f32 0.0, %v2769
      %v2771 = vpop.f32.mrb[0].mxu0
      %v2772 = vpop.f32.mrb[0].mxu0
      %v2773 = vadd.f32 0.0, %v2772
      %v2774 = vpop.f32.mrb[0].mxu0
      %2775 = vmatprep.mubr.bf16.mxu0 0
      %2776 = vmatmul.mubr.bf16.gmra.mrb[0].mxu0 %v2612
      %v2777 = vpop.f32.mrb[0].mxu0
      %v2778 = vadd.f32 0.0, %v2777
      %v2779 = vpop.f32.mrb[0].mxu0
      %v2780 = vpop.f32.mrb[0].mxu0
      %v2781 = vadd.f32 0.0, %v2780
      %v2782 = vpop.f32.mrb[0].mxu0
      %2783 = vmatprep.mubr.bf16.mxu0 0
      %2784 = vmatmul.mubr.bf16.gmra.mrb[0].mxu0 %v2613
      %v2785 = vpop.f32.mrb[0].mxu0
      %v2786 = vadd.f32 0.0, %v2785
      %v2787 = vpop.f32.mrb[0].mxu0
      %v2788 = vpop.f32.mrb[0].mxu0
      %v2789 = vadd.f32 0.0, %v2788
      %v2790 = vpop.f32.mrb[0].mxu0
      %2791 = vmatprep.mubr.bf16.mxu0 0
      %2792 = vmatmul.mubr.bf16.gmra.mrb[0].mxu0 %v2614
      %v2793 = vpop.f32.mrb[0].mxu0
      %v2794 = vadd.f32 0.0, %v2793
      %v2795 = vpop.f32.mrb[0].mxu0
      %v2796 = vpop.f32.mrb[0].mxu0
      %v2797 = vadd.f32 0.0, %v2796
      %v2798 = vpop.f32.mrb[0].mxu0
      %2799 = vmatprep.mubr.bf16.mxu0 0
      %2800 = vmatmul.mubr.bf16.gmra.mrb[0].mxu0 %v2615
      %v2801 = vpop.f32.mrb[0].mxu0
      %v2802 = vadd.f32 0.0, %v2801
      %v2803 = vpop.f32.mrb[0].mxu0
      %v2804 = vpop.f32.mrb[0].mxu0
      %v2805 = vadd.f32 0.0, %v2804
      %v2806 = vpop.f32.mrb[0].mxu0
      %2807 = vmatprep.mubr.bf16.mxu0 0
      %2808 = vmatmul.mubr.bf16.gmra.mrb[0].mxu0 %v2616
      %v2809 = vpop.f32.mrb[0].mxu0
      %v2810 = vadd.f32 0.0, %v2809
      %v2811 = vpop.f32.mrb[0].mxu0
      %v2812 = vpop.f32.mrb[0].mxu0
      %v2813 = vadd.f32 0.0, %v2812
      %v2814 = vpop.f32.mrb[0].mxu0
      %2815 = vmatprep.mubr.bf16.mxu0 0
      %2816 = vmatmul.mubr.bf16.gmra.mrb[0].mxu0 %v2617
      %v2817 = vpop.f32.mrb[0].mxu0
      %v2818 = vadd.f32 0.0, %v2817
      %v2819 = vpop.f32.mrb[0].mxu0
      %v2820 = vpop.f32.mrb[0].mxu0
      %v2821 = vadd.f32 0.0, %v2820
      %v2822 = vpop.f32.mrb[0].mxu0
      %2823 = vmatprep.mubr.bf16.mxu0 0
      %2824 = vmatmul.mubr.bf16.gmra.mrb[0].mxu0 %v2618
      %v2825 = vpop.f32.mrb[0].mxu0
      %v2826 = vadd.f32 0.0, %v2825
      %v2827 = vpop.f32.mrb[0].mxu0
      %v2828 = vpop.f32.mrb[0].mxu0
      %v2829 = vadd.f32 0.0, %v2828
      %v2830 = vpop.f32.mrb[0].mxu0
      %2831 = vmatprep.mubr.bf16.mxu0 0
      %2832 = vmatmul.mubr.bf16.gmra.mrb[0].mxu0 %v2619
      %v2833 = vpop.f32.mrb[0].mxu0
      %v2834 = vadd.f32 0.0, %v2833
      %v2835 = vpop.f32.mrb[0].mxu0
      %v2836 = vpop.f32.mrb[0].mxu0
      %v2837 = vadd.f32 0.0, %v2836
      %v2838 = vpop.f32.mrb[0].mxu0
      %2839 = vmatprep.mubr.bf16.mxu0 0
      %2840 = vmatmul.mubr.bf16.gmra.mrb[0].mxu0 %v2620
      %v2841 = vpop.f32.mrb[0].mxu0
      %v2842 = vadd.f32 0.0, %v2841
      %v2843 = vpop.f32.mrb[0].mxu0
      %v2844 = vpop.f32.mrb[0].mxu0
      %v2845 = vadd.f32 0.0, %v2844
      %v2846 = vpop.f32.mrb[0].mxu0
      %2847 = vmatprep.mubr.bf16.mxu0 0
      %2848 = vmatmul.mubr.bf16.gmra.mrb[0].mxu0 %v2621
      %v2849 = vpop.f32.mrb[0].mxu0
      %v2850 = vadd.f32 0.0, %v2849
      %v2851 = vpop.f32.mrb[0].mxu0
      %v2852 = vpop.f32.mrb[0].mxu0
      %v2853 = vadd.f32 0.0, %v2852
      %v2854 = vpop.f32.mrb[0].mxu0
      %2855 = vmatprep.mubr.bf16.mxu0 0
      %2856 = vmatmul.mubr.bf16.gmra.mrb[0].mxu0 %v2622
      %v2857 = vpop.f32.mrb[0].mxu0
      %v2858 = vadd.f32 0.0, %v2857
      %v2859 = vpop.f32.mrb[0].mxu0
      %v2860 = vpop.f32.mrb[0].mxu0
      %v2861 = vadd.f32 0.0, %v2860
      %v2862 = vpop.f32.mrb[0].mxu0
      %2863 = vmatprep.mubr.bf16.mxu0 0
      %2864 = vmatmul.mubr.bf16.gmra.mrb[0].mxu0 %v2623
      %v2865 = vpop.f32.mrb[0].mxu0
      %v2866 = vadd.f32 0.0, %v2865
      %v2867 = vpop.f32.mrb[0].mxu0
      %v2868 = vpop.f32.mrb[0].mxu0
      %v2869 = vadd.f32 0.0, %v2868
      %v2870 = vpop.f32.mrb[0].mxu0
      %2871 = vmatprep.mubr.bf16.mxu0 0
      %2872 = vmatmul.mubr.bf16.gmra.mrb[0].mxu0 %v2624
      %v2873 = vpop.f32.mrb[0].mxu0
      %v2874 = vadd.f32 0.0, %v2873
      %v2875 = vpop.f32.mrb[0].mxu0
      %v2876 = vpop.f32.mrb[0].mxu0
      %v2877 = vadd.f32 0.0, %v2876
      %v2878 = vpop.f32.mrb[0].mxu0
      %2879 = vmatprep.mubr.bf16.mxu0 0
      %2880 = vmatmul.mubr.bf16.gmra.mrb[0].mxu0 %v2625
      %v2881 = vpop.f32.mrb[0].mxu0
      %v2882 = vadd.f32 0.0, %v2881
      %v2883 = vpop.f32.mrb[0].mxu0
      %v2884 = vpop.f32.mrb[0].mxu0
      %v2885 = vadd.f32 0.0, %v2884
      %v2886 = vpop.f32.mrb[0].mxu0
      %2887 = vmatprep.mubr.bf16.mxu0 0
      %2888 = vmatmul.mubr.bf16.gmra.mrb[0].mxu0 %v2626
      %v2889 = vpop.f32.mrb[0].mxu0
      %v2890 = vadd.f32 0.0, %v2889
      %v2891 = vpop.f32.mrb[0].mxu0
      %v2892 = vpop.f32.mrb[0].mxu0
      %v2893 = vadd.f32 0.0, %v2892
      %v2894 = vpop.f32.mrb[0].mxu0
      %2895 = vmatprep.mubr.bf16.mxu0 0
      %2896 = vmatmul.mubr.bf16.gmra.mrb[0].mxu0 %v2627
      %v2897 = vpop.f32.mrb[0].mxu0
      %v2898 = vadd.f32 0.0, %v2897
      %v2899 = vpop.f32.mrb[0].mxu0
      %v2900 = vpop.f32.mrb[0].mxu0
      %v2901 = vadd.f32 0.0, %v2900
      %v2902 = vpop.f32.mrb[0].mxu0
      %2903 = vmatprep.mubr.bf16.mxu0 0
      %2904 = vmatmul.mubr.bf16.gmra.mrb[0].mxu0 %v2628
      %v2905 = vpop.f32.mrb[0].mxu0
      %v2906 = vadd.f32 0.0, %v2905
      %v2907 = vpop.f32.mrb[0].mxu0
      %v2908 = vpop.f32.mrb[0].mxu0
      %v2909 = vadd.f32 0.0, %v2908
      %v2910 = vpop.f32.mrb[0].mxu0
      %2911 = vmatprep.mubr.bf16.mxu0 0
      %2912 = vmatmul.mubr.bf16.gmra.mrb[0].mxu0 %v2629
      %v2913 = vpop.f32.mrb[0].mxu0
      %v2914 = vadd.f32 0.0, %v2913
      %v2915 = vpop.f32.mrb[0].mxu0
      %v2916 = vpop.f32.mrb[0].mxu0
      %v2917 = vadd.f32 0.0, %v2916
      %v2918 = vpop.f32.mrb[0].mxu0
      %2919 = vmatprep.mubr.bf16.mxu0 0
      %2920 = vmatmul.mubr.bf16.gmra.mrb[0].mxu0 %v2630
      %v2921 = vpop.f32.mrb[0].mxu0
      %v2922 = vadd.f32 0.0, %v2921
      %v2923 = vpop.f32.mrb[0].mxu0
      %v2924 = vpop.f32.mrb[0].mxu0
      %v2925 = vadd.f32 0.0, %v2924
      %v2926 = vpop.f32.mrb[0].mxu0
      %2927 = vdwg.mxu0
      %v2928 = vld [vmem:[#allocation4] sm:$0xff]
      %v2929 = vld [vmem:[#allocation4 + $0x8] sm:$0xff]
      %v2930 = vld [vmem:[#allocation4 + $0x10] sm:$0xff]
      %v2931 = vld [vmem:[#allocation4 + $0x18] sm:$0xff]
      %v2932 = vld [vmem:[#allocation4 + $0x20] sm:$0xff]
      %v2933 = vld [vmem:[#allocation4 + $0x28] sm:$0xff]
      %v2934 = vld [vmem:[#allocation4 + $0x30] sm:$0xff]
      %v2935 = vld [vmem:[#allocation4 + $0x38] sm:$0xff]
      %v2936 = vld [vmem:[#allocation4 + $0x40] sm:$0xff]
      %v2937 = vld [vmem:[#allocation4 + $0x48] sm:$0xff]
      %v2938 = vld [vmem:[#allocation4 + $0x50] sm:$0xff]
      %v2939 = vld [vmem:[#allocation4 + $0x58] sm:$0xff]
      %v2940 = vld [vmem:[#allocation4 + $0x60] sm:$0xff]
      %v2941 = vld [vmem:[#allocation4 + $0x68] sm:$0xff]
      %v2942 = vld [vmem:[#allocation4 + $0x70] sm:$0xff]
      %v2943 = vld [vmem:[#allocation4 + $0x78] sm:$0xff]
      %v2944 = vld [vmem:[#allocation4 + $0x80] sm:$0xff]
      %v2945 = vld [vmem:[#allocation4 + $0x88] sm:$0xff]
      %v2946 = vld [vmem:[#allocation4 + $0x90] sm:$0xff]
      %v2947 = vld [vmem:[#allocation4 + $0x98] sm:$0xff]
      %v2948 = vld [vmem:[#allocation4 + $0xa0] sm:$0xff]
      %v2949 = vld [vmem:[#allocation4 + $0xa8] sm:$0xff]
      %v2950 = vld [vmem:[#allocation4 + $0xb0] sm:$0xff]
      %v2951 = vld [vmem:[#allocation4 + $0xb8] sm:$0xff]
      %v2952 = vld [vmem:[#allocation4 + $0xc0] sm:$0xff]
      %v2953 = vld [vmem:[#allocation4 + $0xc8] sm:$0xff]
      %v2954 = vld [vmem:[#allocation4 + $0xd0] sm:$0xff]
      %v2955 = vld [vmem:[#allocation4 + $0xd8] sm:$0xff]
      %v2956 = vld [vmem:[#allocation4 + $0xe0] sm:$0xff]
      %v2957 = vld [vmem:[#allocation4 + $0xe8] sm:$0xff]
      %v2958 = vld [vmem:[#allocation4 + $0xf0] sm:$0xff]
      %v2959 = vld [vmem:[#allocation4 + $0xf8] sm:$0xff]
      %v2960 = vld [vmem:[#allocation4 + $0x100] sm:$0xff]
      %v2961 = vld [vmem:[#allocation4 + $0x108] sm:$0xff]
      %v2962 = vld [vmem:[#allocation4 + $0x110] sm:$0xff]
      %v2963 = vld [vmem:[#allocation4 + $0x118] sm:$0xff]
      %v2964 = vld [vmem:[#allocation4 + $0x120] sm:$0xff]
      %v2965 = vld [vmem:[#allocation4 + $0x128] sm:$0xff]
      %v2966 = vld [vmem:[#allocation4 + $0x130] sm:$0xff]
      %v2967 = vld [vmem:[#allocation4 + $0x138] sm:$0xff]
      %v2968 = vld [vmem:[#allocation4 + $0x140] sm:$0xff]
      %v2969 = vld [vmem:[#allocation4 + $0x148] sm:$0xff]
      %v2970 = vld [vmem:[#allocation4 + $0x150] sm:$0xff]
      %v2971 = vld [vmem:[#allocation4 + $0x158] sm:$0xff]
      %v2972 = vld [vmem:[#allocation4 + $0x160] sm:$0xff]
      %v2973 = vld [vmem:[#allocation4 + $0x168] sm:$0xff]
      %v2974 = vld [vmem:[#allocation4 + $0x170] sm:$0xff]
      %v2975 = vld [vmem:[#allocation4 + $0x178] sm:$0xff]
      %v2976 = vadd.f32 %v2928, %v2738
      %v2977 = vadd.f32 %v2929, %v2741
      %v2978 = vadd.f32 %v2930, %v2746
      %v2979 = vadd.f32 %v2931, %v2749
      %v2980 = vadd.f32 %v2932, %v2754
      %v2981 = vadd.f32 %v2933, %v2757
      %v2982 = vadd.f32 %v2934, %v2762
      %v2983 = vadd.f32 %v2935, %v2765
      %v2984 = vadd.f32 %v2936, %v2770
      %v2985 = vadd.f32 %v2937, %v2773
      %v2986 = vadd.f32 %v2938, %v2778
      %v2987 = vadd.f32 %v2939, %v2781
      %v2988 = vadd.f32 %v2940, %v2786
      %v2989 = vadd.f32 %v2941, %v2789
      %v2990 = vadd.f32 %v2942, %v2794
      %v2991 = vadd.f32 %v2943, %v2797
      %v2992 = vadd.f32 %v2944, %v2802
      %v2993 = vadd.f32 %v2945, %v2805
      %v2994 = vadd.f32 %v2946, %v2810
      %v2995 = vadd.f32 %v2947, %v2813
      %v2996 = vadd.f32 %v2948, %v2818
      %v2997 = vadd.f32 %v2949, %v2821
      %v2998 = vadd.f32 %v2950, %v2826
      %v2999 = vadd.f32 %v2951, %v2829
      %v3000 = vadd.f32 %v2952, %v2834
      %v3001 = vadd.f32 %v2953, %v2837
      %v3002 = vadd.f32 %v2954, %v2842
      %v3003 = vadd.f32 %v2955, %v2845
      %v3004 = vadd.f32 %v2956, %v2850
      %v3005 = vadd.f32 %v2957, %v2853
      %v3006 = vadd.f32 %v2958, %v2858
      %v3007 = vadd.f32 %v2959, %v2861
      %v3008 = vadd.f32 %v2960, %v2866
      %v3009 = vadd.f32 %v2961, %v2869
      %v3010 = vadd.f32 %v2962, %v2874
      %v3011 = vadd.f32 %v2963, %v2877
      %v3012 = vadd.f32 %v2964, %v2882
      %v3013 = vadd.f32 %v2965, %v2885
      %v3014 = vadd.f32 %v2966, %v2890
      %v3015 = vadd.f32 %v2967, %v2893
      %v3016 = vadd.f32 %v2968, %v2898
      %v3017 = vadd.f32 %v2969, %v2901
      %v3018 = vadd.f32 %v2970, %v2906
      %v3019 = vadd.f32 %v2971, %v2909
      %v3020 = vadd.f32 %v2972, %v2914
      %v3021 = vadd.f32 %v2973, %v2917
      %v3022 = vadd.f32 %v2974, %v2922
      %v3023 = vadd.f32 %v2975, %v2925
      %3024 = vst [vmem:[#allocation4] sm:$0xff] %v2976
      %3025 = vst [vmem:[#allocation4 + $0x8] sm:$0xff] %v2977
      %3026 = vst [vmem:[#allocation4 + $0x10] sm:$0xff] %v2978
      %3027 = vst [vmem:[#allocation4 + $0x18] sm:$0xff] %v2979
      %3028 = vst [vmem:[#allocation4 + $0x20] sm:$0xff] %v2980
      %3029 = vst [vmem:[#allocation4 + $0x28] sm:$0xff] %v2981
      %3030 = vst [vmem:[#allocation4 + $0x30] sm:$0xff] %v2982
      %3031 = vst [vmem:[#allocation4 + $0x38] sm:$0xff] %v2983
      %3032 = vst [vmem:[#allocation4 + $0x40] sm:$0xff] %v2984
      %3033 = vst [vmem:[#allocation4 + $0x48] sm:$0xff] %v2985
      %3034 = vst [vmem:[#allocation4 + $0x50] sm:$0xff] %v2986
      %3035 = vst [vmem:[#allocation4 + $0x58] sm:$0xff] %v2987
      %3036 = vst [vmem:[#allocation4 + $0x60] sm:$0xff] %v2988
      %3037 = vst [vmem:[#allocation4 + $0x68] sm:$0xff] %v2989
      %3038 = vst [vmem:[#allocation4 + $0x70] sm:$0xff] %v2990
      %3039 = vst [vmem:[#allocation4 + $0x78] sm:$0xff] %v2991
      %3040 = vst [vmem:[#allocation4 + $0x80] sm:$0xff] %v2992
      %3041 = vst [vmem:[#allocation4 + $0x88] sm:$0xff] %v2993
      %3042 = vst [vmem:[#allocation4 + $0x90] sm:$0xff] %v2994
      %3043 = vst [vmem:[#allocation4 + $0x98] sm:$0xff] %v2995
      %3044 = vst [vmem:[#allocation4 + $0xa0] sm:$0xff] %v2996
      %3045 = vst [vmem:[#allocation4 + $0xa8] sm:$0xff] %v2997
      %3046 = vst [vmem:[#allocation4 + $0xb0] sm:$0xff] %v2998
      %3047 = vst [vmem:[#allocation4 + $0xb8] sm:$0xff] %v2999
      %3048 = vst [vmem:[#allocation4 + $0xc0] sm:$0xff] %v3000
      %3049 = vst [vmem:[#allocation4 + $0xc8] sm:$0xff] %v3001
      %3050 = vst [vmem:[#allocation4 + $0xd0] sm:$0xff] %v3002
      %3051 = vst [vmem:[#allocation4 + $0xd8] sm:$0xff] %v3003
      %3052 = vst [vmem:[#allocation4 + $0xe0] sm:$0xff] %v3004
      %3053 = vst [vmem:[#allocation4 + $0xe8] sm:$0xff] %v3005
      %3054 = vst [vmem:[#allocation4 + $0xf0] sm:$0xff] %v3006
      %3055 = vst [vmem:[#allocation4 + $0xf8] sm:$0xff] %v3007
      %3056 = vst [vmem:[#allocation4 + $0x100] sm:$0xff] %v3008
      %3057 = vst [vmem:[#allocation4 + $0x108] sm:$0xff] %v3009
      %3058 = vst [vmem:[#allocation4 + $0x110] sm:$0xff] %v3010
      %3059 = vst [vmem:[#allocation4 + $0x118] sm:$0xff] %v3011
      %3060 = vst [vmem:[#allocation4 + $0x120] sm:$0xff] %v3012
      %3061 = vst [vmem:[#allocation4 + $0x128] sm:$0xff] %v3013
      %3062 = vst [vmem:[#allocation4 + $0x130] sm:$0xff] %v3014
      %3063 = vst [vmem:[#allocation4 + $0x138] sm:$0xff] %v3015
      %3064 = vst [vmem:[#allocation4 + $0x140] sm:$0xff] %v3016
      %3065 = vst [vmem:[#allocation4 + $0x148] sm:$0xff] %v3017
      %3066 = vst [vmem:[#allocation4 + $0x150] sm:$0xff] %v3018
      %3067 = vst [vmem:[#allocation4 + $0x158] sm:$0xff] %v3019
      %3068 = vst [vmem:[#allocation4 + $0x160] sm:$0xff] %v3020
      %3069 = vst [vmem:[#allocation4 + $0x168] sm:$0xff] %v3021
      %3070 = vst [vmem:[#allocation4 + $0x170] sm:$0xff] %v3022
      %3071 = vst [vmem:[#allocation4 + $0x178] sm:$0xff] %v3023
      %v3072 = vld [vmem:[%s404 + $0xc] sm:$0xf]
      %v3073 = vld [vmem:[%s404 + $0x10] sm:$0xf]
      %v3074 = vld [vmem:[%s404 + $0x14] sm:$0xf]
      %v3075 = vld [vmem:[%s404 + $0x18] sm:$0xf]
      %v3076 = vld [vmem:[%s404 + $0x1c] sm:$0xf]
      %v3077 = vld [vmem:[%s404 + $0x20] sm:$0xf]
      %v3078 = vld [vmem:[%s404 + $0x24] sm:$0xf]
      %v3079 = vld [vmem:[%s404 + $0x28] sm:$0xf]
      %v3080 = vld [vmem:[%s404 + $0x2c] sm:$0xf]
      %v3081 = vld [vmem:[%s404 + $0x30] sm:$0xf]
      %v3082 = vld [vmem:[%s404 + $0x34] sm:$0xf]
      %v3083 = vld [vmem:[%s404 + $0x38] sm:$0xf]
      %v3084 = vld [vmem:[%s404 + $0x3c] sm:$0xf]
      %v3085 = vld [vmem:[%s404 + $0x40] sm:$0xf]
      %v3086 = vld [vmem:[%s404 + $0x44] sm:$0xf]
      %v3087 = vld [vmem:[%s404 + $0x48] sm:$0xf]
      %v3088 = vld [vmem:[%s404 + $0x4c] sm:$0xf]
      %v3089 = vld [vmem:[%s404 + $0x50] sm:$0xf]
      %v3090 = vld [vmem:[%s404 + $0x54] sm:$0xf]
      %v3091 = vld [vmem:[%s404 + $0x58] sm:$0xf]
      %v3092 = vld [vmem:[%s404 + $0x5c] sm:$0xf]
      %v3093 = vld [vmem:[%s404 + $0x60] sm:$0xf]
      %v3094 = vld [vmem:[%s404 + $0x64] sm:$0xf]
      %v3095 = vld [vmem:[%s404 + $0x68] sm:$0xf]
      %v3096 = vld [vmem:[%s404 + $0x6c] sm:$0xf]
      %v3097 = vld [vmem:[%s404 + $0x70] sm:$0xf]
      %v3098 = vld [vmem:[%s404 + $0x74] sm:$0xf]
      %v3099 = vld [vmem:[%s404 + $0x78] sm:$0xf]
      %v3100 = vld [vmem:[%s404 + $0x7c] sm:$0xf]
      %v3101 = vld [vmem:[%s404 + $0x80] sm:$0xf]
      %v3102 = vld [vmem:[%s404 + $0x84] sm:$0xf]
      %v3103 = vld [vmem:[%s404 + $0x88] sm:$0xf]
      %v3104 = vld [vmem:[%s404 + $0x8c] sm:$0xf]
      %v3105 = vld [vmem:[%s404 + $0x90] sm:$0xf]
      %v3106 = vld [vmem:[%s404 + $0x94] sm:$0xf]
      %v3107 = vld [vmem:[%s404 + $0x98] sm:$0xf]
      %v3108 = vld [vmem:[%s404 + $0x9c] sm:$0xf]
      %v3109 = vld [vmem:[%s404 + $0xa0] sm:$0xf]
      %v3110 = vld [vmem:[%s404 + $0xa4] sm:$0xf]
      %v3111 = vld [vmem:[%s404 + $0xa8] sm:$0xf]
      %v3112 = vld [vmem:[%s404 + $0xac] sm:$0xf]
      %v3113 = vld [vmem:[%s404 + $0xb0] sm:$0xf]
      %v3114 = vld [vmem:[%s404 + $0xb4] sm:$0xf]
      %v3115 = vld [vmem:[%s404 + $0xb8] sm:$0xf]
      %v3116 = vld [vmem:[%s404 + $0xbc] sm:$0xf]
      %v3117 = vld [vmem:[%s404 + $0xc0] sm:$0xf]
      %v3118 = vld [vmem:[%s404 + $0xc4] sm:$0xf]
      %v3119 = vld [vmem:[%s404 + $0xc8] sm:$0xf]
      %v3120 = vld [vmem:[%s404 + $0xcc] sm:$0x1]
      %s3121 = scalar_lea.vmem %s1, 256
      %v3122 = vld [vmem:[%s3121] sm:$0xf]
      %v3123 = vld [vmem:[%s3121 + $0x4] sm:$0xf]
      %v3124 = vld [vmem:[%s3121 + $0x8] sm:$0xf]
      %v3125 = vld [vmem:[%s3121 + $0xc] sm:$0xf]
      %v3126 = vld [vmem:[%s3121 + $0x10] sm:$0xf]
      %v3127 = vld [vmem:[%s3121 + $0x14] sm:$0xf]
      %v3128 = vld [vmem:[%s3121 + $0x18] sm:$0xf]
      %v3129 = vld [vmem:[%s3121 + $0x1c] sm:$0xf]
      %v3130 = vld [vmem:[%s3121 + $0x20] sm:$0xf]
      %v3131 = vld [vmem:[%s3121 + $0x24] sm:$0xf]
      %v3132 = vld [vmem:[%s3121 + $0x28] sm:$0xf]
      %v3133 = vld [vmem:[%s3121 + $0x2c] sm:$0xf]
      %v3134 = vld [vmem:[%s3121 + $0x30] sm:$0xf]
      %v3135 = vld [vmem:[%s3121 + $0x34] sm:$0xf]
      %v3136 = vld [vmem:[%s3121 + $0x38] sm:$0xf]
      %v3137 = vld [vmem:[%s3121 + $0x3c] sm:$0xf]
      %v3187 = vunpack.c.l.b16 %v3072
      %v3188 = vunpack.c.l.b16 %v3073
      %v3189 = vunpack.c.l.b16 %v3074
      %v3190 = vunpack.c.l.b16 %v3075
      %v3191 = vunpack.c.l.b16 %v3076
      %v3192 = vunpack.c.l.b16 %v3077
      %v3193 = vunpack.c.l.b16 %v3078
      %v3194 = vunpack.c.l.b16 %v3079
      %v3195 = vunpack.c.l.b16 %v3080
      %v3196 = vunpack.c.l.b16 %v3081
      %v3197 = vunpack.c.l.b16 %v3082
      %v3198 = vunpack.c.l.b16 %v3083
      %v3199 = vunpack.c.l.b16 %v3084
      %v3200 = vunpack.c.l.b16 %v3085
      %v3201 = vunpack.c.l.b16 %v3086
      %v3202 = vunpack.c.l.b16 %v3087
      %v3203 = vunpack.c.l.b16 %v3088
      %v3204 = vunpack.c.l.b16 %v3089
      %v3205 = vunpack.c.l.b16 %v3090
      %v3206 = vunpack.c.l.b16 %v3091
      %v3207 = vunpack.c.l.b16 %v3092
      %v3208 = vunpack.c.l.b16 %v3093
      %v3209 = vunpack.c.l.b16 %v3094
      %v3210 = vunpack.c.l.b16 %v3095
      %v3211 = vunpack.c.l.b16 %v3096
      %v3212 = vunpack.c.l.b16 %v3097
      %v3213 = vunpack.c.l.b16 %v3098
      %v3214 = vunpack.c.l.b16 %v3099
      %v3215 = vunpack.c.l.b16 %v3100
      %v3216 = vunpack.c.l.b16 %v3101
      %v3217 = vunpack.c.l.b16 %v3102
      %v3218 = vunpack.c.l.b16 %v3103
      %v3219 = vunpack.c.l.b16 %v3104
      %v3220 = vunpack.c.l.b16 %v3105
      %v3221 = vunpack.c.l.b16 %v3106
      %v3222 = vunpack.c.l.b16 %v3107
      %v3223 = vunpack.c.l.b16 %v3108
      %v3224 = vunpack.c.l.b16 %v3109
      %v3225 = vunpack.c.l.b16 %v3110
      %v3226 = vunpack.c.l.b16 %v3111
      %v3227 = vunpack.c.l.b16 %v3112
      %v3228 = vunpack.c.l.b16 %v3113
      %v3229 = vunpack.c.l.b16 %v3114
      %v3230 = vunpack.c.l.b16 %v3115
      %v3231 = vunpack.c.l.b16 %v3116
      %v3232 = vunpack.c.l.b16 %v3117
      %v3233 = vunpack.c.l.b16 %v3118
      %v3234 = vunpack.c.l.b16 %v3119
      %v3235 = vunpack.c.l.b16 %v3120
      %v3236 = vpack.c.b16 %v3188, %v3187
      %v3237 = vpack.c.b16 %v3190, %v3189
      %v3238 = vpack.c.b16 %v3192, %v3191
      %v3239 = vpack.c.b16 %v3194, %v3193
      %v3240 = vpack.c.b16 %v3196, %v3195
      %v3241 = vpack.c.b16 %v3198, %v3197
      %v3242 = vpack.c.b16 %v3200, %v3199
      %v3243 = vpack.c.b16 %v3202, %v3201
      %v3244 = vpack.c.b16 %v3204, %v3203
      %v3245 = vpack.c.b16 %v3206, %v3205
      %v3246 = vpack.c.b16 %v3208, %v3207
      %v3247 = vpack.c.b16 %v3210, %v3209
      %v3248 = vpack.c.b16 %v3212, %v3211
      %v3249 = vpack.c.b16 %v3214, %v3213
      %v3250 = vpack.c.b16 %v3216, %v3215
      %v3251 = vpack.c.b16 %v3218, %v3217
      %v3252 = vpack.c.b16 %v3220, %v3219
      %v3253 = vpack.c.b16 %v3222, %v3221
      %v3254 = vpack.c.b16 %v3224, %v3223
      %v3255 = vpack.c.b16 %v3226, %v3225
      %v3256 = vpack.c.b16 %v3228, %v3227
      %v3257 = vpack.c.b16 %v3230, %v3229
      %v3258 = vpack.c.b16 %v3232, %v3231
      %v3259 = vpack.c.b16 %v3234, %v3233
      %v3260 = vpack.c.b16 %v3235, %v3235
      %v3262 = vshrl.u32 %v3236, 16
      %v3264 = vshll.u32 %v3236, 16
      %v3266 = vrot.slane %v3264, 1
      %v3267 = vor.u32 %v3262, %v3266
      %v3269 = vshll.u32 %v3237, 16
      %v3271 = vrot.slane %v3269, 1
      %v3272 = vsel %vm1128, %v3267, %v3271
      %v3273 = vshrl.u32 %v3237, 16
      %v3275 = vor.u32 %v3273, %v3271
      %v3277 = vshll.u32 %v3238, 16
      %v3279 = vrot.slane %v3277, 1
      %v3280 = vsel %vm1128, %v3275, %v3279
      %v3281 = vshrl.u32 %v3238, 16
      %v3283 = vor.u32 %v3281, %v3279
      %v3285 = vshll.u32 %v3239, 16
      %v3287 = vrot.slane %v3285, 1
      %v3288 = vsel %vm1128, %v3283, %v3287
      %v3289 = vshrl.u32 %v3239, 16
      %v3291 = vor.u32 %v3289, %v3287
      %v3293 = vshll.u32 %v3240, 16
      %v3295 = vrot.slane %v3293, 1
      %v3296 = vsel %vm1128, %v3291, %v3295
      %v3297 = vshrl.u32 %v3240, 16
      %v3299 = vor.u32 %v3297, %v3295
      %v3301 = vshll.u32 %v3241, 16
      %v3303 = vrot.slane %v3301, 1
      %v3304 = vsel %vm1128, %v3299, %v3303
      %v3305 = vshrl.u32 %v3241, 16
      %v3307 = vor.u32 %v3305, %v3303
      %v3309 = vshll.u32 %v3242, 16
      %v3311 = vrot.slane %v3309, 1
      %v3312 = vsel %vm1128, %v3307, %v3311
      %v3313 = vshrl.u32 %v3242, 16
      %v3315 = vor.u32 %v3313, %v3311
      %v3317 = vshll.u32 %v3243, 16
      %v3319 = vrot.slane %v3317, 1
      %v3320 = vsel %vm1128, %v3315, %v3319
      %v3321 = vshrl.u32 %v3243, 16
      %v3323 = vor.u32 %v3321, %v3319
      %v3325 = vshll.u32 %v3244, 16
      %v3327 = vrot.slane %v3325, 1
      %v3328 = vsel %vm1128, %v3323, %v3327
      %v3329 = vshrl.u32 %v3244, 16
      %v3331 = vor.u32 %v3329, %v3327
      %v3333 = vshll.u32 %v3245, 16
      %v3335 = vrot.slane %v3333, 1
      %v3336 = vsel %vm1128, %v3331, %v3335
      %v3337 = vshrl.u32 %v3245, 16
      %v3339 = vor.u32 %v3337, %v3335
      %v3341 = vshll.u32 %v3246, 16
      %v3343 = vrot.slane %v3341, 1
      %v3344 = vsel %vm1128, %v3339, %v3343
      %v3345 = vshrl.u32 %v3246, 16
      %v3347 = vor.u32 %v3345, %v3343
      %v3349 = vshll.u32 %v3247, 16
      %v3351 = vrot.slane %v3349, 1
      %v3352 = vsel %vm1128, %v3347, %v3351
      %v3353 = vshrl.u32 %v3247, 16
      %v3355 = vor.u32 %v3353, %v3351
      %v3357 = vshll.u32 %v3248, 16
      %v3359 = vrot.slane %v3357, 1
      %v3360 = vsel %vm1128, %v3355, %v3359
      %v3361 = vshrl.u32 %v3248, 16
      %v3363 = vor.u32 %v3361, %v3359
      %v3365 = vshll.u32 %v3249, 16
      %v3367 = vrot.slane %v3365, 1
      %v3368 = vsel %vm1128, %v3363, %v3367
      %v3369 = vshrl.u32 %v3249, 16
      %v3371 = vor.u32 %v3369, %v3367
      %v3373 = vshll.u32 %v3250, 16
      %v3375 = vrot.slane %v3373, 1
      %v3376 = vsel %vm1128, %v3371, %v3375
      %v3377 = vshrl.u32 %v3250, 16
      %v3379 = vor.u32 %v3377, %v3375
      %v3381 = vshll.u32 %v3251, 16
      %v3383 = vrot.slane %v3381, 1
      %v3384 = vsel %vm1128, %v3379, %v3383
      %v3385 = vshrl.u32 %v3251, 16
      %v3387 = vor.u32 %v3385, %v3383
      %v3389 = vshll.u32 %v3252, 16
      %v3391 = vrot.slane %v3389, 1
      %v3392 = vsel %vm1128, %v3387, %v3391
      %v3393 = vshrl.u32 %v3252, 16
      %v3395 = vor.u32 %v3393, %v3391
      %v3397 = vshll.u32 %v3253, 16
      %v3399 = vrot.slane %v3397, 1
      %v3400 = vsel %vm1128, %v3395, %v3399
      %v3401 = vshrl.u32 %v3253, 16
      %v3403 = vor.u32 %v3401, %v3399
      %v3405 = vshll.u32 %v3254, 16
      %v3407 = vrot.slane %v3405, 1
      %v3408 = vsel %vm1128, %v3403, %v3407
      %v3409 = vshrl.u32 %v3254, 16
      %v3411 = vor.u32 %v3409, %v3407
      %v3413 = vshll.u32 %v3255, 16
      %v3415 = vrot.slane %v3413, 1
      %v3416 = vsel %vm1128, %v3411, %v3415
      %v3417 = vshrl.u32 %v3255, 16
      %v3419 = vor.u32 %v3417, %v3415
      %v3421 = vshll.u32 %v3256, 16
      %v3423 = vrot.slane %v3421, 1
      %v3424 = vsel %vm1128, %v3419, %v3423
      %v3425 = vshrl.u32 %v3256, 16
      %v3427 = vor.u32 %v3425, %v3423
      %v3429 = vshll.u32 %v3257, 16
      %v3431 = vrot.slane %v3429, 1
      %v3432 = vsel %vm1128, %v3427, %v3431
      %v3433 = vshrl.u32 %v3257, 16
      %v3435 = vor.u32 %v3433, %v3431
      %v3437 = vshll.u32 %v3258, 16
      %v3439 = vrot.slane %v3437, 1
      %v3440 = vsel %vm1128, %v3435, %v3439
      %v3441 = vshrl.u32 %v3258, 16
      %v3443 = vor.u32 %v3441, %v3439
      %v3445 = vshll.u32 %v3259, 16
      %v3447 = vrot.slane %v3445, 1
      %v3448 = vsel %vm1128, %v3443, %v3447
      %v3449 = vshrl.u32 %v3259, 16
      %v3451 = vor.u32 %v3449, %v3447
      %v3453 = vshll.u32 %v3260, 16
      %v3455 = vrot.slane %v3453, 1
      %v3456 = vsel %vm1128, %v3451, %v3455
      %v3497 = vunpack.c.l.b16 %v3122
      %v3498 = vunpack.c.l.b16 %v3123
      %v3499 = vunpack.c.l.b16 %v3124
      %v3500 = vunpack.c.l.b16 %v3125
      %v3501 = vunpack.c.l.b16 %v3126
      %v3502 = vunpack.c.l.b16 %v3127
      %v3503 = vunpack.c.l.b16 %v3128
      %v3504 = vunpack.c.l.b16 %v3129
      %v3505 = vunpack.c.l.b16 %v3130
      %v3506 = vunpack.c.l.b16 %v3131
      %v3507 = vunpack.c.l.b16 %v3132
      %v3508 = vunpack.c.l.b16 %v3133
      %v3509 = vunpack.c.l.b16 %v3134
      %v3510 = vunpack.c.l.b16 %v3135
      %v3511 = vunpack.c.l.b16 %v3136
      %v3512 = vunpack.c.l.b16 %v3137
      %v3513 = vpack.c.b16 %v3498, %v3497
      %v3514 = vpack.c.b16 %v3500, %v3499
      %v3515 = vpack.c.b16 %v3502, %v3501
      %v3516 = vpack.c.b16 %v3504, %v3503
      %v3517 = vpack.c.b16 %v3506, %v3505
      %v3518 = vpack.c.b16 %v3508, %v3507
      %v3519 = vpack.c.b16 %v3510, %v3509
      %v3520 = vpack.c.b16 %v3512, %v3511
      %3529 = vmatprep.subr.bf16.mxu0 0
      %3530 = vmatpush1.bf16.msra.mxu0 %v3513
      %3531 = vmatprep.subr.bf16.mxu0 0
      %3532 = vmatpush1.bf16.msra.mxu0 %v3514
      %3533 = vmatprep.subr.bf16.mxu0 0
      %3534 = vmatpush1.bf16.msra.mxu0 %v3515
      %3535 = vmatprep.subr.bf16.mxu0 0
      %3536 = vmatpush1.bf16.msra.mxu0 %v3516
      %3537 = vmatprep.subr.bf16.mxu0 0
      %3538 = vmatpush1.bf16.msra.mxu0 %v3517
      %3539 = vmatprep.subr.bf16.mxu0 0
      %3540 = vmatpush1.bf16.msra.mxu0 %v3518
      %3541 = vmatprep.subr.bf16.mxu0 0
      %3542 = vmatpush1.bf16.msra.mxu0 %v3519
      %3543 = vmatprep.subr.bf16.mxu0 0
      %3544 = vmatpush1.bf16.msra.mxu0 %v3520
      %3545 = vmatprep.subr.bf16.mxu0 0
      %3546 = vmatpush1.bf16.msra.mxu0 0
      %3547 = vmatprep.subr.bf16.mxu0 0
      %3548 = vmatpush1.bf16.msra.mxu0 0
      %3549 = vmatprep.subr.bf16.mxu0 0
      %3550 = vmatpush1.bf16.msra.mxu0 0
      %3551 = vmatprep.subr.bf16.mxu0 0
      %3552 = vmatpush1.bf16.msra.mxu0 0
      %3553 = vmatprep.subr.bf16.mxu0 0
      %3554 = vmatpush1.bf16.msra.mxu0 0
      %3555 = vmatprep.subr.bf16.mxu0 0
      %3556 = vmatpush1.bf16.msra.mxu0 0
      %3557 = vmatprep.subr.bf16.mxu0 0
      %3558 = vmatpush1.bf16.msra.mxu0 0
      %3559 = vmatprep.subr.bf16.mxu0 0
      %3560 = vmatpush1.bf16.msra.mxu0 0
      %3561 = vmatprep.mubr.bf16.mxu0 0
      %3562 = vmatmul.mubr.bf16.gmra.mrb[0].mxu0 %v3272
      %v3563 = vpop.f32.mrb[0].mxu0
      %v3564 = vadd.f32 0.0, %v3563
      %v3565 = vpop.f32.mrb[0].mxu0
      %v3566 = vpop.f32.mrb[0].mxu0
      %v3567 = vadd.f32 0.0, %v3566
      %v3568 = vpop.f32.mrb[0].mxu0
      %3569 = vmatprep.mubr.bf16.mxu0 0
      %3570 = vmatmul.mubr.bf16.gmra.mrb[0].mxu0 %v3280
      %v3571 = vpop.f32.mrb[0].mxu0
      %v3572 = vadd.f32 0.0, %v3571
      %v3573 = vpop.f32.mrb[0].mxu0
      %v3574 = vpop.f32.mrb[0].mxu0
      %v3575 = vadd.f32 0.0, %v3574
      %v3576 = vpop.f32.mrb[0].mxu0
      %3577 = vmatprep.mubr.bf16.mxu0 0
      %3578 = vmatmul.mubr.bf16.gmra.mrb[0].mxu0 %v3288
      %v3579 = vpop.f32.mrb[0].mxu0
      %v3580 = vadd.f32 0.0, %v3579
      %v3581 = vpop.f32.mrb[0].mxu0
      %v3582 = vpop.f32.mrb[0].mxu0
      %v3583 = vadd.f32 0.0, %v3582
      %v3584 = vpop.f32.mrb[0].mxu0
      %3585 = vmatprep.mubr.bf16.mxu0 0
      %3586 = vmatmul.mubr.bf16.gmra.mrb[0].mxu0 %v3296
      %v3587 = vpop.f32.mrb[0].mxu0
      %v3588 = vadd.f32 0.0, %v3587
      %v3589 = vpop.f32.mrb[0].mxu0
      %v3590 = vpop.f32.mrb[0].mxu0
      %v3591 = vadd.f32 0.0, %v3590
      %v3592 = vpop.f32.mrb[0].mxu0
      %3593 = vmatprep.mubr.bf16.mxu0 0
      %3594 = vmatmul.mubr.bf16.gmra.mrb[0].mxu0 %v3304
      %v3595 = vpop.f32.mrb[0].mxu0
      %v3596 = vadd.f32 0.0, %v3595
      %v3597 = vpop.f32.mrb[0].mxu0
      %v3598 = vpop.f32.mrb[0].mxu0
      %v3599 = vadd.f32 0.0, %v3598
      %v3600 = vpop.f32.mrb[0].mxu0
      %3601 = vmatprep.mubr.bf16.mxu0 0
      %3602 = vmatmul.mubr.bf16.gmra.mrb[0].mxu0 %v3312
      %v3603 = vpop.f32.mrb[0].mxu0
      %v3604 = vadd.f32 0.0, %v3603
      %v3605 = vpop.f32.mrb[0].mxu0
      %v3606 = vpop.f32.mrb[0].mxu0
      %v3607 = vadd.f32 0.0, %v3606
      %v3608 = vpop.f32.mrb[0].mxu0
      %3609 = vmatprep.mubr.bf16.mxu0 0
      %3610 = vmatmul.mubr.bf16.gmra.mrb[0].mxu0 %v3320
      %v3611 = vpop.f32.mrb[0].mxu0
      %v3612 = vadd.f32 0.0, %v3611
      %v3613 = vpop.f32.mrb[0].mxu0
      %v3614 = vpop.f32.mrb[0].mxu0
      %v3615 = vadd.f32 0.0, %v3614
      %v3616 = vpop.f32.mrb[0].mxu0
      %3617 = vmatprep.mubr.bf16.mxu0 0
      %3618 = vmatmul.mubr.bf16.gmra.mrb[0].mxu0 %v3328
      %v3619 = vpop.f32.mrb[0].mxu0
      %v3620 = vadd.f32 0.0, %v3619
      %v3621 = vpop.f32.mrb[0].mxu0
      %v3622 = vpop.f32.mrb[0].mxu0
      %v3623 = vadd.f32 0.0, %v3622
      %v3624 = vpop.f32.mrb[0].mxu0
      %3625 = vmatprep.mubr.bf16.mxu0 0
      %3626 = vmatmul.mubr.bf16.gmra.mrb[0].mxu0 %v3336
      %v3627 = vpop.f32.mrb[0].mxu0
      %v3628 = vadd.f32 0.0, %v3627
      %v3629 = vpop.f32.mrb[0].mxu0
      %v3630 = vpop.f32.mrb[0].mxu0
      %v3631 = vadd.f32 0.0, %v3630
      %v3632 = vpop.f32.mrb[0].mxu0
      %3633 = vmatprep.mubr.bf16.mxu0 0
      %3634 = vmatmul.mubr.bf16.gmra.mrb[0].mxu0 %v3344
      %v3635 = vpop.f32.mrb[0].mxu0
      %v3636 = vadd.f32 0.0, %v3635
      %v3637 = vpop.f32.mrb[0].mxu0
      %v3638 = vpop.f32.mrb[0].mxu0
      %v3639 = vadd.f32 0.0, %v3638
      %v3640 = vpop.f32.mrb[0].mxu0
      %3641 = vmatprep.mubr.bf16.mxu0 0
      %3642 = vmatmul.mubr.bf16.gmra.mrb[0].mxu0 %v3352
      %v3643 = vpop.f32.mrb[0].mxu0
      %v3644 = vadd.f32 0.0, %v3643
      %v3645 = vpop.f32.mrb[0].mxu0
      %v3646 = vpop.f32.mrb[0].mxu0
      %v3647 = vadd.f32 0.0, %v3646
      %v3648 = vpop.f32.mrb[0].mxu0
      %3649 = vmatprep.mubr.bf16.mxu0 0
      %3650 = vmatmul.mubr.bf16.gmra.mrb[0].mxu0 %v3360
      %v3651 = vpop.f32.mrb[0].mxu0
      %v3652 = vadd.f32 0.0, %v3651
      %v3653 = vpop.f32.mrb[0].mxu0
      %v3654 = vpop.f32.mrb[0].mxu0
      %v3655 = vadd.f32 0.0, %v3654
      %v3656 = vpop.f32.mrb[0].mxu0
      %3657 = vmatprep.mubr.bf16.mxu0 0
      %3658 = vmatmul.mubr.bf16.gmra.mrb[0].mxu0 %v3368
      %v3659 = vpop.f32.mrb[0].mxu0
      %v3660 = vadd.f32 0.0, %v3659
      %v3661 = vpop.f32.mrb[0].mxu0
      %v3662 = vpop.f32.mrb[0].mxu0
      %v3663 = vadd.f32 0.0, %v3662
      %v3664 = vpop.f32.mrb[0].mxu0
      %3665 = vmatprep.mubr.bf16.mxu0 0
      %3666 = vmatmul.mubr.bf16.gmra.mrb[0].mxu0 %v3376
      %v3667 = vpop.f32.mrb[0].mxu0
      %v3668 = vadd.f32 0.0, %v3667
      %v3669 = vpop.f32.mrb[0].mxu0
      %v3670 = vpop.f32.mrb[0].mxu0
      %v3671 = vadd.f32 0.0, %v3670
      %v3672 = vpop.f32.mrb[0].mxu0
      %3673 = vmatprep.mubr.bf16.mxu0 0
      %3674 = vmatmul.mubr.bf16.gmra.mrb[0].mxu0 %v3384
      %v3675 = vpop.f32.mrb[0].mxu0
      %v3676 = vadd.f32 0.0, %v3675
      %v3677 = vpop.f32.mrb[0].mxu0
      %v3678 = vpop.f32.mrb[0].mxu0
      %v3679 = vadd.f32 0.0, %v3678
      %v3680 = vpop.f32.mrb[0].mxu0
      %3681 = vmatprep.mubr.bf16.mxu0 0
      %3682 = vmatmul.mubr.bf16.gmra.mrb[0].mxu0 %v3392
      %v3683 = vpop.f32.mrb[0].mxu0
      %v3684 = vadd.f32 0.0, %v3683
      %v3685 = vpop.f32.mrb[0].mxu0
      %v3686 = vpop.f32.mrb[0].mxu0
      %v3687 = vadd.f32 0.0, %v3686
      %v3688 = vpop.f32.mrb[0].mxu0
      %3689 = vmatprep.mubr.bf16.mxu0 0
      %3690 = vmatmul.mubr.bf16.gmra.mrb[0].mxu0 %v3400
      %v3691 = vpop.f32.mrb[0].mxu0
      %v3692 = vadd.f32 0.0, %v3691
      %v3693 = vpop.f32.mrb[0].mxu0
      %v3694 = vpop.f32.mrb[0].mxu0
      %v3695 = vadd.f32 0.0, %v3694
      %v3696 = vpop.f32.mrb[0].mxu0
      %3697 = vmatprep.mubr.bf16.mxu0 0
      %3698 = vmatmul.mubr.bf16.gmra.mrb[0].mxu0 %v3408
      %v3699 = vpop.f32.mrb[0].mxu0
      %v3700 = vadd.f32 0.0, %v3699
      %v3701 = vpop.f32.mrb[0].mxu0
      %v3702 = vpop.f32.mrb[0].mxu0
      %v3703 = vadd.f32 0.0, %v3702
      %v3704 = vpop.f32.mrb[0].mxu0
      %3705 = vmatprep.mubr.bf16.mxu0 0
      %3706 = vmatmul.mubr.bf16.gmra.mrb[0].mxu0 %v3416
      %v3707 = vpop.f32.mrb[0].mxu0
      %v3708 = vadd.f32 0.0, %v3707
      %v3709 = vpop.f32.mrb[0].mxu0
      %v3710 = vpop.f32.mrb[0].mxu0
      %v3711 = vadd.f32 0.0, %v3710
      %v3712 = vpop.f32.mrb[0].mxu0
      %3713 = vmatprep.mubr.bf16.mxu0 0
      %3714 = vmatmul.mubr.bf16.gmra.mrb[0].mxu0 %v3424
      %v3715 = vpop.f32.mrb[0].mxu0
      %v3716 = vadd.f32 0.0, %v3715
      %v3717 = vpop.f32.mrb[0].mxu0
      %v3718 = vpop.f32.mrb[0].mxu0
      %v3719 = vadd.f32 0.0, %v3718
      %v3720 = vpop.f32.mrb[0].mxu0
      %3721 = vmatprep.mubr.bf16.mxu0 0
      %3722 = vmatmul.mubr.bf16.gmra.mrb[0].mxu0 %v3432
      %v3723 = vpop.f32.mrb[0].mxu0
      %v3724 = vadd.f32 0.0, %v3723
      %v3725 = vpop.f32.mrb[0].mxu0
      %v3726 = vpop.f32.mrb[0].mxu0
      %v3727 = vadd.f32 0.0, %v3726
      %v3728 = vpop.f32.mrb[0].mxu0
      %3729 = vmatprep.mubr.bf16.mxu0 0
      %3730 = vmatmul.mubr.bf16.gmra.mrb[0].mxu0 %v3440
      %v3731 = vpop.f32.mrb[0].mxu0
      %v3732 = vadd.f32 0.0, %v3731
      %v3733 = vpop.f32.mrb[0].mxu0
      %v3734 = vpop.f32.mrb[0].mxu0
      %v3735 = vadd.f32 0.0, %v3734
      %v3736 = vpop.f32.mrb[0].mxu0
      %3737 = vmatprep.mubr.bf16.mxu0 0
      %3738 = vmatmul.mubr.bf16.gmra.mrb[0].mxu0 %v3448
      %v3739 = vpop.f32.mrb[0].mxu0
      %v3740 = vadd.f32 0.0, %v3739
      %v3741 = vpop.f32.mrb[0].mxu0
      %v3742 = vpop.f32.mrb[0].mxu0
      %v3743 = vadd.f32 0.0, %v3742
      %v3744 = vpop.f32.mrb[0].mxu0
      %3745 = vmatprep.mubr.bf16.mxu0 0
      %3746 = vmatmul.mubr.bf16.gmra.mrb[0].mxu0 %v3456
      %v3747 = vpop.f32.mrb[0].mxu0
      %v3748 = vadd.f32 0.0, %v3747
      %v3749 = vpop.f32.mrb[0].mxu0
      %v3750 = vpop.f32.mrb[0].mxu0
      %v3751 = vadd.f32 0.0, %v3750
      %v3752 = vpop.f32.mrb[0].mxu0
      %3753 = vdwg.mxu0
      %v3754 = vld [vmem:[#allocation4] sm:$0xff]
      %v3755 = vld [vmem:[#allocation4 + $0x8] sm:$0xff]
      %v3756 = vld [vmem:[#allocation4 + $0x10] sm:$0xff]
      %v3757 = vld [vmem:[#allocation4 + $0x18] sm:$0xff]
      %v3758 = vld [vmem:[#allocation4 + $0x20] sm:$0xff]
      %v3759 = vld [vmem:[#allocation4 + $0x28] sm:$0xff]
      %v3760 = vld [vmem:[#allocation4 + $0x30] sm:$0xff]
      %v3761 = vld [vmem:[#allocation4 + $0x38] sm:$0xff]
      %v3762 = vld [vmem:[#allocation4 + $0x40] sm:$0xff]
      %v3763 = vld [vmem:[#allocation4 + $0x48] sm:$0xff]
      %v3764 = vld [vmem:[#allocation4 + $0x50] sm:$0xff]
      %v3765 = vld [vmem:[#allocation4 + $0x58] sm:$0xff]
      %v3766 = vld [vmem:[#allocation4 + $0x60] sm:$0xff]
      %v3767 = vld [vmem:[#allocation4 + $0x68] sm:$0xff]
      %v3768 = vld [vmem:[#allocation4 + $0x70] sm:$0xff]
      %v3769 = vld [vmem:[#allocation4 + $0x78] sm:$0xff]
      %v3770 = vld [vmem:[#allocation4 + $0x80] sm:$0xff]
      %v3771 = vld [vmem:[#allocation4 + $0x88] sm:$0xff]
      %v3772 = vld [vmem:[#allocation4 + $0x90] sm:$0xff]
      %v3773 = vld [vmem:[#allocation4 + $0x98] sm:$0xff]
      %v3774 = vld [vmem:[#allocation4 + $0xa0] sm:$0xff]
      %v3775 = vld [vmem:[#allocation4 + $0xa8] sm:$0xff]
      %v3776 = vld [vmem:[#allocation4 + $0xb0] sm:$0xff]
      %v3777 = vld [vmem:[#allocation4 + $0xb8] sm:$0xff]
      %v3778 = vld [vmem:[#allocation4 + $0xc0] sm:$0xff]
      %v3779 = vld [vmem:[#allocation4 + $0xc8] sm:$0xff]
      %v3780 = vld [vmem:[#allocation4 + $0xd0] sm:$0xff]
      %v3781 = vld [vmem:[#allocation4 + $0xd8] sm:$0xff]
      %v3782 = vld [vmem:[#allocation4 + $0xe0] sm:$0xff]
      %v3783 = vld [vmem:[#allocation4 + $0xe8] sm:$0xff]
      %v3784 = vld [vmem:[#allocation4 + $0xf0] sm:$0xff]
      %v3785 = vld [vmem:[#allocation4 + $0xf8] sm:$0xff]
      %v3786 = vld [vmem:[#allocation4 + $0x100] sm:$0xff]
      %v3787 = vld [vmem:[#allocation4 + $0x108] sm:$0xff]
      %v3788 = vld [vmem:[#allocation4 + $0x110] sm:$0xff]
      %v3789 = vld [vmem:[#allocation4 + $0x118] sm:$0xff]
      %v3790 = vld [vmem:[#allocation4 + $0x120] sm:$0xff]
      %v3791 = vld [vmem:[#allocation4 + $0x128] sm:$0xff]
      %v3792 = vld [vmem:[#allocation4 + $0x130] sm:$0xff]
      %v3793 = vld [vmem:[#allocation4 + $0x138] sm:$0xff]
      %v3794 = vld [vmem:[#allocation4 + $0x140] sm:$0xff]
      %v3795 = vld [vmem:[#allocation4 + $0x148] sm:$0xff]
      %v3796 = vld [vmem:[#allocation4 + $0x150] sm:$0xff]
      %v3797 = vld [vmem:[#allocation4 + $0x158] sm:$0xff]
      %v3798 = vld [vmem:[#allocation4 + $0x160] sm:$0xff]
      %v3799 = vld [vmem:[#allocation4 + $0x168] sm:$0xff]
      %v3800 = vld [vmem:[#allocation4 + $0x170] sm:$0xff]
      %v3801 = vld [vmem:[#allocation4 + $0x178] sm:$0xff]
      %v3802 = vadd.f32 %v3754, %v3564
      %v3803 = vadd.f32 %v3755, %v3567
      %v3804 = vadd.f32 %v3756, %v3572
      %v3805 = vadd.f32 %v3757, %v3575
      %v3806 = vadd.f32 %v3758, %v3580
      %v3807 = vadd.f32 %v3759, %v3583
      %v3808 = vadd.f32 %v3760, %v3588
      %v3809 = vadd.f32 %v3761, %v3591
      %v3810 = vadd.f32 %v3762, %v3596
      %v3811 = vadd.f32 %v3763, %v3599
      %v3812 = vadd.f32 %v3764, %v3604
      %v3813 = vadd.f32 %v3765, %v3607
      %v3814 = vadd.f32 %v3766, %v3612
      %v3815 = vadd.f32 %v3767, %v3615
      %v3816 = vadd.f32 %v3768, %v3620
      %v3817 = vadd.f32 %v3769, %v3623
      %v3818 = vadd.f32 %v3770, %v3628
      %v3819 = vadd.f32 %v3771, %v3631
      %v3820 = vadd.f32 %v3772, %v3636
      %v3821 = vadd.f32 %v3773, %v3639
      %v3822 = vadd.f32 %v3774, %v3644
      %v3823 = vadd.f32 %v3775, %v3647
      %v3824 = vadd.f32 %v3776, %v3652
      %v3825 = vadd.f32 %v3777, %v3655
      %v3826 = vadd.f32 %v3778, %v3660
      %v3827 = vadd.f32 %v3779, %v3663
      %v3828 = vadd.f32 %v3780, %v3668
      %v3829 = vadd.f32 %v3781, %v3671
      %v3830 = vadd.f32 %v3782, %v3676
      %v3831 = vadd.f32 %v3783, %v3679
      %v3832 = vadd.f32 %v3784, %v3684
      %v3833 = vadd.f32 %v3785, %v3687
      %v3834 = vadd.f32 %v3786, %v3692
      %v3835 = vadd.f32 %v3787, %v3695
      %v3836 = vadd.f32 %v3788, %v3700
      %v3837 = vadd.f32 %v3789, %v3703
      %v3838 = vadd.f32 %v3790, %v3708
      %v3839 = vadd.f32 %v3791, %v3711
      %v3840 = vadd.f32 %v3792, %v3716
      %v3841 = vadd.f32 %v3793, %v3719
      %v3842 = vadd.f32 %v3794, %v3724
      %v3843 = vadd.f32 %v3795, %v3727
      %v3844 = vadd.f32 %v3796, %v3732
      %v3845 = vadd.f32 %v3797, %v3735
      %v3846 = vadd.f32 %v3798, %v3740
      %v3847 = vadd.f32 %v3799, %v3743
      %v3848 = vadd.f32 %v3800, %v3748
      %v3849 = vadd.f32 %v3801, %v3751
      %3850 = vst [vmem:[#allocation4] sm:$0xff] %v3802
      %3851 = vst [vmem:[#allocation4 + $0x8] sm:$0xff] %v3803
      %3852 = vst [vmem:[#allocation4 + $0x10] sm:$0xff] %v3804
      %3853 = vst [vmem:[#allocation4 + $0x18] sm:$0xff] %v3805
      %3854 = vst [vmem:[#allocation4 + $0x20] sm:$0xff] %v3806
      %3855 = vst [vmem:[#allocation4 + $0x28] sm:$0xff] %v3807
      %3856 = vst [vmem:[#allocation4 + $0x30] sm:$0xff] %v3808
      %3857 = vst [vmem:[#allocation4 + $0x38] sm:$0xff] %v3809
      %3858 = vst [vmem:[#allocation4 + $0x40] sm:$0xff] %v3810
      %3859 = vst [vmem:[#allocation4 + $0x48] sm:$0xff] %v3811
      %3860 = vst [vmem:[#allocation4 + $0x50] sm:$0xff] %v3812
      %3861 = vst [vmem:[#allocation4 + $0x58] sm:$0xff] %v3813
      %3862 = vst [vmem:[#allocation4 + $0x60] sm:$0xff] %v3814
      %3863 = vst [vmem:[#allocation4 + $0x68] sm:$0xff] %v3815
      %3864 = vst [vmem:[#allocation4 + $0x70] sm:$0xff] %v3816
      %3865 = vst [vmem:[#allocation4 + $0x78] sm:$0xff] %v3817
      %3866 = vst [vmem:[#allocation4 + $0x80] sm:$0xff] %v3818
      %3867 = vst [vmem:[#allocation4 + $0x88] sm:$0xff] %v3819
      %3868 = vst [vmem:[#allocation4 + $0x90] sm:$0xff] %v3820
      %3869 = vst [vmem:[#allocation4 + $0x98] sm:$0xff] %v3821
      %3870 = vst [vmem:[#allocation4 + $0xa0] sm:$0xff] %v3822
      %3871 = vst [vmem:[#allocation4 + $0xa8] sm:$0xff] %v3823
      %3872 = vst [vmem:[#allocation4 + $0xb0] sm:$0xff] %v3824
      %3873 = vst [vmem:[#allocation4 + $0xb8] sm:$0xff] %v3825
      %3874 = vst [vmem:[#allocation4 + $0xc0] sm:$0xff] %v3826
      %3875 = vst [vmem:[#allocation4 + $0xc8] sm:$0xff] %v3827
      %3876 = vst [vmem:[#allocation4 + $0xd0] sm:$0xff] %v3828
      %3877 = vst [vmem:[#allocation4 + $0xd8] sm:$0xff] %v3829
      %3878 = vst [vmem:[#allocation4 + $0xe0] sm:$0xff] %v3830
      %3879 = vst [vmem:[#allocation4 + $0xe8] sm:$0xff] %v3831
      %3880 = vst [vmem:[#allocation4 + $0xf0] sm:$0xff] %v3832
      %3881 = vst [vmem:[#allocation4 + $0xf8] sm:$0xff] %v3833
      %3882 = vst [vmem:[#allocation4 + $0x100] sm:$0xff] %v3834
      %3883 = vst [vmem:[#allocation4 + $0x108] sm:$0xff] %v3835
      %3884 = vst [vmem:[#allocation4 + $0x110] sm:$0xff] %v3836
      %3885 = vst [vmem:[#allocation4 + $0x118] sm:$0xff] %v3837
      %3886 = vst [vmem:[#allocation4 + $0x120] sm:$0xff] %v3838
      %3887 = vst [vmem:[#allocation4 + $0x128] sm:$0xff] %v3839
      %3888 = vst [vmem:[#allocation4 + $0x130] sm:$0xff] %v3840
      %3889 = vst [vmem:[#allocation4 + $0x138] sm:$0xff] %v3841
      %3890 = vst [vmem:[#allocation4 + $0x140] sm:$0xff] %v3842
      %3891 = vst [vmem:[#allocation4 + $0x148] sm:$0xff] %v3843
      %3892 = vst [vmem:[#allocation4 + $0x150] sm:$0xff] %v3844
      %3893 = vst [vmem:[#allocation4 + $0x158] sm:$0xff] %v3845
      %3894 = vst [vmem:[#allocation4 + $0x160] sm:$0xff] %v3846
      %3895 = vst [vmem:[#allocation4 + $0x168] sm:$0xff] %v3847
      %3896 = vst [vmem:[#allocation4 + $0x170] sm:$0xff] %v3848
      %3897 = vst [vmem:[#allocation4 + $0x178] sm:$0xff] %v3849
      %v3898 = vld [vmem:[%s404 + $0xc] sm:$0xe]
      %v3899 = vld [vmem:[%s404 + $0x10] sm:$0xf]
      %v3900 = vld [vmem:[%s404 + $0x14] sm:$0xf]
      %v3901 = vld [vmem:[%s404 + $0x18] sm:$0xf]
      %v3902 = vld [vmem:[%s404 + $0x1c] sm:$0xf]
      %v3903 = vld [vmem:[%s404 + $0x20] sm:$0xf]
      %v3904 = vld [vmem:[%s404 + $0x24] sm:$0xf]
      %v3905 = vld [vmem:[%s404 + $0x28] sm:$0xf]
      %v3906 = vld [vmem:[%s404 + $0x2c] sm:$0xf]
      %v3907 = vld [vmem:[%s404 + $0x30] sm:$0xf]
      %v3908 = vld [vmem:[%s404 + $0x34] sm:$0xf]
      %v3909 = vld [vmem:[%s404 + $0x38] sm:$0xf]
      %v3910 = vld [vmem:[%s404 + $0x3c] sm:$0xf]
      %v3911 = vld [vmem:[%s404 + $0x40] sm:$0xf]
      %v3912 = vld [vmem:[%s404 + $0x44] sm:$0xf]
      %v3913 = vld [vmem:[%s404 + $0x48] sm:$0xf]
      %v3914 = vld [vmem:[%s404 + $0x4c] sm:$0xf]
      %v3915 = vld [vmem:[%s404 + $0x50] sm:$0xf]
      %v3916 = vld [vmem:[%s404 + $0x54] sm:$0xf]
      %v3917 = vld [vmem:[%s404 + $0x58] sm:$0xf]
      %v3918 = vld [vmem:[%s404 + $0x5c] sm:$0xf]
      %v3919 = vld [vmem:[%s404 + $0x60] sm:$0xf]
      %v3920 = vld [vmem:[%s404 + $0x64] sm:$0xf]
      %v3921 = vld [vmem:[%s404 + $0x68] sm:$0xf]
      %v3922 = vld [vmem:[%s404 + $0x6c] sm:$0xf]
      %v3923 = vld [vmem:[%s404 + $0x70] sm:$0xf]
      %v3924 = vld [vmem:[%s404 + $0x74] sm:$0xf]
      %v3925 = vld [vmem:[%s404 + $0x78] sm:$0xf]
      %v3926 = vld [vmem:[%s404 + $0x7c] sm:$0xf]
      %v3927 = vld [vmem:[%s404 + $0x80] sm:$0xf]
      %v3928 = vld [vmem:[%s404 + $0x84] sm:$0xf]
      %v3929 = vld [vmem:[%s404 + $0x88] sm:$0xf]
      %v3930 = vld [vmem:[%s404 + $0x8c] sm:$0xf]
      %v3931 = vld [vmem:[%s404 + $0x90] sm:$0xf]
      %v3932 = vld [vmem:[%s404 + $0x94] sm:$0xf]
      %v3933 = vld [vmem:[%s404 + $0x98] sm:$0xf]
      %v3934 = vld [vmem:[%s404 + $0x9c] sm:$0xf]
      %v3935 = vld [vmem:[%s404 + $0xa0] sm:$0xf]
      %v3936 = vld [vmem:[%s404 + $0xa4] sm:$0xf]
      %v3937 = vld [vmem:[%s404 + $0xa8] sm:$0xf]
      %v3938 = vld [vmem:[%s404 + $0xac] sm:$0xf]
      %v3939 = vld [vmem:[%s404 + $0xb0] sm:$0xf]
      %v3940 = vld [vmem:[%s404 + $0xb4] sm:$0xf]
      %v3941 = vld [vmem:[%s404 + $0xb8] sm:$0xf]
      %v3942 = vld [vmem:[%s404 + $0xbc] sm:$0xf]
      %v3943 = vld [vmem:[%s404 + $0xc0] sm:$0xf]
      %v3944 = vld [vmem:[%s404 + $0xc4] sm:$0xf]
      %v3945 = vld [vmem:[%s404 + $0xc8] sm:$0xf]
      %v3946 = vld [vmem:[%s404 + $0xcc] sm:$0x1]
      %s3947 = scalar_lea.vmem %s1, 320
      %v3948 = vld [vmem:[%s3947] sm:$0xf]
      %v3949 = vld [vmem:[%s3947 + $0x4] sm:$0xf]
      %v3950 = vld [vmem:[%s3947 + $0x8] sm:$0xf]
      %v3951 = vld [vmem:[%s3947 + $0xc] sm:$0xf]
      %v3952 = vld [vmem:[%s3947 + $0x10] sm:$0xf]
      %v3953 = vld [vmem:[%s3947 + $0x14] sm:$0xf]
      %v3954 = vld [vmem:[%s3947 + $0x18] sm:$0xf]
      %v3955 = vld [vmem:[%s3947 + $0x1c] sm:$0xf]
      %v3956 = vld [vmem:[%s3947 + $0x20] sm:$0xf]
      %v3957 = vld [vmem:[%s3947 + $0x24] sm:$0xf]
      %v3958 = vld [vmem:[%s3947 + $0x28] sm:$0xf]
      %v3959 = vld [vmem:[%s3947 + $0x2c] sm:$0xf]
      %v3960 = vld [vmem:[%s3947 + $0x30] sm:$0xf]
      %v3961 = vld [vmem:[%s3947 + $0x34] sm:$0xf]
      %v3962 = vld [vmem:[%s3947 + $0x38] sm:$0xf]
      %v3963 = vld [vmem:[%s3947 + $0x3c] sm:$0xf]
      %v4013 = vunpack.c.l.b16 %v3898
      %v4014 = vunpack.c.l.b16 %v3899
      %v4015 = vunpack.c.l.b16 %v3900
      %v4016 = vunpack.c.l.b16 %v3901
      %v4017 = vunpack.c.l.b16 %v3902
      %v4018 = vunpack.c.l.b16 %v3903
      %v4019 = vunpack.c.l.b16 %v3904
      %v4020 = vunpack.c.l.b16 %v3905
      %v4021 = vunpack.c.l.b16 %v3906
      %v4022 = vunpack.c.l.b16 %v3907
      %v4023 = vunpack.c.l.b16 %v3908
      %v4024 = vunpack.c.l.b16 %v3909
      %v4025 = vunpack.c.l.b16 %v3910
      %v4026 = vunpack.c.l.b16 %v3911
      %v4027 = vunpack.c.l.b16 %v3912
      %v4028 = vunpack.c.l.b16 %v3913
      %v4029 = vunpack.c.l.b16 %v3914
      %v4030 = vunpack.c.l.b16 %v3915
      %v4031 = vunpack.c.l.b16 %v3916
      %v4032 = vunpack.c.l.b16 %v3917
      %v4033 = vunpack.c.l.b16 %v3918
      %v4034 = vunpack.c.l.b16 %v3919
      %v4035 = vunpack.c.l.b16 %v3920
      %v4036 = vunpack.c.l.b16 %v3921
      %v4037 = vunpack.c.l.b16 %v3922
      %v4038 = vunpack.c.l.b16 %v3923
      %v4039 = vunpack.c.l.b16 %v3924
      %v4040 = vunpack.c.l.b16 %v3925
      %v4041 = vunpack.c.l.b16 %v3926
      %v4042 = vunpack.c.l.b16 %v3927
      %v4043 = vunpack.c.l.b16 %v3928
      %v4044 = vunpack.c.l.b16 %v3929
      %v4045 = vunpack.c.l.b16 %v3930
      %v4046 = vunpack.c.l.b16 %v3931
      %v4047 = vunpack.c.l.b16 %v3932
      %v4048 = vunpack.c.l.b16 %v3933
      %v4049 = vunpack.c.l.b16 %v3934
      %v4050 = vunpack.c.l.b16 %v3935
      %v4051 = vunpack.c.l.b16 %v3936
      %v4052 = vunpack.c.l.b16 %v3937
      %v4053 = vunpack.c.l.b16 %v3938
      %v4054 = vunpack.c.l.b16 %v3939
      %v4055 = vunpack.c.l.b16 %v3940
      %v4056 = vunpack.c.l.b16 %v3941
      %v4057 = vunpack.c.l.b16 %v3942
      %v4058 = vunpack.c.l.b16 %v3943
      %v4059 = vunpack.c.l.b16 %v3944
      %v4060 = vunpack.c.l.b16 %v3945
      %v4061 = vunpack.c.l.b16 %v3946
      %v4062 = vpack.c.b16 %v4014, %v4013
      %v4063 = vpack.c.b16 %v4016, %v4015
      %v4064 = vpack.c.b16 %v4018, %v4017
      %v4065 = vpack.c.b16 %v4020, %v4019
      %v4066 = vpack.c.b16 %v4022, %v4021
      %v4067 = vpack.c.b16 %v4024, %v4023
      %v4068 = vpack.c.b16 %v4026, %v4025
      %v4069 = vpack.c.b16 %v4028, %v4027
      %v4070 = vpack.c.b16 %v4030, %v4029
      %v4071 = vpack.c.b16 %v4032, %v4031
      %v4072 = vpack.c.b16 %v4034, %v4033
      %v4073 = vpack.c.b16 %v4036, %v4035
      %v4074 = vpack.c.b16 %v4038, %v4037
      %v4075 = vpack.c.b16 %v4040, %v4039
      %v4076 = vpack.c.b16 %v4042, %v4041
      %v4077 = vpack.c.b16 %v4044, %v4043
      %v4078 = vpack.c.b16 %v4046, %v4045
      %v4079 = vpack.c.b16 %v4048, %v4047
      %v4080 = vpack.c.b16 %v4050, %v4049
      %v4081 = vpack.c.b16 %v4052, %v4051
      %v4082 = vpack.c.b16 %v4054, %v4053
      %v4083 = vpack.c.b16 %v4056, %v4055
      %v4084 = vpack.c.b16 %v4058, %v4057
      %v4085 = vpack.c.b16 %v4060, %v4059
      %v4086 = vpack.c.b16 %v4061, %v4061
      %v4087 = vrot.slane %v4062, 1
      %v4088 = vrot.slane %v4063, 1
      %v4089 = vsel %vm1955, %v4087, %v4088
      %v4090 = vrot.slane %v4064, 1
      %v4091 = vsel %vm1955, %v4088, %v4090
      %v4092 = vrot.slane %v4065, 1
      %v4093 = vsel %vm1955, %v4090, %v4092
      %v4094 = vrot.slane %v4066, 1
      %v4095 = vsel %vm1955, %v4092, %v4094
      %v4096 = vrot.slane %v4067, 1
      %v4097 = vsel %vm1955, %v4094, %v4096
      %v4098 = vrot.slane %v4068, 1
      %v4099 = vsel %vm1955, %v4096, %v4098
      %v4100 = vrot.slane %v4069, 1
      %v4101 = vsel %vm1955, %v4098, %v4100
      %v4102 = vrot.slane %v4070, 1
      %v4103 = vsel %vm1955, %v4100, %v4102
      %v4104 = vrot.slane %v4071, 1
      %v4105 = vsel %vm1955, %v4102, %v4104
      %v4106 = vrot.slane %v4072, 1
      %v4107 = vsel %vm1955, %v4104, %v4106
      %v4108 = vrot.slane %v4073, 1
      %v4109 = vsel %vm1955, %v4106, %v4108
      %v4110 = vrot.slane %v4074, 1
      %v4111 = vsel %vm1955, %v4108, %v4110
      %v4112 = vrot.slane %v4075, 1
      %v4113 = vsel %vm1955, %v4110, %v4112
      %v4114 = vrot.slane %v4076, 1
      %v4115 = vsel %vm1955, %v4112, %v4114
      %v4116 = vrot.slane %v4077, 1
      %v4117 = vsel %vm1955, %v4114, %v4116
      %v4118 = vrot.slane %v4078, 1
      %v4119 = vsel %vm1955, %v4116, %v4118
      %v4120 = vrot.slane %v4079, 1
      %v4121 = vsel %vm1955, %v4118, %v4120
      %v4122 = vrot.slane %v4080, 1
      %v4123 = vsel %vm1955, %v4120, %v4122
      %v4124 = vrot.slane %v4081, 1
      %v4125 = vsel %vm1955, %v4122, %v4124
      %v4126 = vrot.slane %v4082, 1
      %v4127 = vsel %vm1955, %v4124, %v4126
      %v4128 = vrot.slane %v4083, 1
      %v4129 = vsel %vm1955, %v4126, %v4128
      %v4130 = vrot.slane %v4084, 1
      %v4131 = vsel %vm1955, %v4128, %v4130
      %v4132 = vrot.slane %v4085, 1
      %v4133 = vsel %vm1955, %v4130, %v4132
      %v4134 = vrot.slane %v4086, 1
      %v4135 = vsel %vm1955, %v4132, %v4134
      %v4176 = vunpack.c.l.b16 %v3948
      %v4177 = vunpack.c.l.b16 %v3949
      %v4178 = vunpack.c.l.b16 %v3950
      %v4179 = vunpack.c.l.b16 %v3951
      %v4180 = vunpack.c.l.b16 %v3952
      %v4181 = vunpack.c.l.b16 %v3953
      %v4182 = vunpack.c.l.b16 %v3954
      %v4183 = vunpack.c.l.b16 %v3955
      %v4184 = vunpack.c.l.b16 %v3956
      %v4185 = vunpack.c.l.b16 %v3957
      %v4186 = vunpack.c.l.b16 %v3958
      %v4187 = vunpack.c.l.b16 %v3959
      %v4188 = vunpack.c.l.b16 %v3960
      %v4189 = vunpack.c.l.b16 %v3961
      %v4190 = vunpack.c.l.b16 %v3962
      %v4191 = vunpack.c.l.b16 %v3963
      %v4192 = vpack.c.b16 %v4177, %v4176
      %v4193 = vpack.c.b16 %v4179, %v4178
      %v4194 = vpack.c.b16 %v4181, %v4180
      %v4195 = vpack.c.b16 %v4183, %v4182
      %v4196 = vpack.c.b16 %v4185, %v4184
      %v4197 = vpack.c.b16 %v4187, %v4186
      %v4198 = vpack.c.b16 %v4189, %v4188
      %v4199 = vpack.c.b16 %v4191, %v4190
      %4208 = vmatprep.subr.bf16.mxu0 0
      %4209 = vmatpush1.bf16.msra.mxu0 %v4192
      %4210 = vmatprep.subr.bf16.mxu0 0
      %4211 = vmatpush1.bf16.msra.mxu0 %v4193
      %4212 = vmatprep.subr.bf16.mxu0 0
      %4213 = vmatpush1.bf16.msra.mxu0 %v4194
      %4214 = vmatprep.subr.bf16.mxu0 0
      %4215 = vmatpush1.bf16.msra.mxu0 %v4195
      %4216 = vmatprep.subr.bf16.mxu0 0
      %4217 = vmatpush1.bf16.msra.mxu0 %v4196
      %4218 = vmatprep.subr.bf16.mxu0 0
      %4219 = vmatpush1.bf16.msra.mxu0 %v4197
      %4220 = vmatprep.subr.bf16.mxu0 0
      %4221 = vmatpush1.bf16.msra.mxu0 %v4198
      %4222 = vmatprep.subr.bf16.mxu0 0
      %4223 = vmatpush1.bf16.msra.mxu0 %v4199
      %4224 = vmatprep.subr.bf16.mxu0 0
      %4225 = vmatpush1.bf16.msra.mxu0 0
      %4226 = vmatprep.subr.bf16.mxu0 0
      %4227 = vmatpush1.bf16.msra.mxu0 0
      %4228 = vmatprep.subr.bf16.mxu0 0
      %4229 = vmatpush1.bf16.msra.mxu0 0
      %4230 = vmatprep.subr.bf16.mxu0 0
      %4231 = vmatpush1.bf16.msra.mxu0 0
      %4232 = vmatprep.subr.bf16.mxu0 0
      %4233 = vmatpush1.bf16.msra.mxu0 0
      %4234 = vmatprep.subr.bf16.mxu0 0
      %4235 = vmatpush1.bf16.msra.mxu0 0
      %4236 = vmatprep.subr.bf16.mxu0 0
      %4237 = vmatpush1.bf16.msra.mxu0 0
      %4238 = vmatprep.subr.bf16.mxu0 0
      %4239 = vmatpush1.bf16.msra.mxu0 0
      %4240 = vmatprep.mubr.bf16.mxu0 0
      %4241 = vmatmul.mubr.bf16.gmra.mrb[0].mxu0 %v4089
      %v4242 = vpop.f32.mrb[0].mxu0
      %v4243 = vadd.f32 0.0, %v4242
      %v4244 = vpop.f32.mrb[0].mxu0
      %v4245 = vpop.f32.mrb[0].mxu0
      %v4246 = vadd.f32 0.0, %v4245
      %v4247 = vpop.f32.mrb[0].mxu0
      %4248 = vmatprep.mubr.bf16.mxu0 0
      %4249 = vmatmul.mubr.bf16.gmra.mrb[0].mxu0 %v4091
      %v4250 = vpop.f32.mrb[0].mxu0
      %v4251 = vadd.f32 0.0, %v4250
      %v4252 = vpop.f32.mrb[0].mxu0
      %v4253 = vpop.f32.mrb[0].mxu0
      %v4254 = vadd.f32 0.0, %v4253
      %v4255 = vpop.f32.mrb[0].mxu0
      %4256 = vmatprep.mubr.bf16.mxu0 0
      %4257 = vmatmul.mubr.bf16.gmra.mrb[0].mxu0 %v4093
      %v4258 = vpop.f32.mrb[0].mxu0
      %v4259 = vadd.f32 0.0, %v4258
      %v4260 = vpop.f32.mrb[0].mxu0
      %v4261 = vpop.f32.mrb[0].mxu0
      %v4262 = vadd.f32 0.0, %v4261
      %v4263 = vpop.f32.mrb[0].mxu0
      %4264 = vmatprep.mubr.bf16.mxu0 0
      %4265 = vmatmul.mubr.bf16.gmra.mrb[0].mxu0 %v4095
      %v4266 = vpop.f32.mrb[0].mxu0
      %v4267 = vadd.f32 0.0, %v4266
      %v4268 = vpop.f32.mrb[0].mxu0
      %v4269 = vpop.f32.mrb[0].mxu0
      %v4270 = vadd.f32 0.0, %v4269
      %v4271 = vpop.f32.mrb[0].mxu0
      %4272 = vmatprep.mubr.bf16.mxu0 0
      %4273 = vmatmul.mubr.bf16.gmra.mrb[0].mxu0 %v4097
      %v4274 = vpop.f32.mrb[0].mxu0
      %v4275 = vadd.f32 0.0, %v4274
      %v4276 = vpop.f32.mrb[0].mxu0
      %v4277 = vpop.f32.mrb[0].mxu0
      %v4278 = vadd.f32 0.0, %v4277
      %v4279 = vpop.f32.mrb[0].mxu0
      %4280 = vmatprep.mubr.bf16.mxu0 0
      %4281 = vmatmul.mubr.bf16.gmra.mrb[0].mxu0 %v4099
      %v4282 = vpop.f32.mrb[0].mxu0
      %v4283 = vadd.f32 0.0, %v4282
      %v4284 = vpop.f32.mrb[0].mxu0
      %v4285 = vpop.f32.mrb[0].mxu0
      %v4286 = vadd.f32 0.0, %v4285
      %v4287 = vpop.f32.mrb[0].mxu0
      %4288 = vmatprep.mubr.bf16.mxu0 0
      %4289 = vmatmul.mubr.bf16.gmra.mrb[0].mxu0 %v4101
      %v4290 = vpop.f32.mrb[0].mxu0
      %v4291 = vadd.f32 0.0, %v4290
      %v4292 = vpop.f32.mrb[0].mxu0
      %v4293 = vpop.f32.mrb[0].mxu0
      %v4294 = vadd.f32 0.0, %v4293
      %v4295 = vpop.f32.mrb[0].mxu0
      %4296 = vmatprep.mubr.bf16.mxu0 0
      %4297 = vmatmul.mubr.bf16.gmra.mrb[0].mxu0 %v4103
      %v4298 = vpop.f32.mrb[0].mxu0
      %v4299 = vadd.f32 0.0, %v4298
      %v4300 = vpop.f32.mrb[0].mxu0
      %v4301 = vpop.f32.mrb[0].mxu0
      %v4302 = vadd.f32 0.0, %v4301
      %v4303 = vpop.f32.mrb[0].mxu0
      %4304 = vmatprep.mubr.bf16.mxu0 0
      %4305 = vmatmul.mubr.bf16.gmra.mrb[0].mxu0 %v4105
      %v4306 = vpop.f32.mrb[0].mxu0
      %v4307 = vadd.f32 0.0, %v4306
      %v4308 = vpop.f32.mrb[0].mxu0
      %v4309 = vpop.f32.mrb[0].mxu0
      %v4310 = vadd.f32 0.0, %v4309
      %v4311 = vpop.f32.mrb[0].mxu0
      %4312 = vmatprep.mubr.bf16.mxu0 0
      %4313 = vmatmul.mubr.bf16.gmra.mrb[0].mxu0 %v4107
      %v4314 = vpop.f32.mrb[0].mxu0
      %v4315 = vadd.f32 0.0, %v4314
      %v4316 = vpop.f32.mrb[0].mxu0
      %v4317 = vpop.f32.mrb[0].mxu0
      %v4318 = vadd.f32 0.0, %v4317
      %v4319 = vpop.f32.mrb[0].mxu0
      %4320 = vmatprep.mubr.bf16.mxu0 0
      %4321 = vmatmul.mubr.bf16.gmra.mrb[0].mxu0 %v4109
      %v4322 = vpop.f32.mrb[0].mxu0
      %v4323 = vadd.f32 0.0, %v4322
      %v4324 = vpop.f32.mrb[0].mxu0
      %v4325 = vpop.f32.mrb[0].mxu0
      %v4326 = vadd.f32 0.0, %v4325
      %v4327 = vpop.f32.mrb[0].mxu0
      %4328 = vmatprep.mubr.bf16.mxu0 0
      %4329 = vmatmul.mubr.bf16.gmra.mrb[0].mxu0 %v4111
      %v4330 = vpop.f32.mrb[0].mxu0
      %v4331 = vadd.f32 0.0, %v4330
      %v4332 = vpop.f32.mrb[0].mxu0
      %v4333 = vpop.f32.mrb[0].mxu0
      %v4334 = vadd.f32 0.0, %v4333
      %v4335 = vpop.f32.mrb[0].mxu0
      %4336 = vmatprep.mubr.bf16.mxu0 0
      %4337 = vmatmul.mubr.bf16.gmra.mrb[0].mxu0 %v4113
      %v4338 = vpop.f32.mrb[0].mxu0
      %v4339 = vadd.f32 0.0, %v4338
      %v4340 = vpop.f32.mrb[0].mxu0
      %v4341 = vpop.f32.mrb[0].mxu0
      %v4342 = vadd.f32 0.0, %v4341
      %v4343 = vpop.f32.mrb[0].mxu0
      %4344 = vmatprep.mubr.bf16.mxu0 0
      %4345 = vmatmul.mubr.bf16.gmra.mrb[0].mxu0 %v4115
      %v4346 = vpop.f32.mrb[0].mxu0
      %v4347 = vadd.f32 0.0, %v4346
      %v4348 = vpop.f32.mrb[0].mxu0
      %v4349 = vpop.f32.mrb[0].mxu0
      %v4350 = vadd.f32 0.0, %v4349
      %v4351 = vpop.f32.mrb[0].mxu0
      %4352 = vmatprep.mubr.bf16.mxu0 0
      %4353 = vmatmul.mubr.bf16.gmra.mrb[0].mxu0 %v4117
      %v4354 = vpop.f32.mrb[0].mxu0
      %v4355 = vadd.f32 0.0, %v4354
      %v4356 = vpop.f32.mrb[0].mxu0
      %v4357 = vpop.f32.mrb[0].mxu0
      %v4358 = vadd.f32 0.0, %v4357
      %v4359 = vpop.f32.mrb[0].mxu0
      %4360 = vmatprep.mubr.bf16.mxu0 0
      %4361 = vmatmul.mubr.bf16.gmra.mrb[0].mxu0 %v4119
      %v4362 = vpop.f32.mrb[0].mxu0
      %v4363 = vadd.f32 0.0, %v4362
      %v4364 = vpop.f32.mrb[0].mxu0
      %v4365 = vpop.f32.mrb[0].mxu0
      %v4366 = vadd.f32 0.0, %v4365
      %v4367 = vpop.f32.mrb[0].mxu0
      %4368 = vmatprep.mubr.bf16.mxu0 0
      %4369 = vmatmul.mubr.bf16.gmra.mrb[0].mxu0 %v4121
      %v4370 = vpop.f32.mrb[0].mxu0
      %v4371 = vadd.f32 0.0, %v4370
      %v4372 = vpop.f32.mrb[0].mxu0
      %v4373 = vpop.f32.mrb[0].mxu0
      %v4374 = vadd.f32 0.0, %v4373
      %v4375 = vpop.f32.mrb[0].mxu0
      %4376 = vmatprep.mubr.bf16.mxu0 0
      %4377 = vmatmul.mubr.bf16.gmra.mrb[0].mxu0 %v4123
      %v4378 = vpop.f32.mrb[0].mxu0
      %v4379 = vadd.f32 0.0, %v4378
      %v4380 = vpop.f32.mrb[0].mxu0
      %v4381 = vpop.f32.mrb[0].mxu0
      %v4382 = vadd.f32 0.0, %v4381
      %v4383 = vpop.f32.mrb[0].mxu0
      %4384 = vmatprep.mubr.bf16.mxu0 0
      %4385 = vmatmul.mubr.bf16.gmra.mrb[0].mxu0 %v4125
      %v4386 = vpop.f32.mrb[0].mxu0
      %v4387 = vadd.f32 0.0, %v4386
      %v4388 = vpop.f32.mrb[0].mxu0
      %v4389 = vpop.f32.mrb[0].mxu0
      %v4390 = vadd.f32 0.0, %v4389
      %v4391 = vpop.f32.mrb[0].mxu0
      %4392 = vmatprep.mubr.bf16.mxu0 0
      %4393 = vmatmul.mubr.bf16.gmra.mrb[0].mxu0 %v4127
      %v4394 = vpop.f32.mrb[0].mxu0
      %v4395 = vadd.f32 0.0, %v4394
      %v4396 = vpop.f32.mrb[0].mxu0
      %v4397 = vpop.f32.mrb[0].mxu0
      %v4398 = vadd.f32 0.0, %v4397
      %v4399 = vpop.f32.mrb[0].mxu0
      %4400 = vmatprep.mubr.bf16.mxu0 0
      %4401 = vmatmul.mubr.bf16.gmra.mrb[0].mxu0 %v4129
      %v4402 = vpop.f32.mrb[0].mxu0
      %v4403 = vadd.f32 0.0, %v4402
      %v4404 = vpop.f32.mrb[0].mxu0
      %v4405 = vpop.f32.mrb[0].mxu0
      %v4406 = vadd.f32 0.0, %v4405
      %v4407 = vpop.f32.mrb[0].mxu0
      %4408 = vmatprep.mubr.bf16.mxu0 0
      %4409 = vmatmul.mubr.bf16.gmra.mrb[0].mxu0 %v4131
      %v4410 = vpop.f32.mrb[0].mxu0
      %v4411 = vadd.f32 0.0, %v4410
      %v4412 = vpop.f32.mrb[0].mxu0
      %v4413 = vpop.f32.mrb[0].mxu0
      %v4414 = vadd.f32 0.0, %v4413
      %v4415 = vpop.f32.mrb[0].mxu0
      %4416 = vmatprep.mubr.bf16.mxu0 0
      %4417 = vmatmul.mubr.bf16.gmra.mrb[0].mxu0 %v4133
      %v4418 = vpop.f32.mrb[0].mxu0
      %v4419 = vadd.f32 0.0, %v4418
      %v4420 = vpop.f32.mrb[0].mxu0
      %v4421 = vpop.f32.mrb[0].mxu0
      %v4422 = vadd.f32 0.0, %v4421
      %v4423 = vpop.f32.mrb[0].mxu0
      %4424 = vmatprep.mubr.bf16.mxu0 0
      %4425 = vmatmul.mubr.bf16.gmra.mrb[0].mxu0 %v4135
      %v4426 = vpop.f32.mrb[0].mxu0
      %v4427 = vadd.f32 0.0, %v4426
      %v4428 = vpop.f32.mrb[0].mxu0
      %v4429 = vpop.f32.mrb[0].mxu0
      %v4430 = vadd.f32 0.0, %v4429
      %v4431 = vpop.f32.mrb[0].mxu0
      %4432 = vdwg.mxu0
      %v4433 = vld [vmem:[#allocation4] sm:$0xff]
      %v4434 = vld [vmem:[#allocation4 + $0x8] sm:$0xff]
      %v4435 = vld [vmem:[#allocation4 + $0x10] sm:$0xff]
      %v4436 = vld [vmem:[#allocation4 + $0x18] sm:$0xff]
      %v4437 = vld [vmem:[#allocation4 + $0x20] sm:$0xff]
      %v4438 = vld [vmem:[#allocation4 + $0x28] sm:$0xff]
      %v4439 = vld [vmem:[#allocation4 + $0x30] sm:$0xff]
      %v4440 = vld [vmem:[#allocation4 + $0x38] sm:$0xff]
      %v4441 = vld [vmem:[#allocation4 + $0x40] sm:$0xff]
      %v4442 = vld [vmem:[#allocation4 + $0x48] sm:$0xff]
      %v4443 = vld [vmem:[#allocation4 + $0x50] sm:$0xff]
      %v4444 = vld [vmem:[#allocation4 + $0x58] sm:$0xff]
      %v4445 = vld [vmem:[#allocation4 + $0x60] sm:$0xff]
      %v4446 = vld [vmem:[#allocation4 + $0x68] sm:$0xff]
      %v4447 = vld [vmem:[#allocation4 + $0x70] sm:$0xff]
      %v4448 = vld [vmem:[#allocation4 + $0x78] sm:$0xff]
      %v4449 = vld [vmem:[#allocation4 + $0x80] sm:$0xff]
      %v4450 = vld [vmem:[#allocation4 + $0x88] sm:$0xff]
      %v4451 = vld [vmem:[#allocation4 + $0x90] sm:$0xff]
      %v4452 = vld [vmem:[#allocation4 + $0x98] sm:$0xff]
      %v4453 = vld [vmem:[#allocation4 + $0xa0] sm:$0xff]
      %v4454 = vld [vmem:[#allocation4 + $0xa8] sm:$0xff]
      %v4455 = vld [vmem:[#allocation4 + $0xb0] sm:$0xff]
      %v4456 = vld [vmem:[#allocation4 + $0xb8] sm:$0xff]
      %v4457 = vld [vmem:[#allocation4 + $0xc0] sm:$0xff]
      %v4458 = vld [vmem:[#allocation4 + $0xc8] sm:$0xff]
      %v4459 = vld [vmem:[#allocation4 + $0xd0] sm:$0xff]
      %v4460 = vld [vmem:[#allocation4 + $0xd8] sm:$0xff]
      %v4461 = vld [vmem:[#allocation4 + $0xe0] sm:$0xff]
      %v4462 = vld [vmem:[#allocation4 + $0xe8] sm:$0xff]
      %v4463 = vld [vmem:[#allocation4 + $0xf0] sm:$0xff]
      %v4464 = vld [vmem:[#allocation4 + $0xf8] sm:$0xff]
      %v4465 = vld [vmem:[#allocation4 + $0x100] sm:$0xff]
      %v4466 = vld [vmem:[#allocation4 + $0x108] sm:$0xff]
      %v4467 = vld [vmem:[#allocation4 + $0x110] sm:$0xff]
      %v4468 = vld [vmem:[#allocation4 + $0x118] sm:$0xff]
      %v4469 = vld [vmem:[#allocation4 + $0x120] sm:$0xff]
      %v4470 = vld [vmem:[#allocation4 + $0x128] sm:$0xff]
      %v4471 = vld [vmem:[#allocation4 + $0x130] sm:$0xff]
      %v4472 = vld [vmem:[#allocation4 + $0x138] sm:$0xff]
      %v4473 = vld [vmem:[#allocation4 + $0x140] sm:$0xff]
      %v4474 = vld [vmem:[#allocation4 + $0x148] sm:$0xff]
      %v4475 = vld [vmem:[#allocation4 + $0x150] sm:$0xff]
      %v4476 = vld [vmem:[#allocation4 + $0x158] sm:$0xff]
      %v4477 = vld [vmem:[#allocation4 + $0x160] sm:$0xff]
      %v4478 = vld [vmem:[#allocation4 + $0x168] sm:$0xff]
      %v4479 = vld [vmem:[#allocation4 + $0x170] sm:$0xff]
      %v4480 = vld [vmem:[#allocation4 + $0x178] sm:$0xff]
      %v4481 = vadd.f32 %v4433, %v4243
      %v4482 = vadd.f32 %v4434, %v4246
      %v4483 = vadd.f32 %v4435, %v4251
      %v4484 = vadd.f32 %v4436, %v4254
      %v4485 = vadd.f32 %v4437, %v4259
      %v4486 = vadd.f32 %v4438, %v4262
      %v4487 = vadd.f32 %v4439, %v4267
      %v4488 = vadd.f32 %v4440, %v4270
      %v4489 = vadd.f32 %v4441, %v4275
      %v4490 = vadd.f32 %v4442, %v4278
      %v4491 = vadd.f32 %v4443, %v4283
      %v4492 = vadd.f32 %v4444, %v4286
      %v4493 = vadd.f32 %v4445, %v4291
      %v4494 = vadd.f32 %v4446, %v4294
      %v4495 = vadd.f32 %v4447, %v4299
      %v4496 = vadd.f32 %v4448, %v4302
      %v4497 = vadd.f32 %v4449, %v4307
      %v4498 = vadd.f32 %v4450, %v4310
      %v4499 = vadd.f32 %v4451, %v4315
      %v4500 = vadd.f32 %v4452, %v4318
      %v4501 = vadd.f32 %v4453, %v4323
      %v4502 = vadd.f32 %v4454, %v4326
      %v4503 = vadd.f32 %v4455, %v4331
      %v4504 = vadd.f32 %v4456, %v4334
      %v4505 = vadd.f32 %v4457, %v4339
      %v4506 = vadd.f32 %v4458, %v4342
      %v4507 = vadd.f32 %v4459, %v4347
      %v4508 = vadd.f32 %v4460, %v4350
      %v4509 = vadd.f32 %v4461, %v4355
      %v4510 = vadd.f32 %v4462, %v4358
      %v4511 = vadd.f32 %v4463, %v4363
      %v4512 = vadd.f32 %v4464, %v4366
      %v4513 = vadd.f32 %v4465, %v4371
      %v4514 = vadd.f32 %v4466, %v4374
      %v4515 = vadd.f32 %v4467, %v4379
      %v4516 = vadd.f32 %v4468, %v4382
      %v4517 = vadd.f32 %v4469, %v4387
      %v4518 = vadd.f32 %v4470, %v4390
      %v4519 = vadd.f32 %v4471, %v4395
      %v4520 = vadd.f32 %v4472, %v4398
      %v4521 = vadd.f32 %v4473, %v4403
      %v4522 = vadd.f32 %v4474, %v4406
      %v4523 = vadd.f32 %v4475, %v4411
      %v4524 = vadd.f32 %v4476, %v4414
      %v4525 = vadd.f32 %v4477, %v4419
      %v4526 = vadd.f32 %v4478, %v4422
      %v4527 = vadd.f32 %v4479, %v4427
      %v4528 = vadd.f32 %v4480, %v4430
      %4529 = vst [vmem:[#allocation4] sm:$0xff] %v4481
      %4530 = vst [vmem:[#allocation4 + $0x8] sm:$0xff] %v4482
      %4531 = vst [vmem:[#allocation4 + $0x10] sm:$0xff] %v4483
      %4532 = vst [vmem:[#allocation4 + $0x18] sm:$0xff] %v4484
      %4533 = vst [vmem:[#allocation4 + $0x20] sm:$0xff] %v4485
      %4534 = vst [vmem:[#allocation4 + $0x28] sm:$0xff] %v4486
      %4535 = vst [vmem:[#allocation4 + $0x30] sm:$0xff] %v4487
      %4536 = vst [vmem:[#allocation4 + $0x38] sm:$0xff] %v4488
      %4537 = vst [vmem:[#allocation4 + $0x40] sm:$0xff] %v4489
      %4538 = vst [vmem:[#allocation4 + $0x48] sm:$0xff] %v4490
      %4539 = vst [vmem:[#allocation4 + $0x50] sm:$0xff] %v4491
      %4540 = vst [vmem:[#allocation4 + $0x58] sm:$0xff] %v4492
      %4541 = vst [vmem:[#allocation4 + $0x60] sm:$0xff] %v4493
      %4542 = vst [vmem:[#allocation4 + $0x68] sm:$0xff] %v4494
      %4543 = vst [vmem:[#allocation4 + $0x70] sm:$0xff] %v4495
      %4544 = vst [vmem:[#allocation4 + $0x78] sm:$0xff] %v4496
      %4545 = vst [vmem:[#allocation4 + $0x80] sm:$0xff] %v4497
      %4546 = vst [vmem:[#allocation4 + $0x88] sm:$0xff] %v4498
      %4547 = vst [vmem:[#allocation4 + $0x90] sm:$0xff] %v4499
      %4548 = vst [vmem:[#allocation4 + $0x98] sm:$0xff] %v4500
      %4549 = vst [vmem:[#allocation4 + $0xa0] sm:$0xff] %v4501
      %4550 = vst [vmem:[#allocation4 + $0xa8] sm:$0xff] %v4502
      %4551 = vst [vmem:[#allocation4 + $0xb0] sm:$0xff] %v4503
      %4552 = vst [vmem:[#allocation4 + $0xb8] sm:$0xff] %v4504
      %4553 = vst [vmem:[#allocation4 + $0xc0] sm:$0xff] %v4505
      %4554 = vst [vmem:[#allocation4 + $0xc8] sm:$0xff] %v4506
      %4555 = vst [vmem:[#allocation4 + $0xd0] sm:$0xff] %v4507
      %4556 = vst [vmem:[#allocation4 + $0xd8] sm:$0xff] %v4508
      %4557 = vst [vmem:[#allocation4 + $0xe0] sm:$0xff] %v4509
      %4558 = vst [vmem:[#allocation4 + $0xe8] sm:$0xff] %v4510
      %4559 = vst [vmem:[#allocation4 + $0xf0] sm:$0xff] %v4511
      %4560 = vst [vmem:[#allocation4 + $0xf8] sm:$0xff] %v4512
      %4561 = vst [vmem:[#allocation4 + $0x100] sm:$0xff] %v4513
      %4562 = vst [vmem:[#allocation4 + $0x108] sm:$0xff] %v4514
      %4563 = vst [vmem:[#allocation4 + $0x110] sm:$0xff] %v4515
      %4564 = vst [vmem:[#allocation4 + $0x118] sm:$0xff] %v4516
      %4565 = vst [vmem:[#allocation4 + $0x120] sm:$0xff] %v4517
      %4566 = vst [vmem:[#allocation4 + $0x128] sm:$0xff] %v4518
      %4567 = vst [vmem:[#allocation4 + $0x130] sm:$0xff] %v4519
      %4568 = vst [vmem:[#allocation4 + $0x138] sm:$0xff] %v4520
      %4569 = vst [vmem:[#allocation4 + $0x140] sm:$0xff] %v4521
      %4570 = vst [vmem:[#allocation4 + $0x148] sm:$0xff] %v4522
      %4571 = vst [vmem:[#allocation4 + $0x150] sm:$0xff] %v4523
      %4572 = vst [vmem:[#allocation4 + $0x158] sm:$0xff] %v4524
      %4573 = vst [vmem:[#allocation4 + $0x160] sm:$0xff] %v4525
      %4574 = vst [vmem:[#allocation4 + $0x168] sm:$0xff] %v4526
      %4575 = vst [vmem:[#allocation4 + $0x170] sm:$0xff] %v4527
      %4576 = vst [vmem:[#allocation4 + $0x178] sm:$0xff] %v4528
      %v4577 = vld [vmem:[%s404 + $0x18] sm:$0xf]
      %v4578 = vld [vmem:[%s404 + $0x1c] sm:$0xf]
      %v4579 = vld [vmem:[%s404 + $0x20] sm:$0xf]
      %v4580 = vld [vmem:[%s404 + $0x24] sm:$0xf]
      %v4581 = vld [vmem:[%s404 + $0x28] sm:$0xf]
      %v4582 = vld [vmem:[%s404 + $0x2c] sm:$0xf]
      %v4583 = vld [vmem:[%s404 + $0x30] sm:$0xf]
      %v4584 = vld [vmem:[%s404 + $0x34] sm:$0xf]
      %v4585 = vld [vmem:[%s404 + $0x38] sm:$0xf]
      %v4586 = vld [vmem:[%s404 + $0x3c] sm:$0xf]
      %v4587 = vld [vmem:[%s404 + $0x40] sm:$0xf]
      %v4588 = vld [vmem:[%s404 + $0x44] sm:$0xf]
      %v4589 = vld [vmem:[%s404 + $0x48] sm:$0xf]
      %v4590 = vld [vmem:[%s404 + $0x4c] sm:$0xf]
      %v4591 = vld [vmem:[%s404 + $0x50] sm:$0xf]
      %v4592 = vld [vmem:[%s404 + $0x54] sm:$0xf]
      %v4593 = vld [vmem:[%s404 + $0x58] sm:$0xf]
      %v4594 = vld [vmem:[%s404 + $0x5c] sm:$0xf]
      %v4595 = vld [vmem:[%s404 + $0x60] sm:$0xf]
      %v4596 = vld [vmem:[%s404 + $0x64] sm:$0xf]
      %v4597 = vld [vmem:[%s404 + $0x68] sm:$0xf]
      %v4598 = vld [vmem:[%s404 + $0x6c] sm:$0xf]
      %v4599 = vld [vmem:[%s404 + $0x70] sm:$0xf]
      %v4600 = vld [vmem:[%s404 + $0x74] sm:$0xf]
      %v4601 = vld [vmem:[%s404 + $0x78] sm:$0xf]
      %v4602 = vld [vmem:[%s404 + $0x7c] sm:$0xf]
      %v4603 = vld [vmem:[%s404 + $0x80] sm:$0xf]
      %v4604 = vld [vmem:[%s404 + $0x84] sm:$0xf]
      %v4605 = vld [vmem:[%s404 + $0x88] sm:$0xf]
      %v4606 = vld [vmem:[%s404 + $0x8c] sm:$0xf]
      %v4607 = vld [vmem:[%s404 + $0x90] sm:$0xf]
      %v4608 = vld [vmem:[%s404 + $0x94] sm:$0xf]
      %v4609 = vld [vmem:[%s404 + $0x98] sm:$0xf]
      %v4610 = vld [vmem:[%s404 + $0x9c] sm:$0xf]
      %v4611 = vld [vmem:[%s404 + $0xa0] sm:$0xf]
      %v4612 = vld [vmem:[%s404 + $0xa4] sm:$0xf]
      %v4613 = vld [vmem:[%s404 + $0xa8] sm:$0xf]
      %v4614 = vld [vmem:[%s404 + $0xac] sm:$0xf]
      %v4615 = vld [vmem:[%s404 + $0xb0] sm:$0xf]
      %v4616 = vld [vmem:[%s404 + $0xb4] sm:$0xf]
      %v4617 = vld [vmem:[%s404 + $0xb8] sm:$0xf]
      %v4618 = vld [vmem:[%s404 + $0xbc] sm:$0xf]
      %v4619 = vld [vmem:[%s404 + $0xc0] sm:$0xf]
      %v4620 = vld [vmem:[%s404 + $0xc4] sm:$0xf]
      %v4621 = vld [vmem:[%s404 + $0xc8] sm:$0xf]
      %v4622 = vld [vmem:[%s404 + $0xcc] sm:$0xf]
      %v4623 = vld [vmem:[%s404 + $0xd0] sm:$0xf]
      %v4624 = vld [vmem:[%s404 + $0xd4] sm:$0xf]
      %s4625 = scalar_lea.vmem %s1, 384
      %v4626 = vld [vmem:[%s4625] sm:$0xf]
      %v4627 = vld [vmem:[%s4625 + $0x4] sm:$0xf]
      %v4628 = vld [vmem:[%s4625 + $0x8] sm:$0xf]
      %v4629 = vld [vmem:[%s4625 + $0xc] sm:$0xf]
      %v4630 = vld [vmem:[%s4625 + $0x10] sm:$0xf]
      %v4631 = vld [vmem:[%s4625 + $0x14] sm:$0xf]
      %v4632 = vld [vmem:[%s4625 + $0x18] sm:$0xf]
      %v4633 = vld [vmem:[%s4625 + $0x1c] sm:$0xf]
      %v4634 = vld [vmem:[%s4625 + $0x20] sm:$0xf]
      %v4635 = vld [vmem:[%s4625 + $0x24] sm:$0xf]
      %v4636 = vld [vmem:[%s4625 + $0x28] sm:$0xf]
      %v4637 = vld [vmem:[%s4625 + $0x2c] sm:$0xf]
      %v4638 = vld [vmem:[%s4625 + $0x30] sm:$0xf]
      %v4639 = vld [vmem:[%s4625 + $0x34] sm:$0xf]
      %v4640 = vld [vmem:[%s4625 + $0x38] sm:$0xf]
      %v4641 = vld [vmem:[%s4625 + $0x3c] sm:$0xf]
      %v4690 = vunpack.c.l.b16 %v4577
      %v4691 = vunpack.c.l.b16 %v4578
      %v4692 = vunpack.c.l.b16 %v4579
      %v4693 = vunpack.c.l.b16 %v4580
      %v4694 = vunpack.c.l.b16 %v4581
      %v4695 = vunpack.c.l.b16 %v4582
      %v4696 = vunpack.c.l.b16 %v4583
      %v4697 = vunpack.c.l.b16 %v4584
      %v4698 = vunpack.c.l.b16 %v4585
      %v4699 = vunpack.c.l.b16 %v4586
      %v4700 = vunpack.c.l.b16 %v4587
      %v4701 = vunpack.c.l.b16 %v4588
      %v4702 = vunpack.c.l.b16 %v4589
      %v4703 = vunpack.c.l.b16 %v4590
      %v4704 = vunpack.c.l.b16 %v4591
      %v4705 = vunpack.c.l.b16 %v4592
      %v4706 = vunpack.c.l.b16 %v4593
      %v4707 = vunpack.c.l.b16 %v4594
      %v4708 = vunpack.c.l.b16 %v4595
      %v4709 = vunpack.c.l.b16 %v4596
      %v4710 = vunpack.c.l.b16 %v4597
      %v4711 = vunpack.c.l.b16 %v4598
      %v4712 = vunpack.c.l.b16 %v4599
      %v4713 = vunpack.c.l.b16 %v4600
      %v4714 = vunpack.c.l.b16 %v4601
      %v4715 = vunpack.c.l.b16 %v4602
      %v4716 = vunpack.c.l.b16 %v4603
      %v4717 = vunpack.c.l.b16 %v4604
      %v4718 = vunpack.c.l.b16 %v4605
      %v4719 = vunpack.c.l.b16 %v4606
      %v4720 = vunpack.c.l.b16 %v4607
      %v4721 = vunpack.c.l.b16 %v4608
      %v4722 = vunpack.c.l.b16 %v4609
      %v4723 = vunpack.c.l.b16 %v4610
      %v4724 = vunpack.c.l.b16 %v4611
      %v4725 = vunpack.c.l.b16 %v4612
      %v4726 = vunpack.c.l.b16 %v4613
      %v4727 = vunpack.c.l.b16 %v4614
      %v4728 = vunpack.c.l.b16 %v4615
      %v4729 = vunpack.c.l.b16 %v4616
      %v4730 = vunpack.c.l.b16 %v4617
      %v4731 = vunpack.c.l.b16 %v4618
      %v4732 = vunpack.c.l.b16 %v4619
      %v4733 = vunpack.c.l.b16 %v4620
      %v4734 = vunpack.c.l.b16 %v4621
      %v4735 = vunpack.c.l.b16 %v4622
      %v4736 = vunpack.c.l.b16 %v4623
      %v4737 = vunpack.c.l.b16 %v4624
      %v4738 = vpack.c.b16 %v4691, %v4690
      %v4739 = vpack.c.b16 %v4693, %v4692
      %v4740 = vpack.c.b16 %v4695, %v4694
      %v4741 = vpack.c.b16 %v4697, %v4696
      %v4742 = vpack.c.b16 %v4699, %v4698
      %v4743 = vpack.c.b16 %v4701, %v4700
      %v4744 = vpack.c.b16 %v4703, %v4702
      %v4745 = vpack.c.b16 %v4705, %v4704
      %v4746 = vpack.c.b16 %v4707, %v4706
      %v4747 = vpack.c.b16 %v4709, %v4708
      %v4748 = vpack.c.b16 %v4711, %v4710
      %v4749 = vpack.c.b16 %v4713, %v4712
      %v4750 = vpack.c.b16 %v4715, %v4714
      %v4751 = vpack.c.b16 %v4717, %v4716
      %v4752 = vpack.c.b16 %v4719, %v4718
      %v4753 = vpack.c.b16 %v4721, %v4720
      %v4754 = vpack.c.b16 %v4723, %v4722
      %v4755 = vpack.c.b16 %v4725, %v4724
      %v4756 = vpack.c.b16 %v4727, %v4726
      %v4757 = vpack.c.b16 %v4729, %v4728
      %v4758 = vpack.c.b16 %v4731, %v4730
      %v4759 = vpack.c.b16 %v4733, %v4732
      %v4760 = vpack.c.b16 %v4735, %v4734
      %v4761 = vpack.c.b16 %v4737, %v4736
      %v4802 = vunpack.c.l.b16 %v4626
      %v4803 = vunpack.c.l.b16 %v4627
      %v4804 = vunpack.c.l.b16 %v4628
      %v4805 = vunpack.c.l.b16 %v4629
      %v4806 = vunpack.c.l.b16 %v4630
      %v4807 = vunpack.c.l.b16 %v4631
      %v4808 = vunpack.c.l.b16 %v4632
      %v4809 = vunpack.c.l.b16 %v4633
      %v4810 = vunpack.c.l.b16 %v4634
      %v4811 = vunpack.c.l.b16 %v4635
      %v4812 = vunpack.c.l.b16 %v4636
      %v4813 = vunpack.c.l.b16 %v4637
      %v4814 = vunpack.c.l.b16 %v4638
      %v4815 = vunpack.c.l.b16 %v4639
      %v4816 = vunpack.c.l.b16 %v4640
      %v4817 = vunpack.c.l.b16 %v4641
      %v4818 = vpack.c.b16 %v4803, %v4802
      %v4819 = vpack.c.b16 %v4805, %v4804
      %v4820 = vpack.c.b16 %v4807, %v4806
      %v4821 = vpack.c.b16 %v4809, %v4808
      %v4822 = vpack.c.b16 %v4811, %v4810
      %v4823 = vpack.c.b16 %v4813, %v4812
      %v4824 = vpack.c.b16 %v4815, %v4814
      %v4825 = vpack.c.b16 %v4817, %v4816
      %4834 = vmatprep.subr.bf16.mxu0 0
      %4835 = vmatpush1.bf16.msra.mxu0 %v4818
      %4836 = vmatprep.subr.bf16.mxu0 0
      %4837 = vmatpush1.bf16.msra.mxu0 %v4819
      %4838 = vmatprep.subr.bf16.mxu0 0
      %4839 = vmatpush1.bf16.msra.mxu0 %v4820
      %4840 = vmatprep.subr.bf16.mxu0 0
      %4841 = vmatpush1.bf16.msra.mxu0 %v4821
      %4842 = vmatprep.subr.bf16.mxu0 0
      %4843 = vmatpush1.bf16.msra.mxu0 %v4822
      %4844 = vmatprep.subr.bf16.mxu0 0
      %4845 = vmatpush1.bf16.msra.mxu0 %v4823
      %4846 = vmatprep.subr.bf16.mxu0 0
      %4847 = vmatpush1.bf16.msra.mxu0 %v4824
      %4848 = vmatprep.subr.bf16.mxu0 0
      %4849 = vmatpush1.bf16.msra.mxu0 %v4825
      %4850 = vmatprep.subr.bf16.mxu0 0
      %4851 = vmatpush1.bf16.msra.mxu0 0
      %4852 = vmatprep.subr.bf16.mxu0 0
      %4853 = vmatpush1.bf16.msra.mxu0 0
      %4854 = vmatprep.subr.bf16.mxu0 0
      %4855 = vmatpush1.bf16.msra.mxu0 0
      %4856 = vmatprep.subr.bf16.mxu0 0
      %4857 = vmatpush1.bf16.msra.mxu0 0
      %4858 = vmatprep.subr.bf16.mxu0 0
      %4859 = vmatpush1.bf16.msra.mxu0 0
      %4860 = vmatprep.subr.bf16.mxu0 0
      %4861 = vmatpush1.bf16.msra.mxu0 0
      %4862 = vmatprep.subr.bf16.mxu0 0
      %4863 = vmatpush1.bf16.msra.mxu0 0
      %4864 = vmatprep.subr.bf16.mxu0 0
      %4865 = vmatpush1.bf16.msra.mxu0 0
      %4866 = vmatprep.mubr.bf16.mxu0 0
      %4867 = vmatmul.mubr.bf16.gmra.mrb[0].mxu0 %v4738
      %v4868 = vpop.f32.mrb[0].mxu0
      %v4869 = vadd.f32 0.0, %v4868
      %v4870 = vpop.f32.mrb[0].mxu0
      %v4871 = vpop.f32.mrb[0].mxu0
      %v4872 = vadd.f32 0.0, %v4871
      %v4873 = vpop.f32.mrb[0].mxu0
      %4874 = vmatprep.mubr.bf16.mxu0 0
      %4875 = vmatmul.mubr.bf16.gmra.mrb[0].mxu0 %v4739
      %v4876 = vpop.f32.mrb[0].mxu0
      %v4877 = vadd.f32 0.0, %v4876
      %v4878 = vpop.f32.mrb[0].mxu0
      %v4879 = vpop.f32.mrb[0].mxu0
      %v4880 = vadd.f32 0.0, %v4879
      %v4881 = vpop.f32.mrb[0].mxu0
      %4882 = vmatprep.mubr.bf16.mxu0 0
      %4883 = vmatmul.mubr.bf16.gmra.mrb[0].mxu0 %v4740
      %v4884 = vpop.f32.mrb[0].mxu0
      %v4885 = vadd.f32 0.0, %v4884
      %v4886 = vpop.f32.mrb[0].mxu0
      %v4887 = vpop.f32.mrb[0].mxu0
      %v4888 = vadd.f32 0.0, %v4887
      %v4889 = vpop.f32.mrb[0].mxu0
      %4890 = vmatprep.mubr.bf16.mxu0 0
      %4891 = vmatmul.mubr.bf16.gmra.mrb[0].mxu0 %v4741
      %v4892 = vpop.f32.mrb[0].mxu0
      %v4893 = vadd.f32 0.0, %v4892
      %v4894 = vpop.f32.mrb[0].mxu0
      %v4895 = vpop.f32.mrb[0].mxu0
      %v4896 = vadd.f32 0.0, %v4895
      %v4897 = vpop.f32.mrb[0].mxu0
      %4898 = vmatprep.mubr.bf16.mxu0 0
      %4899 = vmatmul.mubr.bf16.gmra.mrb[0].mxu0 %v4742
      %v4900 = vpop.f32.mrb[0].mxu0
      %v4901 = vadd.f32 0.0, %v4900
      %v4902 = vpop.f32.mrb[0].mxu0
      %v4903 = vpop.f32.mrb[0].mxu0
      %v4904 = vadd.f32 0.0, %v4903
      %v4905 = vpop.f32.mrb[0].mxu0
      %4906 = vmatprep.mubr.bf16.mxu0 0
      %4907 = vmatmul.mubr.bf16.gmra.mrb[0].mxu0 %v4743
      %v4908 = vpop.f32.mrb[0].mxu0
      %v4909 = vadd.f32 0.0, %v4908
      %v4910 = vpop.f32.mrb[0].mxu0
      %v4911 = vpop.f32.mrb[0].mxu0
      %v4912 = vadd.f32 0.0, %v4911
      %v4913 = vpop.f32.mrb[0].mxu0
      %4914 = vmatprep.mubr.bf16.mxu0 0
      %4915 = vmatmul.mubr.bf16.gmra.mrb[0].mxu0 %v4744
      %v4916 = vpop.f32.mrb[0].mxu0
      %v4917 = vadd.f32 0.0, %v4916
      %v4918 = vpop.f32.mrb[0].mxu0
      %v4919 = vpop.f32.mrb[0].mxu0
      %v4920 = vadd.f32 0.0, %v4919
      %v4921 = vpop.f32.mrb[0].mxu0
      %4922 = vmatprep.mubr.bf16.mxu0 0
      %4923 = vmatmul.mubr.bf16.gmra.mrb[0].mxu0 %v4745
      %v4924 = vpop.f32.mrb[0].mxu0
      %v4925 = vadd.f32 0.0, %v4924
      %v4926 = vpop.f32.mrb[0].mxu0
      %v4927 = vpop.f32.mrb[0].mxu0
      %v4928 = vadd.f32 0.0, %v4927
      %v4929 = vpop.f32.mrb[0].mxu0
      %4930 = vmatprep.mubr.bf16.mxu0 0
      %4931 = vmatmul.mubr.bf16.gmra.mrb[0].mxu0 %v4746
      %v4932 = vpop.f32.mrb[0].mxu0
      %v4933 = vadd.f32 0.0, %v4932
      %v4934 = vpop.f32.mrb[0].mxu0
      %v4935 = vpop.f32.mrb[0].mxu0
      %v4936 = vadd.f32 0.0, %v4935
      %v4937 = vpop.f32.mrb[0].mxu0
      %4938 = vmatprep.mubr.bf16.mxu0 0
      %4939 = vmatmul.mubr.bf16.gmra.mrb[0].mxu0 %v4747
      %v4940 = vpop.f32.mrb[0].mxu0
      %v4941 = vadd.f32 0.0, %v4940
      %v4942 = vpop.f32.mrb[0].mxu0
      %v4943 = vpop.f32.mrb[0].mxu0
      %v4944 = vadd.f32 0.0, %v4943
      %v4945 = vpop.f32.mrb[0].mxu0
      %4946 = vmatprep.mubr.bf16.mxu0 0
      %4947 = vmatmul.mubr.bf16.gmra.mrb[0].mxu0 %v4748
      %v4948 = vpop.f32.mrb[0].mxu0
      %v4949 = vadd.f32 0.0, %v4948
      %v4950 = vpop.f32.mrb[0].mxu0
      %v4951 = vpop.f32.mrb[0].mxu0
      %v4952 = vadd.f32 0.0, %v4951
      %v4953 = vpop.f32.mrb[0].mxu0
      %4954 = vmatprep.mubr.bf16.mxu0 0
      %4955 = vmatmul.mubr.bf16.gmra.mrb[0].mxu0 %v4749
      %v4956 = vpop.f32.mrb[0].mxu0
      %v4957 = vadd.f32 0.0, %v4956
      %v4958 = vpop.f32.mrb[0].mxu0
      %v4959 = vpop.f32.mrb[0].mxu0
      %v4960 = vadd.f32 0.0, %v4959
      %v4961 = vpop.f32.mrb[0].mxu0
      %4962 = vmatprep.mubr.bf16.mxu0 0
      %4963 = vmatmul.mubr.bf16.gmra.mrb[0].mxu0 %v4750
      %v4964 = vpop.f32.mrb[0].mxu0
      %v4965 = vadd.f32 0.0, %v4964
      %v4966 = vpop.f32.mrb[0].mxu0
      %v4967 = vpop.f32.mrb[0].mxu0
      %v4968 = vadd.f32 0.0, %v4967
      %v4969 = vpop.f32.mrb[0].mxu0
      %4970 = vmatprep.mubr.bf16.mxu0 0
      %4971 = vmatmul.mubr.bf16.gmra.mrb[0].mxu0 %v4751
      %v4972 = vpop.f32.mrb[0].mxu0
      %v4973 = vadd.f32 0.0, %v4972
      %v4974 = vpop.f32.mrb[0].mxu0
      %v4975 = vpop.f32.mrb[0].mxu0
      %v4976 = vadd.f32 0.0, %v4975
      %v4977 = vpop.f32.mrb[0].mxu0
      %4978 = vmatprep.mubr.bf16.mxu0 0
      %4979 = vmatmul.mubr.bf16.gmra.mrb[0].mxu0 %v4752
      %v4980 = vpop.f32.mrb[0].mxu0
      %v4981 = vadd.f32 0.0, %v4980
      %v4982 = vpop.f32.mrb[0].mxu0
      %v4983 = vpop.f32.mrb[0].mxu0
      %v4984 = vadd.f32 0.0, %v4983
      %v4985 = vpop.f32.mrb[0].mxu0
      %4986 = vmatprep.mubr.bf16.mxu0 0
      %4987 = vmatmul.mubr.bf16.gmra.mrb[0].mxu0 %v4753
      %v4988 = vpop.f32.mrb[0].mxu0
      %v4989 = vadd.f32 0.0, %v4988
      %v4990 = vpop.f32.mrb[0].mxu0
      %v4991 = vpop.f32.mrb[0].mxu0
      %v4992 = vadd.f32 0.0, %v4991
      %v4993 = vpop.f32.mrb[0].mxu0
      %4994 = vmatprep.mubr.bf16.mxu0 0
      %4995 = vmatmul.mubr.bf16.gmra.mrb[0].mxu0 %v4754
      %v4996 = vpop.f32.mrb[0].mxu0
      %v4997 = vadd.f32 0.0, %v4996
      %v4998 = vpop.f32.mrb[0].mxu0
      %v4999 = vpop.f32.mrb[0].mxu0
      %v5000 = vadd.f32 0.0, %v4999
      %v5001 = vpop.f32.mrb[0].mxu0
      %5002 = vmatprep.mubr.bf16.mxu0 0
      %5003 = vmatmul.mubr.bf16.gmra.mrb[0].mxu0 %v4755
      %v5004 = vpop.f32.mrb[0].mxu0
      %v5005 = vadd.f32 0.0, %v5004
      %v5006 = vpop.f32.mrb[0].mxu0
      %v5007 = vpop.f32.mrb[0].mxu0
      %v5008 = vadd.f32 0.0, %v5007
      %v5009 = vpop.f32.mrb[0].mxu0
      %5010 = vmatprep.mubr.bf16.mxu0 0
      %5011 = vmatmul.mubr.bf16.gmra.mrb[0].mxu0 %v4756
      %v5012 = vpop.f32.mrb[0].mxu0
      %v5013 = vadd.f32 0.0, %v5012
      %v5014 = vpop.f32.mrb[0].mxu0
      %v5015 = vpop.f32.mrb[0].mxu0
      %v5016 = vadd.f32 0.0, %v5015
      %v5017 = vpop.f32.mrb[0].mxu0
      %5018 = vmatprep.mubr.bf16.mxu0 0
      %5019 = vmatmul.mubr.bf16.gmra.mrb[0].mxu0 %v4757
      %v5020 = vpop.f32.mrb[0].mxu0
      %v5021 = vadd.f32 0.0, %v5020
      %v5022 = vpop.f32.mrb[0].mxu0
      %v5023 = vpop.f32.mrb[0].mxu0
      %v5024 = vadd.f32 0.0, %v5023
      %v5025 = vpop.f32.mrb[0].mxu0
      %5026 = vmatprep.mubr.bf16.mxu0 0
      %5027 = vmatmul.mubr.bf16.gmra.mrb[0].mxu0 %v4758
      %v5028 = vpop.f32.mrb[0].mxu0
      %v5029 = vadd.f32 0.0, %v5028
      %v5030 = vpop.f32.mrb[0].mxu0
      %v5031 = vpop.f32.mrb[0].mxu0
      %v5032 = vadd.f32 0.0, %v5031
      %v5033 = vpop.f32.mrb[0].mxu0
      %5034 = vmatprep.mubr.bf16.mxu0 0
      %5035 = vmatmul.mubr.bf16.gmra.mrb[0].mxu0 %v4759
      %v5036 = vpop.f32.mrb[0].mxu0
      %v5037 = vadd.f32 0.0, %v5036
      %v5038 = vpop.f32.mrb[0].mxu0
      %v5039 = vpop.f32.mrb[0].mxu0
      %v5040 = vadd.f32 0.0, %v5039
      %v5041 = vpop.f32.mrb[0].mxu0
      %5042 = vmatprep.mubr.bf16.mxu0 0
      %5043 = vmatmul.mubr.bf16.gmra.mrb[0].mxu0 %v4760
      %v5044 = vpop.f32.mrb[0].mxu0
      %v5045 = vadd.f32 0.0, %v5044
      %v5046 = vpop.f32.mrb[0].mxu0
      %v5047 = vpop.f32.mrb[0].mxu0
      %v5048 = vadd.f32 0.0, %v5047
      %v5049 = vpop.f32.mrb[0].mxu0
      %5050 = vmatprep.mubr.bf16.mxu0 0
      %5051 = vmatmul.mubr.bf16.gmra.mrb[0].mxu0 %v4761
      %v5052 = vpop.f32.mrb[0].mxu0
      %v5053 = vadd.f32 0.0, %v5052
      %v5054 = vpop.f32.mrb[0].mxu0
      %v5055 = vpop.f32.mrb[0].mxu0
      %v5056 = vadd.f32 0.0, %v5055
      %v5057 = vpop.f32.mrb[0].mxu0
      %5058 = vdwg.mxu0
      %v5059 = vld [vmem:[#allocation4] sm:$0xff]
      %v5060 = vld [vmem:[#allocation4 + $0x8] sm:$0xff]
      %v5061 = vld [vmem:[#allocation4 + $0x10] sm:$0xff]
      %v5062 = vld [vmem:[#allocation4 + $0x18] sm:$0xff]
      %v5063 = vld [vmem:[#allocation4 + $0x20] sm:$0xff]
      %v5064 = vld [vmem:[#allocation4 + $0x28] sm:$0xff]
      %v5065 = vld [vmem:[#allocation4 + $0x30] sm:$0xff]
      %v5066 = vld [vmem:[#allocation4 + $0x38] sm:$0xff]
      %v5067 = vld [vmem:[#allocation4 + $0x40] sm:$0xff]
      %v5068 = vld [vmem:[#allocation4 + $0x48] sm:$0xff]
      %v5069 = vld [vmem:[#allocation4 + $0x50] sm:$0xff]
      %v5070 = vld [vmem:[#allocation4 + $0x58] sm:$0xff]
      %v5071 = vld [vmem:[#allocation4 + $0x60] sm:$0xff]
      %v5072 = vld [vmem:[#allocation4 + $0x68] sm:$0xff]
      %v5073 = vld [vmem:[#allocation4 + $0x70] sm:$0xff]
      %v5074 = vld [vmem:[#allocation4 + $0x78] sm:$0xff]
      %v5075 = vld [vmem:[#allocation4 + $0x80] sm:$0xff]
      %v5076 = vld [vmem:[#allocation4 + $0x88] sm:$0xff]
      %v5077 = vld [vmem:[#allocation4 + $0x90] sm:$0xff]
      %v5078 = vld [vmem:[#allocation4 + $0x98] sm:$0xff]
      %v5079 = vld [vmem:[#allocation4 + $0xa0] sm:$0xff]
      %v5080 = vld [vmem:[#allocation4 + $0xa8] sm:$0xff]
      %v5081 = vld [vmem:[#allocation4 + $0xb0] sm:$0xff]
      %v5082 = vld [vmem:[#allocation4 + $0xb8] sm:$0xff]
      %v5083 = vld [vmem:[#allocation4 + $0xc0] sm:$0xff]
      %v5084 = vld [vmem:[#allocation4 + $0xc8] sm:$0xff]
      %v5085 = vld [vmem:[#allocation4 + $0xd0] sm:$0xff]
      %v5086 = vld [vmem:[#allocation4 + $0xd8] sm:$0xff]
      %v5087 = vld [vmem:[#allocation4 + $0xe0] sm:$0xff]
      %v5088 = vld [vmem:[#allocation4 + $0xe8] sm:$0xff]
      %v5089 = vld [vmem:[#allocation4 + $0xf0] sm:$0xff]
      %v5090 = vld [vmem:[#allocation4 + $0xf8] sm:$0xff]
      %v5091 = vld [vmem:[#allocation4 + $0x100] sm:$0xff]
      %v5092 = vld [vmem:[#allocation4 + $0x108] sm:$0xff]
      %v5093 = vld [vmem:[#allocation4 + $0x110] sm:$0xff]
      %v5094 = vld [vmem:[#allocation4 + $0x118] sm:$0xff]
      %v5095 = vld [vmem:[#allocation4 + $0x120] sm:$0xff]
      %v5096 = vld [vmem:[#allocation4 + $0x128] sm:$0xff]
      %v5097 = vld [vmem:[#allocation4 + $0x130] sm:$0xff]
      %v5098 = vld [vmem:[#allocation4 + $0x138] sm:$0xff]
      %v5099 = vld [vmem:[#allocation4 + $0x140] sm:$0xff]
      %v5100 = vld [vmem:[#allocation4 + $0x148] sm:$0xff]
      %v5101 = vld [vmem:[#allocation4 + $0x150] sm:$0xff]
      %v5102 = vld [vmem:[#allocation4 + $0x158] sm:$0xff]
      %v5103 = vld [vmem:[#allocation4 + $0x160] sm:$0xff]
      %v5104 = vld [vmem:[#allocation4 + $0x168] sm:$0xff]
      %v5105 = vld [vmem:[#allocation4 + $0x170] sm:$0xff]
      %v5106 = vld [vmem:[#allocation4 + $0x178] sm:$0xff]
      %v5107 = vadd.f32 %v5059, %v4869
      %v5108 = vadd.f32 %v5060, %v4872
      %v5109 = vadd.f32 %v5061, %v4877
      %v5110 = vadd.f32 %v5062, %v4880
      %v5111 = vadd.f32 %v5063, %v4885
      %v5112 = vadd.f32 %v5064, %v4888
      %v5113 = vadd.f32 %v5065, %v4893
      %v5114 = vadd.f32 %v5066, %v4896
      %v5115 = vadd.f32 %v5067, %v4901
      %v5116 = vadd.f32 %v5068, %v4904
      %v5117 = vadd.f32 %v5069, %v4909
      %v5118 = vadd.f32 %v5070, %v4912
      %v5119 = vadd.f32 %v5071, %v4917
      %v5120 = vadd.f32 %v5072, %v4920
      %v5121 = vadd.f32 %v5073, %v4925
      %v5122 = vadd.f32 %v5074, %v4928
      %v5123 = vadd.f32 %v5075, %v4933
      %v5124 = vadd.f32 %v5076, %v4936
      %v5125 = vadd.f32 %v5077, %v4941
      %v5126 = vadd.f32 %v5078, %v4944
      %v5127 = vadd.f32 %v5079, %v4949
      %v5128 = vadd.f32 %v5080, %v4952
      %v5129 = vadd.f32 %v5081, %v4957
      %v5130 = vadd.f32 %v5082, %v4960
      %v5131 = vadd.f32 %v5083, %v4965
      %v5132 = vadd.f32 %v5084, %v4968
      %v5133 = vadd.f32 %v5085, %v4973
      %v5134 = vadd.f32 %v5086, %v4976
      %v5135 = vadd.f32 %v5087, %v4981
      %v5136 = vadd.f32 %v5088, %v4984
      %v5137 = vadd.f32 %v5089, %v4989
      %v5138 = vadd.f32 %v5090, %v4992
      %v5139 = vadd.f32 %v5091, %v4997
      %v5140 = vadd.f32 %v5092, %v5000
      %v5141 = vadd.f32 %v5093, %v5005
      %v5142 = vadd.f32 %v5094, %v5008
      %v5143 = vadd.f32 %v5095, %v5013
      %v5144 = vadd.f32 %v5096, %v5016
      %v5145 = vadd.f32 %v5097, %v5021
      %v5146 = vadd.f32 %v5098, %v5024
      %v5147 = vadd.f32 %v5099, %v5029
      %v5148 = vadd.f32 %v5100, %v5032
      %v5149 = vadd.f32 %v5101, %v5037
      %v5150 = vadd.f32 %v5102, %v5040
      %v5151 = vadd.f32 %v5103, %v5045
      %v5152 = vadd.f32 %v5104, %v5048
      %v5153 = vadd.f32 %v5105, %v5053
      %v5154 = vadd.f32 %v5106, %v5056
      %5155 = vst [vmem:[#allocation4] sm:$0xff] %v5107
      %5156 = vst [vmem:[#allocation4 + $0x8] sm:$0xff] %v5108
      %5157 = vst [vmem:[#allocation4 + $0x10] sm:$0xff] %v5109
      %5158 = vst [vmem:[#allocation4 + $0x18] sm:$0xff] %v5110
      %5159 = vst [vmem:[#allocation4 + $0x20] sm:$0xff] %v5111
      %5160 = vst [vmem:[#allocation4 + $0x28] sm:$0xff] %v5112
      %5161 = vst [vmem:[#allocation4 + $0x30] sm:$0xff] %v5113
      %5162 = vst [vmem:[#allocation4 + $0x38] sm:$0xff] %v5114
      %5163 = vst [vmem:[#allocation4 + $0x40] sm:$0xff] %v5115
      %5164 = vst [vmem:[#allocation4 + $0x48] sm:$0xff] %v5116
      %5165 = vst [vmem:[#allocation4 + $0x50] sm:$0xff] %v5117
      %5166 = vst [vmem:[#allocation4 + $0x58] sm:$0xff] %v5118
      %5167 = vst [vmem:[#allocation4 + $0x60] sm:$0xff] %v5119
      %5168 = vst [vmem:[#allocation4 + $0x68] sm:$0xff] %v5120
      %5169 = vst [vmem:[#allocation4 + $0x70] sm:$0xff] %v5121
      %5170 = vst [vmem:[#allocation4 + $0x78] sm:$0xff] %v5122
      %5171 = vst [vmem:[#allocation4 + $0x80] sm:$0xff] %v5123
      %5172 = vst [vmem:[#allocation4 + $0x88] sm:$0xff] %v5124
      %5173 = vst [vmem:[#allocation4 + $0x90] sm:$0xff] %v5125
      %5174 = vst [vmem:[#allocation4 + $0x98] sm:$0xff] %v5126
      %5175 = vst [vmem:[#allocation4 + $0xa0] sm:$0xff] %v5127
      %5176 = vst [vmem:[#allocation4 + $0xa8] sm:$0xff] %v5128
      %5177 = vst [vmem:[#allocation4 + $0xb0] sm:$0xff] %v5129
      %5178 = vst [vmem:[#allocation4 + $0xb8] sm:$0xff] %v5130
      %5179 = vst [vmem:[#allocation4 + $0xc0] sm:$0xff] %v5131
      %5180 = vst [vmem:[#allocation4 + $0xc8] sm:$0xff] %v5132
      %5181 = vst [vmem:[#allocation4 + $0xd0] sm:$0xff] %v5133
      %5182 = vst [vmem:[#allocation4 + $0xd8] sm:$0xff] %v5134
      %5183 = vst [vmem:[#allocation4 + $0xe0] sm:$0xff] %v5135
      %5184 = vst [vmem:[#allocation4 + $0xe8] sm:$0xff] %v5136
      %5185 = vst [vmem:[#allocation4 + $0xf0] sm:$0xff] %v5137
      %5186 = vst [vmem:[#allocation4 + $0xf8] sm:$0xff] %v5138
      %5187 = vst [vmem:[#allocation4 + $0x100] sm:$0xff] %v5139
      %5188 = vst [vmem:[#allocation4 + $0x108] sm:$0xff] %v5140
      %5189 = vst [vmem:[#allocation4 + $0x110] sm:$0xff] %v5141
      %5190 = vst [vmem:[#allocation4 + $0x118] sm:$0xff] %v5142
      %5191 = vst [vmem:[#allocation4 + $0x120] sm:$0xff] %v5143
      %5192 = vst [vmem:[#allocation4 + $0x128] sm:$0xff] %v5144
      %5193 = vst [vmem:[#allocation4 + $0x130] sm:$0xff] %v5145
      %5194 = vst [vmem:[#allocation4 + $0x138] sm:$0xff] %v5146
      %5195 = vst [vmem:[#allocation4 + $0x140] sm:$0xff] %v5147
      %5196 = vst [vmem:[#allocation4 + $0x148] sm:$0xff] %v5148
      %5197 = vst [vmem:[#allocation4 + $0x150] sm:$0xff] %v5149
      %5198 = vst [vmem:[#allocation4 + $0x158] sm:$0xff] %v5150
      %5199 = vst [vmem:[#allocation4 + $0x160] sm:$0xff] %v5151
      %5200 = vst [vmem:[#allocation4 + $0x168] sm:$0xff] %v5152
      %5201 = vst [vmem:[#allocation4 + $0x170] sm:$0xff] %v5153
      %5202 = vst [vmem:[#allocation4 + $0x178] sm:$0xff] %v5154
      %v5203 = vld [vmem:[%s404 + $0x18] sm:$0xf]
      %v5204 = vld [vmem:[%s404 + $0x1c] sm:$0xf]
      %v5205 = vld [vmem:[%s404 + $0x20] sm:$0xf]
      %v5206 = vld [vmem:[%s404 + $0x24] sm:$0xf]
      %v5207 = vld [vmem:[%s404 + $0x28] sm:$0xf]
      %v5208 = vld [vmem:[%s404 + $0x2c] sm:$0xf]
      %v5209 = vld [vmem:[%s404 + $0x30] sm:$0xf]
      %v5210 = vld [vmem:[%s404 + $0x34] sm:$0xf]
      %v5211 = vld [vmem:[%s404 + $0x38] sm:$0xf]
      %v5212 = vld [vmem:[%s404 + $0x3c] sm:$0xf]
      %v5213 = vld [vmem:[%s404 + $0x40] sm:$0xf]
      %v5214 = vld [vmem:[%s404 + $0x44] sm:$0xf]
      %v5215 = vld [vmem:[%s404 + $0x48] sm:$0xf]
      %v5216 = vld [vmem:[%s404 + $0x4c] sm:$0xf]
      %v5217 = vld [vmem:[%s404 + $0x50] sm:$0xf]
      %v5218 = vld [vmem:[%s404 + $0x54] sm:$0xf]
      %v5219 = vld [vmem:[%s404 + $0x58] sm:$0xf]
      %v5220 = vld [vmem:[%s404 + $0x5c] sm:$0xf]
      %v5221 = vld [vmem:[%s404 + $0x60] sm:$0xf]
      %v5222 = vld [vmem:[%s404 + $0x64] sm:$0xf]
      %v5223 = vld [vmem:[%s404 + $0x68] sm:$0xf]
      %v5224 = vld [vmem:[%s404 + $0x6c] sm:$0xf]
      %v5225 = vld [vmem:[%s404 + $0x70] sm:$0xf]
      %v5226 = vld [vmem:[%s404 + $0x74] sm:$0xf]
      %v5227 = vld [vmem:[%s404 + $0x78] sm:$0xf]
      %v5228 = vld [vmem:[%s404 + $0x7c] sm:$0xf]
      %v5229 = vld [vmem:[%s404 + $0x80] sm:$0xf]
      %v5230 = vld [vmem:[%s404 + $0x84] sm:$0xf]
      %v5231 = vld [vmem:[%s404 + $0x88] sm:$0xf]
      %v5232 = vld [vmem:[%s404 + $0x8c] sm:$0xf]
      %v5233 = vld [vmem:[%s404 + $0x90] sm:$0xf]
      %v5234 = vld [vmem:[%s404 + $0x94] sm:$0xf]
      %v5235 = vld [vmem:[%s404 + $0x98] sm:$0xf]
      %v5236 = vld [vmem:[%s404 + $0x9c] sm:$0xf]
      %v5237 = vld [vmem:[%s404 + $0xa0] sm:$0xf]
      %v5238 = vld [vmem:[%s404 + $0xa4] sm:$0xf]
      %v5239 = vld [vmem:[%s404 + $0xa8] sm:$0xf]
      %v5240 = vld [vmem:[%s404 + $0xac] sm:$0xf]
      %v5241 = vld [vmem:[%s404 + $0xb0] sm:$0xf]
      %v5242 = vld [vmem:[%s404 + $0xb4] sm:$0xf]
      %v5243 = vld [vmem:[%s404 + $0xb8] sm:$0xf]
      %v5244 = vld [vmem:[%s404 + $0xbc] sm:$0xf]
      %v5245 = vld [vmem:[%s404 + $0xc0] sm:$0xf]
      %v5246 = vld [vmem:[%s404 + $0xc4] sm:$0xf]
      %v5247 = vld [vmem:[%s404 + $0xc8] sm:$0xf]
      %v5248 = vld [vmem:[%s404 + $0xcc] sm:$0xf]
      %v5249 = vld [vmem:[%s404 + $0xd0] sm:$0xf]
      %v5250 = vld [vmem:[%s404 + $0xd4] sm:$0xf]
      %v5251 = vld [vmem:[%s404 + $0xd8] sm:$0x1]
      %s5252 = scalar_lea.vmem %s1, 448
      %v5253 = vld [vmem:[%s5252] sm:$0xf]
      %v5254 = vld [vmem:[%s5252 + $0x4] sm:$0xf]
      %v5255 = vld [vmem:[%s5252 + $0x8] sm:$0xf]
      %v5256 = vld [vmem:[%s5252 + $0xc] sm:$0xf]
      %v5257 = vld [vmem:[%s5252 + $0x10] sm:$0xf]
      %v5258 = vld [vmem:[%s5252 + $0x14] sm:$0xf]
      %v5259 = vld [vmem:[%s5252 + $0x18] sm:$0xf]
      %v5260 = vld [vmem:[%s5252 + $0x1c] sm:$0xf]
      %v5261 = vld [vmem:[%s5252 + $0x20] sm:$0xf]
      %v5262 = vld [vmem:[%s5252 + $0x24] sm:$0xf]
      %v5263 = vld [vmem:[%s5252 + $0x28] sm:$0xf]
      %v5264 = vld [vmem:[%s5252 + $0x2c] sm:$0xf]
      %v5265 = vld [vmem:[%s5252 + $0x30] sm:$0xf]
      %v5266 = vld [vmem:[%s5252 + $0x34] sm:$0xf]
      %v5267 = vld [vmem:[%s5252 + $0x38] sm:$0xf]
      %v5268 = vld [vmem:[%s5252 + $0x3c] sm:$0xf]
      %v5318 = vunpack.c.l.b16 %v5203
      %v5319 = vunpack.c.l.b16 %v5204
      %v5320 = vunpack.c.l.b16 %v5205
      %v5321 = vunpack.c.l.b16 %v5206
      %v5322 = vunpack.c.l.b16 %v5207
      %v5323 = vunpack.c.l.b16 %v5208
      %v5324 = vunpack.c.l.b16 %v5209
      %v5325 = vunpack.c.l.b16 %v5210
      %v5326 = vunpack.c.l.b16 %v5211
      %v5327 = vunpack.c.l.b16 %v5212
      %v5328 = vunpack.c.l.b16 %v5213
      %v5329 = vunpack.c.l.b16 %v5214
      %v5330 = vunpack.c.l.b16 %v5215
      %v5331 = vunpack.c.l.b16 %v5216
      %v5332 = vunpack.c.l.b16 %v5217
      %v5333 = vunpack.c.l.b16 %v5218
      %v5334 = vunpack.c.l.b16 %v5219
      %v5335 = vunpack.c.l.b16 %v5220
      %v5336 = vunpack.c.l.b16 %v5221
      %v5337 = vunpack.c.l.b16 %v5222
      %v5338 = vunpack.c.l.b16 %v5223
      %v5339 = vunpack.c.l.b16 %v5224
      %v5340 = vunpack.c.l.b16 %v5225
      %v5341 = vunpack.c.l.b16 %v5226
      %v5342 = vunpack.c.l.b16 %v5227
      %v5343 = vunpack.c.l.b16 %v5228
      %v5344 = vunpack.c.l.b16 %v5229
      %v5345 = vunpack.c.l.b16 %v5230
      %v5346 = vunpack.c.l.b16 %v5231
      %v5347 = vunpack.c.l.b16 %v5232
      %v5348 = vunpack.c.l.b16 %v5233
      %v5349 = vunpack.c.l.b16 %v5234
      %v5350 = vunpack.c.l.b16 %v5235
      %v5351 = vunpack.c.l.b16 %v5236
      %v5352 = vunpack.c.l.b16 %v5237
      %v5353 = vunpack.c.l.b16 %v5238
      %v5354 = vunpack.c.l.b16 %v5239
      %v5355 = vunpack.c.l.b16 %v5240
      %v5356 = vunpack.c.l.b16 %v5241
      %v5357 = vunpack.c.l.b16 %v5242
      %v5358 = vunpack.c.l.b16 %v5243
      %v5359 = vunpack.c.l.b16 %v5244
      %v5360 = vunpack.c.l.b16 %v5245
      %v5361 = vunpack.c.l.b16 %v5246
      %v5362 = vunpack.c.l.b16 %v5247
      %v5363 = vunpack.c.l.b16 %v5248
      %v5364 = vunpack.c.l.b16 %v5249
      %v5365 = vunpack.c.l.b16 %v5250
      %v5366 = vunpack.c.l.b16 %v5251
      %v5367 = vpack.c.b16 %v5319, %v5318
      %v5368 = vpack.c.b16 %v5321, %v5320
      %v5369 = vpack.c.b16 %v5323, %v5322
      %v5370 = vpack.c.b16 %v5325, %v5324
      %v5371 = vpack.c.b16 %v5327, %v5326
      %v5372 = vpack.c.b16 %v5329, %v5328
      %v5373 = vpack.c.b16 %v5331, %v5330
      %v5374 = vpack.c.b16 %v5333, %v5332
      %v5375 = vpack.c.b16 %v5335, %v5334
      %v5376 = vpack.c.b16 %v5337, %v5336
      %v5377 = vpack.c.b16 %v5339, %v5338
      %v5378 = vpack.c.b16 %v5341, %v5340
      %v5379 = vpack.c.b16 %v5343, %v5342
      %v5380 = vpack.c.b16 %v5345, %v5344
      %v5381 = vpack.c.b16 %v5347, %v5346
      %v5382 = vpack.c.b16 %v5349, %v5348
      %v5383 = vpack.c.b16 %v5351, %v5350
      %v5384 = vpack.c.b16 %v5353, %v5352
      %v5385 = vpack.c.b16 %v5355, %v5354
      %v5386 = vpack.c.b16 %v5357, %v5356
      %v5387 = vpack.c.b16 %v5359, %v5358
      %v5388 = vpack.c.b16 %v5361, %v5360
      %v5389 = vpack.c.b16 %v5363, %v5362
      %v5390 = vpack.c.b16 %v5365, %v5364
      %v5391 = vpack.c.b16 %v5366, %v5366
      %v5393 = vshrl.u32 %v5367, 16
      %v5395 = vshll.u32 %v5367, 16
      %v5397 = vrot.slane %v5395, 1
      %v5398 = vor.u32 %v5393, %v5397
      %v5400 = vshll.u32 %v5368, 16
      %v5402 = vrot.slane %v5400, 1
      %v5403 = vsel %vm1128, %v5398, %v5402
      %v5404 = vshrl.u32 %v5368, 16
      %v5406 = vor.u32 %v5404, %v5402
      %v5408 = vshll.u32 %v5369, 16
      %v5410 = vrot.slane %v5408, 1
      %v5411 = vsel %vm1128, %v5406, %v5410
      %v5412 = vshrl.u32 %v5369, 16
      %v5414 = vor.u32 %v5412, %v5410
      %v5416 = vshll.u32 %v5370, 16
      %v5418 = vrot.slane %v5416, 1
      %v5419 = vsel %vm1128, %v5414, %v5418
      %v5420 = vshrl.u32 %v5370, 16
      %v5422 = vor.u32 %v5420, %v5418
      %v5424 = vshll.u32 %v5371, 16
      %v5426 = vrot.slane %v5424, 1
      %v5427 = vsel %vm1128, %v5422, %v5426
      %v5428 = vshrl.u32 %v5371, 16
      %v5430 = vor.u32 %v5428, %v5426
      %v5432 = vshll.u32 %v5372, 16
      %v5434 = vrot.slane %v5432, 1
      %v5435 = vsel %vm1128, %v5430, %v5434
      %v5436 = vshrl.u32 %v5372, 16
      %v5438 = vor.u32 %v5436, %v5434
      %v5440 = vshll.u32 %v5373, 16
      %v5442 = vrot.slane %v5440, 1
      %v5443 = vsel %vm1128, %v5438, %v5442
      %v5444 = vshrl.u32 %v5373, 16
      %v5446 = vor.u32 %v5444, %v5442
      %v5448 = vshll.u32 %v5374, 16
      %v5450 = vrot.slane %v5448, 1
      %v5451 = vsel %vm1128, %v5446, %v5450
      %v5452 = vshrl.u32 %v5374, 16
      %v5454 = vor.u32 %v5452, %v5450
      %v5456 = vshll.u32 %v5375, 16
      %v5458 = vrot.slane %v5456, 1
      %v5459 = vsel %vm1128, %v5454, %v5458
      %v5460 = vshrl.u32 %v5375, 16
      %v5462 = vor.u32 %v5460, %v5458
      %v5464 = vshll.u32 %v5376, 16
      %v5466 = vrot.slane %v5464, 1
      %v5467 = vsel %vm1128, %v5462, %v5466
      %v5468 = vshrl.u32 %v5376, 16
      %v5470 = vor.u32 %v5468, %v5466
      %v5472 = vshll.u32 %v5377, 16
      %v5474 = vrot.slane %v5472, 1
      %v5475 = vsel %vm1128, %v5470, %v5474
      %v5476 = vshrl.u32 %v5377, 16
      %v5478 = vor.u32 %v5476, %v5474
      %v5480 = vshll.u32 %v5378, 16
      %v5482 = vrot.slane %v5480, 1
      %v5483 = vsel %vm1128, %v5478, %v5482
      %v5484 = vshrl.u32 %v5378, 16
      %v5486 = vor.u32 %v5484, %v5482
      %v5488 = vshll.u32 %v5379, 16
      %v5490 = vrot.slane %v5488, 1
      %v5491 = vsel %vm1128, %v5486, %v5490
      %v5492 = vshrl.u32 %v5379, 16
      %v5494 = vor.u32 %v5492, %v5490
      %v5496 = vshll.u32 %v5380, 16
      %v5498 = vrot.slane %v5496, 1
      %v5499 = vsel %vm1128, %v5494, %v5498
      %v5500 = vshrl.u32 %v5380, 16
      %v5502 = vor.u32 %v5500, %v5498
      %v5504 = vshll.u32 %v5381, 16
      %v5506 = vrot.slane %v5504, 1
      %v5507 = vsel %vm1128, %v5502, %v5506
      %v5508 = vshrl.u32 %v5381, 16
      %v5510 = vor.u32 %v5508, %v5506
      %v5512 = vshll.u32 %v5382, 16
      %v5514 = vrot.slane %v5512, 1
      %v5515 = vsel %vm1128, %v5510, %v5514
      %v5516 = vshrl.u32 %v5382, 16
      %v5518 = vor.u32 %v5516, %v5514
      %v5520 = vshll.u32 %v5383, 16
      %v5522 = vrot.slane %v5520, 1
      %v5523 = vsel %vm1128, %v5518, %v5522
      %v5524 = vshrl.u32 %v5383, 16
      %v5526 = vor.u32 %v5524, %v5522
      %v5528 = vshll.u32 %v5384, 16
      %v5530 = vrot.slane %v5528, 1
      %v5531 = vsel %vm1128, %v5526, %v5530
      %v5532 = vshrl.u32 %v5384, 16
      %v5534 = vor.u32 %v5532, %v5530
      %v5536 = vshll.u32 %v5385, 16
      %v5538 = vrot.slane %v5536, 1
      %v5539 = vsel %vm1128, %v5534, %v5538
      %v5540 = vshrl.u32 %v5385, 16
      %v5542 = vor.u32 %v5540, %v5538
      %v5544 = vshll.u32 %v5386, 16
      %v5546 = vrot.slane %v5544, 1
      %v5547 = vsel %vm1128, %v5542, %v5546
      %v5548 = vshrl.u32 %v5386, 16
      %v5550 = vor.u32 %v5548, %v5546
      %v5552 = vshll.u32 %v5387, 16
      %v5554 = vrot.slane %v5552, 1
      %v5555 = vsel %vm1128, %v5550, %v5554
      %v5556 = vshrl.u32 %v5387, 16
      %v5558 = vor.u32 %v5556, %v5554
      %v5560 = vshll.u32 %v5388, 16
      %v5562 = vrot.slane %v5560, 1
      %v5563 = vsel %vm1128, %v5558, %v5562
      %v5564 = vshrl.u32 %v5388, 16
      %v5566 = vor.u32 %v5564, %v5562
      %v5568 = vshll.u32 %v5389, 16
      %v5570 = vrot.slane %v5568, 1
      %v5571 = vsel %vm1128, %v5566, %v5570
      %v5572 = vshrl.u32 %v5389, 16
      %v5574 = vor.u32 %v5572, %v5570
      %v5576 = vshll.u32 %v5390, 16
      %v5578 = vrot.slane %v5576, 1
      %v5579 = vsel %vm1128, %v5574, %v5578
      %v5580 = vshrl.u32 %v5390, 16
      %v5582 = vor.u32 %v5580, %v5578
      %v5584 = vshll.u32 %v5391, 16
      %v5586 = vrot.slane %v5584, 1
      %v5587 = vsel %vm1128, %v5582, %v5586
      %v5628 = vunpack.c.l.b16 %v5253
      %v5629 = vunpack.c.l.b16 %v5254
      %v5630 = vunpack.c.l.b16 %v5255
      %v5631 = vunpack.c.l.b16 %v5256
      %v5632 = vunpack.c.l.b16 %v5257
      %v5633 = vunpack.c.l.b16 %v5258
      %v5634 = vunpack.c.l.b16 %v5259
      %v5635 = vunpack.c.l.b16 %v5260
      %v5636 = vunpack.c.l.b16 %v5261
      %v5637 = vunpack.c.l.b16 %v5262
      %v5638 = vunpack.c.l.b16 %v5263
      %v5639 = vunpack.c.l.b16 %v5264
      %v5640 = vunpack.c.l.b16 %v5265
      %v5641 = vunpack.c.l.b16 %v5266
      %v5642 = vunpack.c.l.b16 %v5267
      %v5643 = vunpack.c.l.b16 %v5268
      %v5644 = vpack.c.b16 %v5629, %v5628
      %v5645 = vpack.c.b16 %v5631, %v5630
      %v5646 = vpack.c.b16 %v5633, %v5632
      %v5647 = vpack.c.b16 %v5635, %v5634
      %v5648 = vpack.c.b16 %v5637, %v5636
      %v5649 = vpack.c.b16 %v5639, %v5638
      %v5650 = vpack.c.b16 %v5641, %v5640
      %v5651 = vpack.c.b16 %v5643, %v5642
      %5660 = vmatprep.subr.bf16.mxu0 0
      %5661 = vmatpush1.bf16.msra.mxu0 %v5644
      %5662 = vmatprep.subr.bf16.mxu0 0
      %5663 = vmatpush1.bf16.msra.mxu0 %v5645
      %5664 = vmatprep.subr.bf16.mxu0 0
      %5665 = vmatpush1.bf16.msra.mxu0 %v5646
      %5666 = vmatprep.subr.bf16.mxu0 0
      %5667 = vmatpush1.bf16.msra.mxu0 %v5647
      %5668 = vmatprep.subr.bf16.mxu0 0
      %5669 = vmatpush1.bf16.msra.mxu0 %v5648
      %5670 = vmatprep.subr.bf16.mxu0 0
      %5671 = vmatpush1.bf16.msra.mxu0 %v5649
      %5672 = vmatprep.subr.bf16.mxu0 0
      %5673 = vmatpush1.bf16.msra.mxu0 %v5650
      %5674 = vmatprep.subr.bf16.mxu0 0
      %5675 = vmatpush1.bf16.msra.mxu0 %v5651
      %5676 = vmatprep.subr.bf16.mxu0 0
      %5677 = vmatpush1.bf16.msra.mxu0 0
      %5678 = vmatprep.subr.bf16.mxu0 0
      %5679 = vmatpush1.bf16.msra.mxu0 0
      %5680 = vmatprep.subr.bf16.mxu0 0
      %5681 = vmatpush1.bf16.msra.mxu0 0
      %5682 = vmatprep.subr.bf16.mxu0 0
      %5683 = vmatpush1.bf16.msra.mxu0 0
      %5684 = vmatprep.subr.bf16.mxu0 0
      %5685 = vmatpush1.bf16.msra.mxu0 0
      %5686 = vmatprep.subr.bf16.mxu0 0
      %5687 = vmatpush1.bf16.msra.mxu0 0
      %5688 = vmatprep.subr.bf16.mxu0 0
      %5689 = vmatpush1.bf16.msra.mxu0 0
      %5690 = vmatprep.subr.bf16.mxu0 0
      %5691 = vmatpush1.bf16.msra.mxu0 0
      %5692 = vmatprep.mubr.bf16.mxu0 0
      %5693 = vmatmul.mubr.bf16.gmra.mrb[0].mxu0 %v5403
      %v5694 = vpop.f32.mrb[0].mxu0
      %v5695 = vadd.f32 0.0, %v5694
      %v5696 = vpop.f32.mrb[0].mxu0
      %v5697 = vpop.f32.mrb[0].mxu0
      %v5698 = vadd.f32 0.0, %v5697
      %v5699 = vpop.f32.mrb[0].mxu0
      %5700 = vmatprep.mubr.bf16.mxu0 0
      %5701 = vmatmul.mubr.bf16.gmra.mrb[0].mxu0 %v5411
      %v5702 = vpop.f32.mrb[0].mxu0
      %v5703 = vadd.f32 0.0, %v5702
      %v5704 = vpop.f32.mrb[0].mxu0
      %v5705 = vpop.f32.mrb[0].mxu0
      %v5706 = vadd.f32 0.0, %v5705
      %v5707 = vpop.f32.mrb[0].mxu0
      %5708 = vmatprep.mubr.bf16.mxu0 0
      %5709 = vmatmul.mubr.bf16.gmra.mrb[0].mxu0 %v5419
      %v5710 = vpop.f32.mrb[0].mxu0
      %v5711 = vadd.f32 0.0, %v5710
      %v5712 = vpop.f32.mrb[0].mxu0
      %v5713 = vpop.f32.mrb[0].mxu0
      %v5714 = vadd.f32 0.0, %v5713
      %v5715 = vpop.f32.mrb[0].mxu0
      %5716 = vmatprep.mubr.bf16.mxu0 0
      %5717 = vmatmul.mubr.bf16.gmra.mrb[0].mxu0 %v5427
      %v5718 = vpop.f32.mrb[0].mxu0
      %v5719 = vadd.f32 0.0, %v5718
      %v5720 = vpop.f32.mrb[0].mxu0
      %v5721 = vpop.f32.mrb[0].mxu0
      %v5722 = vadd.f32 0.0, %v5721
      %v5723 = vpop.f32.mrb[0].mxu0
      %5724 = vmatprep.mubr.bf16.mxu0 0
      %5725 = vmatmul.mubr.bf16.gmra.mrb[0].mxu0 %v5435
      %v5726 = vpop.f32.mrb[0].mxu0
      %v5727 = vadd.f32 0.0, %v5726
      %v5728 = vpop.f32.mrb[0].mxu0
      %v5729 = vpop.f32.mrb[0].mxu0
      %v5730 = vadd.f32 0.0, %v5729
      %v5731 = vpop.f32.mrb[0].mxu0
      %5732 = vmatprep.mubr.bf16.mxu0 0
      %5733 = vmatmul.mubr.bf16.gmra.mrb[0].mxu0 %v5443
      %v5734 = vpop.f32.mrb[0].mxu0
      %v5735 = vadd.f32 0.0, %v5734
      %v5736 = vpop.f32.mrb[0].mxu0
      %v5737 = vpop.f32.mrb[0].mxu0
      %v5738 = vadd.f32 0.0, %v5737
      %v5739 = vpop.f32.mrb[0].mxu0
      %5740 = vmatprep.mubr.bf16.mxu0 0
      %5741 = vmatmul.mubr.bf16.gmra.mrb[0].mxu0 %v5451
      %v5742 = vpop.f32.mrb[0].mxu0
      %v5743 = vadd.f32 0.0, %v5742
      %v5744 = vpop.f32.mrb[0].mxu0
      %v5745 = vpop.f32.mrb[0].mxu0
      %v5746 = vadd.f32 0.0, %v5745
      %v5747 = vpop.f32.mrb[0].mxu0
      %5748 = vmatprep.mubr.bf16.mxu0 0
      %5749 = vmatmul.mubr.bf16.gmra.mrb[0].mxu0 %v5459
      %v5750 = vpop.f32.mrb[0].mxu0
      %v5751 = vadd.f32 0.0, %v5750
      %v5752 = vpop.f32.mrb[0].mxu0
      %v5753 = vpop.f32.mrb[0].mxu0
      %v5754 = vadd.f32 0.0, %v5753
      %v5755 = vpop.f32.mrb[0].mxu0
      %5756 = vmatprep.mubr.bf16.mxu0 0
      %5757 = vmatmul.mubr.bf16.gmra.mrb[0].mxu0 %v5467
      %v5758 = vpop.f32.mrb[0].mxu0
      %v5759 = vadd.f32 0.0, %v5758
      %v5760 = vpop.f32.mrb[0].mxu0
      %v5761 = vpop.f32.mrb[0].mxu0
      %v5762 = vadd.f32 0.0, %v5761
      %v5763 = vpop.f32.mrb[0].mxu0
      %5764 = vmatprep.mubr.bf16.mxu0 0
      %5765 = vmatmul.mubr.bf16.gmra.mrb[0].mxu0 %v5475
      %v5766 = vpop.f32.mrb[0].mxu0
      %v5767 = vadd.f32 0.0, %v5766
      %v5768 = vpop.f32.mrb[0].mxu0
      %v5769 = vpop.f32.mrb[0].mxu0
      %v5770 = vadd.f32 0.0, %v5769
      %v5771 = vpop.f32.mrb[0].mxu0
      %5772 = vmatprep.mubr.bf16.mxu0 0
      %5773 = vmatmul.mubr.bf16.gmra.mrb[0].mxu0 %v5483
      %v5774 = vpop.f32.mrb[0].mxu0
      %v5775 = vadd.f32 0.0, %v5774
      %v5776 = vpop.f32.mrb[0].mxu0
      %v5777 = vpop.f32.mrb[0].mxu0
      %v5778 = vadd.f32 0.0, %v5777
      %v5779 = vpop.f32.mrb[0].mxu0
      %5780 = vmatprep.mubr.bf16.mxu0 0
      %5781 = vmatmul.mubr.bf16.gmra.mrb[0].mxu0 %v5491
      %v5782 = vpop.f32.mrb[0].mxu0
      %v5783 = vadd.f32 0.0, %v5782
      %v5784 = vpop.f32.mrb[0].mxu0
      %v5785 = vpop.f32.mrb[0].mxu0
      %v5786 = vadd.f32 0.0, %v5785
      %v5787 = vpop.f32.mrb[0].mxu0
      %5788 = vmatprep.mubr.bf16.mxu0 0
      %5789 = vmatmul.mubr.bf16.gmra.mrb[0].mxu0 %v5499
      %v5790 = vpop.f32.mrb[0].mxu0
      %v5791 = vadd.f32 0.0, %v5790
      %v5792 = vpop.f32.mrb[0].mxu0
      %v5793 = vpop.f32.mrb[0].mxu0
      %v5794 = vadd.f32 0.0, %v5793
      %v5795 = vpop.f32.mrb[0].mxu0
      %5796 = vmatprep.mubr.bf16.mxu0 0
      %5797 = vmatmul.mubr.bf16.gmra.mrb[0].mxu0 %v5507
      %v5798 = vpop.f32.mrb[0].mxu0
      %v5799 = vadd.f32 0.0, %v5798
      %v5800 = vpop.f32.mrb[0].mxu0
      %v5801 = vpop.f32.mrb[0].mxu0
      %v5802 = vadd.f32 0.0, %v5801
      %v5803 = vpop.f32.mrb[0].mxu0
      %5804 = vmatprep.mubr.bf16.mxu0 0
      %5805 = vmatmul.mubr.bf16.gmra.mrb[0].mxu0 %v5515
      %v5806 = vpop.f32.mrb[0].mxu0
      %v5807 = vadd.f32 0.0, %v5806
      %v5808 = vpop.f32.mrb[0].mxu0
      %v5809 = vpop.f32.mrb[0].mxu0
      %v5810 = vadd.f32 0.0, %v5809
      %v5811 = vpop.f32.mrb[0].mxu0
      %5812 = vmatprep.mubr.bf16.mxu0 0
      %5813 = vmatmul.mubr.bf16.gmra.mrb[0].mxu0 %v5523
      %v5814 = vpop.f32.mrb[0].mxu0
      %v5815 = vadd.f32 0.0, %v5814
      %v5816 = vpop.f32.mrb[0].mxu0
      %v5817 = vpop.f32.mrb[0].mxu0
      %v5818 = vadd.f32 0.0, %v5817
      %v5819 = vpop.f32.mrb[0].mxu0
      %5820 = vmatprep.mubr.bf16.mxu0 0
      %5821 = vmatmul.mubr.bf16.gmra.mrb[0].mxu0 %v5531
      %v5822 = vpop.f32.mrb[0].mxu0
      %v5823 = vadd.f32 0.0, %v5822
      %v5824 = vpop.f32.mrb[0].mxu0
      %v5825 = vpop.f32.mrb[0].mxu0
      %v5826 = vadd.f32 0.0, %v5825
      %v5827 = vpop.f32.mrb[0].mxu0
      %5828 = vmatprep.mubr.bf16.mxu0 0
      %5829 = vmatmul.mubr.bf16.gmra.mrb[0].mxu0 %v5539
      %v5830 = vpop.f32.mrb[0].mxu0
      %v5831 = vadd.f32 0.0, %v5830
      %v5832 = vpop.f32.mrb[0].mxu0
      %v5833 = vpop.f32.mrb[0].mxu0
      %v5834 = vadd.f32 0.0, %v5833
      %v5835 = vpop.f32.mrb[0].mxu0
      %5836 = vmatprep.mubr.bf16.mxu0 0
      %5837 = vmatmul.mubr.bf16.gmra.mrb[0].mxu0 %v5547
      %v5838 = vpop.f32.mrb[0].mxu0
      %v5839 = vadd.f32 0.0, %v5838
      %v5840 = vpop.f32.mrb[0].mxu0
      %v5841 = vpop.f32.mrb[0].mxu0
      %v5842 = vadd.f32 0.0, %v5841
      %v5843 = vpop.f32.mrb[0].mxu0
      %5844 = vmatprep.mubr.bf16.mxu0 0
      %5845 = vmatmul.mubr.bf16.gmra.mrb[0].mxu0 %v5555
      %v5846 = vpop.f32.mrb[0].mxu0
      %v5847 = vadd.f32 0.0, %v5846
      %v5848 = vpop.f32.mrb[0].mxu0
      %v5849 = vpop.f32.mrb[0].mxu0
      %v5850 = vadd.f32 0.0, %v5849
      %v5851 = vpop.f32.mrb[0].mxu0
      %5852 = vmatprep.mubr.bf16.mxu0 0
      %5853 = vmatmul.mubr.bf16.gmra.mrb[0].mxu0 %v5563
      %v5854 = vpop.f32.mrb[0].mxu0
      %v5855 = vadd.f32 0.0, %v5854
      %v5856 = vpop.f32.mrb[0].mxu0
      %v5857 = vpop.f32.mrb[0].mxu0
      %v5858 = vadd.f32 0.0, %v5857
      %v5859 = vpop.f32.mrb[0].mxu0
      %5860 = vmatprep.mubr.bf16.mxu0 0
      %5861 = vmatmul.mubr.bf16.gmra.mrb[0].mxu0 %v5571
      %v5862 = vpop.f32.mrb[0].mxu0
      %v5863 = vadd.f32 0.0, %v5862
      %v5864 = vpop.f32.mrb[0].mxu0
      %v5865 = vpop.f32.mrb[0].mxu0
      %v5866 = vadd.f32 0.0, %v5865
      %v5867 = vpop.f32.mrb[0].mxu0
      %5868 = vmatprep.mubr.bf16.mxu0 0
      %5869 = vmatmul.mubr.bf16.gmra.mrb[0].mxu0 %v5579
      %v5870 = vpop.f32.mrb[0].mxu0
      %v5871 = vadd.f32 0.0, %v5870
      %v5872 = vpop.f32.mrb[0].mxu0
      %v5873 = vpop.f32.mrb[0].mxu0
      %v5874 = vadd.f32 0.0, %v5873
      %v5875 = vpop.f32.mrb[0].mxu0
      %5876 = vmatprep.mubr.bf16.mxu0 0
      %5877 = vmatmul.mubr.bf16.gmra.mrb[0].mxu0 %v5587
      %v5878 = vpop.f32.mrb[0].mxu0
      %v5879 = vadd.f32 0.0, %v5878
      %v5880 = vpop.f32.mrb[0].mxu0
      %v5881 = vpop.f32.mrb[0].mxu0
      %v5882 = vadd.f32 0.0, %v5881
      %v5883 = vpop.f32.mrb[0].mxu0
      %5884 = vdwg.mxu0
      %v5885 = vld [vmem:[#allocation4] sm:$0xff]
      %v5886 = vld [vmem:[#allocation4 + $0x8] sm:$0xff]
      %v5887 = vld [vmem:[#allocation4 + $0x10] sm:$0xff]
      %v5888 = vld [vmem:[#allocation4 + $0x18] sm:$0xff]
      %v5889 = vld [vmem:[#allocation4 + $0x20] sm:$0xff]
      %v5890 = vld [vmem:[#allocation4 + $0x28] sm:$0xff]
      %v5891 = vld [vmem:[#allocation4 + $0x30] sm:$0xff]
      %v5892 = vld [vmem:[#allocation4 + $0x38] sm:$0xff]
      %v5893 = vld [vmem:[#allocation4 + $0x40] sm:$0xff]
      %v5894 = vld [vmem:[#allocation4 + $0x48] sm:$0xff]
      %v5895 = vld [vmem:[#allocation4 + $0x50] sm:$0xff]
      %v5896 = vld [vmem:[#allocation4 + $0x58] sm:$0xff]
      %v5897 = vld [vmem:[#allocation4 + $0x60] sm:$0xff]
      %v5898 = vld [vmem:[#allocation4 + $0x68] sm:$0xff]
      %v5899 = vld [vmem:[#allocation4 + $0x70] sm:$0xff]
      %v5900 = vld [vmem:[#allocation4 + $0x78] sm:$0xff]
      %v5901 = vld [vmem:[#allocation4 + $0x80] sm:$0xff]
      %v5902 = vld [vmem:[#allocation4 + $0x88] sm:$0xff]
      %v5903 = vld [vmem:[#allocation4 + $0x90] sm:$0xff]
      %v5904 = vld [vmem:[#allocation4 + $0x98] sm:$0xff]
      %v5905 = vld [vmem:[#allocation4 + $0xa0] sm:$0xff]
      %v5906 = vld [vmem:[#allocation4 + $0xa8] sm:$0xff]
      %v5907 = vld [vmem:[#allocation4 + $0xb0] sm:$0xff]
      %v5908 = vld [vmem:[#allocation4 + $0xb8] sm:$0xff]
      %v5909 = vld [vmem:[#allocation4 + $0xc0] sm:$0xff]
      %v5910 = vld [vmem:[#allocation4 + $0xc8] sm:$0xff]
      %v5911 = vld [vmem:[#allocation4 + $0xd0] sm:$0xff]
      %v5912 = vld [vmem:[#allocation4 + $0xd8] sm:$0xff]
      %v5913 = vld [vmem:[#allocation4 + $0xe0] sm:$0xff]
      %v5914 = vld [vmem:[#allocation4 + $0xe8] sm:$0xff]
      %v5915 = vld [vmem:[#allocation4 + $0xf0] sm:$0xff]
      %v5916 = vld [vmem:[#allocation4 + $0xf8] sm:$0xff]
      %v5917 = vld [vmem:[#allocation4 + $0x100] sm:$0xff]
      %v5918 = vld [vmem:[#allocation4 + $0x108] sm:$0xff]
      %v5919 = vld [vmem:[#allocation4 + $0x110] sm:$0xff]
      %v5920 = vld [vmem:[#allocation4 + $0x118] sm:$0xff]
      %v5921 = vld [vmem:[#allocation4 + $0x120] sm:$0xff]
      %v5922 = vld [vmem:[#allocation4 + $0x128] sm:$0xff]
      %v5923 = vld [vmem:[#allocation4 + $0x130] sm:$0xff]
      %v5924 = vld [vmem:[#allocation4 + $0x138] sm:$0xff]
      %v5925 = vld [vmem:[#allocation4 + $0x140] sm:$0xff]
      %v5926 = vld [vmem:[#allocation4 + $0x148] sm:$0xff]
      %v5927 = vld [vmem:[#allocation4 + $0x150] sm:$0xff]
      %v5928 = vld [vmem:[#allocation4 + $0x158] sm:$0xff]
      %v5929 = vld [vmem:[#allocation4 + $0x160] sm:$0xff]
      %v5930 = vld [vmem:[#allocation4 + $0x168] sm:$0xff]
      %v5931 = vld [vmem:[#allocation4 + $0x170] sm:$0xff]
      %v5932 = vld [vmem:[#allocation4 + $0x178] sm:$0xff]
      %v5933 = vadd.f32 %v5885, %v5695
      %v5934 = vadd.f32 %v5886, %v5698
      %v5935 = vadd.f32 %v5887, %v5703
      %v5936 = vadd.f32 %v5888, %v5706
      %v5937 = vadd.f32 %v5889, %v5711
      %v5938 = vadd.f32 %v5890, %v5714
      %v5939 = vadd.f32 %v5891, %v5719
      %v5940 = vadd.f32 %v5892, %v5722
      %v5941 = vadd.f32 %v5893, %v5727
      %v5942 = vadd.f32 %v5894, %v5730
      %v5943 = vadd.f32 %v5895, %v5735
      %v5944 = vadd.f32 %v5896, %v5738
      %v5945 = vadd.f32 %v5897, %v5743
      %v5946 = vadd.f32 %v5898, %v5746
      %v5947 = vadd.f32 %v5899, %v5751
      %v5948 = vadd.f32 %v5900, %v5754
      %v5949 = vadd.f32 %v5901, %v5759
      %v5950 = vadd.f32 %v5902, %v5762
      %v5951 = vadd.f32 %v5903, %v5767
      %v5952 = vadd.f32 %v5904, %v5770
      %v5953 = vadd.f32 %v5905, %v5775
      %v5954 = vadd.f32 %v5906, %v5778
      %v5955 = vadd.f32 %v5907, %v5783
      %v5956 = vadd.f32 %v5908, %v5786
      %v5957 = vadd.f32 %v5909, %v5791
      %v5958 = vadd.f32 %v5910, %v5794
      %v5959 = vadd.f32 %v5911, %v5799
      %v5960 = vadd.f32 %v5912, %v5802
      %v5961 = vadd.f32 %v5913, %v5807
      %v5962 = vadd.f32 %v5914, %v5810
      %v5963 = vadd.f32 %v5915, %v5815
      %v5964 = vadd.f32 %v5916, %v5818
      %v5965 = vadd.f32 %v5917, %v5823
      %v5966 = vadd.f32 %v5918, %v5826
      %v5967 = vadd.f32 %v5919, %v5831
      %v5968 = vadd.f32 %v5920, %v5834
      %v5969 = vadd.f32 %v5921, %v5839
      %v5970 = vadd.f32 %v5922, %v5842
      %v5971 = vadd.f32 %v5923, %v5847
      %v5972 = vadd.f32 %v5924, %v5850
      %v5973 = vadd.f32 %v5925, %v5855
      %v5974 = vadd.f32 %v5926, %v5858
      %v5975 = vadd.f32 %v5927, %v5863
      %v5976 = vadd.f32 %v5928, %v5866
      %v5977 = vadd.f32 %v5929, %v5871
      %v5978 = vadd.f32 %v5930, %v5874
      %v5979 = vadd.f32 %v5931, %v5879
      %v5980 = vadd.f32 %v5932, %v5882
      %5981 = vst [vmem:[#allocation4] sm:$0xff] %v5933
      %5982 = vst [vmem:[#allocation4 + $0x8] sm:$0xff] %v5934
      %5983 = vst [vmem:[#allocation4 + $0x10] sm:$0xff] %v5935
      %5984 = vst [vmem:[#allocation4 + $0x18] sm:$0xff] %v5936
      %5985 = vst [vmem:[#allocation4 + $0x20] sm:$0xff] %v5937
      %5986 = vst [vmem:[#allocation4 + $0x28] sm:$0xff] %v5938
      %5987 = vst [vmem:[#allocation4 + $0x30] sm:$0xff] %v5939
      %5988 = vst [vmem:[#allocation4 + $0x38] sm:$0xff] %v5940
      %5989 = vst [vmem:[#allocation4 + $0x40] sm:$0xff] %v5941
      %5990 = vst [vmem:[#allocation4 + $0x48] sm:$0xff] %v5942
      %5991 = vst [vmem:[#allocation4 + $0x50] sm:$0xff] %v5943
      %5992 = vst [vmem:[#allocation4 + $0x58] sm:$0xff] %v5944
      %5993 = vst [vmem:[#allocation4 + $0x60] sm:$0xff] %v5945
      %5994 = vst [vmem:[#allocation4 + $0x68] sm:$0xff] %v5946
      %5995 = vst [vmem:[#allocation4 + $0x70] sm:$0xff] %v5947
      %5996 = vst [vmem:[#allocation4 + $0x78] sm:$0xff] %v5948
      %5997 = vst [vmem:[#allocation4 + $0x80] sm:$0xff] %v5949
      %5998 = vst [vmem:[#allocation4 + $0x88] sm:$0xff] %v5950
      %5999 = vst [vmem:[#allocation4 + $0x90] sm:$0xff] %v5951
      %6000 = vst [vmem:[#allocation4 + $0x98] sm:$0xff] %v5952
      %6001 = vst [vmem:[#allocation4 + $0xa0] sm:$0xff] %v5953
      %6002 = vst [vmem:[#allocation4 + $0xa8] sm:$0xff] %v5954
      %6003 = vst [vmem:[#allocation4 + $0xb0] sm:$0xff] %v5955
      %6004 = vst [vmem:[#allocation4 + $0xb8] sm:$0xff] %v5956
      %6005 = vst [vmem:[#allocation4 + $0xc0] sm:$0xff] %v5957
      %6006 = vst [vmem:[#allocation4 + $0xc8] sm:$0xff] %v5958
      %6007 = vst [vmem:[#allocation4 + $0xd0] sm:$0xff] %v5959
      %6008 = vst [vmem:[#allocation4 + $0xd8] sm:$0xff] %v5960
      %6009 = vst [vmem:[#allocation4 + $0xe0] sm:$0xff] %v5961
      %6010 = vst [vmem:[#allocation4 + $0xe8] sm:$0xff] %v5962
      %6011 = vst [vmem:[#allocation4 + $0xf0] sm:$0xff] %v5963
      %6012 = vst [vmem:[#allocation4 + $0xf8] sm:$0xff] %v5964
      %6013 = vst [vmem:[#allocation4 + $0x100] sm:$0xff] %v5965
      %6014 = vst [vmem:[#allocation4 + $0x108] sm:$0xff] %v5966
      %6015 = vst [vmem:[#allocation4 + $0x110] sm:$0xff] %v5967
      %6016 = vst [vmem:[#allocation4 + $0x118] sm:$0xff] %v5968
      %6017 = vst [vmem:[#allocation4 + $0x120] sm:$0xff] %v5969
      %6018 = vst [vmem:[#allocation4 + $0x128] sm:$0xff] %v5970
      %6019 = vst [vmem:[#allocation4 + $0x130] sm:$0xff] %v5971
      %6020 = vst [vmem:[#allocation4 + $0x138] sm:$0xff] %v5972
      %6021 = vst [vmem:[#allocation4 + $0x140] sm:$0xff] %v5973
      %6022 = vst [vmem:[#allocation4 + $0x148] sm:$0xff] %v5974
      %6023 = vst [vmem:[#allocation4 + $0x150] sm:$0xff] %v5975
      %6024 = vst [vmem:[#allocation4 + $0x158] sm:$0xff] %v5976
      %6025 = vst [vmem:[#allocation4 + $0x160] sm:$0xff] %v5977
      %6026 = vst [vmem:[#allocation4 + $0x168] sm:$0xff] %v5978
      %6027 = vst [vmem:[#allocation4 + $0x170] sm:$0xff] %v5979
      %6028 = vst [vmem:[#allocation4 + $0x178] sm:$0xff] %v5980
      %v6029 = vld [vmem:[%s404 + $0x18] sm:$0xe]
      %v6030 = vld [vmem:[%s404 + $0x1c] sm:$0xf]
      %v6031 = vld [vmem:[%s404 + $0x20] sm:$0xf]
      %v6032 = vld [vmem:[%s404 + $0x24] sm:$0xf]
      %v6033 = vld [vmem:[%s404 + $0x28] sm:$0xf]
      %v6034 = vld [vmem:[%s404 + $0x2c] sm:$0xf]
      %v6035 = vld [vmem:[%s404 + $0x30] sm:$0xf]
      %v6036 = vld [vmem:[%s404 + $0x34] sm:$0xf]
      %v6037 = vld [vmem:[%s404 + $0x38] sm:$0xf]
      %v6038 = vld [vmem:[%s404 + $0x3c] sm:$0xf]
      %v6039 = vld [vmem:[%s404 + $0x40] sm:$0xf]
      %v6040 = vld [vmem:[%s404 + $0x44] sm:$0xf]
      %v6041 = vld [vmem:[%s404 + $0x48] sm:$0xf]
      %v6042 = vld [vmem:[%s404 + $0x4c] sm:$0xf]
      %v6043 = vld [vmem:[%s404 + $0x50] sm:$0xf]
      %v6044 = vld [vmem:[%s404 + $0x54] sm:$0xf]
      %v6045 = vld [vmem:[%s404 + $0x58] sm:$0xf]
      %v6046 = vld [vmem:[%s404 + $0x5c] sm:$0xf]
      %v6047 = vld [vmem:[%s404 + $0x60] sm:$0xf]
      %v6048 = vld [vmem:[%s404 + $0x64] sm:$0xf]
      %v6049 = vld [vmem:[%s404 + $0x68] sm:$0xf]
      %v6050 = vld [vmem:[%s404 + $0x6c] sm:$0xf]
      %v6051 = vld [vmem:[%s404 + $0x70] sm:$0xf]
      %v6052 = vld [vmem:[%s404 + $0x74] sm:$0xf]
      %v6053 = vld [vmem:[%s404 + $0x78] sm:$0xf]
      %v6054 = vld [vmem:[%s404 + $0x7c] sm:$0xf]
      %v6055 = vld [vmem:[%s404 + $0x80] sm:$0xf]
      %v6056 = vld [vmem:[%s404 + $0x84] sm:$0xf]
      %v6057 = vld [vmem:[%s404 + $0x88] sm:$0xf]
      %v6058 = vld [vmem:[%s404 + $0x8c] sm:$0xf]
      %v6059 = vld [vmem:[%s404 + $0x90] sm:$0xf]
      %v6060 = vld [vmem:[%s404 + $0x94] sm:$0xf]
      %v6061 = vld [vmem:[%s404 + $0x98] sm:$0xf]
      %v6062 = vld [vmem:[%s404 + $0x9c] sm:$0xf]
      %v6063 = vld [vmem:[%s404 + $0xa0] sm:$0xf]
      %v6064 = vld [vmem:[%s404 + $0xa4] sm:$0xf]
      %v6065 = vld [vmem:[%s404 + $0xa8] sm:$0xf]
      %v6066 = vld [vmem:[%s404 + $0xac] sm:$0xf]
      %v6067 = vld [vmem:[%s404 + $0xb0] sm:$0xf]
      %v6068 = vld [vmem:[%s404 + $0xb4] sm:$0xf]
      %v6069 = vld [vmem:[%s404 + $0xb8] sm:$0xf]
      %v6070 = vld [vmem:[%s404 + $0xbc] sm:$0xf]
      %v6071 = vld [vmem:[%s404 + $0xc0] sm:$0xf]
      %v6072 = vld [vmem:[%s404 + $0xc4] sm:$0xf]
      %v6073 = vld [vmem:[%s404 + $0xc8] sm:$0xf]
      %v6074 = vld [vmem:[%s404 + $0xcc] sm:$0xf]
      %v6075 = vld [vmem:[%s404 + $0xd0] sm:$0xf]
      %v6076 = vld [vmem:[%s404 + $0xd4] sm:$0xf]
      %v6077 = vld [vmem:[%s404 + $0xd8] sm:$0x1]
      %s6078 = scalar_lea.vmem %s1, 512
      %v6079 = vld [vmem:[%s6078] sm:$0xf]
      %v6080 = vld [vmem:[%s6078 + $0x4] sm:$0xf]
      %v6081 = vld [vmem:[%s6078 + $0x8] sm:$0xf]
      %v6082 = vld [vmem:[%s6078 + $0xc] sm:$0xf]
      %v6083 = vld [vmem:[%s6078 + $0x10] sm:$0xf]
      %v6084 = vld [vmem:[%s6078 + $0x14] sm:$0xf]
      %v6085 = vld [vmem:[%s6078 + $0x18] sm:$0xf]
      %v6086 = vld [vmem:[%s6078 + $0x1c] sm:$0xf]
      %v6087 = vld [vmem:[%s6078 + $0x20] sm:$0xf]
      %v6088 = vld [vmem:[%s6078 + $0x24] sm:$0xf]
      %v6089 = vld [vmem:[%s6078 + $0x28] sm:$0xf]
      %v6090 = vld [vmem:[%s6078 + $0x2c] sm:$0xf]
      %v6091 = vld [vmem:[%s6078 + $0x30] sm:$0xf]
      %v6092 = vld [vmem:[%s6078 + $0x34] sm:$0xf]
      %v6093 = vld [vmem:[%s6078 + $0x38] sm:$0xf]
      %v6094 = vld [vmem:[%s6078 + $0x3c] sm:$0xf]
      %v6144 = vunpack.c.l.b16 %v6029
      %v6145 = vunpack.c.l.b16 %v6030
      %v6146 = vunpack.c.l.b16 %v6031
      %v6147 = vunpack.c.l.b16 %v6032
      %v6148 = vunpack.c.l.b16 %v6033
      %v6149 = vunpack.c.l.b16 %v6034
      %v6150 = vunpack.c.l.b16 %v6035
      %v6151 = vunpack.c.l.b16 %v6036
      %v6152 = vunpack.c.l.b16 %v6037
      %v6153 = vunpack.c.l.b16 %v6038
      %v6154 = vunpack.c.l.b16 %v6039
      %v6155 = vunpack.c.l.b16 %v6040
      %v6156 = vunpack.c.l.b16 %v6041
      %v6157 = vunpack.c.l.b16 %v6042
      %v6158 = vunpack.c.l.b16 %v6043
      %v6159 = vunpack.c.l.b16 %v6044
      %v6160 = vunpack.c.l.b16 %v6045
      %v6161 = vunpack.c.l.b16 %v6046
      %v6162 = vunpack.c.l.b16 %v6047
      %v6163 = vunpack.c.l.b16 %v6048
      %v6164 = vunpack.c.l.b16 %v6049
      %v6165 = vunpack.c.l.b16 %v6050
      %v6166 = vunpack.c.l.b16 %v6051
      %v6167 = vunpack.c.l.b16 %v6052
      %v6168 = vunpack.c.l.b16 %v6053
      %v6169 = vunpack.c.l.b16 %v6054
      %v6170 = vunpack.c.l.b16 %v6055
      %v6171 = vunpack.c.l.b16 %v6056
      %v6172 = vunpack.c.l.b16 %v6057
      %v6173 = vunpack.c.l.b16 %v6058
      %v6174 = vunpack.c.l.b16 %v6059
      %v6175 = vunpack.c.l.b16 %v6060
      %v6176 = vunpack.c.l.b16 %v6061
      %v6177 = vunpack.c.l.b16 %v6062
      %v6178 = vunpack.c.l.b16 %v6063
      %v6179 = vunpack.c.l.b16 %v6064
      %v6180 = vunpack.c.l.b16 %v6065
      %v6181 = vunpack.c.l.b16 %v6066
      %v6182 = vunpack.c.l.b16 %v6067
      %v6183 = vunpack.c.l.b16 %v6068
      %v6184 = vunpack.c.l.b16 %v6069
      %v6185 = vunpack.c.l.b16 %v6070
      %v6186 = vunpack.c.l.b16 %v6071
      %v6187 = vunpack.c.l.b16 %v6072
      %v6188 = vunpack.c.l.b16 %v6073
      %v6189 = vunpack.c.l.b16 %v6074
      %v6190 = vunpack.c.l.b16 %v6075
      %v6191 = vunpack.c.l.b16 %v6076
      %v6192 = vunpack.c.l.b16 %v6077
      %v6193 = vpack.c.b16 %v6145, %v6144
      %v6194 = vpack.c.b16 %v6147, %v6146
      %v6195 = vpack.c.b16 %v6149, %v6148
      %v6196 = vpack.c.b16 %v6151, %v6150
      %v6197 = vpack.c.b16 %v6153, %v6152
      %v6198 = vpack.c.b16 %v6155, %v6154
      %v6199 = vpack.c.b16 %v6157, %v6156
      %v6200 = vpack.c.b16 %v6159, %v6158
      %v6201 = vpack.c.b16 %v6161, %v6160
      %v6202 = vpack.c.b16 %v6163, %v6162
      %v6203 = vpack.c.b16 %v6165, %v6164
      %v6204 = vpack.c.b16 %v6167, %v6166
      %v6205 = vpack.c.b16 %v6169, %v6168
      %v6206 = vpack.c.b16 %v6171, %v6170
      %v6207 = vpack.c.b16 %v6173, %v6172
      %v6208 = vpack.c.b16 %v6175, %v6174
      %v6209 = vpack.c.b16 %v6177, %v6176
      %v6210 = vpack.c.b16 %v6179, %v6178
      %v6211 = vpack.c.b16 %v6181, %v6180
      %v6212 = vpack.c.b16 %v6183, %v6182
      %v6213 = vpack.c.b16 %v6185, %v6184
      %v6214 = vpack.c.b16 %v6187, %v6186
      %v6215 = vpack.c.b16 %v6189, %v6188
      %v6216 = vpack.c.b16 %v6191, %v6190
      %v6217 = vpack.c.b16 %v6192, %v6192
      %v6218 = vrot.slane %v6193, 1
      %v6219 = vrot.slane %v6194, 1
      %v6220 = vsel %vm1955, %v6218, %v6219
      %v6221 = vrot.slane %v6195, 1
      %v6222 = vsel %vm1955, %v6219, %v6221
      %v6223 = vrot.slane %v6196, 1
      %v6224 = vsel %vm1955, %v6221, %v6223
      %v6225 = vrot.slane %v6197, 1
      %v6226 = vsel %vm1955, %v6223, %v6225
      %v6227 = vrot.slane %v6198, 1
      %v6228 = vsel %vm1955, %v6225, %v6227
      %v6229 = vrot.slane %v6199, 1
      %v6230 = vsel %vm1955, %v6227, %v6229
      %v6231 = vrot.slane %v6200, 1
      %v6232 = vsel %vm1955, %v6229, %v6231
      %v6233 = vrot.slane %v6201, 1
      %v6234 = vsel %vm1955, %v6231, %v6233
      %v6235 = vrot.slane %v6202, 1
      %v6236 = vsel %vm1955, %v6233, %v6235
      %v6237 = vrot.slane %v6203, 1
      %v6238 = vsel %vm1955, %v6235, %v6237
      %v6239 = vrot.slane %v6204, 1
      %v6240 = vsel %vm1955, %v6237, %v6239
      %v6241 = vrot.slane %v6205, 1
      %v6242 = vsel %vm1955, %v6239, %v6241
      %v6243 = vrot.slane %v6206, 1
      %v6244 = vsel %vm1955, %v6241, %v6243
      %v6245 = vrot.slane %v6207, 1
      %v6246 = vsel %vm1955, %v6243, %v6245
      %v6247 = vrot.slane %v6208, 1
      %v6248 = vsel %vm1955, %v6245, %v6247
      %v6249 = vrot.slane %v6209, 1
      %v6250 = vsel %vm1955, %v6247, %v6249
      %v6251 = vrot.slane %v6210, 1
      %v6252 = vsel %vm1955, %v6249, %v6251
      %v6253 = vrot.slane %v6211, 1
      %v6254 = vsel %vm1955, %v6251, %v6253
      %v6255 = vrot.slane %v6212, 1
      %v6256 = vsel %vm1955, %v6253, %v6255
      %v6257 = vrot.slane %v6213, 1
      %v6258 = vsel %vm1955, %v6255, %v6257
      %v6259 = vrot.slane %v6214, 1
      %v6260 = vsel %vm1955, %v6257, %v6259
      %v6261 = vrot.slane %v6215, 1
      %v6262 = vsel %vm1955, %v6259, %v6261
      %v6263 = vrot.slane %v6216, 1
      %v6264 = vsel %vm1955, %v6261, %v6263
      %v6265 = vrot.slane %v6217, 1
      %v6266 = vsel %vm1955, %v6263, %v6265
      %v6307 = vunpack.c.l.b16 %v6079
      %v6308 = vunpack.c.l.b16 %v6080
      %v6309 = vunpack.c.l.b16 %v6081
      %v6310 = vunpack.c.l.b16 %v6082
      %v6311 = vunpack.c.l.b16 %v6083
      %v6312 = vunpack.c.l.b16 %v6084
      %v6313 = vunpack.c.l.b16 %v6085
      %v6314 = vunpack.c.l.b16 %v6086
      %v6315 = vunpack.c.l.b16 %v6087
      %v6316 = vunpack.c.l.b16 %v6088
      %v6317 = vunpack.c.l.b16 %v6089
      %v6318 = vunpack.c.l.b16 %v6090
      %v6319 = vunpack.c.l.b16 %v6091
      %v6320 = vunpack.c.l.b16 %v6092
      %v6321 = vunpack.c.l.b16 %v6093
      %v6322 = vunpack.c.l.b16 %v6094
      %v6323 = vpack.c.b16 %v6308, %v6307
      %v6324 = vpack.c.b16 %v6310, %v6309
      %v6325 = vpack.c.b16 %v6312, %v6311
      %v6326 = vpack.c.b16 %v6314, %v6313
      %v6327 = vpack.c.b16 %v6316, %v6315
      %v6328 = vpack.c.b16 %v6318, %v6317
      %v6329 = vpack.c.b16 %v6320, %v6319
      %v6330 = vpack.c.b16 %v6322, %v6321
      %6339 = vmatprep.subr.bf16.mxu0 0
      %6340 = vmatpush1.bf16.msra.mxu0 %v6323
      %6341 = vmatprep.subr.bf16.mxu0 0
      %6342 = vmatpush1.bf16.msra.mxu0 %v6324
      %6343 = vmatprep.subr.bf16.mxu0 0
      %6344 = vmatpush1.bf16.msra.mxu0 %v6325
      %6345 = vmatprep.subr.bf16.mxu0 0
      %6346 = vmatpush1.bf16.msra.mxu0 %v6326
      %6347 = vmatprep.subr.bf16.mxu0 0
      %6348 = vmatpush1.bf16.msra.mxu0 %v6327
      %6349 = vmatprep.subr.bf16.mxu0 0
      %6350 = vmatpush1.bf16.msra.mxu0 %v6328
      %6351 = vmatprep.subr.bf16.mxu0 0
      %6352 = vmatpush1.bf16.msra.mxu0 %v6329
      %6353 = vmatprep.subr.bf16.mxu0 0
      %6354 = vmatpush1.bf16.msra.mxu0 %v6330
      %6355 = vmatprep.subr.bf16.mxu0 0
      %6356 = vmatpush1.bf16.msra.mxu0 0
      %6357 = vmatprep.subr.bf16.mxu0 0
      %6358 = vmatpush1.bf16.msra.mxu0 0
      %6359 = vmatprep.subr.bf16.mxu0 0
      %6360 = vmatpush1.bf16.msra.mxu0 0
      %6361 = vmatprep.subr.bf16.mxu0 0
      %6362 = vmatpush1.bf16.msra.mxu0 0
      %6363 = vmatprep.subr.bf16.mxu0 0
      %6364 = vmatpush1.bf16.msra.mxu0 0
      %6365 = vmatprep.subr.bf16.mxu0 0
      %6366 = vmatpush1.bf16.msra.mxu0 0
      %6367 = vmatprep.subr.bf16.mxu0 0
      %6368 = vmatpush1.bf16.msra.mxu0 0
      %6369 = vmatprep.subr.bf16.mxu0 0
      %6370 = vmatpush1.bf16.msra.mxu0 0
      %6371 = vmatprep.mubr.bf16.mxu0 0
      %6372 = vmatmul.mubr.bf16.gmra.mrb[0].mxu0 %v6220
      %v6373 = vpop.f32.mrb[0].mxu0
      %v6374 = vadd.f32 0.0, %v6373
      %v6375 = vpop.f32.mrb[0].mxu0
      %v6376 = vpop.f32.mrb[0].mxu0
      %v6377 = vadd.f32 0.0, %v6376
      %v6378 = vpop.f32.mrb[0].mxu0
      %6379 = vmatprep.mubr.bf16.mxu0 0
      %6380 = vmatmul.mubr.bf16.gmra.mrb[0].mxu0 %v6222
      %v6381 = vpop.f32.mrb[0].mxu0
      %v6382 = vadd.f32 0.0, %v6381
      %v6383 = vpop.f32.mrb[0].mxu0
      %v6384 = vpop.f32.mrb[0].mxu0
      %v6385 = vadd.f32 0.0, %v6384
      %v6386 = vpop.f32.mrb[0].mxu0
      %6387 = vmatprep.mubr.bf16.mxu0 0
      %6388 = vmatmul.mubr.bf16.gmra.mrb[0].mxu0 %v6224
      %v6389 = vpop.f32.mrb[0].mxu0
      %v6390 = vadd.f32 0.0, %v6389
      %v6391 = vpop.f32.mrb[0].mxu0
      %v6392 = vpop.f32.mrb[0].mxu0
      %v6393 = vadd.f32 0.0, %v6392
      %v6394 = vpop.f32.mrb[0].mxu0
      %6395 = vmatprep.mubr.bf16.mxu0 0
      %6396 = vmatmul.mubr.bf16.gmra.mrb[0].mxu0 %v6226
      %v6397 = vpop.f32.mrb[0].mxu0
      %v6398 = vadd.f32 0.0, %v6397
      %v6399 = vpop.f32.mrb[0].mxu0
      %v6400 = vpop.f32.mrb[0].mxu0
      %v6401 = vadd.f32 0.0, %v6400
      %v6402 = vpop.f32.mrb[0].mxu0
      %6403 = vmatprep.mubr.bf16.mxu0 0
      %6404 = vmatmul.mubr.bf16.gmra.mrb[0].mxu0 %v6228
      %v6405 = vpop.f32.mrb[0].mxu0
      %v6406 = vadd.f32 0.0, %v6405
      %v6407 = vpop.f32.mrb[0].mxu0
      %v6408 = vpop.f32.mrb[0].mxu0
      %v6409 = vadd.f32 0.0, %v6408
      %v6410 = vpop.f32.mrb[0].mxu0
      %6411 = vmatprep.mubr.bf16.mxu0 0
      %6412 = vmatmul.mubr.bf16.gmra.mrb[0].mxu0 %v6230
      %v6413 = vpop.f32.mrb[0].mxu0
      %v6414 = vadd.f32 0.0, %v6413
      %v6415 = vpop.f32.mrb[0].mxu0
      %v6416 = vpop.f32.mrb[0].mxu0
      %v6417 = vadd.f32 0.0, %v6416
      %v6418 = vpop.f32.mrb[0].mxu0
      %6419 = vmatprep.mubr.bf16.mxu0 0
      %6420 = vmatmul.mubr.bf16.gmra.mrb[0].mxu0 %v6232
      %v6421 = vpop.f32.mrb[0].mxu0
      %v6422 = vadd.f32 0.0, %v6421
      %v6423 = vpop.f32.mrb[0].mxu0
      %v6424 = vpop.f32.mrb[0].mxu0
      %v6425 = vadd.f32 0.0, %v6424
      %v6426 = vpop.f32.mrb[0].mxu0
      %6427 = vmatprep.mubr.bf16.mxu0 0
      %6428 = vmatmul.mubr.bf16.gmra.mrb[0].mxu0 %v6234
      %v6429 = vpop.f32.mrb[0].mxu0
      %v6430 = vadd.f32 0.0, %v6429
      %v6431 = vpop.f32.mrb[0].mxu0
      %v6432 = vpop.f32.mrb[0].mxu0
      %v6433 = vadd.f32 0.0, %v6432
      %v6434 = vpop.f32.mrb[0].mxu0
      %6435 = vmatprep.mubr.bf16.mxu0 0
      %6436 = vmatmul.mubr.bf16.gmra.mrb[0].mxu0 %v6236
      %v6437 = vpop.f32.mrb[0].mxu0
      %v6438 = vadd.f32 0.0, %v6437
      %v6439 = vpop.f32.mrb[0].mxu0
      %v6440 = vpop.f32.mrb[0].mxu0
      %v6441 = vadd.f32 0.0, %v6440
      %v6442 = vpop.f32.mrb[0].mxu0
      %6443 = vmatprep.mubr.bf16.mxu0 0
      %6444 = vmatmul.mubr.bf16.gmra.mrb[0].mxu0 %v6238
      %v6445 = vpop.f32.mrb[0].mxu0
      %v6446 = vadd.f32 0.0, %v6445
      %v6447 = vpop.f32.mrb[0].mxu0
      %v6448 = vpop.f32.mrb[0].mxu0
      %v6449 = vadd.f32 0.0, %v6448
      %v6450 = vpop.f32.mrb[0].mxu0
      %6451 = vmatprep.mubr.bf16.mxu0 0
      %6452 = vmatmul.mubr.bf16.gmra.mrb[0].mxu0 %v6240
      %v6453 = vpop.f32.mrb[0].mxu0
      %v6454 = vadd.f32 0.0, %v6453
      %v6455 = vpop.f32.mrb[0].mxu0
      %v6456 = vpop.f32.mrb[0].mxu0
      %v6457 = vadd.f32 0.0, %v6456
      %v6458 = vpop.f32.mrb[0].mxu0
      %6459 = vmatprep.mubr.bf16.mxu0 0
      %6460 = vmatmul.mubr.bf16.gmra.mrb[0].mxu0 %v6242
      %v6461 = vpop.f32.mrb[0].mxu0
      %v6462 = vadd.f32 0.0, %v6461
      %v6463 = vpop.f32.mrb[0].mxu0
      %v6464 = vpop.f32.mrb[0].mxu0
      %v6465 = vadd.f32 0.0, %v6464
      %v6466 = vpop.f32.mrb[0].mxu0
      %6467 = vmatprep.mubr.bf16.mxu0 0
      %6468 = vmatmul.mubr.bf16.gmra.mrb[0].mxu0 %v6244
      %v6469 = vpop.f32.mrb[0].mxu0
      %v6470 = vadd.f32 0.0, %v6469
      %v6471 = vpop.f32.mrb[0].mxu0
      %v6472 = vpop.f32.mrb[0].mxu0
      %v6473 = vadd.f32 0.0, %v6472
      %v6474 = vpop.f32.mrb[0].mxu0
      %6475 = vmatprep.mubr.bf16.mxu0 0
      %6476 = vmatmul.mubr.bf16.gmra.mrb[0].mxu0 %v6246
      %v6477 = vpop.f32.mrb[0].mxu0
      %v6478 = vadd.f32 0.0, %v6477
      %v6479 = vpop.f32.mrb[0].mxu0
      %v6480 = vpop.f32.mrb[0].mxu0
      %v6481 = vadd.f32 0.0, %v6480
      %v6482 = vpop.f32.mrb[0].mxu0
      %6483 = vmatprep.mubr.bf16.mxu0 0
      %6484 = vmatmul.mubr.bf16.gmra.mrb[0].mxu0 %v6248
      %v6485 = vpop.f32.mrb[0].mxu0
      %v6486 = vadd.f32 0.0, %v6485
      %v6487 = vpop.f32.mrb[0].mxu0
      %v6488 = vpop.f32.mrb[0].mxu0
      %v6489 = vadd.f32 0.0, %v6488
      %v6490 = vpop.f32.mrb[0].mxu0
      %6491 = vmatprep.mubr.bf16.mxu0 0
      %6492 = vmatmul.mubr.bf16.gmra.mrb[0].mxu0 %v6250
      %v6493 = vpop.f32.mrb[0].mxu0
      %v6494 = vadd.f32 0.0, %v6493
      %v6495 = vpop.f32.mrb[0].mxu0
      %v6496 = vpop.f32.mrb[0].mxu0
      %v6497 = vadd.f32 0.0, %v6496
      %v6498 = vpop.f32.mrb[0].mxu0
      %6499 = vmatprep.mubr.bf16.mxu0 0
      %6500 = vmatmul.mubr.bf16.gmra.mrb[0].mxu0 %v6252
      %v6501 = vpop.f32.mrb[0].mxu0
      %v6502 = vadd.f32 0.0, %v6501
      %v6503 = vpop.f32.mrb[0].mxu0
      %v6504 = vpop.f32.mrb[0].mxu0
      %v6505 = vadd.f32 0.0, %v6504
      %v6506 = vpop.f32.mrb[0].mxu0
      %6507 = vmatprep.mubr.bf16.mxu0 0
      %6508 = vmatmul.mubr.bf16.gmra.mrb[0].mxu0 %v6254
      %v6509 = vpop.f32.mrb[0].mxu0
      %v6510 = vadd.f32 0.0, %v6509
      %v6511 = vpop.f32.mrb[0].mxu0
      %v6512 = vpop.f32.mrb[0].mxu0
      %v6513 = vadd.f32 0.0, %v6512
      %v6514 = vpop.f32.mrb[0].mxu0
      %6515 = vmatprep.mubr.bf16.mxu0 0
      %6516 = vmatmul.mubr.bf16.gmra.mrb[0].mxu0 %v6256
      %v6517 = vpop.f32.mrb[0].mxu0
      %v6518 = vadd.f32 0.0, %v6517
      %v6519 = vpop.f32.mrb[0].mxu0
      %v6520 = vpop.f32.mrb[0].mxu0
      %v6521 = vadd.f32 0.0, %v6520
      %v6522 = vpop.f32.mrb[0].mxu0
      %6523 = vmatprep.mubr.bf16.mxu0 0
      %6524 = vmatmul.mubr.bf16.gmra.mrb[0].mxu0 %v6258
      %v6525 = vpop.f32.mrb[0].mxu0
      %v6526 = vadd.f32 0.0, %v6525
      %v6527 = vpop.f32.mrb[0].mxu0
      %v6528 = vpop.f32.mrb[0].mxu0
      %v6529 = vadd.f32 0.0, %v6528
      %v6530 = vpop.f32.mrb[0].mxu0
      %6531 = vmatprep.mubr.bf16.mxu0 0
      %6532 = vmatmul.mubr.bf16.gmra.mrb[0].mxu0 %v6260
      %v6533 = vpop.f32.mrb[0].mxu0
      %v6534 = vadd.f32 0.0, %v6533
      %v6535 = vpop.f32.mrb[0].mxu0
      %v6536 = vpop.f32.mrb[0].mxu0
      %v6537 = vadd.f32 0.0, %v6536
      %v6538 = vpop.f32.mrb[0].mxu0
      %6539 = vmatprep.mubr.bf16.mxu0 0
      %6540 = vmatmul.mubr.bf16.gmra.mrb[0].mxu0 %v6262
      %v6541 = vpop.f32.mrb[0].mxu0
      %v6542 = vadd.f32 0.0, %v6541
      %v6543 = vpop.f32.mrb[0].mxu0
      %v6544 = vpop.f32.mrb[0].mxu0
      %v6545 = vadd.f32 0.0, %v6544
      %v6546 = vpop.f32.mrb[0].mxu0
      %6547 = vmatprep.mubr.bf16.mxu0 0
      %6548 = vmatmul.mubr.bf16.gmra.mrb[0].mxu0 %v6264
      %v6549 = vpop.f32.mrb[0].mxu0
      %v6550 = vadd.f32 0.0, %v6549
      %v6551 = vpop.f32.mrb[0].mxu0
      %v6552 = vpop.f32.mrb[0].mxu0
      %v6553 = vadd.f32 0.0, %v6552
      %v6554 = vpop.f32.mrb[0].mxu0
      %6555 = vmatprep.mubr.bf16.mxu0 0
      %6556 = vmatmul.mubr.bf16.gmra.mrb[0].mxu0 %v6266
      %v6557 = vpop.f32.mrb[0].mxu0
      %v6558 = vadd.f32 0.0, %v6557
      %v6559 = vpop.f32.mrb[0].mxu0
      %v6560 = vpop.f32.mrb[0].mxu0
      %v6561 = vadd.f32 0.0, %v6560
      %v6562 = vpop.f32.mrb[0].mxu0
      %6563 = vdwg.mxu0
      %v6564 = vld [vmem:[#allocation4] sm:$0xff]
      %v6565 = vld [vmem:[#allocation4 + $0x8] sm:$0xff]
      %v6566 = vld [vmem:[#allocation4 + $0x10] sm:$0xff]
      %v6567 = vld [vmem:[#allocation4 + $0x18] sm:$0xff]
      %v6568 = vld [vmem:[#allocation4 + $0x20] sm:$0xff]
      %v6569 = vld [vmem:[#allocation4 + $0x28] sm:$0xff]
      %v6570 = vld [vmem:[#allocation4 + $0x30] sm:$0xff]
      %v6571 = vld [vmem:[#allocation4 + $0x38] sm:$0xff]
      %v6572 = vld [vmem:[#allocation4 + $0x40] sm:$0xff]
      %v6573 = vld [vmem:[#allocation4 + $0x48] sm:$0xff]
      %v6574 = vld [vmem:[#allocation4 + $0x50] sm:$0xff]
      %v6575 = vld [vmem:[#allocation4 + $0x58] sm:$0xff]
      %v6576 = vld [vmem:[#allocation4 + $0x60] sm:$0xff]
      %v6577 = vld [vmem:[#allocation4 + $0x68] sm:$0xff]
      %v6578 = vld [vmem:[#allocation4 + $0x70] sm:$0xff]
      %v6579 = vld [vmem:[#allocation4 + $0x78] sm:$0xff]
      %v6580 = vld [vmem:[#allocation4 + $0x80] sm:$0xff]
      %v6581 = vld [vmem:[#allocation4 + $0x88] sm:$0xff]
      %v6582 = vld [vmem:[#allocation4 + $0x90] sm:$0xff]
      %v6583 = vld [vmem:[#allocation4 + $0x98] sm:$0xff]
      %v6584 = vld [vmem:[#allocation4 + $0xa0] sm:$0xff]
      %v6585 = vld [vmem:[#allocation4 + $0xa8] sm:$0xff]
      %v6586 = vld [vmem:[#allocation4 + $0xb0] sm:$0xff]
      %v6587 = vld [vmem:[#allocation4 + $0xb8] sm:$0xff]
      %v6588 = vld [vmem:[#allocation4 + $0xc0] sm:$0xff]
      %v6589 = vld [vmem:[#allocation4 + $0xc8] sm:$0xff]
      %v6590 = vld [vmem:[#allocation4 + $0xd0] sm:$0xff]
      %v6591 = vld [vmem:[#allocation4 + $0xd8] sm:$0xff]
      %v6592 = vld [vmem:[#allocation4 + $0xe0] sm:$0xff]
      %v6593 = vld [vmem:[#allocation4 + $0xe8] sm:$0xff]
      %v6594 = vld [vmem:[#allocation4 + $0xf0] sm:$0xff]
      %v6595 = vld [vmem:[#allocation4 + $0xf8] sm:$0xff]
      %v6596 = vld [vmem:[#allocation4 + $0x100] sm:$0xff]
      %v6597 = vld [vmem:[#allocation4 + $0x108] sm:$0xff]
      %v6598 = vld [vmem:[#allocation4 + $0x110] sm:$0xff]
      %v6599 = vld [vmem:[#allocation4 + $0x118] sm:$0xff]
      %v6600 = vld [vmem:[#allocation4 + $0x120] sm:$0xff]
      %v6601 = vld [vmem:[#allocation4 + $0x128] sm:$0xff]
      %v6602 = vld [vmem:[#allocation4 + $0x130] sm:$0xff]
      %v6603 = vld [vmem:[#allocation4 + $0x138] sm:$0xff]
      %v6604 = vld [vmem:[#allocation4 + $0x140] sm:$0xff]
      %v6605 = vld [vmem:[#allocation4 + $0x148] sm:$0xff]
      %v6606 = vld [vmem:[#allocation4 + $0x150] sm:$0xff]
      %v6607 = vld [vmem:[#allocation4 + $0x158] sm:$0xff]
      %v6608 = vld [vmem:[#allocation4 + $0x160] sm:$0xff]
      %v6609 = vld [vmem:[#allocation4 + $0x168] sm:$0xff]
      %v6610 = vld [vmem:[#allocation4 + $0x170] sm:$0xff]
      %v6611 = vld [vmem:[#allocation4 + $0x178] sm:$0xff]
      %v6612 = vadd.f32 %v6564, %v6374
      %v6613 = vadd.f32 %v6565, %v6377
      %v6614 = vadd.f32 %v6566, %v6382
      %v6615 = vadd.f32 %v6567, %v6385
      %v6616 = vadd.f32 %v6568, %v6390
      %v6617 = vadd.f32 %v6569, %v6393
      %v6618 = vadd.f32 %v6570, %v6398
      %v6619 = vadd.f32 %v6571, %v6401
      %v6620 = vadd.f32 %v6572, %v6406
      %v6621 = vadd.f32 %v6573, %v6409
      %v6622 = vadd.f32 %v6574, %v6414
      %v6623 = vadd.f32 %v6575, %v6417
      %v6624 = vadd.f32 %v6576, %v6422
      %v6625 = vadd.f32 %v6577, %v6425
      %v6626 = vadd.f32 %v6578, %v6430
      %v6627 = vadd.f32 %v6579, %v6433
      %v6628 = vadd.f32 %v6580, %v6438
      %v6629 = vadd.f32 %v6581, %v6441
      %v6630 = vadd.f32 %v6582, %v6446
      %v6631 = vadd.f32 %v6583, %v6449
      %v6632 = vadd.f32 %v6584, %v6454
      %v6633 = vadd.f32 %v6585, %v6457
      %v6634 = vadd.f32 %v6586, %v6462
      %v6635 = vadd.f32 %v6587, %v6465
      %v6636 = vadd.f32 %v6588, %v6470
      %v6637 = vadd.f32 %v6589, %v6473
      %v6638 = vadd.f32 %v6590, %v6478
      %v6639 = vadd.f32 %v6591, %v6481
      %v6640 = vadd.f32 %v6592, %v6486
      %v6641 = vadd.f32 %v6593, %v6489
      %v6642 = vadd.f32 %v6594, %v6494
      %v6643 = vadd.f32 %v6595, %v6497
      %v6644 = vadd.f32 %v6596, %v6502
      %v6645 = vadd.f32 %v6597, %v6505
      %v6646 = vadd.f32 %v6598, %v6510
      %v6647 = vadd.f32 %v6599, %v6513
      %v6648 = vadd.f32 %v6600, %v6518
      %v6649 = vadd.f32 %v6601, %v6521
      %v6650 = vadd.f32 %v6602, %v6526
      %v6651 = vadd.f32 %v6603, %v6529
      %v6652 = vadd.f32 %v6604, %v6534
      %v6653 = vadd.f32 %v6605, %v6537
      %v6654 = vadd.f32 %v6606, %v6542
      %v6655 = vadd.f32 %v6607, %v6545
      %v6656 = vadd.f32 %v6608, %v6550
      %v6657 = vadd.f32 %v6609, %v6553
      %v6658 = vadd.f32 %v6610, %v6558
      %v6659 = vadd.f32 %v6611, %v6561
      %6660 = vst [vmem:[#allocation4] sm:$0xff] %v6612
      %6661 = vst [vmem:[#allocation4 + $0x8] sm:$0xff] %v6613
      %6662 = vst [vmem:[#allocation4 + $0x10] sm:$0xff] %v6614
      %6663 = vst [vmem:[#allocation4 + $0x18] sm:$0xff] %v6615
      %6664 = vst [vmem:[#allocation4 + $0x20] sm:$0xff] %v6616
      %6665 = vst [vmem:[#allocation4 + $0x28] sm:$0xff] %v6617
      %6666 = vst [vmem:[#allocation4 + $0x30] sm:$0xff] %v6618
      %6667 = vst [vmem:[#allocation4 + $0x38] sm:$0xff] %v6619
      %6668 = vst [vmem:[#allocation4 + $0x40] sm:$0xff] %v6620
      %6669 = vst [vmem:[#allocation4 + $0x48] sm:$0xff] %v6621
      %6670 = vst [vmem:[#allocation4 + $0x50] sm:$0xff] %v6622
      %6671 = vst [vmem:[#allocation4 + $0x58] sm:$0xff] %v6623
      %6672 = vst [vmem:[#allocation4 + $0x60] sm:$0xff] %v6624
      %6673 = vst [vmem:[#allocation4 + $0x68] sm:$0xff] %v6625
      %6674 = vst [vmem:[#allocation4 + $0x70] sm:$0xff] %v6626
      %6675 = vst [vmem:[#allocation4 + $0x78] sm:$0xff] %v6627
      %6676 = vst [vmem:[#allocation4 + $0x80] sm:$0xff] %v6628
      %6677 = vst [vmem:[#allocation4 + $0x88] sm:$0xff] %v6629
      %6678 = vst [vmem:[#allocation4 + $0x90] sm:$0xff] %v6630
      %6679 = vst [vmem:[#allocation4 + $0x98] sm:$0xff] %v6631
      %6680 = vst [vmem:[#allocation4 + $0xa0] sm:$0xff] %v6632
      %6681 = vst [vmem:[#allocation4 + $0xa8] sm:$0xff] %v6633
      %6682 = vst [vmem:[#allocation4 + $0xb0] sm:$0xff] %v6634
      %6683 = vst [vmem:[#allocation4 + $0xb8] sm:$0xff] %v6635
      %6684 = vst [vmem:[#allocation4 + $0xc0] sm:$0xff] %v6636
      %6685 = vst [vmem:[#allocation4 + $0xc8] sm:$0xff] %v6637
      %6686 = vst [vmem:[#allocation4 + $0xd0] sm:$0xff] %v6638
      %6687 = vst [vmem:[#allocation4 + $0xd8] sm:$0xff] %v6639
      %6688 = vst [vmem:[#allocation4 + $0xe0] sm:$0xff] %v6640
      %6689 = vst [vmem:[#allocation4 + $0xe8] sm:$0xff] %v6641
      %6690 = vst [vmem:[#allocation4 + $0xf0] sm:$0xff] %v6642
      %6691 = vst [vmem:[#allocation4 + $0xf8] sm:$0xff] %v6643
      %6692 = vst [vmem:[#allocation4 + $0x100] sm:$0xff] %v6644
      %6693 = vst [vmem:[#allocation4 + $0x108] sm:$0xff] %v6645
      %6694 = vst [vmem:[#allocation4 + $0x110] sm:$0xff] %v6646
      %6695 = vst [vmem:[#allocation4 + $0x118] sm:$0xff] %v6647
      %6696 = vst [vmem:[#allocation4 + $0x120] sm:$0xff] %v6648
      %6697 = vst [vmem:[#allocation4 + $0x128] sm:$0xff] %v6649
      %6698 = vst [vmem:[#allocation4 + $0x130] sm:$0xff] %v6650
      %6699 = vst [vmem:[#allocation4 + $0x138] sm:$0xff] %v6651
      %6700 = vst [vmem:[#allocation4 + $0x140] sm:$0xff] %v6652
      %6701 = vst [vmem:[#allocation4 + $0x148] sm:$0xff] %v6653
      %6702 = vst [vmem:[#allocation4 + $0x150] sm:$0xff] %v6654
      %6703 = vst [vmem:[#allocation4 + $0x158] sm:$0xff] %v6655
      %6704 = vst [vmem:[#allocation4 + $0x160] sm:$0xff] %v6656
      %6705 = vst [vmem:[#allocation4 + $0x168] sm:$0xff] %v6657
      %6706 = vst [vmem:[#allocation4 + $0x170] sm:$0xff] %v6658
      %6707 = vst [vmem:[#allocation4 + $0x178] sm:$0xff] %v6659
      %v6708 = vld [vmem:[#allocation4] sm:$0xff]
      %v6709 = vld [vmem:[#allocation4 + $0x8] sm:$0xff]
      %v6710 = vld [vmem:[#allocation4 + $0x18] sm:$0xff]
      %v6711 = vld [vmem:[#allocation4 + $0x20] sm:$0xff]
      %v6712 = vld [vmem:[#allocation4 + $0x30] sm:$0xff]
      %v6713 = vld [vmem:[#allocation4 + $0x38] sm:$0xff]
      %v6714 = vld [vmem:[#allocation4 + $0x48] sm:$0xff]
      %v6715 = vld [vmem:[#allocation4 + $0x50] sm:$0xff]
      %v6716 = vld [vmem:[#allocation4 + $0x60] sm:$0xff]
      %v6717 = vld [vmem:[#allocation4 + $0x68] sm:$0xff]
      %v6718 = vld [vmem:[#allocation4 + $0x78] sm:$0xff]
      %v6719 = vld [vmem:[#allocation4 + $0x80] sm:$0xff]
      %v6720 = vld [vmem:[#allocation4 + $0x90] sm:$0xff]
      %v6721 = vld [vmem:[#allocation4 + $0x98] sm:$0xff]
      %v6722 = vld [vmem:[#allocation4 + $0xa8] sm:$0xff]
      %v6723 = vld [vmem:[#allocation4 + $0xb0] sm:$0xff]
      %v6724 = vld [vmem:[#allocation4 + $0xc0] sm:$0xff]
      %v6725 = vld [vmem:[#allocation4 + $0xc8] sm:$0xff]
      %v6726 = vld [vmem:[#allocation4 + $0xd8] sm:$0xff]
      %v6727 = vld [vmem:[#allocation4 + $0xe0] sm:$0xff]
      %v6728 = vld [vmem:[#allocation4 + $0xf0] sm:$0xff]
      %v6729 = vld [vmem:[#allocation4 + $0xf8] sm:$0xff]
      %v6730 = vld [vmem:[#allocation4 + $0x108] sm:$0xff]
      %v6731 = vld [vmem:[#allocation4 + $0x110] sm:$0xff]
      %v6732 = vld [vmem:[#allocation4 + $0x120] sm:$0xff]
      %v6733 = vld [vmem:[#allocation4 + $0x128] sm:$0xff]
      %v6734 = vld [vmem:[#allocation4 + $0x138] sm:$0xff]
      %v6735 = vld [vmem:[#allocation4 + $0x140] sm:$0xff]
      %v6736 = vld [vmem:[#allocation4 + $0x150] sm:$0xff]
      %v6737 = vld [vmem:[#allocation4 + $0x158] sm:$0xff]
      %v6738 = vld [vmem:[#allocation4 + $0x168] sm:$0xff]
      %v6739 = vld [vmem:[#allocation4 + $0x170] sm:$0xff]
      %v6740 = vld [vmem:[%s2] sm:$0x1]
      %v6742 = vlaneseq
      %v6743 = vshrl.u32 %v6742, 7
      %v6744 = vsub.s32 0, %v6743
      %v6745 = vrot.slane %v6740, %v6744
      %v6747 = vmul.f32 %v6708, %v6745
      %v6748 = vmul.f32 %v6709, %v6745
      %v6749 = vmul.f32 %v6710, %v6745
      %v6750 = vmul.f32 %v6711, %v6745
      %v6751 = vmul.f32 %v6712, %v6745
      %v6752 = vmul.f32 %v6713, %v6745
      %v6753 = vmul.f32 %v6714, %v6745
      %v6754 = vmul.f32 %v6715, %v6745
      %v6755 = vmul.f32 %v6716, %v6745
      %v6756 = vmul.f32 %v6717, %v6745
      %v6757 = vmul.f32 %v6718, %v6745
      %v6758 = vmul.f32 %v6719, %v6745
      %v6759 = vmul.f32 %v6720, %v6745
      %v6760 = vmul.f32 %v6721, %v6745
      %v6761 = vmul.f32 %v6722, %v6745
      %v6762 = vmul.f32 %v6723, %v6745
      %v6763 = vmul.f32 %v6724, %v6745
      %v6764 = vmul.f32 %v6725, %v6745
      %v6765 = vmul.f32 %v6726, %v6745
      %v6766 = vmul.f32 %v6727, %v6745
      %v6767 = vmul.f32 %v6728, %v6745
      %v6768 = vmul.f32 %v6729, %v6745
      %v6769 = vmul.f32 %v6730, %v6745
      %v6770 = vmul.f32 %v6731, %v6745
      %v6771 = vmul.f32 %v6732, %v6745
      %v6772 = vmul.f32 %v6733, %v6745
      %v6773 = vmul.f32 %v6734, %v6745
      %v6774 = vmul.f32 %v6735, %v6745
      %v6775 = vmul.f32 %v6736, %v6745
      %v6776 = vmul.f32 %v6737, %v6745
      %v6777 = vmul.f32 %v6738, %v6745
      %v6778 = vmul.f32 %v6739, %v6745
      %v6779 = vld [vmem:[%s3] sm:$0x1]
      %v6781 = vlaneseq
      %v6782 = vshrl.u32 %v6781, 7
      %v6783 = vsub.s32 0, %v6782
      %v6784 = vrot.slane %v6779, %v6783
      %v6786 = vadd.f32 %v6747, %v6784
      %v6787 = vadd.f32 %v6748, %v6784
      %v6788 = vadd.f32 %v6749, %v6784
      %v6789 = vadd.f32 %v6750, %v6784
      %v6790 = vadd.f32 %v6751, %v6784
      %v6791 = vadd.f32 %v6752, %v6784
      %v6792 = vadd.f32 %v6753, %v6784
      %v6793 = vadd.f32 %v6754, %v6784
      %v6794 = vadd.f32 %v6755, %v6784
      %v6795 = vadd.f32 %v6756, %v6784
      %v6796 = vadd.f32 %v6757, %v6784
      %v6797 = vadd.f32 %v6758, %v6784
      %v6798 = vadd.f32 %v6759, %v6784
      %v6799 = vadd.f32 %v6760, %v6784
      %v6800 = vadd.f32 %v6761, %v6784
      %v6801 = vadd.f32 %v6762, %v6784
      %v6802 = vadd.f32 %v6763, %v6784
      %v6803 = vadd.f32 %v6764, %v6784
      %v6804 = vadd.f32 %v6765, %v6784
      %v6805 = vadd.f32 %v6766, %v6784
      %v6806 = vadd.f32 %v6767, %v6784
      %v6807 = vadd.f32 %v6768, %v6784
      %v6808 = vadd.f32 %v6769, %v6784
      %v6809 = vadd.f32 %v6770, %v6784
      %v6810 = vadd.f32 %v6771, %v6784
      %v6811 = vadd.f32 %v6772, %v6784
      %v6812 = vadd.f32 %v6773, %v6784
      %v6813 = vadd.f32 %v6774, %v6784
      %v6814 = vadd.f32 %v6775, %v6784
      %v6815 = vadd.f32 %v6776, %v6784
      %v6816 = vadd.f32 %v6777, %v6784
      %v6817 = vadd.f32 %v6778, %v6784
      %v6818 = vmax.f32 %v6786, 0.0
      %v6819 = vmax.f32 %v6787, 0.0
      %v6820 = vmax.f32 %v6788, 0.0
      %v6821 = vmax.f32 %v6789, 0.0
      %v6822 = vmax.f32 %v6790, 0.0
      %v6823 = vmax.f32 %v6791, 0.0
      %v6824 = vmax.f32 %v6792, 0.0
      %v6825 = vmax.f32 %v6793, 0.0
      %v6826 = vmax.f32 %v6794, 0.0
      %v6827 = vmax.f32 %v6795, 0.0
      %v6828 = vmax.f32 %v6796, 0.0
      %v6829 = vmax.f32 %v6797, 0.0
      %v6830 = vmax.f32 %v6798, 0.0
      %v6831 = vmax.f32 %v6799, 0.0
      %v6832 = vmax.f32 %v6800, 0.0
      %v6833 = vmax.f32 %v6801, 0.0
      %v6834 = vmax.f32 %v6802, 0.0
      %v6835 = vmax.f32 %v6803, 0.0
      %v6836 = vmax.f32 %v6804, 0.0
      %v6837 = vmax.f32 %v6805, 0.0
      %v6838 = vmax.f32 %v6806, 0.0
      %v6839 = vmax.f32 %v6807, 0.0
      %v6840 = vmax.f32 %v6808, 0.0
      %v6841 = vmax.f32 %v6809, 0.0
      %v6842 = vmax.f32 %v6810, 0.0
      %v6843 = vmax.f32 %v6811, 0.0
      %v6844 = vmax.f32 %v6812, 0.0
      %v6845 = vmax.f32 %v6813, 0.0
      %v6846 = vmax.f32 %v6814, 0.0
      %v6847 = vmax.f32 %v6815, 0.0
      %v6848 = vmax.f32 %v6816, 0.0
      %v6849 = vmax.f32 %v6817, 0.0
      %v6850 = vpack.c.bf16 %v6819, %v6818
      %v6851 = vpack.c.bf16 %v6821, %v6820
      %v6852 = vpack.c.bf16 %v6823, %v6822
      %v6853 = vpack.c.bf16 %v6825, %v6824
      %v6854 = vpack.c.bf16 %v6827, %v6826
      %v6855 = vpack.c.bf16 %v6829, %v6828
      %v6856 = vpack.c.bf16 %v6831, %v6830
      %v6857 = vpack.c.bf16 %v6833, %v6832
      %v6858 = vpack.c.bf16 %v6835, %v6834
      %v6859 = vpack.c.bf16 %v6837, %v6836
      %v6860 = vpack.c.bf16 %v6839, %v6838
      %v6861 = vpack.c.bf16 %v6841, %v6840
      %v6862 = vpack.c.bf16 %v6843, %v6842
      %v6863 = vpack.c.bf16 %v6845, %v6844
      %v6864 = vpack.c.bf16 %v6847, %v6846
      %v6865 = vpack.c.bf16 %v6849, %v6848
      %v6882 = vunpack.c.l.b16 %v6850
      %v6883 = vunpack.c.h.b16 %v6850
      %v6884 = vunpack.c.l.b16 %v6851
      %v6885 = vunpack.c.h.b16 %v6851
      %v6886 = vunpack.c.l.b16 %v6852
      %v6887 = vunpack.c.h.b16 %v6852
      %v6888 = vunpack.c.l.b16 %v6853
      %v6889 = vunpack.c.h.b16 %v6853
      %v6890 = vunpack.c.l.b16 %v6854
      %v6891 = vunpack.c.h.b16 %v6854
      %v6892 = vunpack.c.l.b16 %v6855
      %v6893 = vunpack.c.h.b16 %v6855
      %v6894 = vunpack.c.l.b16 %v6856
      %v6895 = vunpack.c.h.b16 %v6856
      %v6896 = vunpack.c.l.b16 %v6857
      %v6897 = vunpack.c.h.b16 %v6857
      %v6898 = vunpack.c.l.b16 %v6858
      %v6899 = vunpack.c.h.b16 %v6858
      %v6900 = vunpack.c.l.b16 %v6859
      %v6901 = vunpack.c.h.b16 %v6859
      %v6902 = vunpack.c.l.b16 %v6860
      %v6903 = vunpack.c.h.b16 %v6860
      %v6904 = vunpack.c.l.b16 %v6861
      %v6905 = vunpack.c.h.b16 %v6861
      %v6906 = vunpack.c.l.b16 %v6862
      %v6907 = vunpack.c.h.b16 %v6862
      %v6908 = vunpack.c.l.b16 %v6863
      %v6909 = vunpack.c.h.b16 %v6863
      %v6910 = vunpack.c.l.b16 %v6864
      %v6911 = vunpack.c.h.b16 %v6864
      %v6912 = vunpack.c.l.b16 %v6865
      %v6913 = vunpack.c.h.b16 %v6865
      %v6914 = vpack.c.b16 %v6882, %v6882
      %v6915 = vpack.c.b16 %v6883, %v6883
      %v6916 = vpack.c.b16 %v6884, %v6884
      %v6917 = vpack.c.b16 %v6885, %v6885
      %v6918 = vpack.c.b16 %v6886, %v6886
      %v6919 = vpack.c.b16 %v6887, %v6887
      %v6920 = vpack.c.b16 %v6888, %v6888
      %v6921 = vpack.c.b16 %v6889, %v6889
      %v6922 = vpack.c.b16 %v6890, %v6890
      %v6923 = vpack.c.b16 %v6891, %v6891
      %v6924 = vpack.c.b16 %v6892, %v6892
      %v6925 = vpack.c.b16 %v6893, %v6893
      %v6926 = vpack.c.b16 %v6894, %v6894
      %v6927 = vpack.c.b16 %v6895, %v6895
      %v6928 = vpack.c.b16 %v6896, %v6896
      %v6929 = vpack.c.b16 %v6897, %v6897
      %v6930 = vpack.c.b16 %v6898, %v6898
      %v6931 = vpack.c.b16 %v6899, %v6899
      %v6932 = vpack.c.b16 %v6900, %v6900
      %v6933 = vpack.c.b16 %v6901, %v6901
      %v6934 = vpack.c.b16 %v6902, %v6902
      %v6935 = vpack.c.b16 %v6903, %v6903
      %v6936 = vpack.c.b16 %v6904, %v6904
      %v6937 = vpack.c.b16 %v6905, %v6905
      %v6938 = vpack.c.b16 %v6906, %v6906
      %v6939 = vpack.c.b16 %v6907, %v6907
      %v6940 = vpack.c.b16 %v6908, %v6908
      %v6941 = vpack.c.b16 %v6909, %v6909
      %v6942 = vpack.c.b16 %v6910, %v6910
      %v6943 = vpack.c.b16 %v6911, %v6911
      %v6944 = vpack.c.b16 %v6912, %v6912
      %v6945 = vpack.c.b16 %v6913, %v6913
      %6978 = vst [vmem:[%s175] sm:$0xf] %v6914
      %6979 = vst [vmem:[%s175 + $0x4] sm:$0xf] %v6915
      %6980 = vst [vmem:[%s175 + $0x8] sm:$0xf] %v6916
      %6981 = vst [vmem:[%s175 + $0xc] sm:$0xf] %v6917
      %6982 = vst [vmem:[%s175 + $0x10] sm:$0xf] %v6918
      %6983 = vst [vmem:[%s175 + $0x14] sm:$0xf] %v6919
      %6984 = vst [vmem:[%s175 + $0x18] sm:$0xf] %v6920
      %6985 = vst [vmem:[%s175 + $0x1c] sm:$0xf] %v6921
      %6986 = vst [vmem:[%s175 + $0x20] sm:$0xf] %v6922
      %6987 = vst [vmem:[%s175 + $0x24] sm:$0xf] %v6923
      %6988 = vst [vmem:[%s175 + $0x28] sm:$0xf] %v6924
      %6989 = vst [vmem:[%s175 + $0x2c] sm:$0xf] %v6925
      %6990 = vst [vmem:[%s175 + $0x30] sm:$0xf] %v6926
      %6991 = vst [vmem:[%s175 + $0x34] sm:$0xf] %v6927
      %6992 = vst [vmem:[%s175 + $0x38] sm:$0xf] %v6928
      %6993 = vst [vmem:[%s175 + $0x3c] sm:$0xf] %v6929
      %6994 = vst [vmem:[%s175 + $0x40] sm:$0xf] %v6930
      %6995 = vst [vmem:[%s175 + $0x44] sm:$0xf] %v6931
      %6996 = vst [vmem:[%s175 + $0x48] sm:$0xf] %v6932
      %6997 = vst [vmem:[%s175 + $0x4c] sm:$0xf] %v6933
      %6998 = vst [vmem:[%s175 + $0x50] sm:$0xf] %v6934
      %6999 = vst [vmem:[%s175 + $0x54] sm:$0xf] %v6935
      %7000 = vst [vmem:[%s175 + $0x58] sm:$0xf] %v6936
      %7001 = vst [vmem:[%s175 + $0x5c] sm:$0xf] %v6937
      %7002 = vst [vmem:[%s175 + $0x60] sm:$0xf] %v6938
      %7003 = vst [vmem:[%s175 + $0x64] sm:$0xf] %v6939
      %7004 = vst [vmem:[%s175 + $0x68] sm:$0xf] %v6940
      %7005 = vst [vmem:[%s175 + $0x6c] sm:$0xf] %v6941
      %7006 = vst [vmem:[%s175 + $0x70] sm:$0xf] %v6942
      %7007 = vst [vmem:[%s175 + $0x74] sm:$0xf] %v6943
      %7008 = vst [vmem:[%s175 + $0x78] sm:$0xf] %v6944
      %7009 = vst [vmem:[%s175 + $0x7c] sm:$0xf] %v6945
      %s7010 = smul.u32 16, %s20
      %p7011 = scmp.lt.s32.totalorder %s19, 1
      %s7012 = scalar_select %p7011, %s19, 1
      %p7013 = scmp.lt.s32.totalorder %s7010, 15
      %s7014 = scalar_select %p7013, %s7010, 15
      %s7015 = smul.addr %s7014, 2
      %s7016 = smul.addr %s7012, 32
      %s7017 = sadd.s32 %s7015, %s7016
      %s7018 = smul.addr %s7017, 4
      %s7019 = scalar_lea.vmem %s4, %s7018
      // Predicated region
      $region109: #{_lambda_.5} parent=31 // pred_check
        %p7020 = pneg %p110
      $region110: #{_lambda_.5} parent=31 // pred_check_branch
        %7022 = sbr.rel (%p7020) target = $region112
      $region111: #{_lambda_.5} parent=31 // pred_region
        %s7023 = smul.u32 16, %s20
      $region112: #{_lambda_.5} parent=31 // pred_fallthru
        _
    $region32: #{_lambda_.5} parent=5 // pred_fallthru
      _
    %p7024 = scmp.le.s32.totalorder 2, %s10
    // Predicated region
    $region113: #{_lambda_.5} parent=5 // pred_check
      %p7025 = pneg %p7024
    $region114: #{_lambda_.5} parent=5 // pred_check_branch
      %7027 = sbr.rel (%p7025) target = $region116
    $region115: #{_lambda_.5} parent=5 // pred_region
      %s7028 = ssub.s32 %s10, 2
      // Predicated region
      $region117: #{_lambda_.5} parent=115 // pred_check
        %p7029 = pneg %p116
      $region118: #{_lambda_.5} parent=115 // pred_check_branch
        %7031 = sbr.rel (%p7029) target = $region120
      $region119: #{_lambda_.5} parent=115 // pred_region
        %s7032 = smul.u32 16, %s22
        %p7033 = scmp.lt.s32.totalorder %s21, 1
        %s7034 = scalar_select %p7033, %s21, 1
        %p7035 = scmp.lt.s32.totalorder %s7032, 15
        %s7036 = scalar_select %p7035, %s7032, 15
        %s7037 = smul.addr %s7036, 2
        %s7038 = smul.addr %s7034, 32
        %s7039 = sadd.s32 %s7037, %s7038
        %s7040 = smul.addr %s7039, 4
        %s7041 = scalar_lea.vmem %s4, %s7040
      $region120: #{_lambda_.5} parent=115 // pred_fallthru
        _
    $region116: #{_lambda_.5} parent=5 // pred_fallthru
      _
  $region6: #{_lambda_.5} parent=0 // loop_footer
    %s14 = sadd.s32 1, %s10
  $region7: #{_lambda_.5} parent=0 // loop_footer_branch
    %9 = sbr.rel target = $region3
  $region8: #{_lambda_.5} parent=0 // loop_exit
    _
  %7042 = vsyncmov [#allocation3]
  %s7043 = vpop.sfrf %7042
  %p7044 = scmp.eq.s32.totalorder %s7043, 0
  %p7045 = pneg %p7044
  %7047 = shalt.err (%p7045)
  %s7048 = scalar_lea.sflag [#allocation3], 1
  %7049 = vsyncmov %s7048
  %s7050 = vpop.sfrf %7049
  %p7051 = scmp.eq.s32.totalorder %s7050, 0
  %p7052 = pneg %p7051
  %7054 = shalt.err (%p7052)

</llo_original>
